<compile_context>
chip_gen: v7x
topology: tpu7x:2x2x1
jax: 0.10.0
libtpu: 0.0.40
codegen_flags: <defaults>
</compile_context>

<pallas_src>
import jax
import jax.numpy as jnp
from jax.experimental import pallas as pl
from jax.experimental.pallas import tpu as pltpu

EPS = 1e-5
LANE = 128


def _round_up(x, m):
    return (x + m - 1) // m * m


def double_conv_kernel(x_ref, w1_ref, g1_ref, be1_ref, w2_ref, g2_ref, be2_ref,
                       o_ref, cols1_ref, hpad_ref, cols2_ref):
    # x_ref:   (N, H+2, W+2, Cin_p)   zero-padded input (spatial + channel), NHWC
    # w1_ref:  (9*Cin_p,  Cmid_p)     packed conv1 weights, row = (dy*3+dx)*Cin_p + c
    # w2_ref:  (9*Cmid_p, Cout_p)     packed conv2 weights
    # g*/be*:  (1, C_p)               BN gamma / beta (zero-padded channels)
    # o_ref:   (N, H, W, Cout_p)      lane-dense output
    # cols1_ref / cols2_ref:          im2col scratch (N*H*W, 9*C_p)
    # hpad_ref:(N, H+2, W+2, Cmid_p)  padded intermediate
    N, Hp, Wp, Cin_p = x_ref.shape
    H, W = Hp - 2, Wp - 2
    Cmid_p = w1_ref.shape[-1]
    Cout_p = w2_ref.shape[-1]
    rows = N * H * W
    inv_n = 1.0 / rows
    taps = [(dy, dx) for dy in range(3) for dx in range(3)]

    # ---- conv1: one im2col gather pass + one fat MXU matmul (K = 9*Cin_p) ----
    for t, (dy, dx) in enumerate(taps):
        cols1_ref[:, t * Cin_p:(t + 1) * Cin_p] = (
            x_ref[:, dy:dy + H, dx:dx + W, :].reshape(rows, Cin_p))
    acc1 = jnp.dot(cols1_ref[...], w1_ref[...],
                   preferred_element_type=jnp.float32)

    # ---- BN1 (training-mode batch stats, single pass) + ReLU, fused affine ----
    # Conv bias omitted: exactly cancelled by the mean subtraction below.
    s1 = jnp.sum(acc1, axis=0, keepdims=True)
    q1 = jnp.sum(acc1 * acc1, axis=0, keepdims=True)
    mean1 = s1 * inv_n
    var1 = jnp.maximum(q1 * inv_n - mean1 * mean1, 0.0)
    scale1 = g1_ref[...] * jax.lax.rsqrt(var1 + EPS)
    shift1 = be1_ref[...] - mean1 * scale1
    h = jnp.maximum(acc1 * scale1 + shift1, 0.0)

    # ---- padded intermediate: zero only the 1-pixel border, write interior ----
    zrow = jnp.zeros((N, 1, Wp, Cmid_p), hpad_ref.dtype)
    zcol = jnp.zeros((N, Hp, 1, Cmid_p), hpad_ref.dtype)
    hpad_ref[:, 0:1, :, :] = zrow
    hpad_ref[:, H + 1:H + 2, :, :] = zrow
    hpad_ref[:, :, 0:1, :] = zcol
    hpad_ref[:, :, W + 1:W + 2, :] = zcol
    hpad_ref[:, 1:H + 1, 1:W + 1, :] = (
        h.reshape(N, H, W, Cmid_p).astype(hpad_ref.dtype))

    # ---- conv2: one im2col gather pass + one fat MXU matmul (K = 9*Cmid_p) ----
    for t, (dy, dx) in enumerate(taps):
        cols2_ref[:, t * Cmid_p:(t + 1) * Cmid_p] = (
            hpad_ref[:, dy:dy + H, dx:dx + W, :].reshape(rows, Cmid_p))
    acc2 = jnp.dot(cols2_ref[...], w2_ref[...],
                   preferred_element_type=jnp.float32)

    # ---- BN2 + ReLU, lane-dense (Cout_p multiple of 128) output store ----
    s2 = jnp.sum(acc2, axis=0, keepdims=True)
    q2 = jnp.sum(acc2 * acc2, axis=0, keepdims=True)
    mean2 = s2 * inv_n
    var2 = jnp.maximum(q2 * inv_n - mean2 * mean2, 0.0)
    scale2 = g2_ref[...] * jax.lax.rsqrt(var2 + EPS)
    shift2 = be2_ref[...] - mean2 * scale2
    o = jnp.maximum(acc2 * scale2 + shift2, 0.0)
    o_ref[...] = o.reshape(N, H, W, Cout_p).astype(o_ref.dtype)


def _pack_weight(w, cin_pad, cout_pad, dtype):
    # (Cout, Cin, 3, 3) OIHW -> (9*cin_pad, cout_pad); row = (dy*3+dx)*cin_pad + cin
    cout, cin, kh, kw = w.shape
    wk = jnp.transpose(w, (2, 3, 1, 0))
    wk = jnp.pad(wk, ((0, 0), (0, 0), (0, cin_pad - cin), (0, cout_pad - cout)))
    return wk.reshape(kh * kw * cin_pad, cout_pad).astype(dtype)


def _pack_bn(v, c_pad):
    return jnp.pad(v, (0, c_pad - v.shape[0])).reshape(1, c_pad).astype(jnp.float32)


def double_conv(x_nchw, params, compute_dtype=jnp.float32):
    """Fused DoubleConv forward.

    params = (w1, b1, g1, be1, w2, b2, g2, be2) in PyTorch layouts. b1/b2 are
    accepted for interface parity but not sent to the kernel: training-mode
    BatchNorm mean subtraction cancels conv bias exactly.
    Set compute_dtype=jnp.bfloat16 for faster MXU matmuls (f32 accumulate).
    """
    w1, _b1, g1, be1, w2, _b2, g2, be2 = params
    N, Cin, H, W = x_nchw.shape
    Cmid, Cout = w1.shape[0], w2.shape[0]
    Cin_p = _round_up(Cin, LANE)
    Cmid_p = _round_up(Cmid, LANE)
    Cout_p = _round_up(Cout, LANE)
    rows = N * H * W

    # Glue: NCHW -> NHWC, pad spatial by 1 and channels up to a lane multiple
    # (one fused XLA pad), pack weights / BN params for the kernel.
    x = jnp.transpose(x_nchw, (0, 2, 3, 1))
    x_pad = jnp.pad(
        x, ((0, 0), (1, 1), (1, 1), (0, Cin_p - Cin))).astype(compute_dtype)
    w1m = _pack_weight(w1, Cin_p, Cmid_p, compute_dtype)
    w2m = _pack_weight(w2, Cmid_p, Cout_p, compute_dtype)

    flops = 2 * rows * 9 * (Cin_p * Cmid_p + Cmid_p * Cout_p)
    bytes_accessed = 4 * (N * (H + 2) * (W + 2) * Cin_p
                          + 9 * Cin_p * Cmid_p + 9 * Cmid_p * Cout_p
                          + rows * Cout_p + 2 * (Cmid_p + Cout_p))

    # TODO(synk): at production DoubleConv sizes, tile over H row-blocks with a
    # 1-row halo plus a two-pass (sum/sumsq -> normalize) BatchNorm so the
    # working set fits v7x's 64 MiB VMEM and both TensorCores can be used via
    # dimension_semantics=("parallel", ...). At the small shapes used here the
    # whole problem fits VMEM, so a single grid-less call is appropriate.
    out_nhwc = pl.pallas_call(
        double_conv_kernel,
        out_shape=jax.ShapeDtypeStruct((N, H, W, Cout_p), jnp.float32),
        in_specs=[pl.BlockSpec(memory_space=pltpu.MemorySpace.VMEM)] * 7,
        out_specs=pl.BlockSpec(memory_space=pltpu.MemorySpace.VMEM),
        scratch_shapes=[
            pltpu.VMEM((rows, 9 * Cin_p), compute_dtype),          # im2col conv1
            pltpu.VMEM((N, H + 2, W + 2, Cmid_p), compute_dtype),  # padded mid act.
            pltpu.VMEM((rows, 9 * Cmid_p), compute_dtype),         # im2col conv2
        ],
        compiler_params=pltpu.CompilerParams(vmem_limit_bytes=64 * 1024 * 1024),
        cost_estimate=pl.CostEstimate(flops=flops,
                                      transcendentals=Cmid_p + Cout_p,
                                      bytes_accessed=bytes_accessed),
    )(x_pad, w1m,
      _pack_bn(g1, Cmid_p), _pack_bn(be1, Cmid_p),
      w2m,
      _pack_bn(g2, Cout_p), _pack_bn(be2, Cout_p))

    # Drop channel padding, back to NCHW.
    return jnp.transpose(out_nhwc[..., :Cout], (0, 3, 1, 2))


def ref_double_conv(x, params):
    """Pure-JAX reference (matches PyTorch training-mode forward)."""
    w1, b1, g1, be1, w2, b2, g2, be2 = params

    def conv(x, w, b):
        y = jax.lax.conv_general_dilated(
            x, w, window_strides=(1, 1), padding=((1, 1), (1, 1)),
            dimension_numbers=("NCHW", "OIHW", "NCHW"))
        return y + b[None, :, None, None]

    def bn_relu(y, g, be):
        mean = jnp.mean(y, axis=(0, 2, 3), keepdims=True)
        var = jnp.mean((y - mean) ** 2, axis=(0, 2, 3), keepdims=True)
        yn = (y - mean) * jax.lax.rsqrt(var + EPS)
        yn = yn * g[None, :, None, None] + be[None, :, None, None]
        return jnp.maximum(yn, 0.0)

    h = bn_relu(conv(x, w1, b1), g1, be1)
    return bn_relu(conv(h, w2, b2), g2, be2)


def init_params(key, in_channels, out_channels):
    k1, k2, k3, k4 = jax.random.split(key, 4)
    fan1 = in_channels * 9
    fan2 = out_channels * 9
    bound1 = 1.0 / jnp.sqrt(fan1)
    bound2 = 1.0 / jnp.sqrt(fan2)
    w1 = jax.random.uniform(k1, (out_channels, in_channels, 3, 3),
                            jnp.float32, -bound1, bound1)
    b1 = jax.random.uniform(k2, (out_channels,), jnp.float32, -bound1, bound1)
    w2 = jax.random.uniform(k3, (out_channels, out_channels, 3, 3),
                            jnp.float32, -bound2, bound2)
    b2 = jax.random.uniform(k4, (out_channels,), jnp.float32, -bound2, bound2)
    # BatchNorm2d default init: weight = 1, bias = 0.
    g1 = jnp.ones((out_channels,), jnp.float32)
    be1 = jnp.zeros((out_channels,), jnp.float32)
    g2 = jnp.ones((out_channels,), jnp.float32)
    be2 = jnp.zeros((out_channels,), jnp.float32)
    return (w1, b1, g1, be1, w2, b2, g2, be2)


if __name__ == "__main__":
    key = jax.random.PRNGKey(0)
    kx, kp = jax.random.split(key)

    N, Cin, H, W = 2, 4, 16, 16
    Cout = 8

    x = jax.random.normal(kx, (N, Cin, H, W), jnp.float32)
    params = init_params(kp, Cin, Cout)

    out = jax.block_until_ready(double_conv(x, params))
    ref = jax.block_until_ready(ref_double_conv(x, params))

    assert out.shape == (N, Cout, H, W)
    err = jnp.max(jnp.abs(out - ref))
    assert jnp.allclose(out, ref, atol=2e-4, rtol=2e-4), f"max abs err = {err}"

    print("KERNEL_OK")
</pallas_src>

<mosaic_0001>
module attributes {stable_mosaic.version = 11 : i64} {
  func.func @double_conv_kernel(%arg0: memref<2x18x18x128xf32, #tpu.memory_space<vmem>>, %arg1: memref<1152x128xf32, #tpu.memory_space<vmem>>, %arg2: memref<1x128xf32, #tpu.memory_space<vmem>>, %arg3: memref<1x128xf32, #tpu.memory_space<vmem>>, %arg4: memref<1152x128xf32, #tpu.memory_space<vmem>>, %arg5: memref<1x128xf32, #tpu.memory_space<vmem>>, %arg6: memref<1x128xf32, #tpu.memory_space<vmem>>, %arg7: memref<2x16x16x128xf32, #tpu.memory_space<vmem>>, %arg8: memref<512x1152xf32, #tpu.memory_space<vmem>>, %arg9: memref<2x18x18x128xf32, #tpu.memory_space<vmem>>, %arg10: memref<512x1152xf32, #tpu.memory_space<vmem>>) attributes {dimension_semantics = [], scalar_prefetch = 0 : i64, scratch_operands = 3 : i64, tpu.core_type = #tpu.core_type<tc>} {
    %c0 = arith.constant 0 : index
    %c0_0 = arith.constant 0 : index
    %c0_1 = arith.constant 0 : index
    %c0_2 = arith.constant 0 : index
    %0 = vector.load %arg0[%c0, %c0_0, %c0_1, %c0_2] : memref<2x18x18x128xf32, #tpu.memory_space<vmem>>, vector<2x16x16x128xf32>
    %1 = vector.shape_cast %0 : vector<2x16x16x128xf32> to vector<512x128xf32>
    %c0_3 = arith.constant 0 : index
    %c0_4 = arith.constant 0 : index
    %2 = vector.load %arg8[%c0_3, %c0_4] : memref<512x1152xf32, #tpu.memory_space<vmem>>, vector<512x128xf32>
    tpu.vector_store %arg8[%c0_3, %c0_4], %1 {strides = array<i32>} : memref<512x1152xf32, #tpu.memory_space<vmem>>, vector<512x128xf32>,
    %c0_5 = arith.constant 0 : index
    %c0_6 = arith.constant 0 : index
    %c1 = arith.constant 1 : index
    %c0_7 = arith.constant 0 : index
    %3 = vector.load %arg0[%c0_5, %c0_6, %c1, %c0_7] : memref<2x18x18x128xf32, #tpu.memory_space<vmem>>, vector<2x16x16x128xf32>
    %4 = vector.shape_cast %3 : vector<2x16x16x128xf32> to vector<512x128xf32>
    %c0_8 = arith.constant 0 : index
    %c128 = arith.constant 128 : index
    %5 = vector.load %arg8[%c0_8, %c128] : memref<512x1152xf32, #tpu.memory_space<vmem>>, vector<512x128xf32>
    tpu.vector_store %arg8[%c0_8, %c128], %4 {strides = array<i32>} : memref<512x1152xf32, #tpu.memory_space<vmem>>, vector<512x128xf32>,
    %c0_9 = arith.constant 0 : index
    %c0_10 = arith.constant 0 : index
    %c2 = arith.constant 2 : index
    %c0_11 = arith.constant 0 : index
    %6 = vector.load %arg0[%c0_9, %c0_10, %c2, %c0_11] : memref<2x18x18x128xf32, #tpu.memory_space<vmem>>, vector<2x16x16x128xf32>
    %7 = vector.shape_cast %6 : vector<2x16x16x128xf32> to vector<512x128xf32>
    %c0_12 = arith.constant 0 : index
    %c256 = arith.constant 256 : index
    %8 = vector.load %arg8[%c0_12, %c256] : memref<512x1152xf32, #tpu.memory_space<vmem>>, vector<512x128xf32>
    tpu.vector_store %arg8[%c0_12, %c256], %7 {strides = array<i32>} : memref<512x1152xf32, #tpu.memory_space<vmem>>, vector<512x128xf32>,
    %c0_13 = arith.constant 0 : index
    %c1_14 = arith.constant 1 : index
    %c0_15 = arith.constant 0 : index
    %c0_16 = arith.constant 0 : index
    %9 = vector.load %arg0[%c0_13, %c1_14, %c0_15, %c0_16] : memref<2x18x18x128xf32, #tpu.memory_space<vmem>>, vector<2x16x16x128xf32>
    %10 = vector.shape_cast %9 : vector<2x16x16x128xf32> to vector<512x128xf32>
    %c0_17 = arith.constant 0 : index
    %c384 = arith.constant 384 : index
    %11 = vector.load %arg8[%c0_17, %c384] : memref<512x1152xf32, #tpu.memory_space<vmem>>, vector<512x128xf32>
    tpu.vector_store %arg8[%c0_17, %c384], %10 {strides = array<i32>} : memref<512x1152xf32, #tpu.memory_space<vmem>>, vector<512x128xf32>,
    %c0_18 = arith.constant 0 : index
    %c1_19 = arith.constant 1 : index
    %c1_20 = arith.constant 1 : index
    %c0_21 = arith.constant 0 : index
    %12 = vector.load %arg0[%c0_18, %c1_19, %c1_20, %c0_21] : memref<2x18x18x128xf32, #tpu.memory_space<vmem>>, vector<2x16x16x128xf32>
    %13 = vector.shape_cast %12 : vector<2x16x16x128xf32> to vector<512x128xf32>
    %c0_22 = arith.constant 0 : index
    %c512 = arith.constant 512 : index
    %14 = vector.load %arg8[%c0_22, %c512] : memref<512x1152xf32, #tpu.memory_space<vmem>>, vector<512x128xf32>
    tpu.vector_store %arg8[%c0_22, %c512], %13 {strides = array<i32>} : memref<512x1152xf32, #tpu.memory_space<vmem>>, vector<512x128xf32>,
    %c0_23 = arith.constant 0 : index
    %c1_24 = arith.constant 1 : index
    %c2_25 = arith.constant 2 : index
    %c0_26 = arith.constant 0 : index
    %15 = vector.load %arg0[%c0_23, %c1_24, %c2_25, %c0_26] : memref<2x18x18x128xf32, #tpu.memory_space<vmem>>, vector<2x16x16x128xf32>
    %16 = vector.shape_cast %15 : vector<2x16x16x128xf32> to vector<512x128xf32>
    %c0_27 = arith.constant 0 : index
    %c640 = arith.constant 640 : index
    %17 = vector.load %arg8[%c0_27, %c640] : memref<512x1152xf32, #tpu.memory_space<vmem>>, vector<512x128xf32>
    tpu.vector_store %arg8[%c0_27, %c640], %16 {strides = array<i32>} : memref<512x1152xf32, #tpu.memory_space<vmem>>, vector<512x128xf32>,
    %c0_28 = arith.constant 0 : index
    %c2_29 = arith.constant 2 : index
    %c0_30 = arith.constant 0 : index
    %c0_31 = arith.constant 0 : index
    %18 = vector.load %arg0[%c0_28, %c2_29, %c0_30, %c0_31] : memref<2x18x18x128xf32, #tpu.memory_space<vmem>>, vector<2x16x16x128xf32>
    %19 = vector.shape_cast %18 : vector<2x16x16x128xf32> to vector<512x128xf32>
    %c0_32 = arith.constant 0 : index
    %c768 = arith.constant 768 : index
    %20 = vector.load %arg8[%c0_32, %c768] : memref<512x1152xf32, #tpu.memory_space<vmem>>, vector<512x128xf32>
    tpu.vector_store %arg8[%c0_32, %c768], %19 {strides = array<i32>} : memref<512x1152xf32, #tpu.memory_space<vmem>>, vector<512x128xf32>,
    %c0_33 = arith.constant 0 : index
    %c2_34 = arith.constant 2 : index
    %c1_35 = arith.constant 1 : index
    %c0_36 = arith.constant 0 : index
    %21 = vector.load %arg0[%c0_33, %c2_34, %c1_35, %c0_36] : memref<2x18x18x128xf32, #tpu.memory_space<vmem>>, vector<2x16x16x128xf32>
    %22 = vector.shape_cast %21 : vector<2x16x16x128xf32> to vector<512x128xf32>
    %c0_37 = arith.constant 0 : index
    %c896 = arith.constant 896 : index
    %23 = vector.load %arg8[%c0_37, %c896] : memref<512x1152xf32, #tpu.memory_space<vmem>>, vector<512x128xf32>
    tpu.vector_store %arg8[%c0_37, %c896], %22 {strides = array<i32>} : memref<512x1152xf32, #tpu.memory_space<vmem>>, vector<512x128xf32>,
    %c0_38 = arith.constant 0 : index
    %c2_39 = arith.constant 2 : index
    %c2_40 = arith.constant 2 : index
    %c0_41 = arith.constant 0 : index
    %24 = vector.load %arg0[%c0_38, %c2_39, %c2_40, %c0_41] : memref<2x18x18x128xf32, #tpu.memory_space<vmem>>, vector<2x16x16x128xf32>
    %25 = vector.shape_cast %24 : vector<2x16x16x128xf32> to vector<512x128xf32>
    %c0_42 = arith.constant 0 : index
    %c1024 = arith.constant 1024 : index
    %26 = vector.load %arg8[%c0_42, %c1024] : memref<512x1152xf32, #tpu.memory_space<vmem>>, vector<512x128xf32>
    tpu.vector_store %arg8[%c0_42, %c1024], %25 {strides = array<i32>} : memref<512x1152xf32, #tpu.memory_space<vmem>>, vector<512x128xf32>,
    %c0_43 = arith.constant 0 : index
    %c0_44 = arith.constant 0 : index
    %27 = vector.load %arg8[%c0_43, %c0_44] : memref<512x1152xf32, #tpu.memory_space<vmem>>, vector<512x1152xf32>
    %c0_45 = arith.constant 0 : index
    %c0_46 = arith.constant 0 : index
    %28 = vector.load %arg1[%c0_45, %c0_46] : memref<1152x128xf32, #tpu.memory_space<vmem>>, vector<1152x128xf32>
    %cst = arith.constant dense<0.000000e+00> : vector<512x128xf32>
    %29 = tpu.matmul %27, %28, %cst {dimension_numbers = #tpu.dot_dimension_numbers<[1], [0], [0], [1], [0, 0, 1, 1], [], []>} : vector<512x1152xf32>, vector<1152x128xf32>, vector<512x128xf32> -> vector<512x128xf32>
    %cst_47 = arith.constant dense<0.000000e+00> : vector<128xf32>
    %30 = vector.multi_reduction <add>, %29, %cst_47 [0] : vector<512x128xf32> to vector<128xf32>
    %31 = vector.shape_cast %30 : vector<128xf32> to vector<1x128xf32>
    %32 = arith.mulf %29, %29 : vector<512x128xf32>
    %cst_48 = arith.constant dense<0.000000e+00> : vector<128xf32>
    %33 = vector.multi_reduction <add>, %32, %cst_48 [0] : vector<512x128xf32> to vector<128xf32>
    %34 = vector.shape_cast %33 : vector<128xf32> to vector<1x128xf32>
    %cst_49 = arith.constant 0.001953125 : f32
    %35 = vector.broadcast %cst_49 : f32 to vector<1x128xf32>
    %36 = arith.mulf %31, %35 : vector<1x128xf32>
    %cst_50 = arith.constant 0.001953125 : f32
    %37 = vector.broadcast %cst_50 : f32 to vector<1x128xf32>
    %38 = arith.mulf %34, %37 : vector<1x128xf32>
    %39 = arith.mulf %36, %36 : vector<1x128xf32>
    %40 = arith.subf %38, %39 : vector<1x128xf32>
    %cst_51 = arith.constant 0.000000e+00 : f32
    %41 = vector.broadcast %cst_51 : f32 to vector<1x128xf32>
    %42 = arith.maximumf %40, %41 : vector<1x128xf32>
    %c0_52 = arith.constant 0 : index
    %c0_53 = arith.constant 0 : index
    %43 = vector.load %arg2[%c0_52, %c0_53] : memref<1x128xf32, #tpu.memory_space<vmem>>, vector<1x128xf32>
    %cst_54 = arith.constant 9.99999974E-6 : f32
    %44 = vector.broadcast %cst_54 : f32 to vector<1x128xf32>
    %45 = arith.addf %42, %44 : vector<1x128xf32>
    %46 = math.rsqrt %45 : vector<1x128xf32>
    %47 = arith.mulf %43, %46 : vector<1x128xf32>
    %c0_55 = arith.constant 0 : index
    %c0_56 = arith.constant 0 : index
    %48 = vector.load %arg3[%c0_55, %c0_56] : memref<1x128xf32, #tpu.memory_space<vmem>>, vector<1x128xf32>
    %49 = arith.mulf %36, %47 : vector<1x128xf32>
    %50 = arith.subf %48, %49 : vector<1x128xf32>
    %51 = vector.broadcast %47 : vector<1x128xf32> to vector<512x128xf32>
    %52 = arith.mulf %29, %51 : vector<512x128xf32>
    %53 = vector.broadcast %50 : vector<1x128xf32> to vector<512x128xf32>
    %54 = arith.addf %52, %53 : vector<512x128xf32>
    %cst_57 = arith.constant 0.000000e+00 : f32
    %55 = vector.broadcast %cst_57 : f32 to vector<512x128xf32>
    %56 = arith.maximumf %54, %55 : vector<512x128xf32>
    %cst_58 = arith.constant 0.000000e+00 : f32
    %57 = vector.broadcast %cst_58 : f32 to vector<2x1x18x128xf32>
    %cst_59 = arith.constant 0.000000e+00 : f32
    %58 = vector.broadcast %cst_59 : f32 to vector<2x18x1x128xf32>
    %c0_60 = arith.constant 0 : index
    %c0_61 = arith.constant 0 : index
    %c0_62 = arith.constant 0 : index
    %c0_63 = arith.constant 0 : index
    %59 = vector.load %arg9[%c0_60, %c0_61, %c0_62, %c0_63] : memref<2x18x18x128xf32, #tpu.memory_space<vmem>>, vector<2x1x18x128xf32>
    tpu.vector_store %arg9[%c0_60, %c0_61, %c0_62, %c0_63], %57 {strides = array<i32>} : memref<2x18x18x128xf32, #tpu.memory_space<vmem>>, vector<2x1x18x128xf32>,
    %c0_64 = arith.constant 0 : index
    %c17 = arith.constant 17 : index
    %c0_65 = arith.constant 0 : index
    %c0_66 = arith.constant 0 : index
    %60 = vector.load %arg9[%c0_64, %c17, %c0_65, %c0_66] : memref<2x18x18x128xf32, #tpu.memory_space<vmem>>, vector<2x1x18x128xf32>
    tpu.vector_store %arg9[%c0_64, %c17, %c0_65, %c0_66], %57 {strides = array<i32>} : memref<2x18x18x128xf32, #tpu.memory_space<vmem>>, vector<2x1x18x128xf32>,
    %c0_67 = arith.constant 0 : index
    %c0_68 = arith.constant 0 : index
    %c0_69 = arith.constant 0 : index
    %c0_70 = arith.constant 0 : index
    %61 = vector.load %arg9[%c0_67, %c0_68, %c0_69, %c0_70] : memref<2x18x18x128xf32, #tpu.memory_space<vmem>>, vector<2x18x1x128xf32>
    tpu.vector_store %arg9[%c0_67, %c0_68, %c0_69, %c0_70], %58 {strides = array<i32>} : memref<2x18x18x128xf32, #tpu.memory_space<vmem>>, vector<2x18x1x128xf32>,
    %c0_71 = arith.constant 0 : index
    %c0_72 = arith.constant 0 : index
    %c17_73 = arith.constant 17 : index
    %c0_74 = arith.constant 0 : index
    %62 = vector.load %arg9[%c0_71, %c0_72, %c17_73, %c0_74] : memref<2x18x18x128xf32, #tpu.memory_space<vmem>>, vector<2x18x1x128xf32>
    tpu.vector_store %arg9[%c0_71, %c0_72, %c17_73, %c0_74], %58 {strides = array<i32>} : memref<2x18x18x128xf32, #tpu.memory_space<vmem>>, vector<2x18x1x128xf32>,
    %63 = vector.shape_cast %56 : vector<512x128xf32> to vector<2x16x16x128xf32>
    %c0_75 = arith.constant 0 : index
    %c1_76 = arith.constant 1 : index
    %c1_77 = arith.constant 1 : index
    %c0_78 = arith.constant 0 : index
    %64 = vector.load %arg9[%c0_75, %c1_76, %c1_77, %c0_78] : memref<2x18x18x128xf32, #tpu.memory_space<vmem>>, vector<2x16x16x128xf32>
    tpu.vector_store %arg9[%c0_75, %c1_76, %c1_77, %c0_78], %63 {strides = array<i32>} : memref<2x18x18x128xf32, #tpu.memory_space<vmem>>, vector<2x16x16x128xf32>,
    %c0_79 = arith.constant 0 : index
    %c0_80 = arith.constant 0 : index
    %c0_81 = arith.constant 0 : index
    %c0_82 = arith.constant 0 : index
    %65 = vector.load %arg9[%c0_79, %c0_80, %c0_81, %c0_82] : memref<2x18x18x128xf32, #tpu.memory_space<vmem>>, vector<2x16x16x128xf32>
    %66 = vector.shape_cast %65 : vector<2x16x16x128xf32> to vector<512x128xf32>
    %c0_83 = arith.constant 0 : index
    %c0_84 = arith.constant 0 : index
    %67 = vector.load %arg10[%c0_83, %c0_84] : memref<512x1152xf32, #tpu.memory_space<vmem>>, vector<512x128xf32>
    tpu.vector_store %arg10[%c0_83, %c0_84], %66 {strides = array<i32>} : memref<512x1152xf32, #tpu.memory_space<vmem>>, vector<512x128xf32>,
    %c0_85 = arith.constant 0 : index
    %c0_86 = arith.constant 0 : index
    %c1_87 = arith.constant 1 : index
    %c0_88 = arith.constant 0 : index
    %68 = vector.load %arg9[%c0_85, %c0_86, %c1_87, %c0_88] : memref<2x18x18x128xf32, #tpu.memory_space<vmem>>, vector<2x16x16x128xf32>
    %69 = vector.shape_cast %68 : vector<2x16x16x128xf32> to vector<512x128xf32>
    %c0_89 = arith.constant 0 : index
    %c128_90 = arith.constant 128 : index
    %70 = vector.load %arg10[%c0_89, %c128_90] : memref<512x1152xf32, #tpu.memory_space<vmem>>, vector<512x128xf32>
    tpu.vector_store %arg10[%c0_89, %c128_90], %69 {strides = array<i32>} : memref<512x1152xf32, #tpu.memory_space<vmem>>, vector<512x128xf32>,
    %c0_91 = arith.constant 0 : index
    %c0_92 = arith.constant 0 : index
    %c2_93 = arith.constant 2 : index
    %c0_94 = arith.constant 0 : index
    %71 = vector.load %arg9[%c0_91, %c0_92, %c2_93, %c0_94] : memref<2x18x18x128xf32, #tpu.memory_space<vmem>>, vector<2x16x16x128xf32>
    %72 = vector.shape_cast %71 : vector<2x16x16x128xf32> to vector<512x128xf32>
    %c0_95 = arith.constant 0 : index
    %c256_96 = arith.constant 256 : index
    %73 = vector.load %arg10[%c0_95, %c256_96] : memref<512x1152xf32, #tpu.memory_space<vmem>>, vector<512x128xf32>
    tpu.vector_store %arg10[%c0_95, %c256_96], %72 {strides = array<i32>} : memref<512x1152xf32, #tpu.memory_space<vmem>>, vector<512x128xf32>,
    %c0_97 = arith.constant 0 : index
    %c1_98 = arith.constant 1 : index
    %c0_99 = arith.constant 0 : index
    %c0_100 = arith.constant 0 : index
    %74 = vector.load %arg9[%c0_97, %c1_98, %c0_99, %c0_100] : memref<2x18x18x128xf32, #tpu.memory_space<vmem>>, vector<2x16x16x128xf32>
    %75 = vector.shape_cast %74 : vector<2x16x16x128xf32> to vector<512x128xf32>
    %c0_101 = arith.constant 0 : index
    %c384_102 = arith.constant 384 : index
    %76 = vector.load %arg10[%c0_101, %c384_102] : memref<512x1152xf32, #tpu.memory_space<vmem>>, vector<512x128xf32>
    tpu.vector_store %arg10[%c0_101, %c384_102], %75 {strides = array<i32>} : memref<512x1152xf32, #tpu.memory_space<vmem>>, vector<512x128xf32>,
    %c0_103 = arith.constant 0 : index
    %c1_104 = arith.constant 1 : index
    %c1_105 = arith.constant 1 : index
    %c0_106 = arith.constant 0 : index
    %77 = vector.load %arg9[%c0_103, %c1_104, %c1_105, %c0_106] : memref<2x18x18x128xf32, #tpu.memory_space<vmem>>, vector<2x16x16x128xf32>
    %78 = vector.shape_cast %77 : vector<2x16x16x128xf32> to vector<512x128xf32>
    %c0_107 = arith.constant 0 : index
    %c512_108 = arith.constant 512 : index
    %79 = vector.load %arg10[%c0_107, %c512_108] : memref<512x1152xf32, #tpu.memory_space<vmem>>, vector<512x128xf32>
    tpu.vector_store %arg10[%c0_107, %c512_108], %78 {strides = array<i32>} : memref<512x1152xf32, #tpu.memory_space<vmem>>, vector<512x128xf32>,
    %c0_109 = arith.constant 0 : index
    %c1_110 = arith.constant 1 : index
    %c2_111 = arith.constant 2 : index
    %c0_112 = arith.constant 0 : index
    %80 = vector.load %arg9[%c0_109, %c1_110, %c2_111, %c0_112] : memref<2x18x18x128xf32, #tpu.memory_space<vmem>>, vector<2x16x16x128xf32>
    %81 = vector.shape_cast %80 : vector<2x16x16x128xf32> to vector<512x128xf32>
    %c0_113 = arith.constant 0 : index
    %c640_114 = arith.constant 640 : index
    %82 = vector.load %arg10[%c0_113, %c640_114] : memref<512x1152xf32, #tpu.memory_space<vmem>>, vector<512x128xf32>
    tpu.vector_store %arg10[%c0_113, %c640_114], %81 {strides = array<i32>} : memref<512x1152xf32, #tpu.memory_space<vmem>>, vector<512x128xf32>,
    %c0_115 = arith.constant 0 : index
    %c2_116 = arith.constant 2 : index
    %c0_117 = arith.constant 0 : index
    %c0_118 = arith.constant 0 : index
    %83 = vector.load %arg9[%c0_115, %c2_116, %c0_117, %c0_118] : memref<2x18x18x128xf32, #tpu.memory_space<vmem>>, vector<2x16x16x128xf32>
    %84 = vector.shape_cast %83 : vector<2x16x16x128xf32> to vector<512x128xf32>
    %c0_119 = arith.constant 0 : index
    %c768_120 = arith.constant 768 : index
    %85 = vector.load %arg10[%c0_119, %c768_120] : memref<512x1152xf32, #tpu.memory_space<vmem>>, vector<512x128xf32>
    tpu.vector_store %arg10[%c0_119, %c768_120], %84 {strides = array<i32>} : memref<512x1152xf32, #tpu.memory_space<vmem>>, vector<512x128xf32>,
    %c0_121 = arith.constant 0 : index
    %c2_122 = arith.constant 2 : index
    %c1_123 = arith.constant 1 : index
    %c0_124 = arith.constant 0 : index
    %86 = vector.load %arg9[%c0_121, %c2_122, %c1_123, %c0_124] : memref<2x18x18x128xf32, #tpu.memory_space<vmem>>, vector<2x16x16x128xf32>
    %87 = vector.shape_cast %86 : vector<2x16x16x128xf32> to vector<512x128xf32>
    %c0_125 = arith.constant 0 : index
    %c896_126 = arith.constant 896 : index
    %88 = vector.load %arg10[%c0_125, %c896_126] : memref<512x1152xf32, #tpu.memory_space<vmem>>, vector<512x128xf32>
    tpu.vector_store %arg10[%c0_125, %c896_126], %87 {strides = array<i32>} : memref<512x1152xf32, #tpu.memory_space<vmem>>, vector<512x128xf32>,
    %c0_127 = arith.constant 0 : index
    %c2_128 = arith.constant 2 : index
    %c2_129 = arith.constant 2 : index
    %c0_130 = arith.constant 0 : index
    %89 = vector.load %arg9[%c0_127, %c2_128, %c2_129, %c0_130] : memref<2x18x18x128xf32, #tpu.memory_space<vmem>>, vector<2x16x16x128xf32>
    %90 = vector.shape_cast %89 : vector<2x16x16x128xf32> to vector<512x128xf32>
    %c0_131 = arith.constant 0 : index
    %c1024_132 = arith.constant 1024 : index
    %91 = vector.load %arg10[%c0_131, %c1024_132] : memref<512x1152xf32, #tpu.memory_space<vmem>>, vector<512x128xf32>
    tpu.vector_store %arg10[%c0_131, %c1024_132], %90 {strides = array<i32>} : memref<512x1152xf32, #tpu.memory_space<vmem>>, vector<512x128xf32>,
    %c0_133 = arith.constant 0 : index
    %c0_134 = arith.constant 0 : index
    %92 = vector.load %arg10[%c0_133, %c0_134] : memref<512x1152xf32, #tpu.memory_space<vmem>>, vector<512x1152xf32>
    %c0_135 = arith.constant 0 : index
    %c0_136 = arith.constant 0 : index
    %93 = vector.load %arg4[%c0_135, %c0_136] : memref<1152x128xf32, #tpu.memory_space<vmem>>, vector<1152x128xf32>
    %cst_137 = arith.constant dense<0.000000e+00> : vector<512x128xf32>
    %94 = tpu.matmul %92, %93, %cst_137 {dimension_numbers = #tpu.dot_dimension_numbers<[1], [0], [0], [1], [0, 0, 1, 1], [], []>} : vector<512x1152xf32>, vector<1152x128xf32>, vector<512x128xf32> -> vector<512x128xf32>
    %cst_138 = arith.constant dense<0.000000e+00> : vector<128xf32>
    %95 = vector.multi_reduction <add>, %94, %cst_138 [0] : vector<512x128xf32> to vector<128xf32>
    %96 = vector.shape_cast %95 : vector<128xf32> to vector<1x128xf32>
    %97 = arith.mulf %94, %94 : vector<512x128xf32>
    %cst_139 = arith.constant dense<0.000000e+00> : vector<128xf32>
    %98 = vector.multi_reduction <add>, %97, %cst_139 [0] : vector<512x128xf32> to vector<128xf32>
    %99 = vector.shape_cast %98 : vector<128xf32> to vector<1x128xf32>
    %cst_140 = arith.constant 0.001953125 : f32
    %100 = vector.broadcast %cst_140 : f32 to vector<1x128xf32>
    %101 = arith.mulf %96, %100 : vector<1x128xf32>
    %cst_141 = arith.constant 0.001953125 : f32
    %102 = vector.broadcast %cst_141 : f32 to vector<1x128xf32>
    %103 = arith.mulf %99, %102 : vector<1x128xf32>
    %104 = arith.mulf %101, %101 : vector<1x128xf32>
    %105 = arith.subf %103, %104 : vector<1x128xf32>
    %cst_142 = arith.constant 0.000000e+00 : f32
    %106 = vector.broadcast %cst_142 : f32 to vector<1x128xf32>
    %107 = arith.maximumf %105, %106 : vector<1x128xf32>
    %c0_143 = arith.constant 0 : index
    %c0_144 = arith.constant 0 : index
    %108 = vector.load %arg5[%c0_143, %c0_144] : memref<1x128xf32, #tpu.memory_space<vmem>>, vector<1x128xf32>
    %cst_145 = arith.constant 9.99999974E-6 : f32
    %109 = vector.broadcast %cst_145 : f32 to vector<1x128xf32>
    %110 = arith.addf %107, %109 : vector<1x128xf32>
    %111 = math.rsqrt %110 : vector<1x128xf32>
    %112 = arith.mulf %108, %111 : vector<1x128xf32>
    %c0_146 = arith.constant 0 : index
    %c0_147 = arith.constant 0 : index
    %113 = vector.load %arg6[%c0_146, %c0_147] : memref<1x128xf32, #tpu.memory_space<vmem>>, vector<1x128xf32>
    %114 = arith.mulf %101, %112 : vector<1x128xf32>
    %115 = arith.subf %113, %114 : vector<1x128xf32>
    %116 = vector.broadcast %112 : vector<1x128xf32> to vector<512x128xf32>
    %117 = arith.mulf %94, %116 : vector<512x128xf32>
    %118 = vector.broadcast %115 : vector<1x128xf32> to vector<512x128xf32>
    %119 = arith.addf %117, %118 : vector<512x128xf32>
    %cst_148 = arith.constant 0.000000e+00 : f32
    %120 = vector.broadcast %cst_148 : f32 to vector<512x128xf32>
    %121 = arith.maximumf %119, %120 : vector<512x128xf32>
    %122 = vector.shape_cast %121 : vector<512x128xf32> to vector<2x16x16x128xf32>
    %c0_149 = arith.constant 0 : index
    %c0_150 = arith.constant 0 : index
    %c0_151 = arith.constant 0 : index
    %c0_152 = arith.constant 0 : index
    %123 = vector.load %arg7[%c0_149, %c0_150, %c0_151, %c0_152] : memref<2x16x16x128xf32, #tpu.memory_space<vmem>>, vector<2x16x16x128xf32>
    tpu.vector_store %arg7[%c0_149, %c0_150, %c0_151, %c0_152], %122 {strides = array<i32>} : memref<2x16x16x128xf32, #tpu.memory_space<vmem>>, vector<2x16x16x128xf32>,
    return
  }
}

</mosaic_0001>

<llo_original>
// kernel: tpu_custom_call.1
$region0: #{tpu_custom_call.1}
  #allocation0 [shape = 'u32[]', space=smem, size = 0x4, offset = 0x4, fixed_abs, tag = 'smem constant byte address 0x4 - core index']
  #allocation1 [shape = 'u32[144,128]{1,0:T(1,128)}', space=vmem, size = 0x12000, scoped, tag = 'internal scratch']
  #allocation2 [shape = 'f32[512,1152]{1,0:T(8,128)}', space=vmem, size = 0x240000, scoped, tag = 'scratch operand']
  #allocation3 [shape = 'f32[2,18,18,128]{3,2,1,0:T(8,128)}', space=vmem, size = 0x6c000, scoped, tag = 'scratch operand']
  #allocation4 [shape = 'f32[512,1152]{1,0:T(8,128)}', space=vmem, size = 0x240000, scoped, tag = 'scratch operand']
  %s0 = inlined_call_operand.hbm [shape: f32[2,18,18,128], index: 0, kind: input, shape index: {}]
  %s1 = inlined_call_operand.hbm [shape: f32[1152,128], index: 1, kind: input, shape index: {}]
  %s2 = inlined_call_operand.hbm [shape: f32[1,128], index: 2, kind: input, shape index: {}]
  %s3 = inlined_call_operand.hbm [shape: f32[1,128], index: 3, kind: input, shape index: {}]
  %s4 = inlined_call_operand.hbm [shape: f32[1152,128], index: 4, kind: input, shape index: {}]
  %s5 = inlined_call_operand.hbm [shape: f32[1,128], index: 5, kind: input, shape index: {}]
  %s6 = inlined_call_operand.hbm [shape: f32[1,128], index: 6, kind: input, shape index: {}]
  %s7 = inlined_call_operand.hbm [shape: f32[2,16,16,128], index: 7, kind: output, shape index: {}]
  %s8 = sld [smem:[#allocation0]]
  $region66: #{tpu_custom_call.1} parent=0
    _
  %s10 = ssub.s32 1, %s8
  %s11 = scalar_select 0, %s10, %s8
  $region1: #{tpu_custom_call.1} parent=0
    #allocation5 [shape = 'u8[442368]{0}', space=vmem, size = 0x6c000, scoped, tag = 'input window, operand 0, single buffered']
    #allocation6 [shape = 's32[1]{0}', space=sflag, size = 0x4, scoped, tag = 'scoped memory for tpu_custom_call.1']
    #allocation7 [shape = 's32[1]{0}', space=sflag, size = 0x4, scoped, tag = 'scoped memory for tpu_custom_call.1']
    #allocation8 [shape = 'u8[589824]{0}', space=vmem, size = 0x90000, scoped, tag = 'input window, operand 1, single buffered']
    #allocation9 [shape = 's32[1]{0}', space=sflag, size = 0x4, scoped, tag = 'scoped memory for tpu_custom_call.1']
    #allocation10 [shape = 'u8[512]{0}', space=vmem, size = 0x400, scoped, tag = 'input window, operand 2, single buffered']
    #allocation11 [shape = 'u8[512]{0}', space=vmem, size = 0x400, scoped, tag = 'input window, operand 3, single buffered']
    #allocation12 [shape = 's32[1]{0}', space=sflag, size = 0x4, scoped, tag = 'scoped memory for tpu_custom_call.1']
    #allocation13 [shape = 'u8[589824]{0}', space=vmem, size = 0x90000, scoped, tag = 'input window, operand 4, single buffered']
    #allocation14 [shape = 'u8[512]{0}', space=vmem, size = 0x400, scoped, tag = 'input window, operand 5, single buffered']
    #allocation15 [shape = 's32[1]{0}', space=sflag, size = 0x4, scoped, tag = 'scoped memory for tpu_custom_call.1']
    #allocation16 [shape = 'u8[512]{0}', space=vmem, size = 0x400, scoped, tag = 'input window, operand 6, single buffered']
    #allocation17 [shape = 'u8[262144]{0}', space=vmem, size = 0x40000, scoped, tag = 'output window, operand 0, single buffered']
    %12 = vsyncpa [#allocation6], 0
    %13 = vsyncpa [#allocation9], 0
    %14 = vsyncpa [#allocation12], 0
    %15 = vsyncpa [#allocation15], 0
    %16 = vsyncpa [#allocation7], 0
    // Predicated region
    $region2: #{tpu_custom_call.1} parent=1 // pred_check
      _
    $region3: #{tpu_custom_call.1} parent=1 // pred_check_branch
      %18 = sbr.rel (0) target = $region5
    $region4: #{tpu_custom_call.1} parent=1 // pred_region
      %s20 = ssub.s32 13824, 13824
      %21 = vsyncadd [#allocation6], %s20
      %s22 = sshll.u32 [#allocation5], 4
      %s23 = int_to_ptr.vmem [resolvable:$true] %s22
      %28 = dma.hbm_to_vmem [thread:$0]  %s0, 13824, %s23, [#allocation6], 128, 128, 8
    $region5: #{tpu_custom_call.1} parent=1 // pred_fallthru
      _
    // Predicated region
    $region6: #{tpu_custom_call.1} parent=1 // pred_check
      _
    $region7: #{tpu_custom_call.1} parent=1 // pred_check_branch
      %30 = sbr.rel (0) target = $region9
    $region8: #{tpu_custom_call.1} parent=1 // pred_region
      %s32 = ssub.s32 18432, 18432
      %33 = vsyncadd [#allocation9], %s32
      %s34 = sshll.u32 [#allocation8], 4
      %s35 = int_to_ptr.vmem [resolvable:$true] %s34
      %40 = dma.hbm_to_vmem [thread:$0]  %s1, 18432, %s35, [#allocation9], 128, 128, 8
    $region9: #{tpu_custom_call.1} parent=1 // pred_fallthru
      _
    // Predicated region
    $region10: #{tpu_custom_call.1} parent=1 // pred_check
      _
    $region11: #{tpu_custom_call.1} parent=1 // pred_check_branch
      %42 = sbr.rel (0) target = $region13
    $region12: #{tpu_custom_call.1} parent=1 // pred_region
      %s44 = ssub.s32 16, 16
      %45 = vsyncadd [#allocation9], %s44
      %s47 = sshll.u32 [#allocation10], 4
      %s48 = int_to_ptr.vmem [resolvable:$true] %s47
      %50 = dma.hbm_to_vmem [thread:$0]  %s2, 16, %s48, [#allocation9]
    $region13: #{tpu_custom_call.1} parent=1 // pred_fallthru
      _
    // Predicated region
    $region14: #{tpu_custom_call.1} parent=1 // pred_check
      _
    $region15: #{tpu_custom_call.1} parent=1 // pred_check_branch
      %52 = sbr.rel (0) target = $region17
    $region16: #{tpu_custom_call.1} parent=1 // pred_region
      %s54 = ssub.s32 16, 16
      %55 = vsyncadd [#allocation12], %s54
      %s57 = sshll.u32 [#allocation11], 4
      %s58 = int_to_ptr.vmem [resolvable:$true] %s57
      %60 = dma.hbm_to_vmem [thread:$0]  %s3, 16, %s58, [#allocation12]
    $region17: #{tpu_custom_call.1} parent=1 // pred_fallthru
      _
    // Predicated region
    $region18: #{tpu_custom_call.1} parent=1 // pred_check
      _
    $region19: #{tpu_custom_call.1} parent=1 // pred_check_branch
      %62 = sbr.rel (0) target = $region21
    $region20: #{tpu_custom_call.1} parent=1 // pred_region
      %s64 = ssub.s32 18432, 18432
      %65 = vsyncadd [#allocation12], %s64
      %s66 = sshll.u32 [#allocation13], 4
      %s67 = int_to_ptr.vmem [resolvable:$true] %s66
      %72 = dma.hbm_to_vmem [thread:$0]  %s4, 18432, %s67, [#allocation12], 128, 128, 8
    $region21: #{tpu_custom_call.1} parent=1 // pred_fallthru
      _
    // Predicated region
    $region22: #{tpu_custom_call.1} parent=1 // pred_check
      _
    $region23: #{tpu_custom_call.1} parent=1 // pred_check_branch
      %74 = sbr.rel (0) target = $region25
    $region24: #{tpu_custom_call.1} parent=1 // pred_region
      %s76 = ssub.s32 16, 16
      %77 = vsyncadd [#allocation15], %s76
      %s79 = sshll.u32 [#allocation14], 4
      %s80 = int_to_ptr.vmem [resolvable:$true] %s79
      %82 = dma.hbm_to_vmem [thread:$0]  %s5, 16, %s80, [#allocation15]
    $region25: #{tpu_custom_call.1} parent=1 // pred_fallthru
      _
    // Predicated region
    $region26: #{tpu_custom_call.1} parent=1 // pred_check
      _
    $region27: #{tpu_custom_call.1} parent=1 // pred_check_branch
      %84 = sbr.rel (0) target = $region29
    $region28: #{tpu_custom_call.1} parent=1 // pred_region
      %s86 = ssub.s32 16, 16
      %87 = vsyncadd [#allocation15], %s86
      %s89 = sshll.u32 [#allocation16], 4
      %s90 = int_to_ptr.vmem [resolvable:$true] %s89
      %92 = dma.hbm_to_vmem [thread:$0]  %s6, 16, %s90, [#allocation15]
    $region29: #{tpu_custom_call.1} parent=1 // pred_fallthru
      _
    // Predicated region
    $region30: #{tpu_custom_call.1} parent=1 // pred_check
      _
    $region31: #{tpu_custom_call.1} parent=1 // pred_check_branch
      %94 = sbr.rel (0) target = $region33
    $region32: #{tpu_custom_call.1} parent=1 // pred_region
      %95 = dma.done [#allocation6], 13824
    $region33: #{tpu_custom_call.1} parent=1 // pred_fallthru
      _
    // Predicated region
    $region34: #{tpu_custom_call.1} parent=1 // pred_check
      _
    $region35: #{tpu_custom_call.1} parent=1 // pred_check_branch
      %97 = sbr.rel (0) target = $region37
    $region36: #{tpu_custom_call.1} parent=1 // pred_region
      %98 = dma.done [#allocation9], 18432
    $region37: #{tpu_custom_call.1} parent=1 // pred_fallthru
      _
    // Predicated region
    $region38: #{tpu_custom_call.1} parent=1 // pred_check
      _
    $region39: #{tpu_custom_call.1} parent=1 // pred_check_branch
      %100 = sbr.rel (0) target = $region41
    $region40: #{tpu_custom_call.1} parent=1 // pred_region
      %101 = dma.done [#allocation9], 16
    $region41: #{tpu_custom_call.1} parent=1 // pred_fallthru
      _
    // Predicated region
    $region42: #{tpu_custom_call.1} parent=1 // pred_check
      _
    $region43: #{tpu_custom_call.1} parent=1 // pred_check_branch
      %103 = sbr.rel (0) target = $region45
    $region44: #{tpu_custom_call.1} parent=1 // pred_region
      %104 = dma.done [#allocation12], 16
    $region45: #{tpu_custom_call.1} parent=1 // pred_fallthru
      _
    // Predicated region
    $region46: #{tpu_custom_call.1} parent=1 // pred_check
      _
    $region47: #{tpu_custom_call.1} parent=1 // pred_check_branch
      %106 = sbr.rel (0) target = $region49
    $region48: #{tpu_custom_call.1} parent=1 // pred_region
      %107 = dma.done [#allocation12], 18432
    $region49: #{tpu_custom_call.1} parent=1 // pred_fallthru
      _
    // Predicated region
    $region50: #{tpu_custom_call.1} parent=1 // pred_check
      _
    $region51: #{tpu_custom_call.1} parent=1 // pred_check_branch
      %109 = sbr.rel (0) target = $region53
    $region52: #{tpu_custom_call.1} parent=1 // pred_region
      %110 = dma.done [#allocation15], 16
    $region53: #{tpu_custom_call.1} parent=1 // pred_fallthru
      _
    // Predicated region
    $region54: #{tpu_custom_call.1} parent=1 // pred_check
      _
    $region55: #{tpu_custom_call.1} parent=1 // pred_check_branch
      %112 = sbr.rel (0) target = $region57
    $region56: #{tpu_custom_call.1} parent=1 // pred_region
      %113 = dma.done [#allocation15], 16
    $region57: #{tpu_custom_call.1} parent=1 // pred_fallthru
      _
    %v114 = vld [vmem:[#allocation5] sm:$0xff]
    %v115 = vld [vmem:[#allocation5 + $0x8] sm:$0xff]
    %v116 = vld [vmem:[#allocation5 + $0x18] sm:$0xff]
    %v117 = vld [vmem:[#allocation5 + $0x20] sm:$0xff]
    %v118 = vld [vmem:[#allocation5 + $0x30] sm:$0xff]
    %v119 = vld [vmem:[#allocation5 + $0x38] sm:$0xff]
    %v120 = vld [vmem:[#allocation5 + $0x48] sm:$0xff]
    %v121 = vld [vmem:[#allocation5 + $0x50] sm:$0xff]
    %v122 = vld [vmem:[#allocation5 + $0x60] sm:$0xff]
    %v123 = vld [vmem:[#allocation5 + $0x68] sm:$0xff]
    %v124 = vld [vmem:[#allocation5 + $0x78] sm:$0xff]
    %v125 = vld [vmem:[#allocation5 + $0x80] sm:$0xff]
    %v126 = vld [vmem:[#allocation5 + $0x90] sm:$0xff]
    %v127 = vld [vmem:[#allocation5 + $0x98] sm:$0xff]
    %v128 = vld [vmem:[#allocation5 + $0xa8] sm:$0xff]
    %v129 = vld [vmem:[#allocation5 + $0xb0] sm:$0xff]
    %v130 = vld [vmem:[#allocation5 + $0xc0] sm:$0xff]
    %v131 = vld [vmem:[#allocation5 + $0xc8] sm:$0xff]
    %v132 = vld [vmem:[#allocation5 + $0xd8] sm:$0xff]
    %v133 = vld [vmem:[#allocation5 + $0xe0] sm:$0xff]
    %v134 = vld [vmem:[#allocation5 + $0xf0] sm:$0xff]
    %v135 = vld [vmem:[#allocation5 + $0xf8] sm:$0xff]
    %v136 = vld [vmem:[#allocation5 + $0x108] sm:$0xff]
    %v137 = vld [vmem:[#allocation5 + $0x110] sm:$0xff]
    %v138 = vld [vmem:[#allocation5 + $0x120] sm:$0xff]
    %v139 = vld [vmem:[#allocation5 + $0x128] sm:$0xff]
    %v140 = vld [vmem:[#allocation5 + $0x138] sm:$0xff]
    %v141 = vld [vmem:[#allocation5 + $0x140] sm:$0xff]
    %v142 = vld [vmem:[#allocation5 + $0x150] sm:$0xff]
    %v143 = vld [vmem:[#allocation5 + $0x158] sm:$0xff]
    %v144 = vld [vmem:[#allocation5 + $0x168] sm:$0xff]
    %v145 = vld [vmem:[#allocation5 + $0x170] sm:$0xff]
    %v146 = vld [vmem:[#allocation5 + $0x1b0] sm:$0xff]
    %v147 = vld [vmem:[#allocation5 + $0x1b8] sm:$0xff]
    %v148 = vld [vmem:[#allocation5 + $0x1c8] sm:$0xff]
    %v149 = vld [vmem:[#allocation5 + $0x1d0] sm:$0xff]
    %v150 = vld [vmem:[#allocation5 + $0x1e0] sm:$0xff]
    %v151 = vld [vmem:[#allocation5 + $0x1e8] sm:$0xff]
    %v152 = vld [vmem:[#allocation5 + $0x1f8] sm:$0xff]
    %v153 = vld [vmem:[#allocation5 + $0x200] sm:$0xff]
    %v154 = vld [vmem:[#allocation5 + $0x210] sm:$0xff]
    %v155 = vld [vmem:[#allocation5 + $0x218] sm:$0xff]
    %v156 = vld [vmem:[#allocation5 + $0x228] sm:$0xff]
    %v157 = vld [vmem:[#allocation5 + $0x230] sm:$0xff]
    %v158 = vld [vmem:[#allocation5 + $0x240] sm:$0xff]
    %v159 = vld [vmem:[#allocation5 + $0x248] sm:$0xff]
    %v160 = vld [vmem:[#allocation5 + $0x258] sm:$0xff]
    %v161 = vld [vmem:[#allocation5 + $0x260] sm:$0xff]
    %v162 = vld [vmem:[#allocation5 + $0x270] sm:$0xff]
    %v163 = vld [vmem:[#allocation5 + $0x278] sm:$0xff]
    %v164 = vld [vmem:[#allocation5 + $0x288] sm:$0xff]
    %v165 = vld [vmem:[#allocation5 + $0x290] sm:$0xff]
    %v166 = vld [vmem:[#allocation5 + $0x2a0] sm:$0xff]
    %v167 = vld [vmem:[#allocation5 + $0x2a8] sm:$0xff]
    %v168 = vld [vmem:[#allocation5 + $0x2b8] sm:$0xff]
    %v169 = vld [vmem:[#allocation5 + $0x2c0] sm:$0xff]
    %v170 = vld [vmem:[#allocation5 + $0x2d0] sm:$0xff]
    %v171 = vld [vmem:[#allocation5 + $0x2d8] sm:$0xff]
    %v172 = vld [vmem:[#allocation5 + $0x2e8] sm:$0xff]
    %v173 = vld [vmem:[#allocation5 + $0x2f0] sm:$0xff]
    %v174 = vld [vmem:[#allocation5 + $0x300] sm:$0xff]
    %v175 = vld [vmem:[#allocation5 + $0x308] sm:$0xff]
    %v176 = vld [vmem:[#allocation5 + $0x318] sm:$0xff]
    %v177 = vld [vmem:[#allocation5 + $0x320] sm:$0xff]
    %178 = vst [vmem:[#allocation2] sm:$0xff] %v114
    %179 = vst [vmem:[#allocation2 + $0x48] sm:$0xff] %v115
    %180 = vst [vmem:[#allocation2 + $0x90] sm:$0xff] %v116
    %181 = vst [vmem:[#allocation2 + $0xd8] sm:$0xff] %v117
    %182 = vst [vmem:[#allocation2 + $0x120] sm:$0xff] %v118
    %183 = vst [vmem:[#allocation2 + $0x168] sm:$0xff] %v119
    %184 = vst [vmem:[#allocation2 + $0x1b0] sm:$0xff] %v120
    %185 = vst [vmem:[#allocation2 + $0x1f8] sm:$0xff] %v121
    %186 = vst [vmem:[#allocation2 + $0x240] sm:$0xff] %v122
    %187 = vst [vmem:[#allocation2 + $0x288] sm:$0xff] %v123
    %188 = vst [vmem:[#allocation2 + $0x2d0] sm:$0xff] %v124
    %189 = vst [vmem:[#allocation2 + $0x318] sm:$0xff] %v125
    %190 = vst [vmem:[#allocation2 + $0x360] sm:$0xff] %v126
    %191 = vst [vmem:[#allocation2 + $0x3a8] sm:$0xff] %v127
    %192 = vst [vmem:[#allocation2 + $0x3f0] sm:$0xff] %v128
    %193 = vst [vmem:[#allocation2 + $0x438] sm:$0xff] %v129
    %194 = vst [vmem:[#allocation2 + $0x480] sm:$0xff] %v130
    %195 = vst [vmem:[#allocation2 + $0x4c8] sm:$0xff] %v131
    %196 = vst [vmem:[#allocation2 + $0x510] sm:$0xff] %v132
    %197 = vst [vmem:[#allocation2 + $0x558] sm:$0xff] %v133
    %198 = vst [vmem:[#allocation2 + $0x5a0] sm:$0xff] %v134
    %199 = vst [vmem:[#allocation2 + $0x5e8] sm:$0xff] %v135
    %200 = vst [vmem:[#allocation2 + $0x630] sm:$0xff] %v136
    %201 = vst [vmem:[#allocation2 + $0x678] sm:$0xff] %v137
    %202 = vst [vmem:[#allocation2 + $0x6c0] sm:$0xff] %v138
    %203 = vst [vmem:[#allocation2 + $0x708] sm:$0xff] %v139
    %204 = vst [vmem:[#allocation2 + $0x750] sm:$0xff] %v140
    %205 = vst [vmem:[#allocation2 + $0x798] sm:$0xff] %v141
    %206 = vst [vmem:[#allocation2 + $0x7e0] sm:$0xff] %v142
    %207 = vst [vmem:[#allocation2 + $0x828] sm:$0xff] %v143
    %208 = vst [vmem:[#allocation2 + $0x870] sm:$0xff] %v144
    %209 = vst [vmem:[#allocation2 + $0x8b8] sm:$0xff] %v145
    %210 = vst [vmem:[#allocation2 + $0x900] sm:$0xff] %v146
    %211 = vst [vmem:[#allocation2 + $0x948] sm:$0xff] %v147
    %212 = vst [vmem:[#allocation2 + $0x990] sm:$0xff] %v148
    %213 = vst [vmem:[#allocation2 + $0x9d8] sm:$0xff] %v149
    %214 = vst [vmem:[#allocation2 + $0xa20] sm:$0xff] %v150
    %215 = vst [vmem:[#allocation2 + $0xa68] sm:$0xff] %v151
    %216 = vst [vmem:[#allocation2 + $0xab0] sm:$0xff] %v152
    %217 = vst [vmem:[#allocation2 + $0xaf8] sm:$0xff] %v153
    %218 = vst [vmem:[#allocation2 + $0xb40] sm:$0xff] %v154
    %219 = vst [vmem:[#allocation2 + $0xb88] sm:$0xff] %v155
    %220 = vst [vmem:[#allocation2 + $0xbd0] sm:$0xff] %v156
    %221 = vst [vmem:[#allocation2 + $0xc18] sm:$0xff] %v157
    %222 = vst [vmem:[#allocation2 + $0xc60] sm:$0xff] %v158
    %223 = vst [vmem:[#allocation2 + $0xca8] sm:$0xff] %v159
    %224 = vst [vmem:[#allocation2 + $0xcf0] sm:$0xff] %v160
    %225 = vst [vmem:[#allocation2 + $0xd38] sm:$0xff] %v161
    %226 = vst [vmem:[#allocation2 + $0xd80] sm:$0xff] %v162
    %227 = vst [vmem:[#allocation2 + $0xdc8] sm:$0xff] %v163
    %228 = vst [vmem:[#allocation2 + $0xe10] sm:$0xff] %v164
    %229 = vst [vmem:[#allocation2 + $0xe58] sm:$0xff] %v165
    %230 = vst [vmem:[#allocation2 + $0xea0] sm:$0xff] %v166
    %231 = vst [vmem:[#allocation2 + $0xee8] sm:$0xff] %v167
    %232 = vst [vmem:[#allocation2 + $0xf30] sm:$0xff] %v168
    %233 = vst [vmem:[#allocation2 + $0xf78] sm:$0xff] %v169
    %234 = vst [vmem:[#allocation2 + $0xfc0] sm:$0xff] %v170
    %235 = vst [vmem:[#allocation2 + $0x1008] sm:$0xff] %v171
    %236 = vst [vmem:[#allocation2 + $0x1050] sm:$0xff] %v172
    %237 = vst [vmem:[#allocation2 + $0x1098] sm:$0xff] %v173
    %238 = vst [vmem:[#allocation2 + $0x10e0] sm:$0xff] %v174
    %239 = vst [vmem:[#allocation2 + $0x1128] sm:$0xff] %v175
    %240 = vst [vmem:[#allocation2 + $0x1170] sm:$0xff] %v176
    %241 = vst [vmem:[#allocation2 + $0x11b8] sm:$0xff] %v177
    %v242 = vld [vmem:[#allocation5 + $0x1] sm:$0xff]
    %v243 = vld [vmem:[#allocation5 + $0x9] sm:$0xff]
    %v244 = vld [vmem:[#allocation5 + $0x19] sm:$0xff]
    %v245 = vld [vmem:[#allocation5 + $0x21] sm:$0xff]
    %v246 = vld [vmem:[#allocation5 + $0x31] sm:$0xff]
    %v247 = vld [vmem:[#allocation5 + $0x39] sm:$0xff]
    %v248 = vld [vmem:[#allocation5 + $0x49] sm:$0xff]
    %v249 = vld [vmem:[#allocation5 + $0x51] sm:$0xff]
    %v250 = vld [vmem:[#allocation5 + $0x61] sm:$0xff]
    %v251 = vld [vmem:[#allocation5 + $0x69] sm:$0xff]
    %v252 = vld [vmem:[#allocation5 + $0x79] sm:$0xff]
    %v253 = vld [vmem:[#allocation5 + $0x81] sm:$0xff]
    %v254 = vld [vmem:[#allocation5 + $0x91] sm:$0xff]
    %v255 = vld [vmem:[#allocation5 + $0x99] sm:$0xff]
    %v256 = vld [vmem:[#allocation5 + $0xa9] sm:$0xff]
    %v257 = vld [vmem:[#allocation5 + $0xb1] sm:$0xff]
    %v258 = vld [vmem:[#allocation5 + $0xc1] sm:$0xff]
    %v259 = vld [vmem:[#allocation5 + $0xc9] sm:$0xff]
    %v260 = vld [vmem:[#allocation5 + $0xd9] sm:$0xff]
    %v261 = vld [vmem:[#allocation5 + $0xe1] sm:$0xff]
    %v262 = vld [vmem:[#allocation5 + $0xf1] sm:$0xff]
    %v263 = vld [vmem:[#allocation5 + $0xf9] sm:$0xff]
    %v264 = vld [vmem:[#allocation5 + $0x109] sm:$0xff]
    %v265 = vld [vmem:[#allocation5 + $0x111] sm:$0xff]
    %v266 = vld [vmem:[#allocation5 + $0x121] sm:$0xff]
    %v267 = vld [vmem:[#allocation5 + $0x129] sm:$0xff]
    %v268 = vld [vmem:[#allocation5 + $0x139] sm:$0xff]
    %v269 = vld [vmem:[#allocation5 + $0x141] sm:$0xff]
    %v270 = vld [vmem:[#allocation5 + $0x151] sm:$0xff]
    %v271 = vld [vmem:[#allocation5 + $0x159] sm:$0xff]
    %v272 = vld [vmem:[#allocation5 + $0x169] sm:$0xff]
    %v273 = vld [vmem:[#allocation5 + $0x171] sm:$0xff]
    %v274 = vld [vmem:[#allocation5 + $0x1b1] sm:$0xff]
    %v275 = vld [vmem:[#allocation5 + $0x1b9] sm:$0xff]
    %v276 = vld [vmem:[#allocation5 + $0x1c9] sm:$0xff]
    %v277 = vld [vmem:[#allocation5 + $0x1d1] sm:$0xff]
    %v278 = vld [vmem:[#allocation5 + $0x1e1] sm:$0xff]
    %v279 = vld [vmem:[#allocation5 + $0x1e9] sm:$0xff]
    %v280 = vld [vmem:[#allocation5 + $0x1f9] sm:$0xff]
    %v281 = vld [vmem:[#allocation5 + $0x201] sm:$0xff]
    %v282 = vld [vmem:[#allocation5 + $0x211] sm:$0xff]
    %v283 = vld [vmem:[#allocation5 + $0x219] sm:$0xff]
    %v284 = vld [vmem:[#allocation5 + $0x229] sm:$0xff]
    %v285 = vld [vmem:[#allocation5 + $0x231] sm:$0xff]
    %v286 = vld [vmem:[#allocation5 + $0x241] sm:$0xff]
    %v287 = vld [vmem:[#allocation5 + $0x249] sm:$0xff]
    %v288 = vld [vmem:[#allocation5 + $0x259] sm:$0xff]
    %v289 = vld [vmem:[#allocation5 + $0x261] sm:$0xff]
    %v290 = vld [vmem:[#allocation5 + $0x271] sm:$0xff]
    %v291 = vld [vmem:[#allocation5 + $0x279] sm:$0xff]
    %v292 = vld [vmem:[#allocation5 + $0x289] sm:$0xff]
    %v293 = vld [vmem:[#allocation5 + $0x291] sm:$0xff]
    %v294 = vld [vmem:[#allocation5 + $0x2a1] sm:$0xff]
    %v295 = vld [vmem:[#allocation5 + $0x2a9] sm:$0xff]
    %v296 = vld [vmem:[#allocation5 + $0x2b9] sm:$0xff]
    %v297 = vld [vmem:[#allocation5 + $0x2c1] sm:$0xff]
    %v298 = vld [vmem:[#allocation5 + $0x2d1] sm:$0xff]
    %v299 = vld [vmem:[#allocation5 + $0x2d9] sm:$0xff]
    %v300 = vld [vmem:[#allocation5 + $0x2e9] sm:$0xff]
    %v301 = vld [vmem:[#allocation5 + $0x2f1] sm:$0xff]
    %v302 = vld [vmem:[#allocation5 + $0x301] sm:$0xff]
    %v303 = vld [vmem:[#allocation5 + $0x309] sm:$0xff]
    %v304 = vld [vmem:[#allocation5 + $0x319] sm:$0xff]
    %v305 = vld [vmem:[#allocation5 + $0x321] sm:$0xff]
    %306 = vst [vmem:[#allocation2 + $0x8] sm:$0xff] %v242
    %307 = vst [vmem:[#allocation2 + $0x50] sm:$0xff] %v243
    %308 = vst [vmem:[#allocation2 + $0x98] sm:$0xff] %v244
    %309 = vst [vmem:[#allocation2 + $0xe0] sm:$0xff] %v245
    %310 = vst [vmem:[#allocation2 + $0x128] sm:$0xff] %v246
    %311 = vst [vmem:[#allocation2 + $0x170] sm:$0xff] %v247
    %312 = vst [vmem:[#allocation2 + $0x1b8] sm:$0xff] %v248
    %313 = vst [vmem:[#allocation2 + $0x200] sm:$0xff] %v249
    %314 = vst [vmem:[#allocation2 + $0x248] sm:$0xff] %v250
    %315 = vst [vmem:[#allocation2 + $0x290] sm:$0xff] %v251
    %316 = vst [vmem:[#allocation2 + $0x2d8] sm:$0xff] %v252
    %317 = vst [vmem:[#allocation2 + $0x320] sm:$0xff] %v253
    %318 = vst [vmem:[#allocation2 + $0x368] sm:$0xff] %v254
    %319 = vst [vmem:[#allocation2 + $0x3b0] sm:$0xff] %v255
    %320 = vst [vmem:[#allocation2 + $0x3f8] sm:$0xff] %v256
    %321 = vst [vmem:[#allocation2 + $0x440] sm:$0xff] %v257
    %322 = vst [vmem:[#allocation2 + $0x488] sm:$0xff] %v258
    %323 = vst [vmem:[#allocation2 + $0x4d0] sm:$0xff] %v259
    %324 = vst [vmem:[#allocation2 + $0x518] sm:$0xff] %v260
    %325 = vst [vmem:[#allocation2 + $0x560] sm:$0xff] %v261
    %326 = vst [vmem:[#allocation2 + $0x5a8] sm:$0xff] %v262
    %327 = vst [vmem:[#allocation2 + $0x5f0] sm:$0xff] %v263
    %328 = vst [vmem:[#allocation2 + $0x638] sm:$0xff] %v264
    %329 = vst [vmem:[#allocation2 + $0x680] sm:$0xff] %v265
    %330 = vst [vmem:[#allocation2 + $0x6c8] sm:$0xff] %v266
    %331 = vst [vmem:[#allocation2 + $0x710] sm:$0xff] %v267
    %332 = vst [vmem:[#allocation2 + $0x758] sm:$0xff] %v268
    %333 = vst [vmem:[#allocation2 + $0x7a0] sm:$0xff] %v269
    %334 = vst [vmem:[#allocation2 + $0x7e8] sm:$0xff] %v270
    %335 = vst [vmem:[#allocation2 + $0x830] sm:$0xff] %v271
    %336 = vst [vmem:[#allocation2 + $0x878] sm:$0xff] %v272
    %337 = vst [vmem:[#allocation2 + $0x8c0] sm:$0xff] %v273
    %338 = vst [vmem:[#allocation2 + $0x908] sm:$0xff] %v274
    %339 = vst [vmem:[#allocation2 + $0x950] sm:$0xff] %v275
    %340 = vst [vmem:[#allocation2 + $0x998] sm:$0xff] %v276
    %341 = vst [vmem:[#allocation2 + $0x9e0] sm:$0xff] %v277
    %342 = vst [vmem:[#allocation2 + $0xa28] sm:$0xff] %v278
    %343 = vst [vmem:[#allocation2 + $0xa70] sm:$0xff] %v279
    %344 = vst [vmem:[#allocation2 + $0xab8] sm:$0xff] %v280
    %345 = vst [vmem:[#allocation2 + $0xb00] sm:$0xff] %v281
    %346 = vst [vmem:[#allocation2 + $0xb48] sm:$0xff] %v282
    %347 = vst [vmem:[#allocation2 + $0xb90] sm:$0xff] %v283
    %348 = vst [vmem:[#allocation2 + $0xbd8] sm:$0xff] %v284
    %349 = vst [vmem:[#allocation2 + $0xc20] sm:$0xff] %v285
    %350 = vst [vmem:[#allocation2 + $0xc68] sm:$0xff] %v286
    %351 = vst [vmem:[#allocation2 + $0xcb0] sm:$0xff] %v287
    %352 = vst [vmem:[#allocation2 + $0xcf8] sm:$0xff] %v288
    %353 = vst [vmem:[#allocation2 + $0xd40] sm:$0xff] %v289
    %354 = vst [vmem:[#allocation2 + $0xd88] sm:$0xff] %v290
    %355 = vst [vmem:[#allocation2 + $0xdd0] sm:$0xff] %v291
    %356 = vst [vmem:[#allocation2 + $0xe18] sm:$0xff] %v292
    %357 = vst [vmem:[#allocation2 + $0xe60] sm:$0xff] %v293
    %358 = vst [vmem:[#allocation2 + $0xea8] sm:$0xff] %v294
    %359 = vst [vmem:[#allocation2 + $0xef0] sm:$0xff] %v295
    %360 = vst [vmem:[#allocation2 + $0xf38] sm:$0xff] %v296
    %361 = vst [vmem:[#allocation2 + $0xf80] sm:$0xff] %v297
    %362 = vst [vmem:[#allocation2 + $0xfc8] sm:$0xff] %v298
    %363 = vst [vmem:[#allocation2 + $0x1010] sm:$0xff] %v299
    %364 = vst [vmem:[#allocation2 + $0x1058] sm:$0xff] %v300
    %365 = vst [vmem:[#allocation2 + $0x10a0] sm:$0xff] %v301
    %366 = vst [vmem:[#allocation2 + $0x10e8] sm:$0xff] %v302
    %367 = vst [vmem:[#allocation2 + $0x1130] sm:$0xff] %v303
    %368 = vst [vmem:[#allocation2 + $0x1178] sm:$0xff] %v304
    %369 = vst [vmem:[#allocation2 + $0x11c0] sm:$0xff] %v305
    %v370 = vld [vmem:[#allocation5 + $0x2] sm:$0xff]
    %v371 = vld [vmem:[#allocation5 + $0xa] sm:$0xff]
    %v372 = vld [vmem:[#allocation5 + $0x1a] sm:$0xff]
    %v373 = vld [vmem:[#allocation5 + $0x22] sm:$0xff]
    %v374 = vld [vmem:[#allocation5 + $0x32] sm:$0xff]
    %v375 = vld [vmem:[#allocation5 + $0x3a] sm:$0xff]
    %v376 = vld [vmem:[#allocation5 + $0x4a] sm:$0xff]
    %v377 = vld [vmem:[#allocation5 + $0x52] sm:$0xff]
    %v378 = vld [vmem:[#allocation5 + $0x62] sm:$0xff]
    %v379 = vld [vmem:[#allocation5 + $0x6a] sm:$0xff]
    %v380 = vld [vmem:[#allocation5 + $0x7a] sm:$0xff]
    %v381 = vld [vmem:[#allocation5 + $0x82] sm:$0xff]
    %v382 = vld [vmem:[#allocation5 + $0x92] sm:$0xff]
    %v383 = vld [vmem:[#allocation5 + $0x9a] sm:$0xff]
    %v384 = vld [vmem:[#allocation5 + $0xaa] sm:$0xff]
    %v385 = vld [vmem:[#allocation5 + $0xb2] sm:$0xff]
    %v386 = vld [vmem:[#allocation5 + $0xc2] sm:$0xff]
    %v387 = vld [vmem:[#allocation5 + $0xca] sm:$0xff]
    %v388 = vld [vmem:[#allocation5 + $0xda] sm:$0xff]
    %v389 = vld [vmem:[#allocation5 + $0xe2] sm:$0xff]
    %v390 = vld [vmem:[#allocation5 + $0xf2] sm:$0xff]
    %v391 = vld [vmem:[#allocation5 + $0xfa] sm:$0xff]
    %v392 = vld [vmem:[#allocation5 + $0x10a] sm:$0xff]
    %v393 = vld [vmem:[#allocation5 + $0x112] sm:$0xff]
    %v394 = vld [vmem:[#allocation5 + $0x122] sm:$0xff]
    %v395 = vld [vmem:[#allocation5 + $0x12a] sm:$0xff]
    %v396 = vld [vmem:[#allocation5 + $0x13a] sm:$0xff]
    %v397 = vld [vmem:[#allocation5 + $0x142] sm:$0xff]
    %v398 = vld [vmem:[#allocation5 + $0x152] sm:$0xff]
    %v399 = vld [vmem:[#allocation5 + $0x15a] sm:$0xff]
    %v400 = vld [vmem:[#allocation5 + $0x16a] sm:$0xff]
    %v401 = vld [vmem:[#allocation5 + $0x172] sm:$0xff]
    %v402 = vld [vmem:[#allocation5 + $0x1b2] sm:$0xff]
    %v403 = vld [vmem:[#allocation5 + $0x1ba] sm:$0xff]
    %v404 = vld [vmem:[#allocation5 + $0x1ca] sm:$0xff]
    %v405 = vld [vmem:[#allocation5 + $0x1d2] sm:$0xff]
    %v406 = vld [vmem:[#allocation5 + $0x1e2] sm:$0xff]
    %v407 = vld [vmem:[#allocation5 + $0x1ea] sm:$0xff]
    %v408 = vld [vmem:[#allocation5 + $0x1fa] sm:$0xff]
    %v409 = vld [vmem:[#allocation5 + $0x202] sm:$0xff]
    %v410 = vld [vmem:[#allocation5 + $0x212] sm:$0xff]
    %v411 = vld [vmem:[#allocation5 + $0x21a] sm:$0xff]
    %v412 = vld [vmem:[#allocation5 + $0x22a] sm:$0xff]
    %v413 = vld [vmem:[#allocation5 + $0x232] sm:$0xff]
    %v414 = vld [vmem:[#allocation5 + $0x242] sm:$0xff]
    %v415 = vld [vmem:[#allocation5 + $0x24a] sm:$0xff]
    %v416 = vld [vmem:[#allocation5 + $0x25a] sm:$0xff]
    %v417 = vld [vmem:[#allocation5 + $0x262] sm:$0xff]
    %v418 = vld [vmem:[#allocation5 + $0x272] sm:$0xff]
    %v419 = vld [vmem:[#allocation5 + $0x27a] sm:$0xff]
    %v420 = vld [vmem:[#allocation5 + $0x28a] sm:$0xff]
    %v421 = vld [vmem:[#allocation5 + $0x292] sm:$0xff]
    %v422 = vld [vmem:[#allocation5 + $0x2a2] sm:$0xff]
    %v423 = vld [vmem:[#allocation5 + $0x2aa] sm:$0xff]
    %v424 = vld [vmem:[#allocation5 + $0x2ba] sm:$0xff]
    %v425 = vld [vmem:[#allocation5 + $0x2c2] sm:$0xff]
    %v426 = vld [vmem:[#allocation5 + $0x2d2] sm:$0xff]
    %v427 = vld [vmem:[#allocation5 + $0x2da] sm:$0xff]
    %v428 = vld [vmem:[#allocation5 + $0x2ea] sm:$0xff]
    %v429 = vld [vmem:[#allocation5 + $0x2f2] sm:$0xff]
    %v430 = vld [vmem:[#allocation5 + $0x302] sm:$0xff]
    %v431 = vld [vmem:[#allocation5 + $0x30a] sm:$0xff]
    %v432 = vld [vmem:[#allocation5 + $0x31a] sm:$0xff]
    %v433 = vld [vmem:[#allocation5 + $0x322] sm:$0xff]
    %434 = vst [vmem:[#allocation2 + $0x10] sm:$0xff] %v370
    %435 = vst [vmem:[#allocation2 + $0x58] sm:$0xff] %v371
    %436 = vst [vmem:[#allocation2 + $0xa0] sm:$0xff] %v372
    %437 = vst [vmem:[#allocation2 + $0xe8] sm:$0xff] %v373
    %438 = vst [vmem:[#allocation2 + $0x130] sm:$0xff] %v374
    %439 = vst [vmem:[#allocation2 + $0x178] sm:$0xff] %v375
    %440 = vst [vmem:[#allocation2 + $0x1c0] sm:$0xff] %v376
    %441 = vst [vmem:[#allocation2 + $0x208] sm:$0xff] %v377
    %442 = vst [vmem:[#allocation2 + $0x250] sm:$0xff] %v378
    %443 = vst [vmem:[#allocation2 + $0x298] sm:$0xff] %v379
    %444 = vst [vmem:[#allocation2 + $0x2e0] sm:$0xff] %v380
    %445 = vst [vmem:[#allocation2 + $0x328] sm:$0xff] %v381
    %446 = vst [vmem:[#allocation2 + $0x370] sm:$0xff] %v382
    %447 = vst [vmem:[#allocation2 + $0x3b8] sm:$0xff] %v383
    %448 = vst [vmem:[#allocation2 + $0x400] sm:$0xff] %v384
    %449 = vst [vmem:[#allocation2 + $0x448] sm:$0xff] %v385
    %450 = vst [vmem:[#allocation2 + $0x490] sm:$0xff] %v386
    %451 = vst [vmem:[#allocation2 + $0x4d8] sm:$0xff] %v387
    %452 = vst [vmem:[#allocation2 + $0x520] sm:$0xff] %v388
    %453 = vst [vmem:[#allocation2 + $0x568] sm:$0xff] %v389
    %454 = vst [vmem:[#allocation2 + $0x5b0] sm:$0xff] %v390
    %455 = vst [vmem:[#allocation2 + $0x5f8] sm:$0xff] %v391
    %456 = vst [vmem:[#allocation2 + $0x640] sm:$0xff] %v392
    %457 = vst [vmem:[#allocation2 + $0x688] sm:$0xff] %v393
    %458 = vst [vmem:[#allocation2 + $0x6d0] sm:$0xff] %v394
    %459 = vst [vmem:[#allocation2 + $0x718] sm:$0xff] %v395
    %460 = vst [vmem:[#allocation2 + $0x760] sm:$0xff] %v396
    %461 = vst [vmem:[#allocation2 + $0x7a8] sm:$0xff] %v397
    %462 = vst [vmem:[#allocation2 + $0x7f0] sm:$0xff] %v398
    %463 = vst [vmem:[#allocation2 + $0x838] sm:$0xff] %v399
    %464 = vst [vmem:[#allocation2 + $0x880] sm:$0xff] %v400
    %465 = vst [vmem:[#allocation2 + $0x8c8] sm:$0xff] %v401
    %466 = vst [vmem:[#allocation2 + $0x910] sm:$0xff] %v402
    %467 = vst [vmem:[#allocation2 + $0x958] sm:$0xff] %v403
    %468 = vst [vmem:[#allocation2 + $0x9a0] sm:$0xff] %v404
    %469 = vst [vmem:[#allocation2 + $0x9e8] sm:$0xff] %v405
    %470 = vst [vmem:[#allocation2 + $0xa30] sm:$0xff] %v406
    %471 = vst [vmem:[#allocation2 + $0xa78] sm:$0xff] %v407
    %472 = vst [vmem:[#allocation2 + $0xac0] sm:$0xff] %v408
    %473 = vst [vmem:[#allocation2 + $0xb08] sm:$0xff] %v409
    %474 = vst [vmem:[#allocation2 + $0xb50] sm:$0xff] %v410
    %475 = vst [vmem:[#allocation2 + $0xb98] sm:$0xff] %v411
    %476 = vst [vmem:[#allocation2 + $0xbe0] sm:$0xff] %v412
    %477 = vst [vmem:[#allocation2 + $0xc28] sm:$0xff] %v413
    %478 = vst [vmem:[#allocation2 + $0xc70] sm:$0xff] %v414
    %479 = vst [vmem:[#allocation2 + $0xcb8] sm:$0xff] %v415
    %480 = vst [vmem:[#allocation2 + $0xd00] sm:$0xff] %v416
    %481 = vst [vmem:[#allocation2 + $0xd48] sm:$0xff] %v417
    %482 = vst [vmem:[#allocation2 + $0xd90] sm:$0xff] %v418
    %483 = vst [vmem:[#allocation2 + $0xdd8] sm:$0xff] %v419
    %484 = vst [vmem:[#allocation2 + $0xe20] sm:$0xff] %v420
    %485 = vst [vmem:[#allocation2 + $0xe68] sm:$0xff] %v421
    %486 = vst [vmem:[#allocation2 + $0xeb0] sm:$0xff] %v422
    %487 = vst [vmem:[#allocation2 + $0xef8] sm:$0xff] %v423
    %488 = vst [vmem:[#allocation2 + $0xf40] sm:$0xff] %v424
    %489 = vst [vmem:[#allocation2 + $0xf88] sm:$0xff] %v425
    %490 = vst [vmem:[#allocation2 + $0xfd0] sm:$0xff] %v426
    %491 = vst [vmem:[#allocation2 + $0x1018] sm:$0xff] %v427
    %492 = vst [vmem:[#allocation2 + $0x1060] sm:$0xff] %v428
    %493 = vst [vmem:[#allocation2 + $0x10a8] sm:$0xff] %v429
    %494 = vst [vmem:[#allocation2 + $0x10f0] sm:$0xff] %v430
    %495 = vst [vmem:[#allocation2 + $0x1138] sm:$0xff] %v431
    %496 = vst [vmem:[#allocation2 + $0x1180] sm:$0xff] %v432
    %497 = vst [vmem:[#allocation2 + $0x11c8] sm:$0xff] %v433
    %s498 = scalar_lea.vmem [#allocation5], 24
    %v499 = vld [vmem:[%s498] sm:$0xff]
    %v500 = vld [vmem:[%s498 + $0x8] sm:$0xff]
    %v501 = vld [vmem:[%s498 + $0x18] sm:$0xff]
    %v502 = vld [vmem:[%s498 + $0x20] sm:$0xff]
    %v503 = vld [vmem:[%s498 + $0x30] sm:$0xff]
    %v504 = vld [vmem:[%s498 + $0x38] sm:$0xff]
    %v505 = vld [vmem:[%s498 + $0x48] sm:$0xff]
    %v506 = vld [vmem:[%s498 + $0x50] sm:$0xff]
    %v507 = vld [vmem:[%s498 + $0x60] sm:$0xff]
    %v508 = vld [vmem:[%s498 + $0x68] sm:$0xff]
    %v509 = vld [vmem:[%s498 + $0x78] sm:$0xff]
    %v510 = vld [vmem:[%s498 + $0x80] sm:$0xff]
    %v511 = vld [vmem:[%s498 + $0x90] sm:$0xff]
    %v512 = vld [vmem:[%s498 + $0x98] sm:$0xff]
    %v513 = vld [vmem:[%s498 + $0xa8] sm:$0xff]
    %v514 = vld [vmem:[%s498 + $0xb0] sm:$0xff]
    %v515 = vld [vmem:[%s498 + $0xc0] sm:$0xff]
    %v516 = vld [vmem:[%s498 + $0xc8] sm:$0xff]
    %v517 = vld [vmem:[%s498 + $0xd8] sm:$0xff]
    %v518 = vld [vmem:[%s498 + $0xe0] sm:$0xff]
    %v519 = vld [vmem:[%s498 + $0xf0] sm:$0xff]
    %v520 = vld [vmem:[%s498 + $0xf8] sm:$0xff]
    %v521 = vld [vmem:[%s498 + $0x108] sm:$0xff]
    %v522 = vld [vmem:[%s498 + $0x110] sm:$0xff]
    %v523 = vld [vmem:[%s498 + $0x120] sm:$0xff]
    %v524 = vld [vmem:[%s498 + $0x128] sm:$0xff]
    %v525 = vld [vmem:[%s498 + $0x138] sm:$0xff]
    %v526 = vld [vmem:[%s498 + $0x140] sm:$0xff]
    %v527 = vld [vmem:[%s498 + $0x150] sm:$0xff]
    %v528 = vld [vmem:[%s498 + $0x158] sm:$0xff]
    %v529 = vld [vmem:[%s498 + $0x168] sm:$0xff]
    %v530 = vld [vmem:[%s498 + $0x170] sm:$0xff]
    %v531 = vld [vmem:[%s498 + $0x1b0] sm:$0xff]
    %v532 = vld [vmem:[%s498 + $0x1b8] sm:$0xff]
    %v533 = vld [vmem:[%s498 + $0x1c8] sm:$0xff]
    %v534 = vld [vmem:[%s498 + $0x1d0] sm:$0xff]
    %v535 = vld [vmem:[%s498 + $0x1e0] sm:$0xff]
    %v536 = vld [vmem:[%s498 + $0x1e8] sm:$0xff]
    %v537 = vld [vmem:[%s498 + $0x1f8] sm:$0xff]
    %v538 = vld [vmem:[%s498 + $0x200] sm:$0xff]
    %v539 = vld [vmem:[%s498 + $0x210] sm:$0xff]
    %v540 = vld [vmem:[%s498 + $0x218] sm:$0xff]
    %v541 = vld [vmem:[%s498 + $0x228] sm:$0xff]
    %v542 = vld [vmem:[%s498 + $0x230] sm:$0xff]
    %v543 = vld [vmem:[%s498 + $0x240] sm:$0xff]
    %v544 = vld [vmem:[%s498 + $0x248] sm:$0xff]
    %v545 = vld [vmem:[%s498 + $0x258] sm:$0xff]
    %v546 = vld [vmem:[%s498 + $0x260] sm:$0xff]
    %v547 = vld [vmem:[%s498 + $0x270] sm:$0xff]
    %v548 = vld [vmem:[%s498 + $0x278] sm:$0xff]
    %v549 = vld [vmem:[%s498 + $0x288] sm:$0xff]
    %v550 = vld [vmem:[%s498 + $0x290] sm:$0xff]
    %v551 = vld [vmem:[%s498 + $0x2a0] sm:$0xff]
    %v552 = vld [vmem:[%s498 + $0x2a8] sm:$0xff]
    %v553 = vld [vmem:[%s498 + $0x2b8] sm:$0xff]
    %v554 = vld [vmem:[%s498 + $0x2c0] sm:$0xff]
    %v555 = vld [vmem:[%s498 + $0x2d0] sm:$0xff]
    %v556 = vld [vmem:[%s498 + $0x2d8] sm:$0xff]
    %v557 = vld [vmem:[%s498 + $0x2e8] sm:$0xff]
    %v558 = vld [vmem:[%s498 + $0x2f0] sm:$0xff]
    %v559 = vld [vmem:[%s498 + $0x300] sm:$0xff]
    %v560 = vld [vmem:[%s498 + $0x308] sm:$0xff]
    %v561 = vld [vmem:[%s498 + $0x318] sm:$0xff]
    %v562 = vld [vmem:[%s498 + $0x320] sm:$0xff]
    %563 = vst [vmem:[#allocation2 + $0x18] sm:$0xff] %v499
    %564 = vst [vmem:[#allocation2 + $0x60] sm:$0xff] %v500
    %565 = vst [vmem:[#allocation2 + $0xa8] sm:$0xff] %v501
    %566 = vst [vmem:[#allocation2 + $0xf0] sm:$0xff] %v502
    %567 = vst [vmem:[#allocation2 + $0x138] sm:$0xff] %v503
    %568 = vst [vmem:[#allocation2 + $0x180] sm:$0xff] %v504
    %569 = vst [vmem:[#allocation2 + $0x1c8] sm:$0xff] %v505
    %570 = vst [vmem:[#allocation2 + $0x210] sm:$0xff] %v506
    %571 = vst [vmem:[#allocation2 + $0x258] sm:$0xff] %v507
    %572 = vst [vmem:[#allocation2 + $0x2a0] sm:$0xff] %v508
    %573 = vst [vmem:[#allocation2 + $0x2e8] sm:$0xff] %v509
    %574 = vst [vmem:[#allocation2 + $0x330] sm:$0xff] %v510
    %575 = vst [vmem:[#allocation2 + $0x378] sm:$0xff] %v511
    %576 = vst [vmem:[#allocation2 + $0x3c0] sm:$0xff] %v512
    %577 = vst [vmem:[#allocation2 + $0x408] sm:$0xff] %v513
    %578 = vst [vmem:[#allocation2 + $0x450] sm:$0xff] %v514
    %579 = vst [vmem:[#allocation2 + $0x498] sm:$0xff] %v515
    %580 = vst [vmem:[#allocation2 + $0x4e0] sm:$0xff] %v516
    %581 = vst [vmem:[#allocation2 + $0x528] sm:$0xff] %v517
    %582 = vst [vmem:[#allocation2 + $0x570] sm:$0xff] %v518
    %583 = vst [vmem:[#allocation2 + $0x5b8] sm:$0xff] %v519
    %584 = vst [vmem:[#allocation2 + $0x600] sm:$0xff] %v520
    %585 = vst [vmem:[#allocation2 + $0x648] sm:$0xff] %v521
    %586 = vst [vmem:[#allocation2 + $0x690] sm:$0xff] %v522
    %587 = vst [vmem:[#allocation2 + $0x6d8] sm:$0xff] %v523
    %588 = vst [vmem:[#allocation2 + $0x720] sm:$0xff] %v524
    %589 = vst [vmem:[#allocation2 + $0x768] sm:$0xff] %v525
    %590 = vst [vmem:[#allocation2 + $0x7b0] sm:$0xff] %v526
    %591 = vst [vmem:[#allocation2 + $0x7f8] sm:$0xff] %v527
    %592 = vst [vmem:[#allocation2 + $0x840] sm:$0xff] %v528
    %593 = vst [vmem:[#allocation2 + $0x888] sm:$0xff] %v529
    %594 = vst [vmem:[#allocation2 + $0x8d0] sm:$0xff] %v530
    %595 = vst [vmem:[#allocation2 + $0x918] sm:$0xff] %v531
    %596 = vst [vmem:[#allocation2 + $0x960] sm:$0xff] %v532
    %597 = vst [vmem:[#allocation2 + $0x9a8] sm:$0xff] %v533
    %598 = vst [vmem:[#allocation2 + $0x9f0] sm:$0xff] %v534
    %599 = vst [vmem:[#allocation2 + $0xa38] sm:$0xff] %v535
    %600 = vst [vmem:[#allocation2 + $0xa80] sm:$0xff] %v536
    %601 = vst [vmem:[#allocation2 + $0xac8] sm:$0xff] %v537
    %602 = vst [vmem:[#allocation2 + $0xb10] sm:$0xff] %v538
    %603 = vst [vmem:[#allocation2 + $0xb58] sm:$0xff] %v539
    %604 = vst [vmem:[#allocation2 + $0xba0] sm:$0xff] %v540
    %605 = vst [vmem:[#allocation2 + $0xbe8] sm:$0xff] %v541
    %606 = vst [vmem:[#allocation2 + $0xc30] sm:$0xff] %v542
    %607 = vst [vmem:[#allocation2 + $0xc78] sm:$0xff] %v543
    %608 = vst [vmem:[#allocation2 + $0xcc0] sm:$0xff] %v544
    %609 = vst [vmem:[#allocation2 + $0xd08] sm:$0xff] %v545
    %610 = vst [vmem:[#allocation2 + $0xd50] sm:$0xff] %v546
    %611 = vst [vmem:[#allocation2 + $0xd98] sm:$0xff] %v547
    %612 = vst [vmem:[#allocation2 + $0xde0] sm:$0xff] %v548
    %613 = vst [vmem:[#allocation2 + $0xe28] sm:$0xff] %v549
    %614 = vst [vmem:[#allocation2 + $0xe70] sm:$0xff] %v550
    %615 = vst [vmem:[#allocation2 + $0xeb8] sm:$0xff] %v551
    %616 = vst [vmem:[#allocation2 + $0xf00] sm:$0xff] %v552
    %617 = vst [vmem:[#allocation2 + $0xf48] sm:$0xff] %v553
    %618 = vst [vmem:[#allocation2 + $0xf90] sm:$0xff] %v554
    %619 = vst [vmem:[#allocation2 + $0xfd8] sm:$0xff] %v555
    %620 = vst [vmem:[#allocation2 + $0x1020] sm:$0xff] %v556
    %621 = vst [vmem:[#allocation2 + $0x1068] sm:$0xff] %v557
    %622 = vst [vmem:[#allocation2 + $0x10b0] sm:$0xff] %v558
    %623 = vst [vmem:[#allocation2 + $0x10f8] sm:$0xff] %v559
    %624 = vst [vmem:[#allocation2 + $0x1140] sm:$0xff] %v560
    %625 = vst [vmem:[#allocation2 + $0x1188] sm:$0xff] %v561
    %626 = vst [vmem:[#allocation2 + $0x11d0] sm:$0xff] %v562
    %v627 = vld [vmem:[%s498 + $0x1] sm:$0xff]
    %v628 = vld [vmem:[%s498 + $0x9] sm:$0xff]
    %v629 = vld [vmem:[%s498 + $0x19] sm:$0xff]
    %v630 = vld [vmem:[%s498 + $0x21] sm:$0xff]
    %v631 = vld [vmem:[%s498 + $0x31] sm:$0xff]
    %v632 = vld [vmem:[%s498 + $0x39] sm:$0xff]
    %v633 = vld [vmem:[%s498 + $0x49] sm:$0xff]
    %v634 = vld [vmem:[%s498 + $0x51] sm:$0xff]
    %v635 = vld [vmem:[%s498 + $0x61] sm:$0xff]
    %v636 = vld [vmem:[%s498 + $0x69] sm:$0xff]
    %v637 = vld [vmem:[%s498 + $0x79] sm:$0xff]
    %v638 = vld [vmem:[%s498 + $0x81] sm:$0xff]
    %v639 = vld [vmem:[%s498 + $0x91] sm:$0xff]
    %v640 = vld [vmem:[%s498 + $0x99] sm:$0xff]
    %v641 = vld [vmem:[%s498 + $0xa9] sm:$0xff]
    %v642 = vld [vmem:[%s498 + $0xb1] sm:$0xff]
    %v643 = vld [vmem:[%s498 + $0xc1] sm:$0xff]
    %v644 = vld [vmem:[%s498 + $0xc9] sm:$0xff]
    %v645 = vld [vmem:[%s498 + $0xd9] sm:$0xff]
    %v646 = vld [vmem:[%s498 + $0xe1] sm:$0xff]
    %v647 = vld [vmem:[%s498 + $0xf1] sm:$0xff]
    %v648 = vld [vmem:[%s498 + $0xf9] sm:$0xff]
    %v649 = vld [vmem:[%s498 + $0x109] sm:$0xff]
    %v650 = vld [vmem:[%s498 + $0x111] sm:$0xff]
    %v651 = vld [vmem:[%s498 + $0x121] sm:$0xff]
    %v652 = vld [vmem:[%s498 + $0x129] sm:$0xff]
    %v653 = vld [vmem:[%s498 + $0x139] sm:$0xff]
    %v654 = vld [vmem:[%s498 + $0x141] sm:$0xff]
    %v655 = vld [vmem:[%s498 + $0x151] sm:$0xff]
    %v656 = vld [vmem:[%s498 + $0x159] sm:$0xff]
    %v657 = vld [vmem:[%s498 + $0x169] sm:$0xff]
    %v658 = vld [vmem:[%s498 + $0x171] sm:$0xff]
    %v659 = vld [vmem:[%s498 + $0x1b1] sm:$0xff]
    %v660 = vld [vmem:[%s498 + $0x1b9] sm:$0xff]
    %v661 = vld [vmem:[%s498 + $0x1c9] sm:$0xff]
    %v662 = vld [vmem:[%s498 + $0x1d1] sm:$0xff]
    %v663 = vld [vmem:[%s498 + $0x1e1] sm:$0xff]
    %v664 = vld [vmem:[%s498 + $0x1e9] sm:$0xff]
    %v665 = vld [vmem:[%s498 + $0x1f9] sm:$0xff]
    %v666 = vld [vmem:[%s498 + $0x201] sm:$0xff]
    %v667 = vld [vmem:[%s498 + $0x211] sm:$0xff]
    %v668 = vld [vmem:[%s498 + $0x219] sm:$0xff]
    %v669 = vld [vmem:[%s498 + $0x229] sm:$0xff]
    %v670 = vld [vmem:[%s498 + $0x231] sm:$0xff]
    %v671 = vld [vmem:[%s498 + $0x241] sm:$0xff]
    %v672 = vld [vmem:[%s498 + $0x249] sm:$0xff]
    %v673 = vld [vmem:[%s498 + $0x259] sm:$0xff]
    %v674 = vld [vmem:[%s498 + $0x261] sm:$0xff]
    %v675 = vld [vmem:[%s498 + $0x271] sm:$0xff]
    %v676 = vld [vmem:[%s498 + $0x279] sm:$0xff]
    %v677 = vld [vmem:[%s498 + $0x289] sm:$0xff]
    %v678 = vld [vmem:[%s498 + $0x291] sm:$0xff]
    %v679 = vld [vmem:[%s498 + $0x2a1] sm:$0xff]
    %v680 = vld [vmem:[%s498 + $0x2a9] sm:$0xff]
    %v681 = vld [vmem:[%s498 + $0x2b9] sm:$0xff]
    %v682 = vld [vmem:[%s498 + $0x2c1] sm:$0xff]
    %v683 = vld [vmem:[%s498 + $0x2d1] sm:$0xff]
    %v684 = vld [vmem:[%s498 + $0x2d9] sm:$0xff]
    %v685 = vld [vmem:[%s498 + $0x2e9] sm:$0xff]
    %v686 = vld [vmem:[%s498 + $0x2f1] sm:$0xff]
    %v687 = vld [vmem:[%s498 + $0x301] sm:$0xff]
    %v688 = vld [vmem:[%s498 + $0x309] sm:$0xff]
    %v689 = vld [vmem:[%s498 + $0x319] sm:$0xff]
    %v690 = vld [vmem:[%s498 + $0x321] sm:$0xff]
    %691 = vst [vmem:[#allocation2 + $0x20] sm:$0xff] %v627
    %692 = vst [vmem:[#allocation2 + $0x68] sm:$0xff] %v628
    %693 = vst [vmem:[#allocation2 + $0xb0] sm:$0xff] %v629
    %694 = vst [vmem:[#allocation2 + $0xf8] sm:$0xff] %v630
    %695 = vst [vmem:[#allocation2 + $0x140] sm:$0xff] %v631
    %696 = vst [vmem:[#allocation2 + $0x188] sm:$0xff] %v632
    %697 = vst [vmem:[#allocation2 + $0x1d0] sm:$0xff] %v633
    %698 = vst [vmem:[#allocation2 + $0x218] sm:$0xff] %v634
    %699 = vst [vmem:[#allocation2 + $0x260] sm:$0xff] %v635
    %700 = vst [vmem:[#allocation2 + $0x2a8] sm:$0xff] %v636
    %701 = vst [vmem:[#allocation2 + $0x2f0] sm:$0xff] %v637
    %702 = vst [vmem:[#allocation2 + $0x338] sm:$0xff] %v638
    %703 = vst [vmem:[#allocation2 + $0x380] sm:$0xff] %v639
    %704 = vst [vmem:[#allocation2 + $0x3c8] sm:$0xff] %v640
    %705 = vst [vmem:[#allocation2 + $0x410] sm:$0xff] %v641
    %706 = vst [vmem:[#allocation2 + $0x458] sm:$0xff] %v642
    %707 = vst [vmem:[#allocation2 + $0x4a0] sm:$0xff] %v643
    %708 = vst [vmem:[#allocation2 + $0x4e8] sm:$0xff] %v644
    %709 = vst [vmem:[#allocation2 + $0x530] sm:$0xff] %v645
    %710 = vst [vmem:[#allocation2 + $0x578] sm:$0xff] %v646
    %711 = vst [vmem:[#allocation2 + $0x5c0] sm:$0xff] %v647
    %712 = vst [vmem:[#allocation2 + $0x608] sm:$0xff] %v648
    %713 = vst [vmem:[#allocation2 + $0x650] sm:$0xff] %v649
    %714 = vst [vmem:[#allocation2 + $0x698] sm:$0xff] %v650
    %715 = vst [vmem:[#allocation2 + $0x6e0] sm:$0xff] %v651
    %716 = vst [vmem:[#allocation2 + $0x728] sm:$0xff] %v652
    %717 = vst [vmem:[#allocation2 + $0x770] sm:$0xff] %v653
    %718 = vst [vmem:[#allocation2 + $0x7b8] sm:$0xff] %v654
    %719 = vst [vmem:[#allocation2 + $0x800] sm:$0xff] %v655
    %720 = vst [vmem:[#allocation2 + $0x848] sm:$0xff] %v656
    %721 = vst [vmem:[#allocation2 + $0x890] sm:$0xff] %v657
    %722 = vst [vmem:[#allocation2 + $0x8d8] sm:$0xff] %v658
    %723 = vst [vmem:[#allocation2 + $0x920] sm:$0xff] %v659
    %724 = vst [vmem:[#allocation2 + $0x968] sm:$0xff] %v660
    %725 = vst [vmem:[#allocation2 + $0x9b0] sm:$0xff] %v661
    %726 = vst [vmem:[#allocation2 + $0x9f8] sm:$0xff] %v662
    %727 = vst [vmem:[#allocation2 + $0xa40] sm:$0xff] %v663
    %728 = vst [vmem:[#allocation2 + $0xa88] sm:$0xff] %v664
    %729 = vst [vmem:[#allocation2 + $0xad0] sm:$0xff] %v665
    %730 = vst [vmem:[#allocation2 + $0xb18] sm:$0xff] %v666
    %731 = vst [vmem:[#allocation2 + $0xb60] sm:$0xff] %v667
    %732 = vst [vmem:[#allocation2 + $0xba8] sm:$0xff] %v668
    %733 = vst [vmem:[#allocation2 + $0xbf0] sm:$0xff] %v669
    %734 = vst [vmem:[#allocation2 + $0xc38] sm:$0xff] %v670
    %735 = vst [vmem:[#allocation2 + $0xc80] sm:$0xff] %v671
    %736 = vst [vmem:[#allocation2 + $0xcc8] sm:$0xff] %v672
    %737 = vst [vmem:[#allocation2 + $0xd10] sm:$0xff] %v673
    %738 = vst [vmem:[#allocation2 + $0xd58] sm:$0xff] %v674
    %739 = vst [vmem:[#allocation2 + $0xda0] sm:$0xff] %v675
    %740 = vst [vmem:[#allocation2 + $0xde8] sm:$0xff] %v676
    %741 = vst [vmem:[#allocation2 + $0xe30] sm:$0xff] %v677
    %742 = vst [vmem:[#allocation2 + $0xe78] sm:$0xff] %v678
    %743 = vst [vmem:[#allocation2 + $0xec0] sm:$0xff] %v679
    %744 = vst [vmem:[#allocation2 + $0xf08] sm:$0xff] %v680
    %745 = vst [vmem:[#allocation2 + $0xf50] sm:$0xff] %v681
    %746 = vst [vmem:[#allocation2 + $0xf98] sm:$0xff] %v682
    %747 = vst [vmem:[#allocation2 + $0xfe0] sm:$0xff] %v683
    %748 = vst [vmem:[#allocation2 + $0x1028] sm:$0xff] %v684
    %749 = vst [vmem:[#allocation2 + $0x1070] sm:$0xff] %v685
    %750 = vst [vmem:[#allocation2 + $0x10b8] sm:$0xff] %v686
    %751 = vst [vmem:[#allocation2 + $0x1100] sm:$0xff] %v687
    %752 = vst [vmem:[#allocation2 + $0x1148] sm:$0xff] %v688
    %753 = vst [vmem:[#allocation2 + $0x1190] sm:$0xff] %v689
    %754 = vst [vmem:[#allocation2 + $0x11d8] sm:$0xff] %v690
    %v755 = vld [vmem:[%s498 + $0x2] sm:$0xff]
    %v756 = vld [vmem:[%s498 + $0xa] sm:$0xff]
    %v757 = vld [vmem:[%s498 + $0x1a] sm:$0xff]
    %v758 = vld [vmem:[%s498 + $0x22] sm:$0xff]
    %v759 = vld [vmem:[%s498 + $0x32] sm:$0xff]
    %v760 = vld [vmem:[%s498 + $0x3a] sm:$0xff]
    %v761 = vld [vmem:[%s498 + $0x4a] sm:$0xff]
    %v762 = vld [vmem:[%s498 + $0x52] sm:$0xff]
    %v763 = vld [vmem:[%s498 + $0x62] sm:$0xff]
    %v764 = vld [vmem:[%s498 + $0x6a] sm:$0xff]
    %v765 = vld [vmem:[%s498 + $0x7a] sm:$0xff]
    %v766 = vld [vmem:[%s498 + $0x82] sm:$0xff]
    %v767 = vld [vmem:[%s498 + $0x92] sm:$0xff]
    %v768 = vld [vmem:[%s498 + $0x9a] sm:$0xff]
    %v769 = vld [vmem:[%s498 + $0xaa] sm:$0xff]
    %v770 = vld [vmem:[%s498 + $0xb2] sm:$0xff]
    %v771 = vld [vmem:[%s498 + $0xc2] sm:$0xff]
    %v772 = vld [vmem:[%s498 + $0xca] sm:$0xff]
    %v773 = vld [vmem:[%s498 + $0xda] sm:$0xff]
    %v774 = vld [vmem:[%s498 + $0xe2] sm:$0xff]
    %v775 = vld [vmem:[%s498 + $0xf2] sm:$0xff]
    %v776 = vld [vmem:[%s498 + $0xfa] sm:$0xff]
    %v777 = vld [vmem:[%s498 + $0x10a] sm:$0xff]
    %v778 = vld [vmem:[%s498 + $0x112] sm:$0xff]
    %v779 = vld [vmem:[%s498 + $0x122] sm:$0xff]
    %v780 = vld [vmem:[%s498 + $0x12a] sm:$0xff]
    %v781 = vld [vmem:[%s498 + $0x13a] sm:$0xff]
    %v782 = vld [vmem:[%s498 + $0x142] sm:$0xff]
    %v783 = vld [vmem:[%s498 + $0x152] sm:$0xff]
    %v784 = vld [vmem:[%s498 + $0x15a] sm:$0xff]
    %v785 = vld [vmem:[%s498 + $0x16a] sm:$0xff]
    %v786 = vld [vmem:[%s498 + $0x172] sm:$0xff]
    %v787 = vld [vmem:[%s498 + $0x1b2] sm:$0xff]
    %v788 = vld [vmem:[%s498 + $0x1ba] sm:$0xff]
    %v789 = vld [vmem:[%s498 + $0x1ca] sm:$0xff]
    %v790 = vld [vmem:[%s498 + $0x1d2] sm:$0xff]
    %v791 = vld [vmem:[%s498 + $0x1e2] sm:$0xff]
    %v792 = vld [vmem:[%s498 + $0x1ea] sm:$0xff]
    %v793 = vld [vmem:[%s498 + $0x1fa] sm:$0xff]
    %v794 = vld [vmem:[%s498 + $0x202] sm:$0xff]
    %v795 = vld [vmem:[%s498 + $0x212] sm:$0xff]
    %v796 = vld [vmem:[%s498 + $0x21a] sm:$0xff]
    %v797 = vld [vmem:[%s498 + $0x22a] sm:$0xff]
    %v798 = vld [vmem:[%s498 + $0x232] sm:$0xff]
    %v799 = vld [vmem:[%s498 + $0x242] sm:$0xff]
    %v800 = vld [vmem:[%s498 + $0x24a] sm:$0xff]
    %v801 = vld [vmem:[%s498 + $0x25a] sm:$0xff]
    %v802 = vld [vmem:[%s498 + $0x262] sm:$0xff]
    %v803 = vld [vmem:[%s498 + $0x272] sm:$0xff]
    %v804 = vld [vmem:[%s498 + $0x27a] sm:$0xff]
    %v805 = vld [vmem:[%s498 + $0x28a] sm:$0xff]
    %v806 = vld [vmem:[%s498 + $0x292] sm:$0xff]
    %v807 = vld [vmem:[%s498 + $0x2a2] sm:$0xff]
    %v808 = vld [vmem:[%s498 + $0x2aa] sm:$0xff]
    %v809 = vld [vmem:[%s498 + $0x2ba] sm:$0xff]
    %v810 = vld [vmem:[%s498 + $0x2c2] sm:$0xff]
    %v811 = vld [vmem:[%s498 + $0x2d2] sm:$0xff]
    %v812 = vld [vmem:[%s498 + $0x2da] sm:$0xff]
    %v813 = vld [vmem:[%s498 + $0x2ea] sm:$0xff]
    %v814 = vld [vmem:[%s498 + $0x2f2] sm:$0xff]
    %v815 = vld [vmem:[%s498 + $0x302] sm:$0xff]
    %v816 = vld [vmem:[%s498 + $0x30a] sm:$0xff]
    %v817 = vld [vmem:[%s498 + $0x31a] sm:$0xff]
    %v818 = vld [vmem:[%s498 + $0x322] sm:$0xff]
    %819 = vst [vmem:[#allocation2 + $0x28] sm:$0xff] %v755
    %820 = vst [vmem:[#allocation2 + $0x70] sm:$0xff] %v756
    %821 = vst [vmem:[#allocation2 + $0xb8] sm:$0xff] %v757
    %822 = vst [vmem:[#allocation2 + $0x100] sm:$0xff] %v758
    %823 = vst [vmem:[#allocation2 + $0x148] sm:$0xff] %v759
    %824 = vst [vmem:[#allocation2 + $0x190] sm:$0xff] %v760
    %825 = vst [vmem:[#allocation2 + $0x1d8] sm:$0xff] %v761
    %826 = vst [vmem:[#allocation2 + $0x220] sm:$0xff] %v762
    %827 = vst [vmem:[#allocation2 + $0x268] sm:$0xff] %v763
    %828 = vst [vmem:[#allocation2 + $0x2b0] sm:$0xff] %v764
    %829 = vst [vmem:[#allocation2 + $0x2f8] sm:$0xff] %v765
    %830 = vst [vmem:[#allocation2 + $0x340] sm:$0xff] %v766
    %831 = vst [vmem:[#allocation2 + $0x388] sm:$0xff] %v767
    %832 = vst [vmem:[#allocation2 + $0x3d0] sm:$0xff] %v768
    %833 = vst [vmem:[#allocation2 + $0x418] sm:$0xff] %v769
    %834 = vst [vmem:[#allocation2 + $0x460] sm:$0xff] %v770
    %835 = vst [vmem:[#allocation2 + $0x4a8] sm:$0xff] %v771
    %836 = vst [vmem:[#allocation2 + $0x4f0] sm:$0xff] %v772
    %837 = vst [vmem:[#allocation2 + $0x538] sm:$0xff] %v773
    %838 = vst [vmem:[#allocation2 + $0x580] sm:$0xff] %v774
    %839 = vst [vmem:[#allocation2 + $0x5c8] sm:$0xff] %v775
    %840 = vst [vmem:[#allocation2 + $0x610] sm:$0xff] %v776
    %841 = vst [vmem:[#allocation2 + $0x658] sm:$0xff] %v777
    %842 = vst [vmem:[#allocation2 + $0x6a0] sm:$0xff] %v778
    %843 = vst [vmem:[#allocation2 + $0x6e8] sm:$0xff] %v779
    %844 = vst [vmem:[#allocation2 + $0x730] sm:$0xff] %v780
    %845 = vst [vmem:[#allocation2 + $0x778] sm:$0xff] %v781
    %846 = vst [vmem:[#allocation2 + $0x7c0] sm:$0xff] %v782
    %847 = vst [vmem:[#allocation2 + $0x808] sm:$0xff] %v783
    %848 = vst [vmem:[#allocation2 + $0x850] sm:$0xff] %v784
    %849 = vst [vmem:[#allocation2 + $0x898] sm:$0xff] %v785
    %850 = vst [vmem:[#allocation2 + $0x8e0] sm:$0xff] %v786
    %851 = vst [vmem:[#allocation2 + $0x928] sm:$0xff] %v787
    %852 = vst [vmem:[#allocation2 + $0x970] sm:$0xff] %v788
    %853 = vst [vmem:[#allocation2 + $0x9b8] sm:$0xff] %v789
    %854 = vst [vmem:[#allocation2 + $0xa00] sm:$0xff] %v790
    %855 = vst [vmem:[#allocation2 + $0xa48] sm:$0xff] %v791
    %856 = vst [vmem:[#allocation2 + $0xa90] sm:$0xff] %v792
    %857 = vst [vmem:[#allocation2 + $0xad8] sm:$0xff] %v793
    %858 = vst [vmem:[#allocation2 + $0xb20] sm:$0xff] %v794
    %859 = vst [vmem:[#allocation2 + $0xb68] sm:$0xff] %v795
    %860 = vst [vmem:[#allocation2 + $0xbb0] sm:$0xff] %v796
    %861 = vst [vmem:[#allocation2 + $0xbf8] sm:$0xff] %v797
    %862 = vst [vmem:[#allocation2 + $0xc40] sm:$0xff] %v798
    %863 = vst [vmem:[#allocation2 + $0xc88] sm:$0xff] %v799
    %864 = vst [vmem:[#allocation2 + $0xcd0] sm:$0xff] %v800
    %865 = vst [vmem:[#allocation2 + $0xd18] sm:$0xff] %v801
    %866 = vst [vmem:[#allocation2 + $0xd60] sm:$0xff] %v802
    %867 = vst [vmem:[#allocation2 + $0xda8] sm:$0xff] %v803
    %868 = vst [vmem:[#allocation2 + $0xdf0] sm:$0xff] %v804
    %869 = vst [vmem:[#allocation2 + $0xe38] sm:$0xff] %v805
    %870 = vst [vmem:[#allocation2 + $0xe80] sm:$0xff] %v806
    %871 = vst [vmem:[#allocation2 + $0xec8] sm:$0xff] %v807
    %872 = vst [vmem:[#allocation2 + $0xf10] sm:$0xff] %v808
    %873 = vst [vmem:[#allocation2 + $0xf58] sm:$0xff] %v809
    %874 = vst [vmem:[#allocation2 + $0xfa0] sm:$0xff] %v810
    %875 = vst [vmem:[#allocation2 + $0xfe8] sm:$0xff] %v811
    %876 = vst [vmem:[#allocation2 + $0x1030] sm:$0xff] %v812
    %877 = vst [vmem:[#allocation2 + $0x1078] sm:$0xff] %v813
    %878 = vst [vmem:[#allocation2 + $0x10c0] sm:$0xff] %v814
    %879 = vst [vmem:[#allocation2 + $0x1108] sm:$0xff] %v815
    %880 = vst [vmem:[#allocation2 + $0x1150] sm:$0xff] %v816
    %881 = vst [vmem:[#allocation2 + $0x1198] sm:$0xff] %v817
    %882 = vst [vmem:[#allocation2 + $0x11e0] sm:$0xff] %v818
    %s883 = scalar_lea.vmem [#allocation5], 48
    %v884 = vld [vmem:[%s883] sm:$0xff]
    %v885 = vld [vmem:[%s883 + $0x8] sm:$0xff]
    %v886 = vld [vmem:[%s883 + $0x18] sm:$0xff]
    %v887 = vld [vmem:[%s883 + $0x20] sm:$0xff]
    %v888 = vld [vmem:[%s883 + $0x30] sm:$0xff]
    %v889 = vld [vmem:[%s883 + $0x38] sm:$0xff]
    %v890 = vld [vmem:[%s883 + $0x48] sm:$0xff]
    %v891 = vld [vmem:[%s883 + $0x50] sm:$0xff]
    %v892 = vld [vmem:[%s883 + $0x60] sm:$0xff]
    %v893 = vld [vmem:[%s883 + $0x68] sm:$0xff]
    %v894 = vld [vmem:[%s883 + $0x78] sm:$0xff]
    %v895 = vld [vmem:[%s883 + $0x80] sm:$0xff]
    %v896 = vld [vmem:[%s883 + $0x90] sm:$0xff]
    %v897 = vld [vmem:[%s883 + $0x98] sm:$0xff]
    %v898 = vld [vmem:[%s883 + $0xa8] sm:$0xff]
    %v899 = vld [vmem:[%s883 + $0xb0] sm:$0xff]
    %v900 = vld [vmem:[%s883 + $0xc0] sm:$0xff]
    %v901 = vld [vmem:[%s883 + $0xc8] sm:$0xff]
    %v902 = vld [vmem:[%s883 + $0xd8] sm:$0xff]
    %v903 = vld [vmem:[%s883 + $0xe0] sm:$0xff]
    %v904 = vld [vmem:[%s883 + $0xf0] sm:$0xff]
    %v905 = vld [vmem:[%s883 + $0xf8] sm:$0xff]
    %v906 = vld [vmem:[%s883 + $0x108] sm:$0xff]
    %v907 = vld [vmem:[%s883 + $0x110] sm:$0xff]
    %v908 = vld [vmem:[%s883 + $0x120] sm:$0xff]
    %v909 = vld [vmem:[%s883 + $0x128] sm:$0xff]
    %v910 = vld [vmem:[%s883 + $0x138] sm:$0xff]
    %v911 = vld [vmem:[%s883 + $0x140] sm:$0xff]
    %v912 = vld [vmem:[%s883 + $0x150] sm:$0xff]
    %v913 = vld [vmem:[%s883 + $0x158] sm:$0xff]
    %v914 = vld [vmem:[%s883 + $0x168] sm:$0xff]
    %v915 = vld [vmem:[%s883 + $0x170] sm:$0xff]
    %v916 = vld [vmem:[%s883 + $0x1b0] sm:$0xff]
    %v917 = vld [vmem:[%s883 + $0x1b8] sm:$0xff]
    %v918 = vld [vmem:[%s883 + $0x1c8] sm:$0xff]
    %v919 = vld [vmem:[%s883 + $0x1d0] sm:$0xff]
    %v920 = vld [vmem:[%s883 + $0x1e0] sm:$0xff]
    %v921 = vld [vmem:[%s883 + $0x1e8] sm:$0xff]
    %v922 = vld [vmem:[%s883 + $0x1f8] sm:$0xff]
    %v923 = vld [vmem:[%s883 + $0x200] sm:$0xff]
    %v924 = vld [vmem:[%s883 + $0x210] sm:$0xff]
    %v925 = vld [vmem:[%s883 + $0x218] sm:$0xff]
    %v926 = vld [vmem:[%s883 + $0x228] sm:$0xff]
    %v927 = vld [vmem:[%s883 + $0x230] sm:$0xff]
    %v928 = vld [vmem:[%s883 + $0x240] sm:$0xff]
    %v929 = vld [vmem:[%s883 + $0x248] sm:$0xff]
    %v930 = vld [vmem:[%s883 + $0x258] sm:$0xff]
    %v931 = vld [vmem:[%s883 + $0x260] sm:$0xff]
    %v932 = vld [vmem:[%s883 + $0x270] sm:$0xff]
    %v933 = vld [vmem:[%s883 + $0x278] sm:$0xff]
    %v934 = vld [vmem:[%s883 + $0x288] sm:$0xff]
    %v935 = vld [vmem:[%s883 + $0x290] sm:$0xff]
    %v936 = vld [vmem:[%s883 + $0x2a0] sm:$0xff]
    %v937 = vld [vmem:[%s883 + $0x2a8] sm:$0xff]
    %v938 = vld [vmem:[%s883 + $0x2b8] sm:$0xff]
    %v939 = vld [vmem:[%s883 + $0x2c0] sm:$0xff]
    %v940 = vld [vmem:[%s883 + $0x2d0] sm:$0xff]
    %v941 = vld [vmem:[%s883 + $0x2d8] sm:$0xff]
    %v942 = vld [vmem:[%s883 + $0x2e8] sm:$0xff]
    %v943 = vld [vmem:[%s883 + $0x2f0] sm:$0xff]
    %v944 = vld [vmem:[%s883 + $0x300] sm:$0xff]
    %v945 = vld [vmem:[%s883 + $0x308] sm:$0xff]
    %v946 = vld [vmem:[%s883 + $0x318] sm:$0xff]
    %v947 = vld [vmem:[%s883 + $0x320] sm:$0xff]
    %948 = vst [vmem:[#allocation2 + $0x30] sm:$0xff] %v884
    %949 = vst [vmem:[#allocation2 + $0x78] sm:$0xff] %v885
    %950 = vst [vmem:[#allocation2 + $0xc0] sm:$0xff] %v886
    %951 = vst [vmem:[#allocation2 + $0x108] sm:$0xff] %v887
    %952 = vst [vmem:[#allocation2 + $0x150] sm:$0xff] %v888
    %953 = vst [vmem:[#allocation2 + $0x198] sm:$0xff] %v889
    %954 = vst [vmem:[#allocation2 + $0x1e0] sm:$0xff] %v890
    %955 = vst [vmem:[#allocation2 + $0x228] sm:$0xff] %v891
    %956 = vst [vmem:[#allocation2 + $0x270] sm:$0xff] %v892
    %957 = vst [vmem:[#allocation2 + $0x2b8] sm:$0xff] %v893
    %958 = vst [vmem:[#allocation2 + $0x300] sm:$0xff] %v894
    %959 = vst [vmem:[#allocation2 + $0x348] sm:$0xff] %v895
    %960 = vst [vmem:[#allocation2 + $0x390] sm:$0xff] %v896
    %961 = vst [vmem:[#allocation2 + $0x3d8] sm:$0xff] %v897
    %962 = vst [vmem:[#allocation2 + $0x420] sm:$0xff] %v898
    %963 = vst [vmem:[#allocation2 + $0x468] sm:$0xff] %v899
    %964 = vst [vmem:[#allocation2 + $0x4b0] sm:$0xff] %v900
    %965 = vst [vmem:[#allocation2 + $0x4f8] sm:$0xff] %v901
    %966 = vst [vmem:[#allocation2 + $0x540] sm:$0xff] %v902
    %967 = vst [vmem:[#allocation2 + $0x588] sm:$0xff] %v903
    %968 = vst [vmem:[#allocation2 + $0x5d0] sm:$0xff] %v904
    %969 = vst [vmem:[#allocation2 + $0x618] sm:$0xff] %v905
    %970 = vst [vmem:[#allocation2 + $0x660] sm:$0xff] %v906
    %971 = vst [vmem:[#allocation2 + $0x6a8] sm:$0xff] %v907
    %972 = vst [vmem:[#allocation2 + $0x6f0] sm:$0xff] %v908
    %973 = vst [vmem:[#allocation2 + $0x738] sm:$0xff] %v909
    %974 = vst [vmem:[#allocation2 + $0x780] sm:$0xff] %v910
    %975 = vst [vmem:[#allocation2 + $0x7c8] sm:$0xff] %v911
    %976 = vst [vmem:[#allocation2 + $0x810] sm:$0xff] %v912
    %977 = vst [vmem:[#allocation2 + $0x858] sm:$0xff] %v913
    %978 = vst [vmem:[#allocation2 + $0x8a0] sm:$0xff] %v914
    %979 = vst [vmem:[#allocation2 + $0x8e8] sm:$0xff] %v915
    %980 = vst [vmem:[#allocation2 + $0x930] sm:$0xff] %v916
    %981 = vst [vmem:[#allocation2 + $0x978] sm:$0xff] %v917
    %982 = vst [vmem:[#allocation2 + $0x9c0] sm:$0xff] %v918
    %983 = vst [vmem:[#allocation2 + $0xa08] sm:$0xff] %v919
    %984 = vst [vmem:[#allocation2 + $0xa50] sm:$0xff] %v920
    %985 = vst [vmem:[#allocation2 + $0xa98] sm:$0xff] %v921
    %986 = vst [vmem:[#allocation2 + $0xae0] sm:$0xff] %v922
    %987 = vst [vmem:[#allocation2 + $0xb28] sm:$0xff] %v923
    %988 = vst [vmem:[#allocation2 + $0xb70] sm:$0xff] %v924
    %989 = vst [vmem:[#allocation2 + $0xbb8] sm:$0xff] %v925
    %990 = vst [vmem:[#allocation2 + $0xc00] sm:$0xff] %v926
    %991 = vst [vmem:[#allocation2 + $0xc48] sm:$0xff] %v927
    %992 = vst [vmem:[#allocation2 + $0xc90] sm:$0xff] %v928
    %993 = vst [vmem:[#allocation2 + $0xcd8] sm:$0xff] %v929
    %994 = vst [vmem:[#allocation2 + $0xd20] sm:$0xff] %v930
    %995 = vst [vmem:[#allocation2 + $0xd68] sm:$0xff] %v931
    %996 = vst [vmem:[#allocation2 + $0xdb0] sm:$0xff] %v932
    %997 = vst [vmem:[#allocation2 + $0xdf8] sm:$0xff] %v933
    %998 = vst [vmem:[#allocation2 + $0xe40] sm:$0xff] %v934
    %999 = vst [vmem:[#allocation2 + $0xe88] sm:$0xff] %v935
    %1000 = vst [vmem:[#allocation2 + $0xed0] sm:$0xff] %v936
    %1001 = vst [vmem:[#allocation2 + $0xf18] sm:$0xff] %v937
    %1002 = vst [vmem:[#allocation2 + $0xf60] sm:$0xff] %v938
    %1003 = vst [vmem:[#allocation2 + $0xfa8] sm:$0xff] %v939
    %1004 = vst [vmem:[#allocation2 + $0xff0] sm:$0xff] %v940
    %1005 = vst [vmem:[#allocation2 + $0x1038] sm:$0xff] %v941
    %1006 = vst [vmem:[#allocation2 + $0x1080] sm:$0xff] %v942
    %1007 = vst [vmem:[#allocation2 + $0x10c8] sm:$0xff] %v943
    %1008 = vst [vmem:[#allocation2 + $0x1110] sm:$0xff] %v944
    %1009 = vst [vmem:[#allocation2 + $0x1158] sm:$0xff] %v945
    %1010 = vst [vmem:[#allocation2 + $0x11a0] sm:$0xff] %v946
    %1011 = vst [vmem:[#allocation2 + $0x11e8] sm:$0xff] %v947
    %v1012 = vld [vmem:[%s883 + $0x1] sm:$0xff]
    %v1013 = vld [vmem:[%s883 + $0x9] sm:$0xff]
    %v1014 = vld [vmem:[%s883 + $0x19] sm:$0xff]
    %v1015 = vld [vmem:[%s883 + $0x21] sm:$0xff]
    %v1016 = vld [vmem:[%s883 + $0x31] sm:$0xff]
    %v1017 = vld [vmem:[%s883 + $0x39] sm:$0xff]
    %v1018 = vld [vmem:[%s883 + $0x49] sm:$0xff]
    %v1019 = vld [vmem:[%s883 + $0x51] sm:$0xff]
    %v1020 = vld [vmem:[%s883 + $0x61] sm:$0xff]
    %v1021 = vld [vmem:[%s883 + $0x69] sm:$0xff]
    %v1022 = vld [vmem:[%s883 + $0x79] sm:$0xff]
    %v1023 = vld [vmem:[%s883 + $0x81] sm:$0xff]
    %v1024 = vld [vmem:[%s883 + $0x91] sm:$0xff]
    %v1025 = vld [vmem:[%s883 + $0x99] sm:$0xff]
    %v1026 = vld [vmem:[%s883 + $0xa9] sm:$0xff]
    %v1027 = vld [vmem:[%s883 + $0xb1] sm:$0xff]
    %v1028 = vld [vmem:[%s883 + $0xc1] sm:$0xff]
    %v1029 = vld [vmem:[%s883 + $0xc9] sm:$0xff]
    %v1030 = vld [vmem:[%s883 + $0xd9] sm:$0xff]
    %v1031 = vld [vmem:[%s883 + $0xe1] sm:$0xff]
    %v1032 = vld [vmem:[%s883 + $0xf1] sm:$0xff]
    %v1033 = vld [vmem:[%s883 + $0xf9] sm:$0xff]
    %v1034 = vld [vmem:[%s883 + $0x109] sm:$0xff]
    %v1035 = vld [vmem:[%s883 + $0x111] sm:$0xff]
    %v1036 = vld [vmem:[%s883 + $0x121] sm:$0xff]
    %v1037 = vld [vmem:[%s883 + $0x129] sm:$0xff]
    %v1038 = vld [vmem:[%s883 + $0x139] sm:$0xff]
    %v1039 = vld [vmem:[%s883 + $0x141] sm:$0xff]
    %v1040 = vld [vmem:[%s883 + $0x151] sm:$0xff]
    %v1041 = vld [vmem:[%s883 + $0x159] sm:$0xff]
    %v1042 = vld [vmem:[%s883 + $0x169] sm:$0xff]
    %v1043 = vld [vmem:[%s883 + $0x171] sm:$0xff]
    %v1044 = vld [vmem:[%s883 + $0x1b1] sm:$0xff]
    %v1045 = vld [vmem:[%s883 + $0x1b9] sm:$0xff]
    %v1046 = vld [vmem:[%s883 + $0x1c9] sm:$0xff]
    %v1047 = vld [vmem:[%s883 + $0x1d1] sm:$0xff]
    %v1048 = vld [vmem:[%s883 + $0x1e1] sm:$0xff]
    %v1049 = vld [vmem:[%s883 + $0x1e9] sm:$0xff]
    %v1050 = vld [vmem:[%s883 + $0x1f9] sm:$0xff]
    %v1051 = vld [vmem:[%s883 + $0x201] sm:$0xff]
    %v1052 = vld [vmem:[%s883 + $0x211] sm:$0xff]
    %v1053 = vld [vmem:[%s883 + $0x219] sm:$0xff]
    %v1054 = vld [vmem:[%s883 + $0x229] sm:$0xff]
    %v1055 = vld [vmem:[%s883 + $0x231] sm:$0xff]
    %v1056 = vld [vmem:[%s883 + $0x241] sm:$0xff]
    %v1057 = vld [vmem:[%s883 + $0x249] sm:$0xff]
    %v1058 = vld [vmem:[%s883 + $0x259] sm:$0xff]
    %v1059 = vld [vmem:[%s883 + $0x261] sm:$0xff]
    %v1060 = vld [vmem:[%s883 + $0x271] sm:$0xff]
    %v1061 = vld [vmem:[%s883 + $0x279] sm:$0xff]
    %v1062 = vld [vmem:[%s883 + $0x289] sm:$0xff]
    %v1063 = vld [vmem:[%s883 + $0x291] sm:$0xff]
    %v1064 = vld [vmem:[%s883 + $0x2a1] sm:$0xff]
    %v1065 = vld [vmem:[%s883 + $0x2a9] sm:$0xff]
    %v1066 = vld [vmem:[%s883 + $0x2b9] sm:$0xff]
    %v1067 = vld [vmem:[%s883 + $0x2c1] sm:$0xff]
    %v1068 = vld [vmem:[%s883 + $0x2d1] sm:$0xff]
    %v1069 = vld [vmem:[%s883 + $0x2d9] sm:$0xff]
    %v1070 = vld [vmem:[%s883 + $0x2e9] sm:$0xff]
    %v1071 = vld [vmem:[%s883 + $0x2f1] sm:$0xff]
    %v1072 = vld [vmem:[%s883 + $0x301] sm:$0xff]
    %v1073 = vld [vmem:[%s883 + $0x309] sm:$0xff]
    %v1074 = vld [vmem:[%s883 + $0x319] sm:$0xff]
    %v1075 = vld [vmem:[%s883 + $0x321] sm:$0xff]
    %1076 = vst [vmem:[#allocation2 + $0x38] sm:$0xff] %v1012
    %1077 = vst [vmem:[#allocation2 + $0x80] sm:$0xff] %v1013
    %1078 = vst [vmem:[#allocation2 + $0xc8] sm:$0xff] %v1014
    %1079 = vst [vmem:[#allocation2 + $0x110] sm:$0xff] %v1015
    %1080 = vst [vmem:[#allocation2 + $0x158] sm:$0xff] %v1016
    %1081 = vst [vmem:[#allocation2 + $0x1a0] sm:$0xff] %v1017
    %1082 = vst [vmem:[#allocation2 + $0x1e8] sm:$0xff] %v1018
    %1083 = vst [vmem:[#allocation2 + $0x230] sm:$0xff] %v1019
    %1084 = vst [vmem:[#allocation2 + $0x278] sm:$0xff] %v1020
    %1085 = vst [vmem:[#allocation2 + $0x2c0] sm:$0xff] %v1021
    %1086 = vst [vmem:[#allocation2 + $0x308] sm:$0xff] %v1022
    %1087 = vst [vmem:[#allocation2 + $0x350] sm:$0xff] %v1023
    %1088 = vst [vmem:[#allocation2 + $0x398] sm:$0xff] %v1024
    %1089 = vst [vmem:[#allocation2 + $0x3e0] sm:$0xff] %v1025
    %1090 = vst [vmem:[#allocation2 + $0x428] sm:$0xff] %v1026
    %1091 = vst [vmem:[#allocation2 + $0x470] sm:$0xff] %v1027
    %1092 = vst [vmem:[#allocation2 + $0x4b8] sm:$0xff] %v1028
    %1093 = vst [vmem:[#allocation2 + $0x500] sm:$0xff] %v1029
    %1094 = vst [vmem:[#allocation2 + $0x548] sm:$0xff] %v1030
    %1095 = vst [vmem:[#allocation2 + $0x590] sm:$0xff] %v1031
    %1096 = vst [vmem:[#allocation2 + $0x5d8] sm:$0xff] %v1032
    %1097 = vst [vmem:[#allocation2 + $0x620] sm:$0xff] %v1033
    %1098 = vst [vmem:[#allocation2 + $0x668] sm:$0xff] %v1034
    %1099 = vst [vmem:[#allocation2 + $0x6b0] sm:$0xff] %v1035
    %1100 = vst [vmem:[#allocation2 + $0x6f8] sm:$0xff] %v1036
    %1101 = vst [vmem:[#allocation2 + $0x740] sm:$0xff] %v1037
    %1102 = vst [vmem:[#allocation2 + $0x788] sm:$0xff] %v1038
    %1103 = vst [vmem:[#allocation2 + $0x7d0] sm:$0xff] %v1039
    %1104 = vst [vmem:[#allocation2 + $0x818] sm:$0xff] %v1040
    %1105 = vst [vmem:[#allocation2 + $0x860] sm:$0xff] %v1041
    %1106 = vst [vmem:[#allocation2 + $0x8a8] sm:$0xff] %v1042
    %1107 = vst [vmem:[#allocation2 + $0x8f0] sm:$0xff] %v1043
    %1108 = vst [vmem:[#allocation2 + $0x938] sm:$0xff] %v1044
    %1109 = vst [vmem:[#allocation2 + $0x980] sm:$0xff] %v1045
    %1110 = vst [vmem:[#allocation2 + $0x9c8] sm:$0xff] %v1046
    %1111 = vst [vmem:[#allocation2 + $0xa10] sm:$0xff] %v1047
    %1112 = vst [vmem:[#allocation2 + $0xa58] sm:$0xff] %v1048
    %1113 = vst [vmem:[#allocation2 + $0xaa0] sm:$0xff] %v1049
    %1114 = vst [vmem:[#allocation2 + $0xae8] sm:$0xff] %v1050
    %1115 = vst [vmem:[#allocation2 + $0xb30] sm:$0xff] %v1051
    %1116 = vst [vmem:[#allocation2 + $0xb78] sm:$0xff] %v1052
    %1117 = vst [vmem:[#allocation2 + $0xbc0] sm:$0xff] %v1053
    %1118 = vst [vmem:[#allocation2 + $0xc08] sm:$0xff] %v1054
    %1119 = vst [vmem:[#allocation2 + $0xc50] sm:$0xff] %v1055
    %1120 = vst [vmem:[#allocation2 + $0xc98] sm:$0xff] %v1056
    %1121 = vst [vmem:[#allocation2 + $0xce0] sm:$0xff] %v1057
    %1122 = vst [vmem:[#allocation2 + $0xd28] sm:$0xff] %v1058
    %1123 = vst [vmem:[#allocation2 + $0xd70] sm:$0xff] %v1059
    %1124 = vst [vmem:[#allocation2 + $0xdb8] sm:$0xff] %v1060
    %1125 = vst [vmem:[#allocation2 + $0xe00] sm:$0xff] %v1061
    %1126 = vst [vmem:[#allocation2 + $0xe48] sm:$0xff] %v1062
    %1127 = vst [vmem:[#allocation2 + $0xe90] sm:$0xff] %v1063
    %1128 = vst [vmem:[#allocation2 + $0xed8] sm:$0xff] %v1064
    %1129 = vst [vmem:[#allocation2 + $0xf20] sm:$0xff] %v1065
    %1130 = vst [vmem:[#allocation2 + $0xf68] sm:$0xff] %v1066
    %1131 = vst [vmem:[#allocation2 + $0xfb0] sm:$0xff] %v1067
    %1132 = vst [vmem:[#allocation2 + $0xff8] sm:$0xff] %v1068
    %1133 = vst [vmem:[#allocation2 + $0x1040] sm:$0xff] %v1069
    %1134 = vst [vmem:[#allocation2 + $0x1088] sm:$0xff] %v1070
    %1135 = vst [vmem:[#allocation2 + $0x10d0] sm:$0xff] %v1071
    %1136 = vst [vmem:[#allocation2 + $0x1118] sm:$0xff] %v1072
    %1137 = vst [vmem:[#allocation2 + $0x1160] sm:$0xff] %v1073
    %1138 = vst [vmem:[#allocation2 + $0x11a8] sm:$0xff] %v1074
    %1139 = vst [vmem:[#allocation2 + $0x11f0] sm:$0xff] %v1075
    %v1140 = vld [vmem:[%s883 + $0x2] sm:$0xff]
    %v1141 = vld [vmem:[%s883 + $0xa] sm:$0xff]
    %v1142 = vld [vmem:[%s883 + $0x1a] sm:$0xff]
    %v1143 = vld [vmem:[%s883 + $0x22] sm:$0xff]
    %v1144 = vld [vmem:[%s883 + $0x32] sm:$0xff]
    %v1145 = vld [vmem:[%s883 + $0x3a] sm:$0xff]
    %v1146 = vld [vmem:[%s883 + $0x4a] sm:$0xff]
    %v1147 = vld [vmem:[%s883 + $0x52] sm:$0xff]
    %v1148 = vld [vmem:[%s883 + $0x62] sm:$0xff]
    %v1149 = vld [vmem:[%s883 + $0x6a] sm:$0xff]
    %v1150 = vld [vmem:[%s883 + $0x7a] sm:$0xff]
    %v1151 = vld [vmem:[%s883 + $0x82] sm:$0xff]
    %v1152 = vld [vmem:[%s883 + $0x92] sm:$0xff]
    %v1153 = vld [vmem:[%s883 + $0x9a] sm:$0xff]
    %v1154 = vld [vmem:[%s883 + $0xaa] sm:$0xff]
    %v1155 = vld [vmem:[%s883 + $0xb2] sm:$0xff]
    %v1156 = vld [vmem:[%s883 + $0xc2] sm:$0xff]
    %v1157 = vld [vmem:[%s883 + $0xca] sm:$0xff]
    %v1158 = vld [vmem:[%s883 + $0xda] sm:$0xff]
    %v1159 = vld [vmem:[%s883 + $0xe2] sm:$0xff]
    %v1160 = vld [vmem:[%s883 + $0xf2] sm:$0xff]
    %v1161 = vld [vmem:[%s883 + $0xfa] sm:$0xff]
    %v1162 = vld [vmem:[%s883 + $0x10a] sm:$0xff]
    %v1163 = vld [vmem:[%s883 + $0x112] sm:$0xff]
    %v1164 = vld [vmem:[%s883 + $0x122] sm:$0xff]
    %v1165 = vld [vmem:[%s883 + $0x12a] sm:$0xff]
    %v1166 = vld [vmem:[%s883 + $0x13a] sm:$0xff]
    %v1167 = vld [vmem:[%s883 + $0x142] sm:$0xff]
    %v1168 = vld [vmem:[%s883 + $0x152] sm:$0xff]
    %v1169 = vld [vmem:[%s883 + $0x15a] sm:$0xff]
    %v1170 = vld [vmem:[%s883 + $0x16a] sm:$0xff]
    %v1171 = vld [vmem:[%s883 + $0x172] sm:$0xff]
    %v1172 = vld [vmem:[%s883 + $0x1b2] sm:$0xff]
    %v1173 = vld [vmem:[%s883 + $0x1ba] sm:$0xff]
    %v1174 = vld [vmem:[%s883 + $0x1ca] sm:$0xff]
    %v1175 = vld [vmem:[%s883 + $0x1d2] sm:$0xff]
    %v1176 = vld [vmem:[%s883 + $0x1e2] sm:$0xff]
    %v1177 = vld [vmem:[%s883 + $0x1ea] sm:$0xff]
    %v1178 = vld [vmem:[%s883 + $0x1fa] sm:$0xff]
    %v1179 = vld [vmem:[%s883 + $0x202] sm:$0xff]
    %v1180 = vld [vmem:[%s883 + $0x212] sm:$0xff]
    %v1181 = vld [vmem:[%s883 + $0x21a] sm:$0xff]
    %v1182 = vld [vmem:[%s883 + $0x22a] sm:$0xff]
    %v1183 = vld [vmem:[%s883 + $0x232] sm:$0xff]
    %v1184 = vld [vmem:[%s883 + $0x242] sm:$0xff]
    %v1185 = vld [vmem:[%s883 + $0x24a] sm:$0xff]
    %v1186 = vld [vmem:[%s883 + $0x25a] sm:$0xff]
    %v1187 = vld [vmem:[%s883 + $0x262] sm:$0xff]
    %v1188 = vld [vmem:[%s883 + $0x272] sm:$0xff]
    %v1189 = vld [vmem:[%s883 + $0x27a] sm:$0xff]
    %v1190 = vld [vmem:[%s883 + $0x28a] sm:$0xff]
    %v1191 = vld [vmem:[%s883 + $0x292] sm:$0xff]
    %v1192 = vld [vmem:[%s883 + $0x2a2] sm:$0xff]
    %v1193 = vld [vmem:[%s883 + $0x2aa] sm:$0xff]
    %v1194 = vld [vmem:[%s883 + $0x2ba] sm:$0xff]
    %v1195 = vld [vmem:[%s883 + $0x2c2] sm:$0xff]
    %v1196 = vld [vmem:[%s883 + $0x2d2] sm:$0xff]
    %v1197 = vld [vmem:[%s883 + $0x2da] sm:$0xff]
    %v1198 = vld [vmem:[%s883 + $0x2ea] sm:$0xff]
    %v1199 = vld [vmem:[%s883 + $0x2f2] sm:$0xff]
    %v1200 = vld [vmem:[%s883 + $0x302] sm:$0xff]
    %v1201 = vld [vmem:[%s883 + $0x30a] sm:$0xff]
    %v1202 = vld [vmem:[%s883 + $0x31a] sm:$0xff]
    %v1203 = vld [vmem:[%s883 + $0x322] sm:$0xff]
    %1204 = vst [vmem:[#allocation2 + $0x40] sm:$0xff] %v1140
    %1205 = vst [vmem:[#allocation2 + $0x88] sm:$0xff] %v1141
    %1206 = vst [vmem:[#allocation2 + $0xd0] sm:$0xff] %v1142
    %1207 = vst [vmem:[#allocation2 + $0x118] sm:$0xff] %v1143
    %1208 = vst [vmem:[#allocation2 + $0x160] sm:$0xff] %v1144
    %1209 = vst [vmem:[#allocation2 + $0x1a8] sm:$0xff] %v1145
    %1210 = vst [vmem:[#allocation2 + $0x1f0] sm:$0xff] %v1146
    %1211 = vst [vmem:[#allocation2 + $0x238] sm:$0xff] %v1147
    %1212 = vst [vmem:[#allocation2 + $0x280] sm:$0xff] %v1148
    %1213 = vst [vmem:[#allocation2 + $0x2c8] sm:$0xff] %v1149
    %1214 = vst [vmem:[#allocation2 + $0x310] sm:$0xff] %v1150
    %1215 = vst [vmem:[#allocation2 + $0x358] sm:$0xff] %v1151
    %1216 = vst [vmem:[#allocation2 + $0x3a0] sm:$0xff] %v1152
    %1217 = vst [vmem:[#allocation2 + $0x3e8] sm:$0xff] %v1153
    %1218 = vst [vmem:[#allocation2 + $0x430] sm:$0xff] %v1154
    %1219 = vst [vmem:[#allocation2 + $0x478] sm:$0xff] %v1155
    %1220 = vst [vmem:[#allocation2 + $0x4c0] sm:$0xff] %v1156
    %1221 = vst [vmem:[#allocation2 + $0x508] sm:$0xff] %v1157
    %1222 = vst [vmem:[#allocation2 + $0x550] sm:$0xff] %v1158
    %1223 = vst [vmem:[#allocation2 + $0x598] sm:$0xff] %v1159
    %1224 = vst [vmem:[#allocation2 + $0x5e0] sm:$0xff] %v1160
    %1225 = vst [vmem:[#allocation2 + $0x628] sm:$0xff] %v1161
    %1226 = vst [vmem:[#allocation2 + $0x670] sm:$0xff] %v1162
    %1227 = vst [vmem:[#allocation2 + $0x6b8] sm:$0xff] %v1163
    %1228 = vst [vmem:[#allocation2 + $0x700] sm:$0xff] %v1164
    %1229 = vst [vmem:[#allocation2 + $0x748] sm:$0xff] %v1165
    %1230 = vst [vmem:[#allocation2 + $0x790] sm:$0xff] %v1166
    %1231 = vst [vmem:[#allocation2 + $0x7d8] sm:$0xff] %v1167
    %1232 = vst [vmem:[#allocation2 + $0x820] sm:$0xff] %v1168
    %1233 = vst [vmem:[#allocation2 + $0x868] sm:$0xff] %v1169
    %1234 = vst [vmem:[#allocation2 + $0x8b0] sm:$0xff] %v1170
    %1235 = vst [vmem:[#allocation2 + $0x8f8] sm:$0xff] %v1171
    %1236 = vst [vmem:[#allocation2 + $0x940] sm:$0xff] %v1172
    %1237 = vst [vmem:[#allocation2 + $0x988] sm:$0xff] %v1173
    %1238 = vst [vmem:[#allocation2 + $0x9d0] sm:$0xff] %v1174
    %1239 = vst [vmem:[#allocation2 + $0xa18] sm:$0xff] %v1175
    %1240 = vst [vmem:[#allocation2 + $0xa60] sm:$0xff] %v1176
    %1241 = vst [vmem:[#allocation2 + $0xaa8] sm:$0xff] %v1177
    %1242 = vst [vmem:[#allocation2 + $0xaf0] sm:$0xff] %v1178
    %1243 = vst [vmem:[#allocation2 + $0xb38] sm:$0xff] %v1179
    %1244 = vst [vmem:[#allocation2 + $0xb80] sm:$0xff] %v1180
    %1245 = vst [vmem:[#allocation2 + $0xbc8] sm:$0xff] %v1181
    %1246 = vst [vmem:[#allocation2 + $0xc10] sm:$0xff] %v1182
    %1247 = vst [vmem:[#allocation2 + $0xc58] sm:$0xff] %v1183
    %1248 = vst [vmem:[#allocation2 + $0xca0] sm:$0xff] %v1184
    %1249 = vst [vmem:[#allocation2 + $0xce8] sm:$0xff] %v1185
    %1250 = vst [vmem:[#allocation2 + $0xd30] sm:$0xff] %v1186
    %1251 = vst [vmem:[#allocation2 + $0xd78] sm:$0xff] %v1187
    %1252 = vst [vmem:[#allocation2 + $0xdc0] sm:$0xff] %v1188
    %1253 = vst [vmem:[#allocation2 + $0xe08] sm:$0xff] %v1189
    %1254 = vst [vmem:[#allocation2 + $0xe50] sm:$0xff] %v1190
    %1255 = vst [vmem:[#allocation2 + $0xe98] sm:$0xff] %v1191
    %1256 = vst [vmem:[#allocation2 + $0xee0] sm:$0xff] %v1192
    %1257 = vst [vmem:[#allocation2 + $0xf28] sm:$0xff] %v1193
    %1258 = vst [vmem:[#allocation2 + $0xf70] sm:$0xff] %v1194
    %1259 = vst [vmem:[#allocation2 + $0xfb8] sm:$0xff] %v1195
    %1260 = vst [vmem:[#allocation2 + $0x1000] sm:$0xff] %v1196
    %1261 = vst [vmem:[#allocation2 + $0x1048] sm:$0xff] %v1197
    %1262 = vst [vmem:[#allocation2 + $0x1090] sm:$0xff] %v1198
    %1263 = vst [vmem:[#allocation2 + $0x10d8] sm:$0xff] %v1199
    %1264 = vst [vmem:[#allocation2 + $0x1120] sm:$0xff] %v1200
    %1265 = vst [vmem:[#allocation2 + $0x1168] sm:$0xff] %v1201
    %1266 = vst [vmem:[#allocation2 + $0x11b0] sm:$0xff] %v1202
    %1267 = vst [vmem:[#allocation2 + $0x11f8] sm:$0xff] %v1203
    %v1268 = vld [vmem:[#allocation2] sm:$0xff]
    %v1269 = vld [vmem:[#allocation2 + $0x8] sm:$0xff]
    %v1270 = vld [vmem:[#allocation2 + $0x10] sm:$0xff]
    %v1271 = vld [vmem:[#allocation2 + $0x18] sm:$0xff]
    %v1272 = vld [vmem:[#allocation2 + $0x20] sm:$0xff]
    %v1273 = vld [vmem:[#allocation2 + $0x28] sm:$0xff]
    %v1274 = vld [vmem:[#allocation2 + $0x30] sm:$0xff]
    %v1275 = vld [vmem:[#allocation2 + $0x38] sm:$0xff]
    %v1276 = vld [vmem:[#allocation2 + $0x40] sm:$0xff]
    %v1277 = vld [vmem:[#allocation2 + $0x48] sm:$0xff]
    %v1278 = vld [vmem:[#allocation2 + $0x50] sm:$0xff]
    %v1279 = vld [vmem:[#allocation2 + $0x58] sm:$0xff]
    %v1280 = vld [vmem:[#allocation2 + $0x60] sm:$0xff]
    %v1281 = vld [vmem:[#allocation2 + $0x68] sm:$0xff]
    %v1282 = vld [vmem:[#allocation2 + $0x70] sm:$0xff]
    %v1283 = vld [vmem:[#allocation2 + $0x78] sm:$0xff]
    %v1284 = vld [vmem:[#allocation2 + $0x80] sm:$0xff]
    %v1285 = vld [vmem:[#allocation2 + $0x88] sm:$0xff]
    %v1286 = vld [vmem:[#allocation2 + $0x90] sm:$0xff]
    %v1287 = vld [vmem:[#allocation2 + $0x98] sm:$0xff]
    %v1288 = vld [vmem:[#allocation2 + $0xa0] sm:$0xff]
    %v1289 = vld [vmem:[#allocation2 + $0xa8] sm:$0xff]
    %v1290 = vld [vmem:[#allocation2 + $0xb0] sm:$0xff]
    %v1291 = vld [vmem:[#allocation2 + $0xb8] sm:$0xff]
    %v1292 = vld [vmem:[#allocation2 + $0xc0] sm:$0xff]
    %v1293 = vld [vmem:[#allocation2 + $0xc8] sm:$0xff]
    %v1294 = vld [vmem:[#allocation2 + $0xd0] sm:$0xff]
    %v1295 = vld [vmem:[#allocation2 + $0xd8] sm:$0xff]
    %v1296 = vld [vmem:[#allocation2 + $0xe0] sm:$0xff]
    %v1297 = vld [vmem:[#allocation2 + $0xe8] sm:$0xff]
    %v1298 = vld [vmem:[#allocation2 + $0xf0] sm:$0xff]
    %v1299 = vld [vmem:[#allocation2 + $0xf8] sm:$0xff]
    %v1300 = vld [vmem:[#allocation2 + $0x100] sm:$0xff]
    %v1301 = vld [vmem:[#allocation2 + $0x108] sm:$0xff]
    %v1302 = vld [vmem:[#allocation2 + $0x110] sm:$0xff]
    %v1303 = vld [vmem:[#allocation2 + $0x118] sm:$0xff]
    %v1304 = vld [vmem:[#allocation2 + $0x120] sm:$0xff]
    %v1305 = vld [vmem:[#allocation2 + $0x128] sm:$0xff]
    %v1306 = vld [vmem:[#allocation2 + $0x130] sm:$0xff]
    %v1307 = vld [vmem:[#allocation2 + $0x138] sm:$0xff]
    %v1308 = vld [vmem:[#allocation2 + $0x140] sm:$0xff]
    %v1309 = vld [vmem:[#allocation2 + $0x148] sm:$0xff]
    %v1310 = vld [vmem:[#allocation2 + $0x150] sm:$0xff]
    %v1311 = vld [vmem:[#allocation2 + $0x158] sm:$0xff]
    %v1312 = vld [vmem:[#allocation2 + $0x160] sm:$0xff]
    %v1313 = vld [vmem:[#allocation2 + $0x168] sm:$0xff]
    %v1314 = vld [vmem:[#allocation2 + $0x170] sm:$0xff]
    %v1315 = vld [vmem:[#allocation2 + $0x178] sm:$0xff]
    %v1316 = vld [vmem:[#allocation2 + $0x180] sm:$0xff]
    %v1317 = vld [vmem:[#allocation2 + $0x188] sm:$0xff]
    %v1318 = vld [vmem:[#allocation2 + $0x190] sm:$0xff]
    %v1319 = vld [vmem:[#allocation2 + $0x198] sm:$0xff]
    %v1320 = vld [vmem:[#allocation2 + $0x1a0] sm:$0xff]
    %v1321 = vld [vmem:[#allocation2 + $0x1a8] sm:$0xff]
    %v1322 = vld [vmem:[#allocation2 + $0x1b0] sm:$0xff]
    %v1323 = vld [vmem:[#allocation2 + $0x1b8] sm:$0xff]
    %v1324 = vld [vmem:[#allocation2 + $0x1c0] sm:$0xff]
    %v1325 = vld [vmem:[#allocation2 + $0x1c8] sm:$0xff]
    %v1326 = vld [vmem:[#allocation2 + $0x1d0] sm:$0xff]
    %v1327 = vld [vmem:[#allocation2 + $0x1d8] sm:$0xff]
    %v1328 = vld [vmem:[#allocation2 + $0x1e0] sm:$0xff]
    %v1329 = vld [vmem:[#allocation2 + $0x1e8] sm:$0xff]
    %v1330 = vld [vmem:[#allocation2 + $0x1f0] sm:$0xff]
    %v1331 = vld [vmem:[#allocation2 + $0x1f8] sm:$0xff]
    %v1332 = vld [vmem:[#allocation2 + $0x200] sm:$0xff]
    %v1333 = vld [vmem:[#allocation2 + $0x208] sm:$0xff]
    %v1334 = vld [vmem:[#allocation2 + $0x210] sm:$0xff]
    %v1335 = vld [vmem:[#allocation2 + $0x218] sm:$0xff]
    %v1336 = vld [vmem:[#allocation2 + $0x220] sm:$0xff]
    %v1337 = vld [vmem:[#allocation2 + $0x228] sm:$0xff]
    %v1338 = vld [vmem:[#allocation2 + $0x230] sm:$0xff]
    %v1339 = vld [vmem:[#allocation2 + $0x238] sm:$0xff]
    %v1340 = vld [vmem:[#allocation2 + $0x240] sm:$0xff]
    %v1341 = vld [vmem:[#allocation2 + $0x248] sm:$0xff]
    %v1342 = vld [vmem:[#allocation2 + $0x250] sm:$0xff]
    %v1343 = vld [vmem:[#allocation2 + $0x258] sm:$0xff]
    %v1344 = vld [vmem:[#allocation2 + $0x260] sm:$0xff]
    %v1345 = vld [vmem:[#allocation2 + $0x268] sm:$0xff]
    %v1346 = vld [vmem:[#allocation2 + $0x270] sm:$0xff]
    %v1347 = vld [vmem:[#allocation2 + $0x278] sm:$0xff]
    %v1348 = vld [vmem:[#allocation2 + $0x280] sm:$0xff]
    %v1349 = vld [vmem:[#allocation2 + $0x288] sm:$0xff]
    %v1350 = vld [vmem:[#allocation2 + $0x290] sm:$0xff]
    %v1351 = vld [vmem:[#allocation2 + $0x298] sm:$0xff]
    %v1352 = vld [vmem:[#allocation2 + $0x2a0] sm:$0xff]
    %v1353 = vld [vmem:[#allocation2 + $0x2a8] sm:$0xff]
    %v1354 = vld [vmem:[#allocation2 + $0x2b0] sm:$0xff]
    %v1355 = vld [vmem:[#allocation2 + $0x2b8] sm:$0xff]
    %v1356 = vld [vmem:[#allocation2 + $0x2c0] sm:$0xff]
    %v1357 = vld [vmem:[#allocation2 + $0x2c8] sm:$0xff]
    %v1358 = vld [vmem:[#allocation2 + $0x2d0] sm:$0xff]
    %v1359 = vld [vmem:[#allocation2 + $0x2d8] sm:$0xff]
    %v1360 = vld [vmem:[#allocation2 + $0x2e0] sm:$0xff]
    %v1361 = vld [vmem:[#allocation2 + $0x2e8] sm:$0xff]
    %v1362 = vld [vmem:[#allocation2 + $0x2f0] sm:$0xff]
    %v1363 = vld [vmem:[#allocation2 + $0x2f8] sm:$0xff]
    %v1364 = vld [vmem:[#allocation2 + $0x300] sm:$0xff]
    %v1365 = vld [vmem:[#allocation2 + $0x308] sm:$0xff]
    %v1366 = vld [vmem:[#allocation2 + $0x310] sm:$0xff]
    %v1367 = vld [vmem:[#allocation2 + $0x318] sm:$0xff]
    %v1368 = vld [vmem:[#allocation2 + $0x320] sm:$0xff]
    %v1369 = vld [vmem:[#allocation2 + $0x328] sm:$0xff]
    %v1370 = vld [vmem:[#allocation2 + $0x330] sm:$0xff]
    %v1371 = vld [vmem:[#allocation2 + $0x338] sm:$0xff]
    %v1372 = vld [vmem:[#allocation2 + $0x340] sm:$0xff]
    %v1373 = vld [vmem:[#allocation2 + $0x348] sm:$0xff]
    %v1374 = vld [vmem:[#allocation2 + $0x350] sm:$0xff]
    %v1375 = vld [vmem:[#allocation2 + $0x358] sm:$0xff]
    %v1376 = vld [vmem:[#allocation2 + $0x360] sm:$0xff]
    %v1377 = vld [vmem:[#allocation2 + $0x368] sm:$0xff]
    %v1378 = vld [vmem:[#allocation2 + $0x370] sm:$0xff]
    %v1379 = vld [vmem:[#allocation2 + $0x378] sm:$0xff]
    %v1380 = vld [vmem:[#allocation2 + $0x380] sm:$0xff]
    %v1381 = vld [vmem:[#allocation2 + $0x388] sm:$0xff]
    %v1382 = vld [vmem:[#allocation2 + $0x390] sm:$0xff]
    %v1383 = vld [vmem:[#allocation2 + $0x398] sm:$0xff]
    %v1384 = vld [vmem:[#allocation2 + $0x3a0] sm:$0xff]
    %v1385 = vld [vmem:[#allocation2 + $0x3a8] sm:$0xff]
    %v1386 = vld [vmem:[#allocation2 + $0x3b0] sm:$0xff]
    %v1387 = vld [vmem:[#allocation2 + $0x3b8] sm:$0xff]
    %v1388 = vld [vmem:[#allocation2 + $0x3c0] sm:$0xff]
    %v1389 = vld [vmem:[#allocation2 + $0x3c8] sm:$0xff]
    %v1390 = vld [vmem:[#allocation2 + $0x3d0] sm:$0xff]
    %v1391 = vld [vmem:[#allocation2 + $0x3d8] sm:$0xff]
    %v1392 = vld [vmem:[#allocation2 + $0x3e0] sm:$0xff]
    %v1393 = vld [vmem:[#allocation2 + $0x3e8] sm:$0xff]
    %v1394 = vld [vmem:[#allocation2 + $0x3f0] sm:$0xff]
    %v1395 = vld [vmem:[#allocation2 + $0x3f8] sm:$0xff]
    %v1396 = vld [vmem:[#allocation2 + $0x400] sm:$0xff]
    %v1397 = vld [vmem:[#allocation2 + $0x408] sm:$0xff]
    %v1398 = vld [vmem:[#allocation2 + $0x410] sm:$0xff]
    %v1399 = vld [vmem:[#allocation2 + $0x418] sm:$0xff]
    %v1400 = vld [vmem:[#allocation2 + $0x420] sm:$0xff]
    %v1401 = vld [vmem:[#allocation2 + $0x428] sm:$0xff]
    %v1402 = vld [vmem:[#allocation2 + $0x430] sm:$0xff]
    %v1403 = vld [vmem:[#allocation2 + $0x438] sm:$0xff]
    %v1404 = vld [vmem:[#allocation2 + $0x440] sm:$0xff]
    %v1405 = vld [vmem:[#allocation2 + $0x448] sm:$0xff]
    %v1406 = vld [vmem:[#allocation2 + $0x450] sm:$0xff]
    %v1407 = vld [vmem:[#allocation2 + $0x458] sm:$0xff]
    %v1408 = vld [vmem:[#allocation2 + $0x460] sm:$0xff]
    %v1409 = vld [vmem:[#allocation2 + $0x468] sm:$0xff]
    %v1410 = vld [vmem:[#allocation2 + $0x470] sm:$0xff]
    %v1411 = vld [vmem:[#allocation2 + $0x478] sm:$0xff]
    %v1412 = vld [vmem:[#allocation2 + $0x480] sm:$0xff]
    %v1413 = vld [vmem:[#allocation2 + $0x488] sm:$0xff]
    %v1414 = vld [vmem:[#allocation2 + $0x490] sm:$0xff]
    %v1415 = vld [vmem:[#allocation2 + $0x498] sm:$0xff]
    %v1416 = vld [vmem:[#allocation2 + $0x4a0] sm:$0xff]
    %v1417 = vld [vmem:[#allocation2 + $0x4a8] sm:$0xff]
    %v1418 = vld [vmem:[#allocation2 + $0x4b0] sm:$0xff]
    %v1419 = vld [vmem:[#allocation2 + $0x4b8] sm:$0xff]
    %v1420 = vld [vmem:[#allocation2 + $0x4c0] sm:$0xff]
    %v1421 = vld [vmem:[#allocation2 + $0x4c8] sm:$0xff]
    %v1422 = vld [vmem:[#allocation2 + $0x4d0] sm:$0xff]
    %v1423 = vld [vmem:[#allocation2 + $0x4d8] sm:$0xff]
    %v1424 = vld [vmem:[#allocation2 + $0x4e0] sm:$0xff]
    %v1425 = vld [vmem:[#allocation2 + $0x4e8] sm:$0xff]
    %v1426 = vld [vmem:[#allocation2 + $0x4f0] sm:$0xff]
    %v1427 = vld [vmem:[#allocation2 + $0x4f8] sm:$0xff]
    %v1428 = vld [vmem:[#allocation2 + $0x500] sm:$0xff]
    %v1429 = vld [vmem:[#allocation2 + $0x508] sm:$0xff]
    %v1430 = vld [vmem:[#allocation2 + $0x510] sm:$0xff]
    %v1431 = vld [vmem:[#allocation2 + $0x518] sm:$0xff]
    %v1432 = vld [vmem:[#allocation2 + $0x520] sm:$0xff]
    %v1433 = vld [vmem:[#allocation2 + $0x528] sm:$0xff]
    %v1434 = vld [vmem:[#allocation2 + $0x530] sm:$0xff]
    %v1435 = vld [vmem:[#allocation2 + $0x538] sm:$0xff]
    %v1436 = vld [vmem:[#allocation2 + $0x540] sm:$0xff]
    %v1437 = vld [vmem:[#allocation2 + $0x548] sm:$0xff]
    %v1438 = vld [vmem:[#allocation2 + $0x550] sm:$0xff]
    %v1439 = vld [vmem:[#allocation2 + $0x558] sm:$0xff]
    %v1440 = vld [vmem:[#allocation2 + $0x560] sm:$0xff]
    %v1441 = vld [vmem:[#allocation2 + $0x568] sm:$0xff]
    %v1442 = vld [vmem:[#allocation2 + $0x570] sm:$0xff]
    %v1443 = vld [vmem:[#allocation2 + $0x578] sm:$0xff]
    %v1444 = vld [vmem:[#allocation2 + $0x580] sm:$0xff]
    %v1445 = vld [vmem:[#allocation2 + $0x588] sm:$0xff]
    %v1446 = vld [vmem:[#allocation2 + $0x590] sm:$0xff]
    %v1447 = vld [vmem:[#allocation2 + $0x598] sm:$0xff]
    %v1448 = vld [vmem:[#allocation2 + $0x5a0] sm:$0xff]
    %v1449 = vld [vmem:[#allocation2 + $0x5a8] sm:$0xff]
    %v1450 = vld [vmem:[#allocation2 + $0x5b0] sm:$0xff]
    %v1451 = vld [vmem:[#allocation2 + $0x5b8] sm:$0xff]
    %v1452 = vld [vmem:[#allocation2 + $0x5c0] sm:$0xff]
    %v1453 = vld [vmem:[#allocation2 + $0x5c8] sm:$0xff]
    %v1454 = vld [vmem:[#allocation2 + $0x5d0] sm:$0xff]
    %v1455 = vld [vmem:[#allocation2 + $0x5d8] sm:$0xff]
    %v1456 = vld [vmem:[#allocation2 + $0x5e0] sm:$0xff]
    %v1457 = vld [vmem:[#allocation2 + $0x5e8] sm:$0xff]
    %v1458 = vld [vmem:[#allocation2 + $0x5f0] sm:$0xff]
    %v1459 = vld [vmem:[#allocation2 + $0x5f8] sm:$0xff]
    %v1460 = vld [vmem:[#allocation2 + $0x600] sm:$0xff]
    %v1461 = vld [vmem:[#allocation2 + $0x608] sm:$0xff]
    %v1462 = vld [vmem:[#allocation2 + $0x610] sm:$0xff]
    %v1463 = vld [vmem:[#allocation2 + $0x618] sm:$0xff]
    %v1464 = vld [vmem:[#allocation2 + $0x620] sm:$0xff]
    %v1465 = vld [vmem:[#allocation2 + $0x628] sm:$0xff]
    %v1466 = vld [vmem:[#allocation2 + $0x630] sm:$0xff]
    %v1467 = vld [vmem:[#allocation2 + $0x638] sm:$0xff]
    %v1468 = vld [vmem:[#allocation2 + $0x640] sm:$0xff]
    %v1469 = vld [vmem:[#allocation2 + $0x648] sm:$0xff]
    %v1470 = vld [vmem:[#allocation2 + $0x650] sm:$0xff]
    %v1471 = vld [vmem:[#allocation2 + $0x658] sm:$0xff]
    %v1472 = vld [vmem:[#allocation2 + $0x660] sm:$0xff]
    %v1473 = vld [vmem:[#allocation2 + $0x668] sm:$0xff]
    %v1474 = vld [vmem:[#allocation2 + $0x670] sm:$0xff]
    %v1475 = vld [vmem:[#allocation2 + $0x678] sm:$0xff]
    %v1476 = vld [vmem:[#allocation2 + $0x680] sm:$0xff]
    %v1477 = vld [vmem:[#allocation2 + $0x688] sm:$0xff]
    %v1478 = vld [vmem:[#allocation2 + $0x690] sm:$0xff]
    %v1479 = vld [vmem:[#allocation2 + $0x698] sm:$0xff]
    %v1480 = vld [vmem:[#allocation2 + $0x6a0] sm:$0xff]
    %v1481 = vld [vmem:[#allocation2 + $0x6a8] sm:$0xff]
    %v1482 = vld [vmem:[#allocation2 + $0x6b0] sm:$0xff]
    %v1483 = vld [vmem:[#allocation2 + $0x6b8] sm:$0xff]
    %v1484 = vld [vmem:[#allocation2 + $0x6c0] sm:$0xff]
    %v1485 = vld [vmem:[#allocation2 + $0x6c8] sm:$0xff]
    %v1486 = vld [vmem:[#allocation2 + $0x6d0] sm:$0xff]
    %v1487 = vld [vmem:[#allocation2 + $0x6d8] sm:$0xff]
    %v1488 = vld [vmem:[#allocation2 + $0x6e0] sm:$0xff]
    %v1489 = vld [vmem:[#allocation2 + $0x6e8] sm:$0xff]
    %v1490 = vld [vmem:[#allocation2 + $0x6f0] sm:$0xff]
    %v1491 = vld [vmem:[#allocation2 + $0x6f8] sm:$0xff]
    %v1492 = vld [vmem:[#allocation2 + $0x700] sm:$0xff]
    %v1493 = vld [vmem:[#allocation2 + $0x708] sm:$0xff]
    %v1494 = vld [vmem:[#allocation2 + $0x710] sm:$0xff]
    %v1495 = vld [vmem:[#allocation2 + $0x718] sm:$0xff]
    %v1496 = vld [vmem:[#allocation2 + $0x720] sm:$0xff]
    %v1497 = vld [vmem:[#allocation2 + $0x728] sm:$0xff]
    %v1498 = vld [vmem:[#allocation2 + $0x730] sm:$0xff]
    %v1499 = vld [vmem:[#allocation2 + $0x738] sm:$0xff]
    %v1500 = vld [vmem:[#allocation2 + $0x740] sm:$0xff]
    %v1501 = vld [vmem:[#allocation2 + $0x748] sm:$0xff]
    %v1502 = vld [vmem:[#allocation2 + $0x750] sm:$0xff]
    %v1503 = vld [vmem:[#allocation2 + $0x758] sm:$0xff]
    %v1504 = vld [vmem:[#allocation2 + $0x760] sm:$0xff]
    %v1505 = vld [vmem:[#allocation2 + $0x768] sm:$0xff]
    %v1506 = vld [vmem:[#allocation2 + $0x770] sm:$0xff]
    %v1507 = vld [vmem:[#allocation2 + $0x778] sm:$0xff]
    %v1508 = vld [vmem:[#allocation2 + $0x780] sm:$0xff]
    %v1509 = vld [vmem:[#allocation2 + $0x788] sm:$0xff]
    %v1510 = vld [vmem:[#allocation2 + $0x790] sm:$0xff]
    %v1511 = vld [vmem:[#allocation2 + $0x798] sm:$0xff]
    %v1512 = vld [vmem:[#allocation2 + $0x7a0] sm:$0xff]
    %v1513 = vld [vmem:[#allocation2 + $0x7a8] sm:$0xff]
    %v1514 = vld [vmem:[#allocation2 + $0x7b0] sm:$0xff]
    %v1515 = vld [vmem:[#allocation2 + $0x7b8] sm:$0xff]
    %v1516 = vld [vmem:[#allocation2 + $0x7c0] sm:$0xff]
    %v1517 = vld [vmem:[#allocation2 + $0x7c8] sm:$0xff]
    %v1518 = vld [vmem:[#allocation2 + $0x7d0] sm:$0xff]
    %v1519 = vld [vmem:[#allocation2 + $0x7d8] sm:$0xff]
    %v1520 = vld [vmem:[#allocation2 + $0x7e0] sm:$0xff]
    %v1521 = vld [vmem:[#allocation2 + $0x7e8] sm:$0xff]
    %v1522 = vld [vmem:[#allocation2 + $0x7f0] sm:$0xff]
    %v1523 = vld [vmem:[#allocation2 + $0x7f8] sm:$0xff]
    %v1524 = vld [vmem:[#allocation2 + $0x800] sm:$0xff]
    %v1525 = vld [vmem:[#allocation2 + $0x808] sm:$0xff]
    %v1526 = vld [vmem:[#allocation2 + $0x810] sm:$0xff]
    %v1527 = vld [vmem:[#allocation2 + $0x818] sm:$0xff]
    %v1528 = vld [vmem:[#allocation2 + $0x820] sm:$0xff]
    %v1529 = vld [vmem:[#allocation2 + $0x828] sm:$0xff]
    %v1530 = vld [vmem:[#allocation2 + $0x830] sm:$0xff]
    %v1531 = vld [vmem:[#allocation2 + $0x838] sm:$0xff]
    %v1532 = vld [vmem:[#allocation2 + $0x840] sm:$0xff]
    %v1533 = vld [vmem:[#allocation2 + $0x848] sm:$0xff]
    %v1534 = vld [vmem:[#allocation2 + $0x850] sm:$0xff]
    %v1535 = vld [vmem:[#allocation2 + $0x858] sm:$0xff]
    %v1536 = vld [vmem:[#allocation2 + $0x860] sm:$0xff]
    %v1537 = vld [vmem:[#allocation2 + $0x868] sm:$0xff]
    %v1538 = vld [vmem:[#allocation2 + $0x870] sm:$0xff]
    %v1539 = vld [vmem:[#allocation2 + $0x878] sm:$0xff]
    %v1540 = vld [vmem:[#allocation2 + $0x880] sm:$0xff]
    %v1541 = vld [vmem:[#allocation2 + $0x888] sm:$0xff]
    %v1542 = vld [vmem:[#allocation2 + $0x890] sm:$0xff]
    %v1543 = vld [vmem:[#allocation2 + $0x898] sm:$0xff]
    %v1544 = vld [vmem:[#allocation2 + $0x8a0] sm:$0xff]
    %v1545 = vld [vmem:[#allocation2 + $0x8a8] sm:$0xff]
    %v1546 = vld [vmem:[#allocation2 + $0x8b0] sm:$0xff]
    %v1547 = vld [vmem:[#allocation2 + $0x8b8] sm:$0xff]
    %v1548 = vld [vmem:[#allocation2 + $0x8c0] sm:$0xff]
    %v1549 = vld [vmem:[#allocation2 + $0x8c8] sm:$0xff]
    %v1550 = vld [vmem:[#allocation2 + $0x8d0] sm:$0xff]
    %v1551 = vld [vmem:[#allocation2 + $0x8d8] sm:$0xff]
    %v1552 = vld [vmem:[#allocation2 + $0x8e0] sm:$0xff]
    %v1553 = vld [vmem:[#allocation2 + $0x8e8] sm:$0xff]
    %v1554 = vld [vmem:[#allocation2 + $0x8f0] sm:$0xff]
    %v1555 = vld [vmem:[#allocation2 + $0x8f8] sm:$0xff]
    %v1556 = vld [vmem:[#allocation2 + $0x900] sm:$0xff]
    %v1557 = vld [vmem:[#allocation2 + $0x908] sm:$0xff]
    %v1558 = vld [vmem:[#allocation2 + $0x910] sm:$0xff]
    %v1559 = vld [vmem:[#allocation2 + $0x918] sm:$0xff]
    %v1560 = vld [vmem:[#allocation2 + $0x920] sm:$0xff]
    %v1561 = vld [vmem:[#allocation2 + $0x928] sm:$0xff]
    %v1562 = vld [vmem:[#allocation2 + $0x930] sm:$0xff]
    %v1563 = vld [vmem:[#allocation2 + $0x938] sm:$0xff]
    %v1564 = vld [vmem:[#allocation2 + $0x940] sm:$0xff]
    %v1565 = vld [vmem:[#allocation2 + $0x948] sm:$0xff]
    %v1566 = vld [vmem:[#allocation2 + $0x950] sm:$0xff]
    %v1567 = vld [vmem:[#allocation2 + $0x958] sm:$0xff]
    %v1568 = vld [vmem:[#allocation2 + $0x960] sm:$0xff]
    %v1569 = vld [vmem:[#allocation2 + $0x968] sm:$0xff]
    %v1570 = vld [vmem:[#allocation2 + $0x970] sm:$0xff]
    %v1571 = vld [vmem:[#allocation2 + $0x978] sm:$0xff]
    %v1572 = vld [vmem:[#allocation2 + $0x980] sm:$0xff]
    %v1573 = vld [vmem:[#allocation2 + $0x988] sm:$0xff]
    %v1574 = vld [vmem:[#allocation2 + $0x990] sm:$0xff]
    %v1575 = vld [vmem:[#allocation2 + $0x998] sm:$0xff]
    %v1576 = vld [vmem:[#allocation2 + $0x9a0] sm:$0xff]
    %v1577 = vld [vmem:[#allocation2 + $0x9a8] sm:$0xff]
    %v1578 = vld [vmem:[#allocation2 + $0x9b0] sm:$0xff]
    %v1579 = vld [vmem:[#allocation2 + $0x9b8] sm:$0xff]
    %v1580 = vld [vmem:[#allocation2 + $0x9c0] sm:$0xff]
    %v1581 = vld [vmem:[#allocation2 + $0x9c8] sm:$0xff]
    %v1582 = vld [vmem:[#allocation2 + $0x9d0] sm:$0xff]
    %v1583 = vld [vmem:[#allocation2 + $0x9d8] sm:$0xff]
    %v1584 = vld [vmem:[#allocation2 + $0x9e0] sm:$0xff]
    %v1585 = vld [vmem:[#allocation2 + $0x9e8] sm:$0xff]
    %v1586 = vld [vmem:[#allocation2 + $0x9f0] sm:$0xff]
    %v1587 = vld [vmem:[#allocation2 + $0x9f8] sm:$0xff]
    %v1588 = vld [vmem:[#allocation2 + $0xa00] sm:$0xff]
    %v1589 = vld [vmem:[#allocation2 + $0xa08] sm:$0xff]
    %v1590 = vld [vmem:[#allocation2 + $0xa10] sm:$0xff]
    %v1591 = vld [vmem:[#allocation2 + $0xa18] sm:$0xff]
    %v1592 = vld [vmem:[#allocation2 + $0xa20] sm:$0xff]
    %v1593 = vld [vmem:[#allocation2 + $0xa28] sm:$0xff]
    %v1594 = vld [vmem:[#allocation2 + $0xa30] sm:$0xff]
    %v1595 = vld [vmem:[#allocation2 + $0xa38] sm:$0xff]
    %v1596 = vld [vmem:[#allocation2 + $0xa40] sm:$0xff]
    %v1597 = vld [vmem:[#allocation2 + $0xa48] sm:$0xff]
    %v1598 = vld [vmem:[#allocation2 + $0xa50] sm:$0xff]
    %v1599 = vld [vmem:[#allocation2 + $0xa58] sm:$0xff]
    %v1600 = vld [vmem:[#allocation2 + $0xa60] sm:$0xff]
    %v1601 = vld [vmem:[#allocation2 + $0xa68] sm:$0xff]
    %v1602 = vld [vmem:[#allocation2 + $0xa70] sm:$0xff]
    %v1603 = vld [vmem:[#allocation2 + $0xa78] sm:$0xff]
    %v1604 = vld [vmem:[#allocation2 + $0xa80] sm:$0xff]
    %v1605 = vld [vmem:[#allocation2 + $0xa88] sm:$0xff]
    %v1606 = vld [vmem:[#allocation2 + $0xa90] sm:$0xff]
    %v1607 = vld [vmem:[#allocation2 + $0xa98] sm:$0xff]
    %v1608 = vld [vmem:[#allocation2 + $0xaa0] sm:$0xff]
    %v1609 = vld [vmem:[#allocation2 + $0xaa8] sm:$0xff]
    %v1610 = vld [vmem:[#allocation2 + $0xab0] sm:$0xff]
    %v1611 = vld [vmem:[#allocation2 + $0xab8] sm:$0xff]
    %v1612 = vld [vmem:[#allocation2 + $0xac0] sm:$0xff]
    %v1613 = vld [vmem:[#allocation2 + $0xac8] sm:$0xff]
    %v1614 = vld [vmem:[#allocation2 + $0xad0] sm:$0xff]
    %v1615 = vld [vmem:[#allocation2 + $0xad8] sm:$0xff]
    %v1616 = vld [vmem:[#allocation2 + $0xae0] sm:$0xff]
    %v1617 = vld [vmem:[#allocation2 + $0xae8] sm:$0xff]
    %v1618 = vld [vmem:[#allocation2 + $0xaf0] sm:$0xff]
    %v1619 = vld [vmem:[#allocation2 + $0xaf8] sm:$0xff]
    %v1620 = vld [vmem:[#allocation2 + $0xb00] sm:$0xff]
    %v1621 = vld [vmem:[#allocation2 + $0xb08] sm:$0xff]
    %v1622 = vld [vmem:[#allocation2 + $0xb10] sm:$0xff]
    %v1623 = vld [vmem:[#allocation2 + $0xb18] sm:$0xff]
    %v1624 = vld [vmem:[#allocation2 + $0xb20] sm:$0xff]
    %v1625 = vld [vmem:[#allocation2 + $0xb28] sm:$0xff]
    %v1626 = vld [vmem:[#allocation2 + $0xb30] sm:$0xff]
    %v1627 = vld [vmem:[#allocation2 + $0xb38] sm:$0xff]
    %v1628 = vld [vmem:[#allocation2 + $0xb40] sm:$0xff]
    %v1629 = vld [vmem:[#allocation2 + $0xb48] sm:$0xff]
    %v1630 = vld [vmem:[#allocation2 + $0xb50] sm:$0xff]
    %v1631 = vld [vmem:[#allocation2 + $0xb58] sm:$0xff]
    %v1632 = vld [vmem:[#allocation2 + $0xb60] sm:$0xff]
    %v1633 = vld [vmem:[#allocation2 + $0xb68] sm:$0xff]
    %v1634 = vld [vmem:[#allocation2 + $0xb70] sm:$0xff]
    %v1635 = vld [vmem:[#allocation2 + $0xb78] sm:$0xff]
    %v1636 = vld [vmem:[#allocation2 + $0xb80] sm:$0xff]
    %v1637 = vld [vmem:[#allocation2 + $0xb88] sm:$0xff]
    %v1638 = vld [vmem:[#allocation2 + $0xb90] sm:$0xff]
    %v1639 = vld [vmem:[#allocation2 + $0xb98] sm:$0xff]
    %v1640 = vld [vmem:[#allocation2 + $0xba0] sm:$0xff]
    %v1641 = vld [vmem:[#allocation2 + $0xba8] sm:$0xff]
    %v1642 = vld [vmem:[#allocation2 + $0xbb0] sm:$0xff]
    %v1643 = vld [vmem:[#allocation2 + $0xbb8] sm:$0xff]
    %v1644 = vld [vmem:[#allocation2 + $0xbc0] sm:$0xff]
    %v1645 = vld [vmem:[#allocation2 + $0xbc8] sm:$0xff]
    %v1646 = vld [vmem:[#allocation2 + $0xbd0] sm:$0xff]
    %v1647 = vld [vmem:[#allocation2 + $0xbd8] sm:$0xff]
    %v1648 = vld [vmem:[#allocation2 + $0xbe0] sm:$0xff]
    %v1649 = vld [vmem:[#allocation2 + $0xbe8] sm:$0xff]
    %v1650 = vld [vmem:[#allocation2 + $0xbf0] sm:$0xff]
    %v1651 = vld [vmem:[#allocation2 + $0xbf8] sm:$0xff]
    %v1652 = vld [vmem:[#allocation2 + $0xc00] sm:$0xff]
    %v1653 = vld [vmem:[#allocation2 + $0xc08] sm:$0xff]
    %v1654 = vld [vmem:[#allocation2 + $0xc10] sm:$0xff]
    %v1655 = vld [vmem:[#allocation2 + $0xc18] sm:$0xff]
    %v1656 = vld [vmem:[#allocation2 + $0xc20] sm:$0xff]
    %v1657 = vld [vmem:[#allocation2 + $0xc28] sm:$0xff]
    %v1658 = vld [vmem:[#allocation2 + $0xc30] sm:$0xff]
    %v1659 = vld [vmem:[#allocation2 + $0xc38] sm:$0xff]
    %v1660 = vld [vmem:[#allocation2 + $0xc40] sm:$0xff]
    %v1661 = vld [vmem:[#allocation2 + $0xc48] sm:$0xff]
    %v1662 = vld [vmem:[#allocation2 + $0xc50] sm:$0xff]
    %v1663 = vld [vmem:[#allocation2 + $0xc58] sm:$0xff]
    %v1664 = vld [vmem:[#allocation2 + $0xc60] sm:$0xff]
    %v1665 = vld [vmem:[#allocation2 + $0xc68] sm:$0xff]
    %v1666 = vld [vmem:[#allocation2 + $0xc70] sm:$0xff]
    %v1667 = vld [vmem:[#allocation2 + $0xc78] sm:$0xff]
    %v1668 = vld [vmem:[#allocation2 + $0xc80] sm:$0xff]
    %v1669 = vld [vmem:[#allocation2 + $0xc88] sm:$0xff]
    %v1670 = vld [vmem:[#allocation2 + $0xc90] sm:$0xff]
    %v1671 = vld [vmem:[#allocation2 + $0xc98] sm:$0xff]
    %v1672 = vld [vmem:[#allocation2 + $0xca0] sm:$0xff]
    %v1673 = vld [vmem:[#allocation2 + $0xca8] sm:$0xff]
    %v1674 = vld [vmem:[#allocation2 + $0xcb0] sm:$0xff]
    %v1675 = vld [vmem:[#allocation2 + $0xcb8] sm:$0xff]
    %v1676 = vld [vmem:[#allocation2 + $0xcc0] sm:$0xff]
    %v1677 = vld [vmem:[#allocation2 + $0xcc8] sm:$0xff]
    %v1678 = vld [vmem:[#allocation2 + $0xcd0] sm:$0xff]
    %v1679 = vld [vmem:[#allocation2 + $0xcd8] sm:$0xff]
    %v1680 = vld [vmem:[#allocation2 + $0xce0] sm:$0xff]
    %v1681 = vld [vmem:[#allocation2 + $0xce8] sm:$0xff]
    %v1682 = vld [vmem:[#allocation2 + $0xcf0] sm:$0xff]
    %v1683 = vld [vmem:[#allocation2 + $0xcf8] sm:$0xff]
    %v1684 = vld [vmem:[#allocation2 + $0xd00] sm:$0xff]
    %v1685 = vld [vmem:[#allocation2 + $0xd08] sm:$0xff]
    %v1686 = vld [vmem:[#allocation2 + $0xd10] sm:$0xff]
    %v1687 = vld [vmem:[#allocation2 + $0xd18] sm:$0xff]
    %v1688 = vld [vmem:[#allocation2 + $0xd20] sm:$0xff]
    %v1689 = vld [vmem:[#allocation2 + $0xd28] sm:$0xff]
    %v1690 = vld [vmem:[#allocation2 + $0xd30] sm:$0xff]
    %v1691 = vld [vmem:[#allocation2 + $0xd38] sm:$0xff]
    %v1692 = vld [vmem:[#allocation2 + $0xd40] sm:$0xff]
    %v1693 = vld [vmem:[#allocation2 + $0xd48] sm:$0xff]
    %v1694 = vld [vmem:[#allocation2 + $0xd50] sm:$0xff]
    %v1695 = vld [vmem:[#allocation2 + $0xd58] sm:$0xff]
    %v1696 = vld [vmem:[#allocation2 + $0xd60] sm:$0xff]
    %v1697 = vld [vmem:[#allocation2 + $0xd68] sm:$0xff]
    %v1698 = vld [vmem:[#allocation2 + $0xd70] sm:$0xff]
    %v1699 = vld [vmem:[#allocation2 + $0xd78] sm:$0xff]
    %v1700 = vld [vmem:[#allocation2 + $0xd80] sm:$0xff]
    %v1701 = vld [vmem:[#allocation2 + $0xd88] sm:$0xff]
    %v1702 = vld [vmem:[#allocation2 + $0xd90] sm:$0xff]
    %v1703 = vld [vmem:[#allocation2 + $0xd98] sm:$0xff]
    %v1704 = vld [vmem:[#allocation2 + $0xda0] sm:$0xff]
    %v1705 = vld [vmem:[#allocation2 + $0xda8] sm:$0xff]
    %v1706 = vld [vmem:[#allocation2 + $0xdb0] sm:$0xff]
    %v1707 = vld [vmem:[#allocation2 + $0xdb8] sm:$0xff]
    %v1708 = vld [vmem:[#allocation2 + $0xdc0] sm:$0xff]
    %v1709 = vld [vmem:[#allocation2 + $0xdc8] sm:$0xff]
    %v1710 = vld [vmem:[#allocation2 + $0xdd0] sm:$0xff]
    %v1711 = vld [vmem:[#allocation2 + $0xdd8] sm:$0xff]
    %v1712 = vld [vmem:[#allocation2 + $0xde0] sm:$0xff]
    %v1713 = vld [vmem:[#allocation2 + $0xde8] sm:$0xff]
    %v1714 = vld [vmem:[#allocation2 + $0xdf0] sm:$0xff]
    %v1715 = vld [vmem:[#allocation2 + $0xdf8] sm:$0xff]
    %v1716 = vld [vmem:[#allocation2 + $0xe00] sm:$0xff]
    %v1717 = vld [vmem:[#allocation2 + $0xe08] sm:$0xff]
    %v1718 = vld [vmem:[#allocation2 + $0xe10] sm:$0xff]
    %v1719 = vld [vmem:[#allocation2 + $0xe18] sm:$0xff]
    %v1720 = vld [vmem:[#allocation2 + $0xe20] sm:$0xff]
    %v1721 = vld [vmem:[#allocation2 + $0xe28] sm:$0xff]
    %v1722 = vld [vmem:[#allocation2 + $0xe30] sm:$0xff]
    %v1723 = vld [vmem:[#allocation2 + $0xe38] sm:$0xff]
    %v1724 = vld [vmem:[#allocation2 + $0xe40] sm:$0xff]
    %v1725 = vld [vmem:[#allocation2 + $0xe48] sm:$0xff]
    %v1726 = vld [vmem:[#allocation2 + $0xe50] sm:$0xff]
    %v1727 = vld [vmem:[#allocation2 + $0xe58] sm:$0xff]
    %v1728 = vld [vmem:[#allocation2 + $0xe60] sm:$0xff]
    %v1729 = vld [vmem:[#allocation2 + $0xe68] sm:$0xff]
    %v1730 = vld [vmem:[#allocation2 + $0xe70] sm:$0xff]
    %v1731 = vld [vmem:[#allocation2 + $0xe78] sm:$0xff]
    %v1732 = vld [vmem:[#allocation2 + $0xe80] sm:$0xff]
    %v1733 = vld [vmem:[#allocation2 + $0xe88] sm:$0xff]
    %v1734 = vld [vmem:[#allocation2 + $0xe90] sm:$0xff]
    %v1735 = vld [vmem:[#allocation2 + $0xe98] sm:$0xff]
    %v1736 = vld [vmem:[#allocation2 + $0xea0] sm:$0xff]
    %v1737 = vld [vmem:[#allocation2 + $0xea8] sm:$0xff]
    %v1738 = vld [vmem:[#allocation2 + $0xeb0] sm:$0xff]
    %v1739 = vld [vmem:[#allocation2 + $0xeb8] sm:$0xff]
    %v1740 = vld [vmem:[#allocation2 + $0xec0] sm:$0xff]
    %v1741 = vld [vmem:[#allocation2 + $0xec8] sm:$0xff]
    %v1742 = vld [vmem:[#allocation2 + $0xed0] sm:$0xff]
    %v1743 = vld [vmem:[#allocation2 + $0xed8] sm:$0xff]
    %v1744 = vld [vmem:[#allocation2 + $0xee0] sm:$0xff]
    %v1745 = vld [vmem:[#allocation2 + $0xee8] sm:$0xff]
    %v1746 = vld [vmem:[#allocation2 + $0xef0] sm:$0xff]
    %v1747 = vld [vmem:[#allocation2 + $0xef8] sm:$0xff]
    %v1748 = vld [vmem:[#allocation2 + $0xf00] sm:$0xff]
    %v1749 = vld [vmem:[#allocation2 + $0xf08] sm:$0xff]
    %v1750 = vld [vmem:[#allocation2 + $0xf10] sm:$0xff]
    %v1751 = vld [vmem:[#allocation2 + $0xf18] sm:$0xff]
    %v1752 = vld [vmem:[#allocation2 + $0xf20] sm:$0xff]
    %v1753 = vld [vmem:[#allocation2 + $0xf28] sm:$0xff]
    %v1754 = vld [vmem:[#allocation2 + $0xf30] sm:$0xff]
    %v1755 = vld [vmem:[#allocation2 + $0xf38] sm:$0xff]
    %v1756 = vld [vmem:[#allocation2 + $0xf40] sm:$0xff]
    %v1757 = vld [vmem:[#allocation2 + $0xf48] sm:$0xff]
    %v1758 = vld [vmem:[#allocation2 + $0xf50] sm:$0xff]
    %v1759 = vld [vmem:[#allocation2 + $0xf58] sm:$0xff]
    %v1760 = vld [vmem:[#allocation2 + $0xf60] sm:$0xff]
    %v1761 = vld [vmem:[#allocation2 + $0xf68] sm:$0xff]
    %v1762 = vld [vmem:[#allocation2 + $0xf70] sm:$0xff]
    %v1763 = vld [vmem:[#allocation2 + $0xf78] sm:$0xff]
    %v1764 = vld [vmem:[#allocation2 + $0xf80] sm:$0xff]
    %v1765 = vld [vmem:[#allocation2 + $0xf88] sm:$0xff]
    %v1766 = vld [vmem:[#allocation2 + $0xf90] sm:$0xff]
    %v1767 = vld [vmem:[#allocation2 + $0xf98] sm:$0xff]
    %v1768 = vld [vmem:[#allocation2 + $0xfa0] sm:$0xff]
    %v1769 = vld [vmem:[#allocation2 + $0xfa8] sm:$0xff]
    %v1770 = vld [vmem:[#allocation2 + $0xfb0] sm:$0xff]
    %v1771 = vld [vmem:[#allocation2 + $0xfb8] sm:$0xff]
    %v1772 = vld [vmem:[#allocation2 + $0xfc0] sm:$0xff]
    %v1773 = vld [vmem:[#allocation2 + $0xfc8] sm:$0xff]
    %v1774 = vld [vmem:[#allocation2 + $0xfd0] sm:$0xff]
    %v1775 = vld [vmem:[#allocation2 + $0xfd8] sm:$0xff]
    %v1776 = vld [vmem:[#allocation2 + $0xfe0] sm:$0xff]
    %v1777 = vld [vmem:[#allocation2 + $0xfe8] sm:$0xff]
    %v1778 = vld [vmem:[#allocation2 + $0xff0] sm:$0xff]
    %v1779 = vld [vmem:[#allocation2 + $0xff8] sm:$0xff]
    %v1780 = vld [vmem:[#allocation2 + $0x1000] sm:$0xff]
    %v1781 = vld [vmem:[#allocation2 + $0x1008] sm:$0xff]
    %v1782 = vld [vmem:[#allocation2 + $0x1010] sm:$0xff]
    %v1783 = vld [vmem:[#allocation2 + $0x1018] sm:$0xff]
    %v1784 = vld [vmem:[#allocation2 + $0x1020] sm:$0xff]
    %v1785 = vld [vmem:[#allocation2 + $0x1028] sm:$0xff]
    %v1786 = vld [vmem:[#allocation2 + $0x1030] sm:$0xff]
    %v1787 = vld [vmem:[#allocation2 + $0x1038] sm:$0xff]
    %v1788 = vld [vmem:[#allocation2 + $0x1040] sm:$0xff]
    %v1789 = vld [vmem:[#allocation2 + $0x1048] sm:$0xff]
    %v1790 = vld [vmem:[#allocation2 + $0x1050] sm:$0xff]
    %v1791 = vld [vmem:[#allocation2 + $0x1058] sm:$0xff]
    %v1792 = vld [vmem:[#allocation2 + $0x1060] sm:$0xff]
    %v1793 = vld [vmem:[#allocation2 + $0x1068] sm:$0xff]
    %v1794 = vld [vmem:[#allocation2 + $0x1070] sm:$0xff]
    %v1795 = vld [vmem:[#allocation2 + $0x1078] sm:$0xff]
    %v1796 = vld [vmem:[#allocation2 + $0x1080] sm:$0xff]
    %v1797 = vld [vmem:[#allocation2 + $0x1088] sm:$0xff]
    %v1798 = vld [vmem:[#allocation2 + $0x1090] sm:$0xff]
    %v1799 = vld [vmem:[#allocation2 + $0x1098] sm:$0xff]
    %v1800 = vld [vmem:[#allocation2 + $0x10a0] sm:$0xff]
    %v1801 = vld [vmem:[#allocation2 + $0x10a8] sm:$0xff]
    %v1802 = vld [vmem:[#allocation2 + $0x10b0] sm:$0xff]
    %v1803 = vld [vmem:[#allocation2 + $0x10b8] sm:$0xff]
    %v1804 = vld [vmem:[#allocation2 + $0x10c0] sm:$0xff]
    %v1805 = vld [vmem:[#allocation2 + $0x10c8] sm:$0xff]
    %v1806 = vld [vmem:[#allocation2 + $0x10d0] sm:$0xff]
    %v1807 = vld [vmem:[#allocation2 + $0x10d8] sm:$0xff]
    %v1808 = vld [vmem:[#allocation2 + $0x10e0] sm:$0xff]
    %v1809 = vld [vmem:[#allocation2 + $0x10e8] sm:$0xff]
    %v1810 = vld [vmem:[#allocation2 + $0x10f0] sm:$0xff]
    %v1811 = vld [vmem:[#allocation2 + $0x10f8] sm:$0xff]
    %v1812 = vld [vmem:[#allocation2 + $0x1100] sm:$0xff]
    %v1813 = vld [vmem:[#allocation2 + $0x1108] sm:$0xff]
    %v1814 = vld [vmem:[#allocation2 + $0x1110] sm:$0xff]
    %v1815 = vld [vmem:[#allocation2 + $0x1118] sm:$0xff]
    %v1816 = vld [vmem:[#allocation2 + $0x1120] sm:$0xff]
    %v1817 = vld [vmem:[#allocation2 + $0x1128] sm:$0xff]
    %v1818 = vld [vmem:[#allocation2 + $0x1130] sm:$0xff]
    %v1819 = vld [vmem:[#allocation2 + $0x1138] sm:$0xff]
    %v1820 = vld [vmem:[#allocation2 + $0x1140] sm:$0xff]
    %v1821 = vld [vmem:[#allocation2 + $0x1148] sm:$0xff]
    %v1822 = vld [vmem:[#allocation2 + $0x1150] sm:$0xff]
    %v1823 = vld [vmem:[#allocation2 + $0x1158] sm:$0xff]
    %v1824 = vld [vmem:[#allocation2 + $0x1160] sm:$0xff]
    %v1825 = vld [vmem:[#allocation2 + $0x1168] sm:$0xff]
    %v1826 = vld [vmem:[#allocation2 + $0x1170] sm:$0xff]
    %v1827 = vld [vmem:[#allocation2 + $0x1178] sm:$0xff]
    %v1828 = vld [vmem:[#allocation2 + $0x1180] sm:$0xff]
    %v1829 = vld [vmem:[#allocation2 + $0x1188] sm:$0xff]
    %v1830 = vld [vmem:[#allocation2 + $0x1190] sm:$0xff]
    %v1831 = vld [vmem:[#allocation2 + $0x1198] sm:$0xff]
    %v1832 = vld [vmem:[#allocation2 + $0x11a0] sm:$0xff]
    %v1833 = vld [vmem:[#allocation2 + $0x11a8] sm:$0xff]
    %v1834 = vld [vmem:[#allocation2 + $0x11b0] sm:$0xff]
    %v1835 = vld [vmem:[#allocation2 + $0x11b8] sm:$0xff]
    %v1836 = vld [vmem:[#allocation2 + $0x11c0] sm:$0xff]
    %v1837 = vld [vmem:[#allocation2 + $0x11c8] sm:$0xff]
    %v1838 = vld [vmem:[#allocation2 + $0x11d0] sm:$0xff]
    %v1839 = vld [vmem:[#allocation2 + $0x11d8] sm:$0xff]
    %v1840 = vld [vmem:[#allocation2 + $0x11e0] sm:$0xff]
    %v1841 = vld [vmem:[#allocation2 + $0x11e8] sm:$0xff]
    %v1842 = vld [vmem:[#allocation2 + $0x11f0] sm:$0xff]
    %v1843 = vld [vmem:[#allocation2 + $0x11f8] sm:$0xff]
    %v1844 = vld [vmem:[#allocation8] sm:$0xff]
    %v1845 = vld [vmem:[#allocation8 + $0x8] sm:$0xff]
    %v1846 = vld [vmem:[#allocation8 + $0x10] sm:$0xff]
    %v1847 = vld [vmem:[#allocation8 + $0x18] sm:$0xff]
    %v1848 = vld [vmem:[#allocation8 + $0x20] sm:$0xff]
    %v1849 = vld [vmem:[#allocation8 + $0x28] sm:$0xff]
    %v1850 = vld [vmem:[#allocation8 + $0x30] sm:$0xff]
    %v1851 = vld [vmem:[#allocation8 + $0x38] sm:$0xff]
    %v1852 = vld [vmem:[#allocation8 + $0x40] sm:$0xff]
    %v1853 = vld [vmem:[#allocation8 + $0x48] sm:$0xff]
    %v1854 = vld [vmem:[#allocation8 + $0x50] sm:$0xff]
    %v1855 = vld [vmem:[#allocation8 + $0x58] sm:$0xff]
    %v1856 = vld [vmem:[#allocation8 + $0x60] sm:$0xff]
    %v1857 = vld [vmem:[#allocation8 + $0x68] sm:$0xff]
    %v1858 = vld [vmem:[#allocation8 + $0x70] sm:$0xff]
    %v1859 = vld [vmem:[#allocation8 + $0x78] sm:$0xff]
    %v1860 = vld [vmem:[#allocation8 + $0x80] sm:$0xff]
    %v1861 = vld [vmem:[#allocation8 + $0x88] sm:$0xff]
    %v1862 = vld [vmem:[#allocation8 + $0x90] sm:$0xff]
    %v1863 = vld [vmem:[#allocation8 + $0x98] sm:$0xff]
    %v1864 = vld [vmem:[#allocation8 + $0xa0] sm:$0xff]
    %v1865 = vld [vmem:[#allocation8 + $0xa8] sm:$0xff]
    %v1866 = vld [vmem:[#allocation8 + $0xb0] sm:$0xff]
    %v1867 = vld [vmem:[#allocation8 + $0xb8] sm:$0xff]
    %v1868 = vld [vmem:[#allocation8 + $0xc0] sm:$0xff]
    %v1869 = vld [vmem:[#allocation8 + $0xc8] sm:$0xff]
    %v1870 = vld [vmem:[#allocation8 + $0xd0] sm:$0xff]
    %v1871 = vld [vmem:[#allocation8 + $0xd8] sm:$0xff]
    %v1872 = vld [vmem:[#allocation8 + $0xe0] sm:$0xff]
    %v1873 = vld [vmem:[#allocation8 + $0xe8] sm:$0xff]
    %v1874 = vld [vmem:[#allocation8 + $0xf0] sm:$0xff]
    %v1875 = vld [vmem:[#allocation8 + $0xf8] sm:$0xff]
    %v1876 = vld [vmem:[#allocation8 + $0x100] sm:$0xff]
    %v1877 = vld [vmem:[#allocation8 + $0x108] sm:$0xff]
    %v1878 = vld [vmem:[#allocation8 + $0x110] sm:$0xff]
    %v1879 = vld [vmem:[#allocation8 + $0x118] sm:$0xff]
    %v1880 = vld [vmem:[#allocation8 + $0x120] sm:$0xff]
    %v1881 = vld [vmem:[#allocation8 + $0x128] sm:$0xff]
    %v1882 = vld [vmem:[#allocation8 + $0x130] sm:$0xff]
    %v1883 = vld [vmem:[#allocation8 + $0x138] sm:$0xff]
    %v1884 = vld [vmem:[#allocation8 + $0x140] sm:$0xff]
    %v1885 = vld [vmem:[#allocation8 + $0x148] sm:$0xff]
    %v1886 = vld [vmem:[#allocation8 + $0x150] sm:$0xff]
    %v1887 = vld [vmem:[#allocation8 + $0x158] sm:$0xff]
    %v1888 = vld [vmem:[#allocation8 + $0x160] sm:$0xff]
    %v1889 = vld [vmem:[#allocation8 + $0x168] sm:$0xff]
    %v1890 = vld [vmem:[#allocation8 + $0x170] sm:$0xff]
    %v1891 = vld [vmem:[#allocation8 + $0x178] sm:$0xff]
    %v1892 = vld [vmem:[#allocation8 + $0x180] sm:$0xff]
    %v1893 = vld [vmem:[#allocation8 + $0x188] sm:$0xff]
    %v1894 = vld [vmem:[#allocation8 + $0x190] sm:$0xff]
    %v1895 = vld [vmem:[#allocation8 + $0x198] sm:$0xff]
    %v1896 = vld [vmem:[#allocation8 + $0x1a0] sm:$0xff]
    %v1897 = vld [vmem:[#allocation8 + $0x1a8] sm:$0xff]
    %v1898 = vld [vmem:[#allocation8 + $0x1b0] sm:$0xff]
    %v1899 = vld [vmem:[#allocation8 + $0x1b8] sm:$0xff]
    %v1900 = vld [vmem:[#allocation8 + $0x1c0] sm:$0xff]
    %v1901 = vld [vmem:[#allocation8 + $0x1c8] sm:$0xff]
    %v1902 = vld [vmem:[#allocation8 + $0x1d0] sm:$0xff]
    %v1903 = vld [vmem:[#allocation8 + $0x1d8] sm:$0xff]
    %v1904 = vld [vmem:[#allocation8 + $0x1e0] sm:$0xff]
    %v1905 = vld [vmem:[#allocation8 + $0x1e8] sm:$0xff]
    %v1906 = vld [vmem:[#allocation8 + $0x1f0] sm:$0xff]
    %v1907 = vld [vmem:[#allocation8 + $0x1f8] sm:$0xff]
    %v1908 = vld [vmem:[#allocation8 + $0x200] sm:$0xff]
    %v1909 = vld [vmem:[#allocation8 + $0x208] sm:$0xff]
    %v1910 = vld [vmem:[#allocation8 + $0x210] sm:$0xff]
    %v1911 = vld [vmem:[#allocation8 + $0x218] sm:$0xff]
    %v1912 = vld [vmem:[#allocation8 + $0x220] sm:$0xff]
    %v1913 = vld [vmem:[#allocation8 + $0x228] sm:$0xff]
    %v1914 = vld [vmem:[#allocation8 + $0x230] sm:$0xff]
    %v1915 = vld [vmem:[#allocation8 + $0x238] sm:$0xff]
    %v1916 = vld [vmem:[#allocation8 + $0x240] sm:$0xff]
    %v1917 = vld [vmem:[#allocation8 + $0x248] sm:$0xff]
    %v1918 = vld [vmem:[#allocation8 + $0x250] sm:$0xff]
    %v1919 = vld [vmem:[#allocation8 + $0x258] sm:$0xff]
    %v1920 = vld [vmem:[#allocation8 + $0x260] sm:$0xff]
    %v1921 = vld [vmem:[#allocation8 + $0x268] sm:$0xff]
    %v1922 = vld [vmem:[#allocation8 + $0x270] sm:$0xff]
    %v1923 = vld [vmem:[#allocation8 + $0x278] sm:$0xff]
    %v1924 = vld [vmem:[#allocation8 + $0x280] sm:$0xff]
    %v1925 = vld [vmem:[#allocation8 + $0x288] sm:$0xff]
    %v1926 = vld [vmem:[#allocation8 + $0x290] sm:$0xff]
    %v1927 = vld [vmem:[#allocation8 + $0x298] sm:$0xff]
    %v1928 = vld [vmem:[#allocation8 + $0x2a0] sm:$0xff]
    %v1929 = vld [vmem:[#allocation8 + $0x2a8] sm:$0xff]
    %v1930 = vld [vmem:[#allocation8 + $0x2b0] sm:$0xff]
    %v1931 = vld [vmem:[#allocation8 + $0x2b8] sm:$0xff]
    %v1932 = vld [vmem:[#allocation8 + $0x2c0] sm:$0xff]
    %v1933 = vld [vmem:[#allocation8 + $0x2c8] sm:$0xff]
    %v1934 = vld [vmem:[#allocation8 + $0x2d0] sm:$0xff]
    %v1935 = vld [vmem:[#allocation8 + $0x2d8] sm:$0xff]
    %v1936 = vld [vmem:[#allocation8 + $0x2e0] sm:$0xff]
    %v1937 = vld [vmem:[#allocation8 + $0x2e8] sm:$0xff]
    %v1938 = vld [vmem:[#allocation8 + $0x2f0] sm:$0xff]
    %v1939 = vld [vmem:[#allocation8 + $0x2f8] sm:$0xff]
    %v1940 = vld [vmem:[#allocation8 + $0x300] sm:$0xff]
    %v1941 = vld [vmem:[#allocation8 + $0x308] sm:$0xff]
    %v1942 = vld [vmem:[#allocation8 + $0x310] sm:$0xff]
    %v1943 = vld [vmem:[#allocation8 + $0x318] sm:$0xff]
    %v1944 = vld [vmem:[#allocation8 + $0x320] sm:$0xff]
    %v1945 = vld [vmem:[#allocation8 + $0x328] sm:$0xff]
    %v1946 = vld [vmem:[#allocation8 + $0x330] sm:$0xff]
    %v1947 = vld [vmem:[#allocation8 + $0x338] sm:$0xff]
    %v1948 = vld [vmem:[#allocation8 + $0x340] sm:$0xff]
    %v1949 = vld [vmem:[#allocation8 + $0x348] sm:$0xff]
    %v1950 = vld [vmem:[#allocation8 + $0x350] sm:$0xff]
    %v1951 = vld [vmem:[#allocation8 + $0x358] sm:$0xff]
    %v1952 = vld [vmem:[#allocation8 + $0x360] sm:$0xff]
    %v1953 = vld [vmem:[#allocation8 + $0x368] sm:$0xff]
    %v1954 = vld [vmem:[#allocation8 + $0x370] sm:$0xff]
    %v1955 = vld [vmem:[#allocation8 + $0x378] sm:$0xff]
    %v1956 = vld [vmem:[#allocation8 + $0x380] sm:$0xff]
    %v1957 = vld [vmem:[#allocation8 + $0x388] sm:$0xff]
    %v1958 = vld [vmem:[#allocation8 + $0x390] sm:$0xff]
    %v1959 = vld [vmem:[#allocation8 + $0x398] sm:$0xff]
    %v1960 = vld [vmem:[#allocation8 + $0x3a0] sm:$0xff]
    %v1961 = vld [vmem:[#allocation8 + $0x3a8] sm:$0xff]
    %v1962 = vld [vmem:[#allocation8 + $0x3b0] sm:$0xff]
    %v1963 = vld [vmem:[#allocation8 + $0x3b8] sm:$0xff]
    %v1964 = vld [vmem:[#allocation8 + $0x3c0] sm:$0xff]
    %v1965 = vld [vmem:[#allocation8 + $0x3c8] sm:$0xff]
    %v1966 = vld [vmem:[#allocation8 + $0x3d0] sm:$0xff]
    %v1967 = vld [vmem:[#allocation8 + $0x3d8] sm:$0xff]
    %v1968 = vld [vmem:[#allocation8 + $0x3e0] sm:$0xff]
    %v1969 = vld [vmem:[#allocation8 + $0x3e8] sm:$0xff]
    %v1970 = vld [vmem:[#allocation8 + $0x3f0] sm:$0xff]
    %v1971 = vld [vmem:[#allocation8 + $0x3f8] sm:$0xff]
    %v1972 = vld [vmem:[#allocation8 + $0x400] sm:$0xff]
    %v1973 = vld [vmem:[#allocation8 + $0x408] sm:$0xff]
    %v1974 = vld [vmem:[#allocation8 + $0x410] sm:$0xff]
    %v1975 = vld [vmem:[#allocation8 + $0x418] sm:$0xff]
    %v1976 = vld [vmem:[#allocation8 + $0x420] sm:$0xff]
    %v1977 = vld [vmem:[#allocation8 + $0x428] sm:$0xff]
    %v1978 = vld [vmem:[#allocation8 + $0x430] sm:$0xff]
    %v1979 = vld [vmem:[#allocation8 + $0x438] sm:$0xff]
    %v1980 = vld [vmem:[#allocation8 + $0x440] sm:$0xff]
    %v1981 = vld [vmem:[#allocation8 + $0x448] sm:$0xff]
    %v1982 = vld [vmem:[#allocation8 + $0x450] sm:$0xff]
    %v1983 = vld [vmem:[#allocation8 + $0x458] sm:$0xff]
    %v1984 = vld [vmem:[#allocation8 + $0x460] sm:$0xff]
    %v1985 = vld [vmem:[#allocation8 + $0x468] sm:$0xff]
    %v1986 = vld [vmem:[#allocation8 + $0x470] sm:$0xff]
    %v1987 = vld [vmem:[#allocation8 + $0x478] sm:$0xff]
    %1988 = vmatprep.subr.mxu0 0.0
    %1989 = vmatpush1.msra.mxu0 %v1844
    %1990 = vmatprep.subr.mxu0 0.0
    %1991 = vmatpush1.msra.mxu0 %v1845
    %1992 = vmatprep.subr.mxu0 0.0
    %1993 = vmatpush1.msra.mxu0 %v1846
    %1994 = vmatprep.subr.mxu0 0.0
    %1995 = vmatpush1.msra.mxu0 %v1847
    %1996 = vmatprep.subr.mxu0 0.0
    %1997 = vmatpush1.msra.mxu0 %v1848
    %1998 = vmatprep.subr.mxu0 0.0
    %1999 = vmatpush1.msra.mxu0 %v1849
    %2000 = vmatprep.subr.mxu0 0.0
    %2001 = vmatpush1.msra.mxu0 %v1850
    %2002 = vmatprep.subr.mxu0 0.0
    %2003 = vmatpush1.msra.mxu0 %v1851
    %2004 = vmatprep.subr.mxu0 0.0
    %2005 = vmatpush1.msra.mxu0 %v1852
    %2006 = vmatprep.subr.mxu0 0.0
    %2007 = vmatpush1.msra.mxu0 %v1853
    %2008 = vmatprep.subr.mxu0 0.0
    %2009 = vmatpush1.msra.mxu0 %v1854
    %2010 = vmatprep.subr.mxu0 0.0
    %2011 = vmatpush1.msra.mxu0 %v1855
    %2012 = vmatprep.subr.mxu0 0.0
    %2013 = vmatpush1.msra.mxu0 %v1856
    %2014 = vmatprep.subr.mxu0 0.0
    %2015 = vmatpush1.msra.mxu0 %v1857
    %2016 = vmatprep.subr.mxu0 0.0
    %2017 = vmatpush1.msra.mxu0 %v1858
    %2018 = vmatprep.subr.mxu0 0.0
    %2019 = vmatpush1.msra.mxu0 %v1859
    %2020 = vmatprep.subr.mxu0 0.0
    %2021 = vmatpush1.msra.mxu0 %v1860
    %2022 = vmatprep.subr.mxu0 0.0
    %2023 = vmatpush1.msra.mxu0 %v1861
    %2024 = vmatprep.subr.mxu0 0.0
    %2025 = vmatpush1.msra.mxu0 %v1862
    %2026 = vmatprep.subr.mxu0 0.0
    %2027 = vmatpush1.msra.mxu0 %v1863
    %2028 = vmatprep.subr.mxu0 0.0
    %2029 = vmatpush1.msra.mxu0 %v1864
    %2030 = vmatprep.subr.mxu0 0.0
    %2031 = vmatpush1.msra.mxu0 %v1865
    %2032 = vmatprep.subr.mxu0 0.0
    %2033 = vmatpush1.msra.mxu0 %v1866
    %2034 = vmatprep.subr.mxu0 0.0
    %2035 = vmatpush1.msra.mxu0 %v1867
    %2036 = vmatprep.subr.mxu0 0.0
    %2037 = vmatpush1.msra.mxu0 %v1868
    %2038 = vmatprep.subr.mxu0 0.0
    %2039 = vmatpush1.msra.mxu0 %v1869
    %2040 = vmatprep.subr.mxu0 0.0
    %2041 = vmatpush1.msra.mxu0 %v1870
    %2042 = vmatprep.subr.mxu0 0.0
    %2043 = vmatpush1.msra.mxu0 %v1871
    %2044 = vmatprep.subr.mxu0 0.0
    %2045 = vmatpush1.msra.mxu0 %v1872
    %2046 = vmatprep.subr.mxu0 0.0
    %2047 = vmatpush1.msra.mxu0 %v1873
    %2048 = vmatprep.subr.mxu0 0.0
    %2049 = vmatpush1.msra.mxu0 %v1874
    %2050 = vmatprep.subr.mxu0 0.0
    %2051 = vmatpush1.msra.mxu0 %v1875
    %2052 = vmatprep.mubr.f32.mxu0 %v1269
    %2053 = vmatmul.mubr.f32.gmra.mrb[0].mxu0 %v1268
    %v2054 = vpop.f32.mrb[0].mxu0
    %v2055 = vadd.f32 0.0, %v2054
    %v2056 = vpop.f32.mrb[0].mxu0
    %2057 = vmatprep.mubr.f32.mxu0 %v1278
    %2058 = vmatmul.mubr.f32.gmra.mrb[0].mxu0 %v1277
    %v2059 = vpop.f32.mrb[0].mxu0
    %v2060 = vadd.f32 0.0, %v2059
    %v2061 = vpop.f32.mrb[0].mxu0
    %2062 = vmatprep.mubr.f32.mxu0 %v1287
    %2063 = vmatmul.mubr.f32.gmra.mrb[0].mxu0 %v1286
    %v2064 = vpop.f32.mrb[0].mxu0
    %v2065 = vadd.f32 0.0, %v2064
    %v2066 = vpop.f32.mrb[0].mxu0
    %2067 = vmatprep.mubr.f32.mxu0 %v1296
    %2068 = vmatmul.mubr.f32.gmra.mrb[0].mxu0 %v1295
    %v2069 = vpop.f32.mrb[0].mxu0
    %v2070 = vadd.f32 0.0, %v2069
    %v2071 = vpop.f32.mrb[0].mxu0
    %2072 = vmatprep.mubr.f32.mxu0 %v1305
    %2073 = vmatmul.mubr.f32.gmra.mrb[0].mxu0 %v1304
    %v2074 = vpop.f32.mrb[0].mxu0
    %v2075 = vadd.f32 0.0, %v2074
    %v2076 = vpop.f32.mrb[0].mxu0
    %2077 = vmatprep.mubr.f32.mxu0 %v1314
    %2078 = vmatmul.mubr.f32.gmra.mrb[0].mxu0 %v1313
    %v2079 = vpop.f32.mrb[0].mxu0
    %v2080 = vadd.f32 0.0, %v2079
    %v2081 = vpop.f32.mrb[0].mxu0
    %2082 = vmatprep.mubr.f32.mxu0 %v1323
    %2083 = vmatmul.mubr.f32.gmra.mrb[0].mxu0 %v1322
    %v2084 = vpop.f32.mrb[0].mxu0
    %v2085 = vadd.f32 0.0, %v2084
    %v2086 = vpop.f32.mrb[0].mxu0
    %2087 = vmatprep.mubr.f32.mxu0 %v1332
    %2088 = vmatmul.mubr.f32.gmra.mrb[0].mxu0 %v1331
    %v2089 = vpop.f32.mrb[0].mxu0
    %v2090 = vadd.f32 0.0, %v2089
    %v2091 = vpop.f32.mrb[0].mxu0
    %2092 = vmatprep.mubr.f32.mxu0 %v1341
    %2093 = vmatmul.mubr.f32.gmra.mrb[0].mxu0 %v1340
    %v2094 = vpop.f32.mrb[0].mxu0
    %v2095 = vadd.f32 0.0, %v2094
    %v2096 = vpop.f32.mrb[0].mxu0
    %2097 = vmatprep.mubr.f32.mxu0 %v1350
    %2098 = vmatmul.mubr.f32.gmra.mrb[0].mxu0 %v1349
    %v2099 = vpop.f32.mrb[0].mxu0
    %v2100 = vadd.f32 0.0, %v2099
    %v2101 = vpop.f32.mrb[0].mxu0
    %2102 = vmatprep.mubr.f32.mxu0 %v1359
    %2103 = vmatmul.mubr.f32.gmra.mrb[0].mxu0 %v1358
    %v2104 = vpop.f32.mrb[0].mxu0
    %v2105 = vadd.f32 0.0, %v2104
    %v2106 = vpop.f32.mrb[0].mxu0
    %2107 = vmatprep.mubr.f32.mxu0 %v1368
    %2108 = vmatmul.mubr.f32.gmra.mrb[0].mxu0 %v1367
    %v2109 = vpop.f32.mrb[0].mxu0
    %v2110 = vadd.f32 0.0, %v2109
    %v2111 = vpop.f32.mrb[0].mxu0
    %2112 = vmatprep.mubr.f32.mxu0 %v1377
    %2113 = vmatmul.mubr.f32.gmra.mrb[0].mxu0 %v1376
    %v2114 = vpop.f32.mrb[0].mxu0
    %v2115 = vadd.f32 0.0, %v2114
    %v2116 = vpop.f32.mrb[0].mxu0
    %2117 = vmatprep.mubr.f32.mxu0 %v1386
    %2118 = vmatmul.mubr.f32.gmra.mrb[0].mxu0 %v1385
    %v2119 = vpop.f32.mrb[0].mxu0
    %v2120 = vadd.f32 0.0, %v2119
    %v2121 = vpop.f32.mrb[0].mxu0
    %2122 = vmatprep.mubr.f32.mxu0 %v1395
    %2123 = vmatmul.mubr.f32.gmra.mrb[0].mxu0 %v1394
    %v2124 = vpop.f32.mrb[0].mxu0
    %v2125 = vadd.f32 0.0, %v2124
    %v2126 = vpop.f32.mrb[0].mxu0
    %2127 = vmatprep.mubr.f32.mxu0 %v1404
    %2128 = vmatmul.mubr.f32.gmra.mrb[0].mxu0 %v1403
    %v2129 = vpop.f32.mrb[0].mxu0
    %v2130 = vadd.f32 0.0, %v2129
    %v2131 = vpop.f32.mrb[0].mxu0
    %2132 = vmatprep.mubr.f32.mxu0 %v1413
    %2133 = vmatmul.mubr.f32.gmra.mrb[0].mxu0 %v1412
    %v2134 = vpop.f32.mrb[0].mxu0
    %v2135 = vadd.f32 0.0, %v2134
    %v2136 = vpop.f32.mrb[0].mxu0
    %2137 = vmatprep.mubr.f32.mxu0 %v1422
    %2138 = vmatmul.mubr.f32.gmra.mrb[0].mxu0 %v1421
    %v2139 = vpop.f32.mrb[0].mxu0
    %v2140 = vadd.f32 0.0, %v2139
    %v2141 = vpop.f32.mrb[0].mxu0
    %2142 = vmatprep.mubr.f32.mxu0 %v1431
    %2143 = vmatmul.mubr.f32.gmra.mrb[0].mxu0 %v1430
    %v2144 = vpop.f32.mrb[0].mxu0
    %v2145 = vadd.f32 0.0, %v2144
    %v2146 = vpop.f32.mrb[0].mxu0
    %2147 = vmatprep.mubr.f32.mxu0 %v1440
    %2148 = vmatmul.mubr.f32.gmra.mrb[0].mxu0 %v1439
    %v2149 = vpop.f32.mrb[0].mxu0
    %v2150 = vadd.f32 0.0, %v2149
    %v2151 = vpop.f32.mrb[0].mxu0
    %2152 = vmatprep.mubr.f32.mxu0 %v1449
    %2153 = vmatmul.mubr.f32.gmra.mrb[0].mxu0 %v1448
    %v2154 = vpop.f32.mrb[0].mxu0
    %v2155 = vadd.f32 0.0, %v2154
    %v2156 = vpop.f32.mrb[0].mxu0
    %2157 = vmatprep.mubr.f32.mxu0 %v1458
    %2158 = vmatmul.mubr.f32.gmra.mrb[0].mxu0 %v1457
    %v2159 = vpop.f32.mrb[0].mxu0
    %v2160 = vadd.f32 0.0, %v2159
    %v2161 = vpop.f32.mrb[0].mxu0
    %2162 = vmatprep.mubr.f32.mxu0 %v1467
    %2163 = vmatmul.mubr.f32.gmra.mrb[0].mxu0 %v1466
    %v2164 = vpop.f32.mrb[0].mxu0
    %v2165 = vadd.f32 0.0, %v2164
    %v2166 = vpop.f32.mrb[0].mxu0
    %2167 = vmatprep.mubr.f32.mxu0 %v1476
    %2168 = vmatmul.mubr.f32.gmra.mrb[0].mxu0 %v1475
    %v2169 = vpop.f32.mrb[0].mxu0
    %v2170 = vadd.f32 0.0, %v2169
    %v2171 = vpop.f32.mrb[0].mxu0
    %2172 = vmatprep.mubr.f32.mxu0 %v1485
    %2173 = vmatmul.mubr.f32.gmra.mrb[0].mxu0 %v1484
    %v2174 = vpop.f32.mrb[0].mxu0
    %v2175 = vadd.f32 0.0, %v2174
    %v2176 = vpop.f32.mrb[0].mxu0
    %2177 = vmatprep.mubr.f32.mxu0 %v1494
    %2178 = vmatmul.mubr.f32.gmra.mrb[0].mxu0 %v1493
    %v2179 = vpop.f32.mrb[0].mxu0
    %v2180 = vadd.f32 0.0, %v2179
    %v2181 = vpop.f32.mrb[0].mxu0
    %2182 = vmatprep.mubr.f32.mxu0 %v1503
    %2183 = vmatmul.mubr.f32.gmra.mrb[0].mxu0 %v1502
    %v2184 = vpop.f32.mrb[0].mxu0
    %v2185 = vadd.f32 0.0, %v2184
    %v2186 = vpop.f32.mrb[0].mxu0
    %2187 = vmatprep.mubr.f32.mxu0 %v1512
    %2188 = vmatmul.mubr.f32.gmra.mrb[0].mxu0 %v1511
    %v2189 = vpop.f32.mrb[0].mxu0
    %v2190 = vadd.f32 0.0, %v2189
    %v2191 = vpop.f32.mrb[0].mxu0
    %2192 = vmatprep.mubr.f32.mxu0 %v1521
    %2193 = vmatmul.mubr.f32.gmra.mrb[0].mxu0 %v1520
    %v2194 = vpop.f32.mrb[0].mxu0
    %v2195 = vadd.f32 0.0, %v2194
    %v2196 = vpop.f32.mrb[0].mxu0
    %2197 = vmatprep.mubr.f32.mxu0 %v1530
    %2198 = vmatmul.mubr.f32.gmra.mrb[0].mxu0 %v1529
    %v2199 = vpop.f32.mrb[0].mxu0
    %v2200 = vadd.f32 0.0, %v2199
    %v2201 = vpop.f32.mrb[0].mxu0
    %2202 = vmatprep.mubr.f32.mxu0 %v1539
    %2203 = vmatmul.mubr.f32.gmra.mrb[0].mxu0 %v1538
    %v2204 = vpop.f32.mrb[0].mxu0
    %v2205 = vadd.f32 0.0, %v2204
    %v2206 = vpop.f32.mrb[0].mxu0
    %2207 = vmatprep.mubr.f32.mxu0 %v1548
    %2208 = vmatmul.mubr.f32.gmra.mrb[0].mxu0 %v1547
    %v2209 = vpop.f32.mrb[0].mxu0
    %v2210 = vadd.f32 0.0, %v2209
    %v2211 = vpop.f32.mrb[0].mxu0
    %2212 = vmatprep.mubr.f32.mxu0 %v1557
    %2213 = vmatmul.mubr.f32.gmra.mrb[0].mxu0 %v1556
    %v2214 = vpop.f32.mrb[0].mxu0
    %v2215 = vadd.f32 0.0, %v2214
    %v2216 = vpop.f32.mrb[0].mxu0
    %2217 = vmatprep.mubr.f32.mxu0 %v1566
    %2218 = vmatmul.mubr.f32.gmra.mrb[0].mxu0 %v1565
    %v2219 = vpop.f32.mrb[0].mxu0
    %v2220 = vadd.f32 0.0, %v2219
    %v2221 = vpop.f32.mrb[0].mxu0
    %2222 = vmatprep.mubr.f32.mxu0 %v1575
    %2223 = vmatmul.mubr.f32.gmra.mrb[0].mxu0 %v1574
    %v2224 = vpop.f32.mrb[0].mxu0
    %v2225 = vadd.f32 0.0, %v2224
    %v2226 = vpop.f32.mrb[0].mxu0
    %2227 = vmatprep.mubr.f32.mxu0 %v1584
    %2228 = vmatmul.mubr.f32.gmra.mrb[0].mxu0 %v1583
    %v2229 = vpop.f32.mrb[0].mxu0
    %v2230 = vadd.f32 0.0, %v2229
    %v2231 = vpop.f32.mrb[0].mxu0
    %2232 = vmatprep.mubr.f32.mxu0 %v1593
    %2233 = vmatmul.mubr.f32.gmra.mrb[0].mxu0 %v1592
    %v2234 = vpop.f32.mrb[0].mxu0
    %v2235 = vadd.f32 0.0, %v2234
    %v2236 = vpop.f32.mrb[0].mxu0
    %2237 = vmatprep.mubr.f32.mxu0 %v1602
    %2238 = vmatmul.mubr.f32.gmra.mrb[0].mxu0 %v1601
    %v2239 = vpop.f32.mrb[0].mxu0
    %v2240 = vadd.f32 0.0, %v2239
    %v2241 = vpop.f32.mrb[0].mxu0
    %2242 = vmatprep.mubr.f32.mxu0 %v1611
    %2243 = vmatmul.mubr.f32.gmra.mrb[0].mxu0 %v1610
    %v2244 = vpop.f32.mrb[0].mxu0
    %v2245 = vadd.f32 0.0, %v2244
    %v2246 = vpop.f32.mrb[0].mxu0
    %2247 = vmatprep.mubr.f32.mxu0 %v1620
    %2248 = vmatmul.mubr.f32.gmra.mrb[0].mxu0 %v1619
    %v2249 = vpop.f32.mrb[0].mxu0
    %v2250 = vadd.f32 0.0, %v2249
    %v2251 = vpop.f32.mrb[0].mxu0
    %2252 = vmatprep.mubr.f32.mxu0 %v1629
    %2253 = vmatmul.mubr.f32.gmra.mrb[0].mxu0 %v1628
    %v2254 = vpop.f32.mrb[0].mxu0
    %v2255 = vadd.f32 0.0, %v2254
    %v2256 = vpop.f32.mrb[0].mxu0
    %2257 = vmatprep.mubr.f32.mxu0 %v1638
    %2258 = vmatmul.mubr.f32.gmra.mrb[0].mxu0 %v1637
    %v2259 = vpop.f32.mrb[0].mxu0
    %v2260 = vadd.f32 0.0, %v2259
    %v2261 = vpop.f32.mrb[0].mxu0
    %2262 = vmatprep.mubr.f32.mxu0 %v1647
    %2263 = vmatmul.mubr.f32.gmra.mrb[0].mxu0 %v1646
    %v2264 = vpop.f32.mrb[0].mxu0
    %v2265 = vadd.f32 0.0, %v2264
    %v2266 = vpop.f32.mrb[0].mxu0
    %2267 = vmatprep.mubr.f32.mxu0 %v1656
    %2268 = vmatmul.mubr.f32.gmra.mrb[0].mxu0 %v1655
    %v2269 = vpop.f32.mrb[0].mxu0
    %v2270 = vadd.f32 0.0, %v2269
    %v2271 = vpop.f32.mrb[0].mxu0
    %2272 = vmatprep.mubr.f32.mxu0 %v1665
    %2273 = vmatmul.mubr.f32.gmra.mrb[0].mxu0 %v1664
    %v2274 = vpop.f32.mrb[0].mxu0
    %v2275 = vadd.f32 0.0, %v2274
    %v2276 = vpop.f32.mrb[0].mxu0
    %2277 = vmatprep.mubr.f32.mxu0 %v1674
    %2278 = vmatmul.mubr.f32.gmra.mrb[0].mxu0 %v1673
    %v2279 = vpop.f32.mrb[0].mxu0
    %v2280 = vadd.f32 0.0, %v2279
    %v2281 = vpop.f32.mrb[0].mxu0
    %2282 = vmatprep.mubr.f32.mxu0 %v1683
    %2283 = vmatmul.mubr.f32.gmra.mrb[0].mxu0 %v1682
    %v2284 = vpop.f32.mrb[0].mxu0
    %v2285 = vadd.f32 0.0, %v2284
    %v2286 = vpop.f32.mrb[0].mxu0
    %2287 = vmatprep.mubr.f32.mxu0 %v1692
    %2288 = vmatmul.mubr.f32.gmra.mrb[0].mxu0 %v1691
    %v2289 = vpop.f32.mrb[0].mxu0
    %v2290 = vadd.f32 0.0, %v2289
    %v2291 = vpop.f32.mrb[0].mxu0
    %2292 = vmatprep.mubr.f32.mxu0 %v1701
    %2293 = vmatmul.mubr.f32.gmra.mrb[0].mxu0 %v1700
    %v2294 = vpop.f32.mrb[0].mxu0
    %v2295 = vadd.f32 0.0, %v2294
    %v2296 = vpop.f32.mrb[0].mxu0
    %2297 = vmatprep.mubr.f32.mxu0 %v1710
    %2298 = vmatmul.mubr.f32.gmra.mrb[0].mxu0 %v1709
    %v2299 = vpop.f32.mrb[0].mxu0
    %v2300 = vadd.f32 0.0, %v2299
    %v2301 = vpop.f32.mrb[0].mxu0
    %2302 = vmatprep.mubr.f32.mxu0 %v1719
    %2303 = vmatmul.mubr.f32.gmra.mrb[0].mxu0 %v1718
    %v2304 = vpop.f32.mrb[0].mxu0
    %v2305 = vadd.f32 0.0, %v2304
    %v2306 = vpop.f32.mrb[0].mxu0
    %2307 = vmatprep.mubr.f32.mxu0 %v1728
    %2308 = vmatmul.mubr.f32.gmra.mrb[0].mxu0 %v1727
    %v2309 = vpop.f32.mrb[0].mxu0
    %v2310 = vadd.f32 0.0, %v2309
    %v2311 = vpop.f32.mrb[0].mxu0
    %2312 = vmatprep.mubr.f32.mxu0 %v1737
    %2313 = vmatmul.mubr.f32.gmra.mrb[0].mxu0 %v1736
    %v2314 = vpop.f32.mrb[0].mxu0
    %v2315 = vadd.f32 0.0, %v2314
    %v2316 = vpop.f32.mrb[0].mxu0
    %2317 = vmatprep.mubr.f32.mxu0 %v1746
    %2318 = vmatmul.mubr.f32.gmra.mrb[0].mxu0 %v1745
    %v2319 = vpop.f32.mrb[0].mxu0
    %v2320 = vadd.f32 0.0, %v2319
    %v2321 = vpop.f32.mrb[0].mxu0
    %2322 = vmatprep.mubr.f32.mxu0 %v1755
    %2323 = vmatmul.mubr.f32.gmra.mrb[0].mxu0 %v1754
    %v2324 = vpop.f32.mrb[0].mxu0
    %v2325 = vadd.f32 0.0, %v2324
    %v2326 = vpop.f32.mrb[0].mxu0
    %2327 = vmatprep.mubr.f32.mxu0 %v1764
    %2328 = vmatmul.mubr.f32.gmra.mrb[0].mxu0 %v1763
    %v2329 = vpop.f32.mrb[0].mxu0
    %v2330 = vadd.f32 0.0, %v2329
    %v2331 = vpop.f32.mrb[0].mxu0
    %2332 = vmatprep.mubr.f32.mxu0 %v1773
    %2333 = vmatmul.mubr.f32.gmra.mrb[0].mxu0 %v1772
    %v2334 = vpop.f32.mrb[0].mxu0
    %v2335 = vadd.f32 0.0, %v2334
    %v2336 = vpop.f32.mrb[0].mxu0
    %2337 = vmatprep.mubr.f32.mxu0 %v1782
    %2338 = vmatmul.mubr.f32.gmra.mrb[0].mxu0 %v1781
    %v2339 = vpop.f32.mrb[0].mxu0
    %v2340 = vadd.f32 0.0, %v2339
    %v2341 = vpop.f32.mrb[0].mxu0
    %2342 = vmatprep.mubr.f32.mxu0 %v1791
    %2343 = vmatmul.mubr.f32.gmra.mrb[0].mxu0 %v1790
    %v2344 = vpop.f32.mrb[0].mxu0
    %v2345 = vadd.f32 0.0, %v2344
    %v2346 = vpop.f32.mrb[0].mxu0
    %2347 = vmatprep.mubr.f32.mxu0 %v1800
    %2348 = vmatmul.mubr.f32.gmra.mrb[0].mxu0 %v1799
    %v2349 = vpop.f32.mrb[0].mxu0
    %v2350 = vadd.f32 0.0, %v2349
    %v2351 = vpop.f32.mrb[0].mxu0
    %2352 = vmatprep.mubr.f32.mxu0 %v1809
    %2353 = vmatmul.mubr.f32.gmra.mrb[0].mxu0 %v1808
    %v2354 = vpop.f32.mrb[0].mxu0
    %v2355 = vadd.f32 0.0, %v2354
    %v2356 = vpop.f32.mrb[0].mxu0
    %2357 = vmatprep.mubr.f32.mxu0 %v1818
    %2358 = vmatmul.mubr.f32.gmra.mrb[0].mxu0 %v1817
    %v2359 = vpop.f32.mrb[0].mxu0
    %v2360 = vadd.f32 0.0, %v2359
    %v2361 = vpop.f32.mrb[0].mxu0
    %2362 = vmatprep.mubr.f32.mxu0 %v1827
    %2363 = vmatmul.mubr.f32.gmra.mrb[0].mxu0 %v1826
    %v2364 = vpop.f32.mrb[0].mxu0
    %v2365 = vadd.f32 0.0, %v2364
    %v2366 = vpop.f32.mrb[0].mxu0
    %2367 = vmatprep.mubr.f32.mxu0 %v1836
    %2368 = vmatmul.mubr.f32.gmra.mrb[0].mxu0 %v1835
    %v2369 = vpop.f32.mrb[0].mxu0
    %v2370 = vadd.f32 0.0, %v2369
    %v2371 = vpop.f32.mrb[0].mxu0
    %2372 = vdwg.mxu0
    %2373 = vmatprep.subr.mxu0 0.0
    %2374 = vmatpush1.msra.mxu0 %v1876
    %2375 = vmatprep.subr.mxu0 0.0
    %2376 = vmatpush1.msra.mxu0 %v1877
    %2377 = vmatprep.subr.mxu0 0.0
    %2378 = vmatpush1.msra.mxu0 %v1878
    %2379 = vmatprep.subr.mxu0 0.0
    %2380 = vmatpush1.msra.mxu0 %v1879
    %2381 = vmatprep.subr.mxu0 0.0
    %2382 = vmatpush1.msra.mxu0 %v1880
    %2383 = vmatprep.subr.mxu0 0.0
    %2384 = vmatpush1.msra.mxu0 %v1881
    %2385 = vmatprep.subr.mxu0 0.0
    %2386 = vmatpush1.msra.mxu0 %v1882
    %2387 = vmatprep.subr.mxu0 0.0
    %2388 = vmatpush1.msra.mxu0 %v1883
    %2389 = vmatprep.subr.mxu0 0.0
    %2390 = vmatpush1.msra.mxu0 %v1884
    %2391 = vmatprep.subr.mxu0 0.0
    %2392 = vmatpush1.msra.mxu0 %v1885
    %2393 = vmatprep.subr.mxu0 0.0
    %2394 = vmatpush1.msra.mxu0 %v1886
    %2395 = vmatprep.subr.mxu0 0.0
    %2396 = vmatpush1.msra.mxu0 %v1887
    %2397 = vmatprep.subr.mxu0 0.0
    %2398 = vmatpush1.msra.mxu0 %v1888
    %2399 = vmatprep.subr.mxu0 0.0
    %2400 = vmatpush1.msra.mxu0 %v1889
    %2401 = vmatprep.subr.mxu0 0.0
    %2402 = vmatpush1.msra.mxu0 %v1890
    %2403 = vmatprep.subr.mxu0 0.0
    %2404 = vmatpush1.msra.mxu0 %v1891
    %2405 = vmatprep.subr.mxu0 0.0
    %2406 = vmatpush1.msra.mxu0 %v1892
    %2407 = vmatprep.subr.mxu0 0.0
    %2408 = vmatpush1.msra.mxu0 %v1893
    %2409 = vmatprep.subr.mxu0 0.0
    %2410 = vmatpush1.msra.mxu0 %v1894
    %2411 = vmatprep.subr.mxu0 0.0
    %2412 = vmatpush1.msra.mxu0 %v1895
    %2413 = vmatprep.subr.mxu0 0.0
    %2414 = vmatpush1.msra.mxu0 %v1896
    %2415 = vmatprep.subr.mxu0 0.0
    %2416 = vmatpush1.msra.mxu0 %v1897
    %2417 = vmatprep.subr.mxu0 0.0
    %2418 = vmatpush1.msra.mxu0 %v1898
    %2419 = vmatprep.subr.mxu0 0.0
    %2420 = vmatpush1.msra.mxu0 %v1899
    %2421 = vmatprep.subr.mxu0 0.0
    %2422 = vmatpush1.msra.mxu0 %v1900
    %2423 = vmatprep.subr.mxu0 0.0
    %2424 = vmatpush1.msra.mxu0 %v1901
    %2425 = vmatprep.subr.mxu0 0.0
    %2426 = vmatpush1.msra.mxu0 %v1902
    %2427 = vmatprep.subr.mxu0 0.0
    %2428 = vmatpush1.msra.mxu0 %v1903
    %2429 = vmatprep.subr.mxu0 0.0
    %2430 = vmatpush1.msra.mxu0 %v1904
    %2431 = vmatprep.subr.mxu0 0.0
    %2432 = vmatpush1.msra.mxu0 %v1905
    %2433 = vmatprep.subr.mxu0 0.0
    %2434 = vmatpush1.msra.mxu0 %v1906
    %2435 = vmatprep.subr.mxu0 0.0
    %2436 = vmatpush1.msra.mxu0 %v1907
    %2437 = vmatprep.mubr.f32.mxu0 %v1271
    %2438 = vmatmul.mubr.f32.gmra.mrb[0].mxu0 %v1270
    %v2439 = vpop.f32.mrb[0].mxu0
    %v2440 = vadd.f32 %v2055, %v2439
    %v2441 = vpop.f32.mrb[0].mxu0
    %2442 = vmatprep.mubr.f32.mxu0 %v1280
    %2443 = vmatmul.mubr.f32.gmra.mrb[0].mxu0 %v1279
    %v2444 = vpop.f32.mrb[0].mxu0
    %v2445 = vadd.f32 %v2060, %v2444
    %v2446 = vpop.f32.mrb[0].mxu0
    %2447 = vmatprep.mubr.f32.mxu0 %v1289
    %2448 = vmatmul.mubr.f32.gmra.mrb[0].mxu0 %v1288
    %v2449 = vpop.f32.mrb[0].mxu0
    %v2450 = vadd.f32 %v2065, %v2449
    %v2451 = vpop.f32.mrb[0].mxu0
    %2452 = vmatprep.mubr.f32.mxu0 %v1298
    %2453 = vmatmul.mubr.f32.gmra.mrb[0].mxu0 %v1297
    %v2454 = vpop.f32.mrb[0].mxu0
    %v2455 = vadd.f32 %v2070, %v2454
    %v2456 = vpop.f32.mrb[0].mxu0
    %2457 = vmatprep.mubr.f32.mxu0 %v1307
    %2458 = vmatmul.mubr.f32.gmra.mrb[0].mxu0 %v1306
    %v2459 = vpop.f32.mrb[0].mxu0
    %v2460 = vadd.f32 %v2075, %v2459
    %v2461 = vpop.f32.mrb[0].mxu0
    %2462 = vmatprep.mubr.f32.mxu0 %v1316
    %2463 = vmatmul.mubr.f32.gmra.mrb[0].mxu0 %v1315
    %v2464 = vpop.f32.mrb[0].mxu0
    %v2465 = vadd.f32 %v2080, %v2464
    %v2466 = vpop.f32.mrb[0].mxu0
    %2467 = vmatprep.mubr.f32.mxu0 %v1325
    %2468 = vmatmul.mubr.f32.gmra.mrb[0].mxu0 %v1324
    %v2469 = vpop.f32.mrb[0].mxu0
    %v2470 = vadd.f32 %v2085, %v2469
    %v2471 = vpop.f32.mrb[0].mxu0
    %2472 = vmatprep.mubr.f32.mxu0 %v1334
    %2473 = vmatmul.mubr.f32.gmra.mrb[0].mxu0 %v1333
    %v2474 = vpop.f32.mrb[0].mxu0
    %v2475 = vadd.f32 %v2090, %v2474
    %v2476 = vpop.f32.mrb[0].mxu0
    %2477 = vmatprep.mubr.f32.mxu0 %v1343
    %2478 = vmatmul.mubr.f32.gmra.mrb[0].mxu0 %v1342
    %v2479 = vpop.f32.mrb[0].mxu0
    %v2480 = vadd.f32 %v2095, %v2479
    %v2481 = vpop.f32.mrb[0].mxu0
    %2482 = vmatprep.mubr.f32.mxu0 %v1352
    %2483 = vmatmul.mubr.f32.gmra.mrb[0].mxu0 %v1351
    %v2484 = vpop.f32.mrb[0].mxu0
    %v2485 = vadd.f32 %v2100, %v2484
    %v2486 = vpop.f32.mrb[0].mxu0
    %2487 = vmatprep.mubr.f32.mxu0 %v1361
    %2488 = vmatmul.mubr.f32.gmra.mrb[0].mxu0 %v1360
    %v2489 = vpop.f32.mrb[0].mxu0
    %v2490 = vadd.f32 %v2105, %v2489
    %v2491 = vpop.f32.mrb[0].mxu0
    %2492 = vmatprep.mubr.f32.mxu0 %v1370
    %2493 = vmatmul.mubr.f32.gmra.mrb[0].mxu0 %v1369
    %v2494 = vpop.f32.mrb[0].mxu0
    %v2495 = vadd.f32 %v2110, %v2494
    %v2496 = vpop.f32.mrb[0].mxu0
    %2497 = vmatprep.mubr.f32.mxu0 %v1379
    %2498 = vmatmul.mubr.f32.gmra.mrb[0].mxu0 %v1378
    %v2499 = vpop.f32.mrb[0].mxu0
    %v2500 = vadd.f32 %v2115, %v2499
    %v2501 = vpop.f32.mrb[0].mxu0
    %2502 = vmatprep.mubr.f32.mxu0 %v1388
    %2503 = vmatmul.mubr.f32.gmra.mrb[0].mxu0 %v1387
    %v2504 = vpop.f32.mrb[0].mxu0
    %v2505 = vadd.f32 %v2120, %v2504
    %v2506 = vpop.f32.mrb[0].mxu0
    %2507 = vmatprep.mubr.f32.mxu0 %v1397
    %2508 = vmatmul.mubr.f32.gmra.mrb[0].mxu0 %v1396
    %v2509 = vpop.f32.mrb[0].mxu0
    %v2510 = vadd.f32 %v2125, %v2509
    %v2511 = vpop.f32.mrb[0].mxu0
    %2512 = vmatprep.mubr.f32.mxu0 %v1406
    %2513 = vmatmul.mubr.f32.gmra.mrb[0].mxu0 %v1405
    %v2514 = vpop.f32.mrb[0].mxu0
    %v2515 = vadd.f32 %v2130, %v2514
    %v2516 = vpop.f32.mrb[0].mxu0
    %2517 = vmatprep.mubr.f32.mxu0 %v1415
    %2518 = vmatmul.mubr.f32.gmra.mrb[0].mxu0 %v1414
    %v2519 = vpop.f32.mrb[0].mxu0
    %v2520 = vadd.f32 %v2135, %v2519
    %v2521 = vpop.f32.mrb[0].mxu0
    %2522 = vmatprep.mubr.f32.mxu0 %v1424
    %2523 = vmatmul.mubr.f32.gmra.mrb[0].mxu0 %v1423
    %v2524 = vpop.f32.mrb[0].mxu0
    %v2525 = vadd.f32 %v2140, %v2524
    %v2526 = vpop.f32.mrb[0].mxu0
    %2527 = vmatprep.mubr.f32.mxu0 %v1433
    %2528 = vmatmul.mubr.f32.gmra.mrb[0].mxu0 %v1432
    %v2529 = vpop.f32.mrb[0].mxu0
    %v2530 = vadd.f32 %v2145, %v2529
    %v2531 = vpop.f32.mrb[0].mxu0
    %2532 = vmatprep.mubr.f32.mxu0 %v1442
    %2533 = vmatmul.mubr.f32.gmra.mrb[0].mxu0 %v1441
    %v2534 = vpop.f32.mrb[0].mxu0
    %v2535 = vadd.f32 %v2150, %v2534
    %v2536 = vpop.f32.mrb[0].mxu0
    %2537 = vmatprep.mubr.f32.mxu0 %v1451
    %2538 = vmatmul.mubr.f32.gmra.mrb[0].mxu0 %v1450
    %v2539 = vpop.f32.mrb[0].mxu0
    %v2540 = vadd.f32 %v2155, %v2539
    %v2541 = vpop.f32.mrb[0].mxu0
    %2542 = vmatprep.mubr.f32.mxu0 %v1460
    %2543 = vmatmul.mubr.f32.gmra.mrb[0].mxu0 %v1459
    %v2544 = vpop.f32.mrb[0].mxu0
    %v2545 = vadd.f32 %v2160, %v2544
    %v2546 = vpop.f32.mrb[0].mxu0
    %2547 = vmatprep.mubr.f32.mxu0 %v1469
    %2548 = vmatmul.mubr.f32.gmra.mrb[0].mxu0 %v1468
    %v2549 = vpop.f32.mrb[0].mxu0
    %v2550 = vadd.f32 %v2165, %v2549
    %v2551 = vpop.f32.mrb[0].mxu0
    %2552 = vmatprep.mubr.f32.mxu0 %v1478
    %2553 = vmatmul.mubr.f32.gmra.mrb[0].mxu0 %v1477
    %v2554 = vpop.f32.mrb[0].mxu0
    %v2555 = vadd.f32 %v2170, %v2554
    %v2556 = vpop.f32.mrb[0].mxu0
    %2557 = vmatprep.mubr.f32.mxu0 %v1487
    %2558 = vmatmul.mubr.f32.gmra.mrb[0].mxu0 %v1486
    %v2559 = vpop.f32.mrb[0].mxu0
    %v2560 = vadd.f32 %v2175, %v2559
    %v2561 = vpop.f32.mrb[0].mxu0
    %2562 = vmatprep.mubr.f32.mxu0 %v1496
    %2563 = vmatmul.mubr.f32.gmra.mrb[0].mxu0 %v1495
    %v2564 = vpop.f32.mrb[0].mxu0
    %v2565 = vadd.f32 %v2180, %v2564
    %v2566 = vpop.f32.mrb[0].mxu0
    %2567 = vmatprep.mubr.f32.mxu0 %v1505
    %2568 = vmatmul.mubr.f32.gmra.mrb[0].mxu0 %v1504
    %v2569 = vpop.f32.mrb[0].mxu0
    %v2570 = vadd.f32 %v2185, %v2569
    %v2571 = vpop.f32.mrb[0].mxu0
    %2572 = vmatprep.mubr.f32.mxu0 %v1514
    %2573 = vmatmul.mubr.f32.gmra.mrb[0].mxu0 %v1513
    %v2574 = vpop.f32.mrb[0].mxu0
    %v2575 = vadd.f32 %v2190, %v2574
    %v2576 = vpop.f32.mrb[0].mxu0
    %2577 = vmatprep.mubr.f32.mxu0 %v1523
    %2578 = vmatmul.mubr.f32.gmra.mrb[0].mxu0 %v1522
    %v2579 = vpop.f32.mrb[0].mxu0
    %v2580 = vadd.f32 %v2195, %v2579
    %v2581 = vpop.f32.mrb[0].mxu0
    %2582 = vmatprep.mubr.f32.mxu0 %v1532
    %2583 = vmatmul.mubr.f32.gmra.mrb[0].mxu0 %v1531
    %v2584 = vpop.f32.mrb[0].mxu0
    %v2585 = vadd.f32 %v2200, %v2584
    %v2586 = vpop.f32.mrb[0].mxu0
    %2587 = vmatprep.mubr.f32.mxu0 %v1541
    %2588 = vmatmul.mubr.f32.gmra.mrb[0].mxu0 %v1540
    %v2589 = vpop.f32.mrb[0].mxu0
    %v2590 = vadd.f32 %v2205, %v2589
    %v2591 = vpop.f32.mrb[0].mxu0
    %2592 = vmatprep.mubr.f32.mxu0 %v1550
    %2593 = vmatmul.mubr.f32.gmra.mrb[0].mxu0 %v1549
    %v2594 = vpop.f32.mrb[0].mxu0
    %v2595 = vadd.f32 %v2210, %v2594
    %v2596 = vpop.f32.mrb[0].mxu0
    %2597 = vmatprep.mubr.f32.mxu0 %v1559
    %2598 = vmatmul.mubr.f32.gmra.mrb[0].mxu0 %v1558
    %v2599 = vpop.f32.mrb[0].mxu0
    %v2600 = vadd.f32 %v2215, %v2599
    %v2601 = vpop.f32.mrb[0].mxu0
    %2602 = vmatprep.mubr.f32.mxu0 %v1568
    %2603 = vmatmul.mubr.f32.gmra.mrb[0].mxu0 %v1567
    %v2604 = vpop.f32.mrb[0].mxu0
    %v2605 = vadd.f32 %v2220, %v2604
    %v2606 = vpop.f32.mrb[0].mxu0
    %2607 = vmatprep.mubr.f32.mxu0 %v1577
    %2608 = vmatmul.mubr.f32.gmra.mrb[0].mxu0 %v1576
    %v2609 = vpop.f32.mrb[0].mxu0
    %v2610 = vadd.f32 %v2225, %v2609
    %v2611 = vpop.f32.mrb[0].mxu0
    %2612 = vmatprep.mubr.f32.mxu0 %v1586
    %2613 = vmatmul.mubr.f32.gmra.mrb[0].mxu0 %v1585
    %v2614 = vpop.f32.mrb[0].mxu0
    %v2615 = vadd.f32 %v2230, %v2614
    %v2616 = vpop.f32.mrb[0].mxu0
    %2617 = vmatprep.mubr.f32.mxu0 %v1595
    %2618 = vmatmul.mubr.f32.gmra.mrb[0].mxu0 %v1594
    %v2619 = vpop.f32.mrb[0].mxu0
    %v2620 = vadd.f32 %v2235, %v2619
    %v2621 = vpop.f32.mrb[0].mxu0
    %2622 = vmatprep.mubr.f32.mxu0 %v1604
    %2623 = vmatmul.mubr.f32.gmra.mrb[0].mxu0 %v1603
    %v2624 = vpop.f32.mrb[0].mxu0
    %v2625 = vadd.f32 %v2240, %v2624
    %v2626 = vpop.f32.mrb[0].mxu0
    %2627 = vmatprep.mubr.f32.mxu0 %v1613
    %2628 = vmatmul.mubr.f32.gmra.mrb[0].mxu0 %v1612
    %v2629 = vpop.f32.mrb[0].mxu0
    %v2630 = vadd.f32 %v2245, %v2629
    %v2631 = vpop.f32.mrb[0].mxu0
    %2632 = vmatprep.mubr.f32.mxu0 %v1622
    %2633 = vmatmul.mubr.f32.gmra.mrb[0].mxu0 %v1621
    %v2634 = vpop.f32.mrb[0].mxu0
    %v2635 = vadd.f32 %v2250, %v2634
    %v2636 = vpop.f32.mrb[0].mxu0
    %2637 = vmatprep.mubr.f32.mxu0 %v1631
    %2638 = vmatmul.mubr.f32.gmra.mrb[0].mxu0 %v1630
    %v2639 = vpop.f32.mrb[0].mxu0
    %v2640 = vadd.f32 %v2255, %v2639
    %v2641 = vpop.f32.mrb[0].mxu0
    %2642 = vmatprep.mubr.f32.mxu0 %v1640
    %2643 = vmatmul.mubr.f32.gmra.mrb[0].mxu0 %v1639
    %v2644 = vpop.f32.mrb[0].mxu0
    %v2645 = vadd.f32 %v2260, %v2644
    %v2646 = vpop.f32.mrb[0].mxu0
    %2647 = vmatprep.mubr.f32.mxu0 %v1649
    %2648 = vmatmul.mubr.f32.gmra.mrb[0].mxu0 %v1648
    %v2649 = vpop.f32.mrb[0].mxu0
    %v2650 = vadd.f32 %v2265, %v2649
    %v2651 = vpop.f32.mrb[0].mxu0
    %2652 = vmatprep.mubr.f32.mxu0 %v1658
    %2653 = vmatmul.mubr.f32.gmra.mrb[0].mxu0 %v1657
    %v2654 = vpop.f32.mrb[0].mxu0
    %v2655 = vadd.f32 %v2270, %v2654
    %v2656 = vpop.f32.mrb[0].mxu0
    %2657 = vmatprep.mubr.f32.mxu0 %v1667
    %2658 = vmatmul.mubr.f32.gmra.mrb[0].mxu0 %v1666
    %v2659 = vpop.f32.mrb[0].mxu0
    %v2660 = vadd.f32 %v2275, %v2659
    %v2661 = vpop.f32.mrb[0].mxu0
    %2662 = vmatprep.mubr.f32.mxu0 %v1676
    %2663 = vmatmul.mubr.f32.gmra.mrb[0].mxu0 %v1675
    %v2664 = vpop.f32.mrb[0].mxu0
    %v2665 = vadd.f32 %v2280, %v2664
    %v2666 = vpop.f32.mrb[0].mxu0
    %2667 = vmatprep.mubr.f32.mxu0 %v1685
    %2668 = vmatmul.mubr.f32.gmra.mrb[0].mxu0 %v1684
    %v2669 = vpop.f32.mrb[0].mxu0
    %v2670 = vadd.f32 %v2285, %v2669
    %v2671 = vpop.f32.mrb[0].mxu0
    %2672 = vmatprep.mubr.f32.mxu0 %v1694
    %2673 = vmatmul.mubr.f32.gmra.mrb[0].mxu0 %v1693
    %v2674 = vpop.f32.mrb[0].mxu0
    %v2675 = vadd.f32 %v2290, %v2674
    %v2676 = vpop.f32.mrb[0].mxu0
    %2677 = vmatprep.mubr.f32.mxu0 %v1703
    %2678 = vmatmul.mubr.f32.gmra.mrb[0].mxu0 %v1702
    %v2679 = vpop.f32.mrb[0].mxu0
    %v2680 = vadd.f32 %v2295, %v2679
    %v2681 = vpop.f32.mrb[0].mxu0
    %2682 = vmatprep.mubr.f32.mxu0 %v1712
    %2683 = vmatmul.mubr.f32.gmra.mrb[0].mxu0 %v1711
    %v2684 = vpop.f32.mrb[0].mxu0
    %v2685 = vadd.f32 %v2300, %v2684
    %v2686 = vpop.f32.mrb[0].mxu0
    %2687 = vmatprep.mubr.f32.mxu0 %v1721
    %2688 = vmatmul.mubr.f32.gmra.mrb[0].mxu0 %v1720
    %v2689 = vpop.f32.mrb[0].mxu0
    %v2690 = vadd.f32 %v2305, %v2689
    %v2691 = vpop.f32.mrb[0].mxu0
    %2692 = vmatprep.mubr.f32.mxu0 %v1730
    %2693 = vmatmul.mubr.f32.gmra.mrb[0].mxu0 %v1729
    %v2694 = vpop.f32.mrb[0].mxu0
    %v2695 = vadd.f32 %v2310, %v2694
    %v2696 = vpop.f32.mrb[0].mxu0
    %2697 = vmatprep.mubr.f32.mxu0 %v1739
    %2698 = vmatmul.mubr.f32.gmra.mrb[0].mxu0 %v1738
    %v2699 = vpop.f32.mrb[0].mxu0
    %v2700 = vadd.f32 %v2315, %v2699
    %v2701 = vpop.f32.mrb[0].mxu0
    %2702 = vmatprep.mubr.f32.mxu0 %v1748
    %2703 = vmatmul.mubr.f32.gmra.mrb[0].mxu0 %v1747
    %v2704 = vpop.f32.mrb[0].mxu0
    %v2705 = vadd.f32 %v2320, %v2704
    %v2706 = vpop.f32.mrb[0].mxu0
    %2707 = vmatprep.mubr.f32.mxu0 %v1757
    %2708 = vmatmul.mubr.f32.gmra.mrb[0].mxu0 %v1756
    %v2709 = vpop.f32.mrb[0].mxu0
    %v2710 = vadd.f32 %v2325, %v2709
    %v2711 = vpop.f32.mrb[0].mxu0
    %2712 = vmatprep.mubr.f32.mxu0 %v1766
    %2713 = vmatmul.mubr.f32.gmra.mrb[0].mxu0 %v1765
    %v2714 = vpop.f32.mrb[0].mxu0
    %v2715 = vadd.f32 %v2330, %v2714
    %v2716 = vpop.f32.mrb[0].mxu0
    %2717 = vmatprep.mubr.f32.mxu0 %v1775
    %2718 = vmatmul.mubr.f32.gmra.mrb[0].mxu0 %v1774
    %v2719 = vpop.f32.mrb[0].mxu0
    %v2720 = vadd.f32 %v2335, %v2719
    %v2721 = vpop.f32.mrb[0].mxu0
    %2722 = vmatprep.mubr.f32.mxu0 %v1784
    %2723 = vmatmul.mubr.f32.gmra.mrb[0].mxu0 %v1783
    %v2724 = vpop.f32.mrb[0].mxu0
    %v2725 = vadd.f32 %v2340, %v2724
    %v2726 = vpop.f32.mrb[0].mxu0
    %2727 = vmatprep.mubr.f32.mxu0 %v1793
    %2728 = vmatmul.mubr.f32.gmra.mrb[0].mxu0 %v1792
    %v2729 = vpop.f32.mrb[0].mxu0
    %v2730 = vadd.f32 %v2345, %v2729
    %v2731 = vpop.f32.mrb[0].mxu0
    %2732 = vmatprep.mubr.f32.mxu0 %v1802
    %2733 = vmatmul.mubr.f32.gmra.mrb[0].mxu0 %v1801
    %v2734 = vpop.f32.mrb[0].mxu0
    %v2735 = vadd.f32 %v2350, %v2734
    %v2736 = vpop.f32.mrb[0].mxu0
    %2737 = vmatprep.mubr.f32.mxu0 %v1811
    %2738 = vmatmul.mubr.f32.gmra.mrb[0].mxu0 %v1810
    %v2739 = vpop.f32.mrb[0].mxu0
    %v2740 = vadd.f32 %v2355, %v2739
    %v2741 = vpop.f32.mrb[0].mxu0
    %2742 = vmatprep.mubr.f32.mxu0 %v1820
    %2743 = vmatmul.mubr.f32.gmra.mrb[0].mxu0 %v1819
    %v2744 = vpop.f32.mrb[0].mxu0
    %v2745 = vadd.f32 %v2360, %v2744
    %v2746 = vpop.f32.mrb[0].mxu0
    %2747 = vmatprep.mubr.f32.mxu0 %v1829
    %2748 = vmatmul.mubr.f32.gmra.mrb[0].mxu0 %v1828
    %v2749 = vpop.f32.mrb[0].mxu0
    %v2750 = vadd.f32 %v2365, %v2749
    %v2751 = vpop.f32.mrb[0].mxu0
    %2752 = vmatprep.mubr.f32.mxu0 %v1838
    %2753 = vmatmul.mubr.f32.gmra.mrb[0].mxu0 %v1837
    %v2754 = vpop.f32.mrb[0].mxu0
    %v2755 = vadd.f32 %v2370, %v2754
    %v2756 = vpop.f32.mrb[0].mxu0
    %2757 = vdwg.mxu0
    %2758 = vmatprep.subr.mxu0 0.0
    %2759 = vmatpush1.msra.mxu0 %v1908
    %2760 = vmatprep.subr.mxu0 0.0
    %2761 = vmatpush1.msra.mxu0 %v1909
    %2762 = vmatprep.subr.mxu0 0.0
    %2763 = vmatpush1.msra.mxu0 %v1910
    %2764 = vmatprep.subr.mxu0 0.0
    %2765 = vmatpush1.msra.mxu0 %v1911
    %2766 = vmatprep.subr.mxu0 0.0
    %2767 = vmatpush1.msra.mxu0 %v1912
    %2768 = vmatprep.subr.mxu0 0.0
    %2769 = vmatpush1.msra.mxu0 %v1913
    %2770 = vmatprep.subr.mxu0 0.0
    %2771 = vmatpush1.msra.mxu0 %v1914
    %2772 = vmatprep.subr.mxu0 0.0
    %2773 = vmatpush1.msra.mxu0 %v1915
    %2774 = vmatprep.subr.mxu0 0.0
    %2775 = vmatpush1.msra.mxu0 %v1916
    %2776 = vmatprep.subr.mxu0 0.0
    %2777 = vmatpush1.msra.mxu0 %v1917
    %2778 = vmatprep.subr.mxu0 0.0
    %2779 = vmatpush1.msra.mxu0 %v1918
    %2780 = vmatprep.subr.mxu0 0.0
    %2781 = vmatpush1.msra.mxu0 %v1919
    %2782 = vmatprep.subr.mxu0 0.0
    %2783 = vmatpush1.msra.mxu0 %v1920
    %2784 = vmatprep.subr.mxu0 0.0
    %2785 = vmatpush1.msra.mxu0 %v1921
    %2786 = vmatprep.subr.mxu0 0.0
    %2787 = vmatpush1.msra.mxu0 %v1922
    %2788 = vmatprep.subr.mxu0 0.0
    %2789 = vmatpush1.msra.mxu0 %v1923
    %2790 = vmatprep.subr.mxu0 0.0
    %2791 = vmatpush1.msra.mxu0 %v1924
    %2792 = vmatprep.subr.mxu0 0.0
    %2793 = vmatpush1.msra.mxu0 %v1925
    %2794 = vmatprep.subr.mxu0 0.0
    %2795 = vmatpush1.msra.mxu0 %v1926
    %2796 = vmatprep.subr.mxu0 0.0
    %2797 = vmatpush1.msra.mxu0 %v1927
    %2798 = vmatprep.subr.mxu0 0.0
    %2799 = vmatpush1.msra.mxu0 %v1928
    %2800 = vmatprep.subr.mxu0 0.0
    %2801 = vmatpush1.msra.mxu0 %v1929
    %2802 = vmatprep.subr.mxu0 0.0
    %2803 = vmatpush1.msra.mxu0 %v1930
    %2804 = vmatprep.subr.mxu0 0.0
    %2805 = vmatpush1.msra.mxu0 %v1931
    %2806 = vmatprep.subr.mxu0 0.0
    %2807 = vmatpush1.msra.mxu0 %v1932
    %2808 = vmatprep.subr.mxu0 0.0
    %2809 = vmatpush1.msra.mxu0 %v1933
    %2810 = vmatprep.subr.mxu0 0.0
    %2811 = vmatpush1.msra.mxu0 %v1934
    %2812 = vmatprep.subr.mxu0 0.0
    %2813 = vmatpush1.msra.mxu0 %v1935
    %2814 = vmatprep.subr.mxu0 0.0
    %2815 = vmatpush1.msra.mxu0 %v1936
    %2816 = vmatprep.subr.mxu0 0.0
    %2817 = vmatpush1.msra.mxu0 %v1937
    %2818 = vmatprep.subr.mxu0 0.0
    %2819 = vmatpush1.msra.mxu0 %v1938
    %2820 = vmatprep.subr.mxu0 0.0
    %2821 = vmatpush1.msra.mxu0 %v1939
    %2822 = vmatprep.mubr.f32.mxu0 %v1273
    %2823 = vmatmul.mubr.f32.gmra.mrb[0].mxu0 %v1272
    %v2824 = vpop.f32.mrb[0].mxu0
    %v2825 = vadd.f32 %v2440, %v2824
    %v2826 = vpop.f32.mrb[0].mxu0
    %2827 = vmatprep.mubr.f32.mxu0 %v1282
    %2828 = vmatmul.mubr.f32.gmra.mrb[0].mxu0 %v1281
    %v2829 = vpop.f32.mrb[0].mxu0
    %v2830 = vadd.f32 %v2445, %v2829
    %v2831 = vpop.f32.mrb[0].mxu0
    %2832 = vmatprep.mubr.f32.mxu0 %v1291
    %2833 = vmatmul.mubr.f32.gmra.mrb[0].mxu0 %v1290
    %v2834 = vpop.f32.mrb[0].mxu0
    %v2835 = vadd.f32 %v2450, %v2834
    %v2836 = vpop.f32.mrb[0].mxu0
    %2837 = vmatprep.mubr.f32.mxu0 %v1300
    %2838 = vmatmul.mubr.f32.gmra.mrb[0].mxu0 %v1299
    %v2839 = vpop.f32.mrb[0].mxu0
    %v2840 = vadd.f32 %v2455, %v2839
    %v2841 = vpop.f32.mrb[0].mxu0
    %2842 = vmatprep.mubr.f32.mxu0 %v1309
    %2843 = vmatmul.mubr.f32.gmra.mrb[0].mxu0 %v1308
    %v2844 = vpop.f32.mrb[0].mxu0
    %v2845 = vadd.f32 %v2460, %v2844
    %v2846 = vpop.f32.mrb[0].mxu0
    %2847 = vmatprep.mubr.f32.mxu0 %v1318
    %2848 = vmatmul.mubr.f32.gmra.mrb[0].mxu0 %v1317
    %v2849 = vpop.f32.mrb[0].mxu0
    %v2850 = vadd.f32 %v2465, %v2849
    %v2851 = vpop.f32.mrb[0].mxu0
    %2852 = vmatprep.mubr.f32.mxu0 %v1327
    %2853 = vmatmul.mubr.f32.gmra.mrb[0].mxu0 %v1326
    %v2854 = vpop.f32.mrb[0].mxu0
    %v2855 = vadd.f32 %v2470, %v2854
    %v2856 = vpop.f32.mrb[0].mxu0
    %2857 = vmatprep.mubr.f32.mxu0 %v1336
    %2858 = vmatmul.mubr.f32.gmra.mrb[0].mxu0 %v1335
    %v2859 = vpop.f32.mrb[0].mxu0
    %v2860 = vadd.f32 %v2475, %v2859
    %v2861 = vpop.f32.mrb[0].mxu0
    %2862 = vmatprep.mubr.f32.mxu0 %v1345
    %2863 = vmatmul.mubr.f32.gmra.mrb[0].mxu0 %v1344
    %v2864 = vpop.f32.mrb[0].mxu0
    %v2865 = vadd.f32 %v2480, %v2864
    %v2866 = vpop.f32.mrb[0].mxu0
    %2867 = vmatprep.mubr.f32.mxu0 %v1354
    %2868 = vmatmul.mubr.f32.gmra.mrb[0].mxu0 %v1353
    %v2869 = vpop.f32.mrb[0].mxu0
    %v2870 = vadd.f32 %v2485, %v2869
    %v2871 = vpop.f32.mrb[0].mxu0
    %2872 = vmatprep.mubr.f32.mxu0 %v1363
    %2873 = vmatmul.mubr.f32.gmra.mrb[0].mxu0 %v1362
    %v2874 = vpop.f32.mrb[0].mxu0
    %v2875 = vadd.f32 %v2490, %v2874
    %v2876 = vpop.f32.mrb[0].mxu0
    %2877 = vmatprep.mubr.f32.mxu0 %v1372
    %2878 = vmatmul.mubr.f32.gmra.mrb[0].mxu0 %v1371
    %v2879 = vpop.f32.mrb[0].mxu0
    %v2880 = vadd.f32 %v2495, %v2879
    %v2881 = vpop.f32.mrb[0].mxu0
    %2882 = vmatprep.mubr.f32.mxu0 %v1381
    %2883 = vmatmul.mubr.f32.gmra.mrb[0].mxu0 %v1380
    %v2884 = vpop.f32.mrb[0].mxu0
    %v2885 = vadd.f32 %v2500, %v2884
    %v2886 = vpop.f32.mrb[0].mxu0
    %2887 = vmatprep.mubr.f32.mxu0 %v1390
    %2888 = vmatmul.mubr.f32.gmra.mrb[0].mxu0 %v1389
    %v2889 = vpop.f32.mrb[0].mxu0
    %v2890 = vadd.f32 %v2505, %v2889
    %v2891 = vpop.f32.mrb[0].mxu0
    %2892 = vmatprep.mubr.f32.mxu0 %v1399
    %2893 = vmatmul.mubr.f32.gmra.mrb[0].mxu0 %v1398
    %v2894 = vpop.f32.mrb[0].mxu0
    %v2895 = vadd.f32 %v2510, %v2894
    %v2896 = vpop.f32.mrb[0].mxu0
    %2897 = vmatprep.mubr.f32.mxu0 %v1408
    %2898 = vmatmul.mubr.f32.gmra.mrb[0].mxu0 %v1407
    %v2899 = vpop.f32.mrb[0].mxu0
    %v2900 = vadd.f32 %v2515, %v2899
    %v2901 = vpop.f32.mrb[0].mxu0
    %2902 = vmatprep.mubr.f32.mxu0 %v1417
    %2903 = vmatmul.mubr.f32.gmra.mrb[0].mxu0 %v1416
    %v2904 = vpop.f32.mrb[0].mxu0
    %v2905 = vadd.f32 %v2520, %v2904
    %v2906 = vpop.f32.mrb[0].mxu0
    %2907 = vmatprep.mubr.f32.mxu0 %v1426
    %2908 = vmatmul.mubr.f32.gmra.mrb[0].mxu0 %v1425
    %v2909 = vpop.f32.mrb[0].mxu0
    %v2910 = vadd.f32 %v2525, %v2909
    %v2911 = vpop.f32.mrb[0].mxu0
    %2912 = vmatprep.mubr.f32.mxu0 %v1435
    %2913 = vmatmul.mubr.f32.gmra.mrb[0].mxu0 %v1434
    %v2914 = vpop.f32.mrb[0].mxu0
    %v2915 = vadd.f32 %v2530, %v2914
    %v2916 = vpop.f32.mrb[0].mxu0
    %2917 = vmatprep.mubr.f32.mxu0 %v1444
    %2918 = vmatmul.mubr.f32.gmra.mrb[0].mxu0 %v1443
    %v2919 = vpop.f32.mrb[0].mxu0
    %v2920 = vadd.f32 %v2535, %v2919
    %v2921 = vpop.f32.mrb[0].mxu0
    %2922 = vmatprep.mubr.f32.mxu0 %v1453
    %2923 = vmatmul.mubr.f32.gmra.mrb[0].mxu0 %v1452
    %v2924 = vpop.f32.mrb[0].mxu0
    %v2925 = vadd.f32 %v2540, %v2924
    %v2926 = vpop.f32.mrb[0].mxu0
    %2927 = vmatprep.mubr.f32.mxu0 %v1462
    %2928 = vmatmul.mubr.f32.gmra.mrb[0].mxu0 %v1461
    %v2929 = vpop.f32.mrb[0].mxu0
    %v2930 = vadd.f32 %v2545, %v2929
    %v2931 = vpop.f32.mrb[0].mxu0
    %2932 = vmatprep.mubr.f32.mxu0 %v1471
    %2933 = vmatmul.mubr.f32.gmra.mrb[0].mxu0 %v1470
    %v2934 = vpop.f32.mrb[0].mxu0
    %v2935 = vadd.f32 %v2550, %v2934
    %v2936 = vpop.f32.mrb[0].mxu0
    %2937 = vmatprep.mubr.f32.mxu0 %v1480
    %2938 = vmatmul.mubr.f32.gmra.mrb[0].mxu0 %v1479
    %v2939 = vpop.f32.mrb[0].mxu0
    %v2940 = vadd.f32 %v2555, %v2939
    %v2941 = vpop.f32.mrb[0].mxu0
    %2942 = vmatprep.mubr.f32.mxu0 %v1489
    %2943 = vmatmul.mubr.f32.gmra.mrb[0].mxu0 %v1488
    %v2944 = vpop.f32.mrb[0].mxu0
    %v2945 = vadd.f32 %v2560, %v2944
    %v2946 = vpop.f32.mrb[0].mxu0
    %2947 = vmatprep.mubr.f32.mxu0 %v1498
    %2948 = vmatmul.mubr.f32.gmra.mrb[0].mxu0 %v1497
    %v2949 = vpop.f32.mrb[0].mxu0
    %v2950 = vadd.f32 %v2565, %v2949
    %v2951 = vpop.f32.mrb[0].mxu0
    %2952 = vmatprep.mubr.f32.mxu0 %v1507
    %2953 = vmatmul.mubr.f32.gmra.mrb[0].mxu0 %v1506
    %v2954 = vpop.f32.mrb[0].mxu0
    %v2955 = vadd.f32 %v2570, %v2954
    %v2956 = vpop.f32.mrb[0].mxu0
    %2957 = vmatprep.mubr.f32.mxu0 %v1516
    %2958 = vmatmul.mubr.f32.gmra.mrb[0].mxu0 %v1515
    %v2959 = vpop.f32.mrb[0].mxu0
    %v2960 = vadd.f32 %v2575, %v2959
    %v2961 = vpop.f32.mrb[0].mxu0
    %2962 = vmatprep.mubr.f32.mxu0 %v1525
    %2963 = vmatmul.mubr.f32.gmra.mrb[0].mxu0 %v1524
    %v2964 = vpop.f32.mrb[0].mxu0
    %v2965 = vadd.f32 %v2580, %v2964
    %v2966 = vpop.f32.mrb[0].mxu0
    %2967 = vmatprep.mubr.f32.mxu0 %v1534
    %2968 = vmatmul.mubr.f32.gmra.mrb[0].mxu0 %v1533
    %v2969 = vpop.f32.mrb[0].mxu0
    %v2970 = vadd.f32 %v2585, %v2969
    %v2971 = vpop.f32.mrb[0].mxu0
    %2972 = vmatprep.mubr.f32.mxu0 %v1543
    %2973 = vmatmul.mubr.f32.gmra.mrb[0].mxu0 %v1542
    %v2974 = vpop.f32.mrb[0].mxu0
    %v2975 = vadd.f32 %v2590, %v2974
    %v2976 = vpop.f32.mrb[0].mxu0
    %2977 = vmatprep.mubr.f32.mxu0 %v1552
    %2978 = vmatmul.mubr.f32.gmra.mrb[0].mxu0 %v1551
    %v2979 = vpop.f32.mrb[0].mxu0
    %v2980 = vadd.f32 %v2595, %v2979
    %v2981 = vpop.f32.mrb[0].mxu0
    %2982 = vmatprep.mubr.f32.mxu0 %v1561
    %2983 = vmatmul.mubr.f32.gmra.mrb[0].mxu0 %v1560
    %v2984 = vpop.f32.mrb[0].mxu0
    %v2985 = vadd.f32 %v2600, %v2984
    %v2986 = vpop.f32.mrb[0].mxu0
    %2987 = vmatprep.mubr.f32.mxu0 %v1570
    %2988 = vmatmul.mubr.f32.gmra.mrb[0].mxu0 %v1569
    %v2989 = vpop.f32.mrb[0].mxu0
    %v2990 = vadd.f32 %v2605, %v2989
    %v2991 = vpop.f32.mrb[0].mxu0
    %2992 = vmatprep.mubr.f32.mxu0 %v1579
    %2993 = vmatmul.mubr.f32.gmra.mrb[0].mxu0 %v1578
    %v2994 = vpop.f32.mrb[0].mxu0
    %v2995 = vadd.f32 %v2610, %v2994
    %v2996 = vpop.f32.mrb[0].mxu0
    %2997 = vmatprep.mubr.f32.mxu0 %v1588
    %2998 = vmatmul.mubr.f32.gmra.mrb[0].mxu0 %v1587
    %v2999 = vpop.f32.mrb[0].mxu0
    %v3000 = vadd.f32 %v2615, %v2999
    %v3001 = vpop.f32.mrb[0].mxu0
    %3002 = vmatprep.mubr.f32.mxu0 %v1597
    %3003 = vmatmul.mubr.f32.gmra.mrb[0].mxu0 %v1596
    %v3004 = vpop.f32.mrb[0].mxu0
    %v3005 = vadd.f32 %v2620, %v3004
    %v3006 = vpop.f32.mrb[0].mxu0
    %3007 = vmatprep.mubr.f32.mxu0 %v1606
    %3008 = vmatmul.mubr.f32.gmra.mrb[0].mxu0 %v1605
    %v3009 = vpop.f32.mrb[0].mxu0
    %v3010 = vadd.f32 %v2625, %v3009
    %v3011 = vpop.f32.mrb[0].mxu0
    %3012 = vmatprep.mubr.f32.mxu0 %v1615
    %3013 = vmatmul.mubr.f32.gmra.mrb[0].mxu0 %v1614
    %v3014 = vpop.f32.mrb[0].mxu0
    %v3015 = vadd.f32 %v2630, %v3014
    %v3016 = vpop.f32.mrb[0].mxu0
    %3017 = vmatprep.mubr.f32.mxu0 %v1624
    %3018 = vmatmul.mubr.f32.gmra.mrb[0].mxu0 %v1623
    %v3019 = vpop.f32.mrb[0].mxu0
    %v3020 = vadd.f32 %v2635, %v3019
    %v3021 = vpop.f32.mrb[0].mxu0
    %3022 = vmatprep.mubr.f32.mxu0 %v1633
    %3023 = vmatmul.mubr.f32.gmra.mrb[0].mxu0 %v1632
    %v3024 = vpop.f32.mrb[0].mxu0
    %v3025 = vadd.f32 %v2640, %v3024
    %v3026 = vpop.f32.mrb[0].mxu0
    %3027 = vmatprep.mubr.f32.mxu0 %v1642
    %3028 = vmatmul.mubr.f32.gmra.mrb[0].mxu0 %v1641
    %v3029 = vpop.f32.mrb[0].mxu0
    %v3030 = vadd.f32 %v2645, %v3029
    %v3031 = vpop.f32.mrb[0].mxu0
    %3032 = vmatprep.mubr.f32.mxu0 %v1651
    %3033 = vmatmul.mubr.f32.gmra.mrb[0].mxu0 %v1650
    %v3034 = vpop.f32.mrb[0].mxu0
    %v3035 = vadd.f32 %v2650, %v3034
    %v3036 = vpop.f32.mrb[0].mxu0
    %3037 = vmatprep.mubr.f32.mxu0 %v1660
    %3038 = vmatmul.mubr.f32.gmra.mrb[0].mxu0 %v1659
    %v3039 = vpop.f32.mrb[0].mxu0
    %v3040 = vadd.f32 %v2655, %v3039
    %v3041 = vpop.f32.mrb[0].mxu0
    %3042 = vmatprep.mubr.f32.mxu0 %v1669
    %3043 = vmatmul.mubr.f32.gmra.mrb[0].mxu0 %v1668
    %v3044 = vpop.f32.mrb[0].mxu0
    %v3045 = vadd.f32 %v2660, %v3044
    %v3046 = vpop.f32.mrb[0].mxu0
    %3047 = vmatprep.mubr.f32.mxu0 %v1678
    %3048 = vmatmul.mubr.f32.gmra.mrb[0].mxu0 %v1677
    %v3049 = vpop.f32.mrb[0].mxu0
    %v3050 = vadd.f32 %v2665, %v3049
    %v3051 = vpop.f32.mrb[0].mxu0
    %3052 = vmatprep.mubr.f32.mxu0 %v1687
    %3053 = vmatmul.mubr.f32.gmra.mrb[0].mxu0 %v1686
    %v3054 = vpop.f32.mrb[0].mxu0
    %v3055 = vadd.f32 %v2670, %v3054
    %v3056 = vpop.f32.mrb[0].mxu0
    %3057 = vmatprep.mubr.f32.mxu0 %v1696
    %3058 = vmatmul.mubr.f32.gmra.mrb[0].mxu0 %v1695
    %v3059 = vpop.f32.mrb[0].mxu0
    %v3060 = vadd.f32 %v2675, %v3059
    %v3061 = vpop.f32.mrb[0].mxu0
    %3062 = vmatprep.mubr.f32.mxu0 %v1705
    %3063 = vmatmul.mubr.f32.gmra.mrb[0].mxu0 %v1704
    %v3064 = vpop.f32.mrb[0].mxu0
    %v3065 = vadd.f32 %v2680, %v3064
    %v3066 = vpop.f32.mrb[0].mxu0
    %3067 = vmatprep.mubr.f32.mxu0 %v1714
    %3068 = vmatmul.mubr.f32.gmra.mrb[0].mxu0 %v1713
    %v3069 = vpop.f32.mrb[0].mxu0
    %v3070 = vadd.f32 %v2685, %v3069
    %v3071 = vpop.f32.mrb[0].mxu0
    %3072 = vmatprep.mubr.f32.mxu0 %v1723
    %3073 = vmatmul.mubr.f32.gmra.mrb[0].mxu0 %v1722
    %v3074 = vpop.f32.mrb[0].mxu0
    %v3075 = vadd.f32 %v2690, %v3074
    %v3076 = vpop.f32.mrb[0].mxu0
    %3077 = vmatprep.mubr.f32.mxu0 %v1732
    %3078 = vmatmul.mubr.f32.gmra.mrb[0].mxu0 %v1731
    %v3079 = vpop.f32.mrb[0].mxu0
    %v3080 = vadd.f32 %v2695, %v3079
    %v3081 = vpop.f32.mrb[0].mxu0
    %3082 = vmatprep.mubr.f32.mxu0 %v1741
    %3083 = vmatmul.mubr.f32.gmra.mrb[0].mxu0 %v1740
    %v3084 = vpop.f32.mrb[0].mxu0
    %v3085 = vadd.f32 %v2700, %v3084
    %v3086 = vpop.f32.mrb[0].mxu0
    %3087 = vmatprep.mubr.f32.mxu0 %v1750
    %3088 = vmatmul.mubr.f32.gmra.mrb[0].mxu0 %v1749
    %v3089 = vpop.f32.mrb[0].mxu0
    %v3090 = vadd.f32 %v2705, %v3089
    %v3091 = vpop.f32.mrb[0].mxu0
    %3092 = vmatprep.mubr.f32.mxu0 %v1759
    %3093 = vmatmul.mubr.f32.gmra.mrb[0].mxu0 %v1758
    %v3094 = vpop.f32.mrb[0].mxu0
    %v3095 = vadd.f32 %v2710, %v3094
    %v3096 = vpop.f32.mrb[0].mxu0
    %3097 = vmatprep.mubr.f32.mxu0 %v1768
    %3098 = vmatmul.mubr.f32.gmra.mrb[0].mxu0 %v1767
    %v3099 = vpop.f32.mrb[0].mxu0
    %v3100 = vadd.f32 %v2715, %v3099
    %v3101 = vpop.f32.mrb[0].mxu0
    %3102 = vmatprep.mubr.f32.mxu0 %v1777
    %3103 = vmatmul.mubr.f32.gmra.mrb[0].mxu0 %v1776
    %v3104 = vpop.f32.mrb[0].mxu0
    %v3105 = vadd.f32 %v2720, %v3104
    %v3106 = vpop.f32.mrb[0].mxu0
    %3107 = vmatprep.mubr.f32.mxu0 %v1786
    %3108 = vmatmul.mubr.f32.gmra.mrb[0].mxu0 %v1785
    %v3109 = vpop.f32.mrb[0].mxu0
    %v3110 = vadd.f32 %v2725, %v3109
    %v3111 = vpop.f32.mrb[0].mxu0
    %3112 = vmatprep.mubr.f32.mxu0 %v1795
    %3113 = vmatmul.mubr.f32.gmra.mrb[0].mxu0 %v1794
    %v3114 = vpop.f32.mrb[0].mxu0
    %v3115 = vadd.f32 %v2730, %v3114
    %v3116 = vpop.f32.mrb[0].mxu0
    %3117 = vmatprep.mubr.f32.mxu0 %v1804
    %3118 = vmatmul.mubr.f32.gmra.mrb[0].mxu0 %v1803
    %v3119 = vpop.f32.mrb[0].mxu0
    %v3120 = vadd.f32 %v2735, %v3119
    %v3121 = vpop.f32.mrb[0].mxu0
    %3122 = vmatprep.mubr.f32.mxu0 %v1813
    %3123 = vmatmul.mubr.f32.gmra.mrb[0].mxu0 %v1812
    %v3124 = vpop.f32.mrb[0].mxu0
    %v3125 = vadd.f32 %v2740, %v3124
    %v3126 = vpop.f32.mrb[0].mxu0
    %3127 = vmatprep.mubr.f32.mxu0 %v1822
    %3128 = vmatmul.mubr.f32.gmra.mrb[0].mxu0 %v1821
    %v3129 = vpop.f32.mrb[0].mxu0
    %v3130 = vadd.f32 %v2745, %v3129
    %v3131 = vpop.f32.mrb[0].mxu0
    %3132 = vmatprep.mubr.f32.mxu0 %v1831
    %3133 = vmatmul.mubr.f32.gmra.mrb[0].mxu0 %v1830
    %v3134 = vpop.f32.mrb[0].mxu0
    %v3135 = vadd.f32 %v2750, %v3134
    %v3136 = vpop.f32.mrb[0].mxu0
    %3137 = vmatprep.mubr.f32.mxu0 %v1840
    %3138 = vmatmul.mubr.f32.gmra.mrb[0].mxu0 %v1839
    %v3139 = vpop.f32.mrb[0].mxu0
    %v3140 = vadd.f32 %v2755, %v3139
    %v3141 = vpop.f32.mrb[0].mxu0
    %3142 = vdwg.mxu0
    %3143 = vmatprep.subr.mxu0 0.0
    %3144 = vmatpush1.msra.mxu0 %v1940
    %3145 = vmatprep.subr.mxu0 0.0
    %3146 = vmatpush1.msra.mxu0 %v1941
    %3147 = vmatprep.subr.mxu0 0.0
    %3148 = vmatpush1.msra.mxu0 %v1942
    %3149 = vmatprep.subr.mxu0 0.0
    %3150 = vmatpush1.msra.mxu0 %v1943
    %3151 = vmatprep.subr.mxu0 0.0
    %3152 = vmatpush1.msra.mxu0 %v1944
    %3153 = vmatprep.subr.mxu0 0.0
    %3154 = vmatpush1.msra.mxu0 %v1945
    %3155 = vmatprep.subr.mxu0 0.0
    %3156 = vmatpush1.msra.mxu0 %v1946
    %3157 = vmatprep.subr.mxu0 0.0
    %3158 = vmatpush1.msra.mxu0 %v1947
    %3159 = vmatprep.subr.mxu0 0.0
    %3160 = vmatpush1.msra.mxu0 %v1948
    %3161 = vmatprep.subr.mxu0 0.0
    %3162 = vmatpush1.msra.mxu0 %v1949
    %3163 = vmatprep.subr.mxu0 0.0
    %3164 = vmatpush1.msra.mxu0 %v1950
    %3165 = vmatprep.subr.mxu0 0.0
    %3166 = vmatpush1.msra.mxu0 %v1951
    %3167 = vmatprep.subr.mxu0 0.0
    %3168 = vmatpush1.msra.mxu0 %v1952
    %3169 = vmatprep.subr.mxu0 0.0
    %3170 = vmatpush1.msra.mxu0 %v1953
    %3171 = vmatprep.subr.mxu0 0.0
    %3172 = vmatpush1.msra.mxu0 %v1954
    %3173 = vmatprep.subr.mxu0 0.0
    %3174 = vmatpush1.msra.mxu0 %v1955
    %3175 = vmatprep.subr.mxu0 0.0
    %3176 = vmatpush1.msra.mxu0 %v1956
    %3177 = vmatprep.subr.mxu0 0.0
    %3178 = vmatpush1.msra.mxu0 %v1957
    %3179 = vmatprep.subr.mxu0 0.0
    %3180 = vmatpush1.msra.mxu0 %v1958
    %3181 = vmatprep.subr.mxu0 0.0
    %3182 = vmatpush1.msra.mxu0 %v1959
    %3183 = vmatprep.subr.mxu0 0.0
    %3184 = vmatpush1.msra.mxu0 %v1960
    %3185 = vmatprep.subr.mxu0 0.0
    %3186 = vmatpush1.msra.mxu0 %v1961
    %3187 = vmatprep.subr.mxu0 0.0
    %3188 = vmatpush1.msra.mxu0 %v1962
    %3189 = vmatprep.subr.mxu0 0.0
    %3190 = vmatpush1.msra.mxu0 %v1963
    %3191 = vmatprep.subr.mxu0 0.0
    %3192 = vmatpush1.msra.mxu0 %v1964
    %3193 = vmatprep.subr.mxu0 0.0
    %3194 = vmatpush1.msra.mxu0 %v1965
    %3195 = vmatprep.subr.mxu0 0.0
    %3196 = vmatpush1.msra.mxu0 %v1966
    %3197 = vmatprep.subr.mxu0 0.0
    %3198 = vmatpush1.msra.mxu0 %v1967
    %3199 = vmatprep.subr.mxu0 0.0
    %3200 = vmatpush1.msra.mxu0 %v1968
    %3201 = vmatprep.subr.mxu0 0.0
    %3202 = vmatpush1.msra.mxu0 %v1969
    %3203 = vmatprep.subr.mxu0 0.0
    %3204 = vmatpush1.msra.mxu0 %v1970
    %3205 = vmatprep.subr.mxu0 0.0
    %3206 = vmatpush1.msra.mxu0 %v1971
    %3207 = vmatprep.mubr.f32.mxu0 %v1275
    %3208 = vmatmul.mubr.f32.gmra.mrb[0].mxu0 %v1274
    %v3209 = vpop.f32.mrb[0].mxu0
    %v3210 = vadd.f32 %v2825, %v3209
    %v3211 = vpop.f32.mrb[0].mxu0
    %3212 = vmatprep.mubr.f32.mxu0 %v1284
    %3213 = vmatmul.mubr.f32.gmra.mrb[0].mxu0 %v1283
    %v3214 = vpop.f32.mrb[0].mxu0
    %v3215 = vadd.f32 %v2830, %v3214
    %v3216 = vpop.f32.mrb[0].mxu0
    %3217 = vmatprep.mubr.f32.mxu0 %v1293
    %3218 = vmatmul.mubr.f32.gmra.mrb[0].mxu0 %v1292
    %v3219 = vpop.f32.mrb[0].mxu0
    %v3220 = vadd.f32 %v2835, %v3219
    %v3221 = vpop.f32.mrb[0].mxu0
    %3222 = vmatprep.mubr.f32.mxu0 %v1302
    %3223 = vmatmul.mubr.f32.gmra.mrb[0].mxu0 %v1301
    %v3224 = vpop.f32.mrb[0].mxu0
    %v3225 = vadd.f32 %v2840, %v3224
    %v3226 = vpop.f32.mrb[0].mxu0
    %3227 = vmatprep.mubr.f32.mxu0 %v1311
    %3228 = vmatmul.mubr.f32.gmra.mrb[0].mxu0 %v1310
    %v3229 = vpop.f32.mrb[0].mxu0
    %v3230 = vadd.f32 %v2845, %v3229
    %v3231 = vpop.f32.mrb[0].mxu0
    %3232 = vmatprep.mubr.f32.mxu0 %v1320
    %3233 = vmatmul.mubr.f32.gmra.mrb[0].mxu0 %v1319
    %v3234 = vpop.f32.mrb[0].mxu0
    %v3235 = vadd.f32 %v2850, %v3234
    %v3236 = vpop.f32.mrb[0].mxu0
    %3237 = vmatprep.mubr.f32.mxu0 %v1329
    %3238 = vmatmul.mubr.f32.gmra.mrb[0].mxu0 %v1328
    %v3239 = vpop.f32.mrb[0].mxu0
    %v3240 = vadd.f32 %v2855, %v3239
    %v3241 = vpop.f32.mrb[0].mxu0
    %3242 = vmatprep.mubr.f32.mxu0 %v1338
    %3243 = vmatmul.mubr.f32.gmra.mrb[0].mxu0 %v1337
    %v3244 = vpop.f32.mrb[0].mxu0
    %v3245 = vadd.f32 %v2860, %v3244
    %v3246 = vpop.f32.mrb[0].mxu0
    %3247 = vmatprep.mubr.f32.mxu0 %v1347
    %3248 = vmatmul.mubr.f32.gmra.mrb[0].mxu0 %v1346
    %v3249 = vpop.f32.mrb[0].mxu0
    %v3250 = vadd.f32 %v2865, %v3249
    %v3251 = vpop.f32.mrb[0].mxu0
    %3252 = vmatprep.mubr.f32.mxu0 %v1356
    %3253 = vmatmul.mubr.f32.gmra.mrb[0].mxu0 %v1355
    %v3254 = vpop.f32.mrb[0].mxu0
    %v3255 = vadd.f32 %v2870, %v3254
    %v3256 = vpop.f32.mrb[0].mxu0
    %3257 = vmatprep.mubr.f32.mxu0 %v1365
    %3258 = vmatmul.mubr.f32.gmra.mrb[0].mxu0 %v1364
    %v3259 = vpop.f32.mrb[0].mxu0
    %v3260 = vadd.f32 %v2875, %v3259
    %v3261 = vpop.f32.mrb[0].mxu0
    %3262 = vmatprep.mubr.f32.mxu0 %v1374
    %3263 = vmatmul.mubr.f32.gmra.mrb[0].mxu0 %v1373
    %v3264 = vpop.f32.mrb[0].mxu0
    %v3265 = vadd.f32 %v2880, %v3264
    %v3266 = vpop.f32.mrb[0].mxu0
    %3267 = vmatprep.mubr.f32.mxu0 %v1383
    %3268 = vmatmul.mubr.f32.gmra.mrb[0].mxu0 %v1382
    %v3269 = vpop.f32.mrb[0].mxu0
    %v3270 = vadd.f32 %v2885, %v3269
    %v3271 = vpop.f32.mrb[0].mxu0
    %3272 = vmatprep.mubr.f32.mxu0 %v1392
    %3273 = vmatmul.mubr.f32.gmra.mrb[0].mxu0 %v1391
    %v3274 = vpop.f32.mrb[0].mxu0
    %v3275 = vadd.f32 %v2890, %v3274
    %v3276 = vpop.f32.mrb[0].mxu0
    %3277 = vmatprep.mubr.f32.mxu0 %v1401
    %3278 = vmatmul.mubr.f32.gmra.mrb[0].mxu0 %v1400
    %v3279 = vpop.f32.mrb[0].mxu0
    %v3280 = vadd.f32 %v2895, %v3279
    %v3281 = vpop.f32.mrb[0].mxu0
    %3282 = vmatprep.mubr.f32.mxu0 %v1410
    %3283 = vmatmul.mubr.f32.gmra.mrb[0].mxu0 %v1409
    %v3284 = vpop.f32.mrb[0].mxu0
    %v3285 = vadd.f32 %v2900, %v3284
    %v3286 = vpop.f32.mrb[0].mxu0
    %3287 = vmatprep.mubr.f32.mxu0 %v1419
    %3288 = vmatmul.mubr.f32.gmra.mrb[0].mxu0 %v1418
    %v3289 = vpop.f32.mrb[0].mxu0
    %v3290 = vadd.f32 %v2905, %v3289
    %v3291 = vpop.f32.mrb[0].mxu0
    %3292 = vmatprep.mubr.f32.mxu0 %v1428
    %3293 = vmatmul.mubr.f32.gmra.mrb[0].mxu0 %v1427
    %v3294 = vpop.f32.mrb[0].mxu0
    %v3295 = vadd.f32 %v2910, %v3294
    %v3296 = vpop.f32.mrb[0].mxu0
    %3297 = vmatprep.mubr.f32.mxu0 %v1437
    %3298 = vmatmul.mubr.f32.gmra.mrb[0].mxu0 %v1436
    %v3299 = vpop.f32.mrb[0].mxu0
    %v3300 = vadd.f32 %v2915, %v3299
    %v3301 = vpop.f32.mrb[0].mxu0
    %3302 = vmatprep.mubr.f32.mxu0 %v1446
    %3303 = vmatmul.mubr.f32.gmra.mrb[0].mxu0 %v1445
    %v3304 = vpop.f32.mrb[0].mxu0
    %v3305 = vadd.f32 %v2920, %v3304
    %v3306 = vpop.f32.mrb[0].mxu0
    %3307 = vmatprep.mubr.f32.mxu0 %v1455
    %3308 = vmatmul.mubr.f32.gmra.mrb[0].mxu0 %v1454
    %v3309 = vpop.f32.mrb[0].mxu0
    %v3310 = vadd.f32 %v2925, %v3309
    %v3311 = vpop.f32.mrb[0].mxu0
    %3312 = vmatprep.mubr.f32.mxu0 %v1464
    %3313 = vmatmul.mubr.f32.gmra.mrb[0].mxu0 %v1463
    %v3314 = vpop.f32.mrb[0].mxu0
    %v3315 = vadd.f32 %v2930, %v3314
    %v3316 = vpop.f32.mrb[0].mxu0
    %3317 = vmatprep.mubr.f32.mxu0 %v1473
    %3318 = vmatmul.mubr.f32.gmra.mrb[0].mxu0 %v1472
    %v3319 = vpop.f32.mrb[0].mxu0
    %v3320 = vadd.f32 %v2935, %v3319
    %v3321 = vpop.f32.mrb[0].mxu0
    %3322 = vmatprep.mubr.f32.mxu0 %v1482
    %3323 = vmatmul.mubr.f32.gmra.mrb[0].mxu0 %v1481
    %v3324 = vpop.f32.mrb[0].mxu0
    %v3325 = vadd.f32 %v2940, %v3324
    %v3326 = vpop.f32.mrb[0].mxu0
    %3327 = vmatprep.mubr.f32.mxu0 %v1491
    %3328 = vmatmul.mubr.f32.gmra.mrb[0].mxu0 %v1490
    %v3329 = vpop.f32.mrb[0].mxu0
    %v3330 = vadd.f32 %v2945, %v3329
    %v3331 = vpop.f32.mrb[0].mxu0
    %3332 = vmatprep.mubr.f32.mxu0 %v1500
    %3333 = vmatmul.mubr.f32.gmra.mrb[0].mxu0 %v1499
    %v3334 = vpop.f32.mrb[0].mxu0
    %v3335 = vadd.f32 %v2950, %v3334
    %v3336 = vpop.f32.mrb[0].mxu0
    %3337 = vmatprep.mubr.f32.mxu0 %v1509
    %3338 = vmatmul.mubr.f32.gmra.mrb[0].mxu0 %v1508
    %v3339 = vpop.f32.mrb[0].mxu0
    %v3340 = vadd.f32 %v2955, %v3339
    %v3341 = vpop.f32.mrb[0].mxu0
    %3342 = vmatprep.mubr.f32.mxu0 %v1518
    %3343 = vmatmul.mubr.f32.gmra.mrb[0].mxu0 %v1517
    %v3344 = vpop.f32.mrb[0].mxu0
    %v3345 = vadd.f32 %v2960, %v3344
    %v3346 = vpop.f32.mrb[0].mxu0
    %3347 = vmatprep.mubr.f32.mxu0 %v1527
    %3348 = vmatmul.mubr.f32.gmra.mrb[0].mxu0 %v1526
    %v3349 = vpop.f32.mrb[0].mxu0
    %v3350 = vadd.f32 %v2965, %v3349
    %v3351 = vpop.f32.mrb[0].mxu0
    %3352 = vmatprep.mubr.f32.mxu0 %v1536
    %3353 = vmatmul.mubr.f32.gmra.mrb[0].mxu0 %v1535
    %v3354 = vpop.f32.mrb[0].mxu0
    %v3355 = vadd.f32 %v2970, %v3354
    %v3356 = vpop.f32.mrb[0].mxu0
    %3357 = vmatprep.mubr.f32.mxu0 %v1545
    %3358 = vmatmul.mubr.f32.gmra.mrb[0].mxu0 %v1544
    %v3359 = vpop.f32.mrb[0].mxu0
    %v3360 = vadd.f32 %v2975, %v3359
    %v3361 = vpop.f32.mrb[0].mxu0
    %3362 = vmatprep.mubr.f32.mxu0 %v1554
    %3363 = vmatmul.mubr.f32.gmra.mrb[0].mxu0 %v1553
    %v3364 = vpop.f32.mrb[0].mxu0
    %v3365 = vadd.f32 %v2980, %v3364
    %v3366 = vpop.f32.mrb[0].mxu0
    %3367 = vmatprep.mubr.f32.mxu0 %v1563
    %3368 = vmatmul.mubr.f32.gmra.mrb[0].mxu0 %v1562
    %v3369 = vpop.f32.mrb[0].mxu0
    %v3370 = vadd.f32 %v2985, %v3369
    %v3371 = vpop.f32.mrb[0].mxu0
    %3372 = vmatprep.mubr.f32.mxu0 %v1572
    %3373 = vmatmul.mubr.f32.gmra.mrb[0].mxu0 %v1571
    %v3374 = vpop.f32.mrb[0].mxu0
    %v3375 = vadd.f32 %v2990, %v3374
    %v3376 = vpop.f32.mrb[0].mxu0
    %3377 = vmatprep.mubr.f32.mxu0 %v1581
    %3378 = vmatmul.mubr.f32.gmra.mrb[0].mxu0 %v1580
    %v3379 = vpop.f32.mrb[0].mxu0
    %v3380 = vadd.f32 %v2995, %v3379
    %v3381 = vpop.f32.mrb[0].mxu0
    %3382 = vmatprep.mubr.f32.mxu0 %v1590
    %3383 = vmatmul.mubr.f32.gmra.mrb[0].mxu0 %v1589
    %v3384 = vpop.f32.mrb[0].mxu0
    %v3385 = vadd.f32 %v3000, %v3384
    %v3386 = vpop.f32.mrb[0].mxu0
    %3387 = vmatprep.mubr.f32.mxu0 %v1599
    %3388 = vmatmul.mubr.f32.gmra.mrb[0].mxu0 %v1598
    %v3389 = vpop.f32.mrb[0].mxu0
    %v3390 = vadd.f32 %v3005, %v3389
    %v3391 = vpop.f32.mrb[0].mxu0
    %3392 = vmatprep.mubr.f32.mxu0 %v1608
    %3393 = vmatmul.mubr.f32.gmra.mrb[0].mxu0 %v1607
    %v3394 = vpop.f32.mrb[0].mxu0
    %v3395 = vadd.f32 %v3010, %v3394
    %v3396 = vpop.f32.mrb[0].mxu0
    %3397 = vmatprep.mubr.f32.mxu0 %v1617
    %3398 = vmatmul.mubr.f32.gmra.mrb[0].mxu0 %v1616
    %v3399 = vpop.f32.mrb[0].mxu0
    %v3400 = vadd.f32 %v3015, %v3399
    %v3401 = vpop.f32.mrb[0].mxu0
    %3402 = vmatprep.mubr.f32.mxu0 %v1626
    %3403 = vmatmul.mubr.f32.gmra.mrb[0].mxu0 %v1625
    %v3404 = vpop.f32.mrb[0].mxu0
    %v3405 = vadd.f32 %v3020, %v3404
    %v3406 = vpop.f32.mrb[0].mxu0
    %3407 = vmatprep.mubr.f32.mxu0 %v1635
    %3408 = vmatmul.mubr.f32.gmra.mrb[0].mxu0 %v1634
    %v3409 = vpop.f32.mrb[0].mxu0
    %v3410 = vadd.f32 %v3025, %v3409
    %v3411 = vpop.f32.mrb[0].mxu0
    %3412 = vmatprep.mubr.f32.mxu0 %v1644
    %3413 = vmatmul.mubr.f32.gmra.mrb[0].mxu0 %v1643
    %v3414 = vpop.f32.mrb[0].mxu0
    %v3415 = vadd.f32 %v3030, %v3414
    %v3416 = vpop.f32.mrb[0].mxu0
    %3417 = vmatprep.mubr.f32.mxu0 %v1653
    %3418 = vmatmul.mubr.f32.gmra.mrb[0].mxu0 %v1652
    %v3419 = vpop.f32.mrb[0].mxu0
    %v3420 = vadd.f32 %v3035, %v3419
    %v3421 = vpop.f32.mrb[0].mxu0
    %3422 = vmatprep.mubr.f32.mxu0 %v1662
    %3423 = vmatmul.mubr.f32.gmra.mrb[0].mxu0 %v1661
    %v3424 = vpop.f32.mrb[0].mxu0
    %v3425 = vadd.f32 %v3040, %v3424
    %v3426 = vpop.f32.mrb[0].mxu0
    %3427 = vmatprep.mubr.f32.mxu0 %v1671
    %3428 = vmatmul.mubr.f32.gmra.mrb[0].mxu0 %v1670
    %v3429 = vpop.f32.mrb[0].mxu0
    %v3430 = vadd.f32 %v3045, %v3429
    %v3431 = vpop.f32.mrb[0].mxu0
    %3432 = vmatprep.mubr.f32.mxu0 %v1680
    %3433 = vmatmul.mubr.f32.gmra.mrb[0].mxu0 %v1679
    %v3434 = vpop.f32.mrb[0].mxu0
    %v3435 = vadd.f32 %v3050, %v3434
    %v3436 = vpop.f32.mrb[0].mxu0
    %3437 = vmatprep.mubr.f32.mxu0 %v1689
    %3438 = vmatmul.mubr.f32.gmra.mrb[0].mxu0 %v1688
    %v3439 = vpop.f32.mrb[0].mxu0
    %v3440 = vadd.f32 %v3055, %v3439
    %v3441 = vpop.f32.mrb[0].mxu0
    %3442 = vmatprep.mubr.f32.mxu0 %v1698
    %3443 = vmatmul.mubr.f32.gmra.mrb[0].mxu0 %v1697
    %v3444 = vpop.f32.mrb[0].mxu0
    %v3445 = vadd.f32 %v3060, %v3444
    %v3446 = vpop.f32.mrb[0].mxu0
    %3447 = vmatprep.mubr.f32.mxu0 %v1707
    %3448 = vmatmul.mubr.f32.gmra.mrb[0].mxu0 %v1706
    %v3449 = vpop.f32.mrb[0].mxu0
    %v3450 = vadd.f32 %v3065, %v3449
    %v3451 = vpop.f32.mrb[0].mxu0
    %3452 = vmatprep.mubr.f32.mxu0 %v1716
    %3453 = vmatmul.mubr.f32.gmra.mrb[0].mxu0 %v1715
    %v3454 = vpop.f32.mrb[0].mxu0
    %v3455 = vadd.f32 %v3070, %v3454
    %v3456 = vpop.f32.mrb[0].mxu0
    %3457 = vmatprep.mubr.f32.mxu0 %v1725
    %3458 = vmatmul.mubr.f32.gmra.mrb[0].mxu0 %v1724
    %v3459 = vpop.f32.mrb[0].mxu0
    %v3460 = vadd.f32 %v3075, %v3459
    %v3461 = vpop.f32.mrb[0].mxu0
    %3462 = vmatprep.mubr.f32.mxu0 %v1734
    %3463 = vmatmul.mubr.f32.gmra.mrb[0].mxu0 %v1733
    %v3464 = vpop.f32.mrb[0].mxu0
    %v3465 = vadd.f32 %v3080, %v3464
    %v3466 = vpop.f32.mrb[0].mxu0
    %3467 = vmatprep.mubr.f32.mxu0 %v1743
    %3468 = vmatmul.mubr.f32.gmra.mrb[0].mxu0 %v1742
    %v3469 = vpop.f32.mrb[0].mxu0
    %v3470 = vadd.f32 %v3085, %v3469
    %v3471 = vpop.f32.mrb[0].mxu0
    %3472 = vmatprep.mubr.f32.mxu0 %v1752
    %3473 = vmatmul.mubr.f32.gmra.mrb[0].mxu0 %v1751
    %v3474 = vpop.f32.mrb[0].mxu0
    %v3475 = vadd.f32 %v3090, %v3474
    %v3476 = vpop.f32.mrb[0].mxu0
    %3477 = vmatprep.mubr.f32.mxu0 %v1761
    %3478 = vmatmul.mubr.f32.gmra.mrb[0].mxu0 %v1760
    %v3479 = vpop.f32.mrb[0].mxu0
    %v3480 = vadd.f32 %v3095, %v3479
    %v3481 = vpop.f32.mrb[0].mxu0
    %3482 = vmatprep.mubr.f32.mxu0 %v1770
    %3483 = vmatmul.mubr.f32.gmra.mrb[0].mxu0 %v1769
    %v3484 = vpop.f32.mrb[0].mxu0
    %v3485 = vadd.f32 %v3100, %v3484
    %v3486 = vpop.f32.mrb[0].mxu0
    %3487 = vmatprep.mubr.f32.mxu0 %v1779
    %3488 = vmatmul.mubr.f32.gmra.mrb[0].mxu0 %v1778
    %v3489 = vpop.f32.mrb[0].mxu0
    %v3490 = vadd.f32 %v3105, %v3489
    %v3491 = vpop.f32.mrb[0].mxu0
    %3492 = vmatprep.mubr.f32.mxu0 %v1788
    %3493 = vmatmul.mubr.f32.gmra.mrb[0].mxu0 %v1787
    %v3494 = vpop.f32.mrb[0].mxu0
    %v3495 = vadd.f32 %v3110, %v3494
    %v3496 = vpop.f32.mrb[0].mxu0
    %3497 = vmatprep.mubr.f32.mxu0 %v1797
    %3498 = vmatmul.mubr.f32.gmra.mrb[0].mxu0 %v1796
    %v3499 = vpop.f32.mrb[0].mxu0
    %v3500 = vadd.f32 %v3115, %v3499
    %v3501 = vpop.f32.mrb[0].mxu0
    %3502 = vmatprep.mubr.f32.mxu0 %v1806
    %3503 = vmatmul.mubr.f32.gmra.mrb[0].mxu0 %v1805
    %v3504 = vpop.f32.mrb[0].mxu0
    %v3505 = vadd.f32 %v3120, %v3504
    %v3506 = vpop.f32.mrb[0].mxu0
    %3507 = vmatprep.mubr.f32.mxu0 %v1815
    %3508 = vmatmul.mubr.f32.gmra.mrb[0].mxu0 %v1814
    %v3509 = vpop.f32.mrb[0].mxu0
    %v3510 = vadd.f32 %v3125, %v3509
    %v3511 = vpop.f32.mrb[0].mxu0
    %3512 = vmatprep.mubr.f32.mxu0 %v1824
    %3513 = vmatmul.mubr.f32.gmra.mrb[0].mxu0 %v1823
    %v3514 = vpop.f32.mrb[0].mxu0
    %v3515 = vadd.f32 %v3130, %v3514
    %v3516 = vpop.f32.mrb[0].mxu0
    %3517 = vmatprep.mubr.f32.mxu0 %v1833
    %3518 = vmatmul.mubr.f32.gmra.mrb[0].mxu0 %v1832
    %v3519 = vpop.f32.mrb[0].mxu0
    %v3520 = vadd.f32 %v3135, %v3519
    %v3521 = vpop.f32.mrb[0].mxu0
    %3522 = vmatprep.mubr.f32.mxu0 %v1842
    %3523 = vmatmul.mubr.f32.gmra.mrb[0].mxu0 %v1841
    %v3524 = vpop.f32.mrb[0].mxu0
    %v3525 = vadd.f32 %v3140, %v3524
    %v3526 = vpop.f32.mrb[0].mxu0
    %3527 = vdwg.mxu0
    %3528 = vmatprep.subr.mxu0 0.0
    %3529 = vmatpush1.msra.mxu0 %v1972
    %3530 = vmatprep.subr.mxu0 0.0
    %3531 = vmatpush1.msra.mxu0 %v1973
    %3532 = vmatprep.subr.mxu0 0.0
    %3533 = vmatpush1.msra.mxu0 %v1974
    %3534 = vmatprep.subr.mxu0 0.0
    %3535 = vmatpush1.msra.mxu0 %v1975
    %3536 = vmatprep.subr.mxu0 0.0
    %3537 = vmatpush1.msra.mxu0 %v1976
    %3538 = vmatprep.subr.mxu0 0.0
    %3539 = vmatpush1.msra.mxu0 %v1977
    %3540 = vmatprep.subr.mxu0 0.0
    %3541 = vmatpush1.msra.mxu0 %v1978
    %3542 = vmatprep.subr.mxu0 0.0
    %3543 = vmatpush1.msra.mxu0 %v1979
    %3544 = vmatprep.subr.mxu0 0.0
    %3545 = vmatpush1.msra.mxu0 %v1980
    %3546 = vmatprep.subr.mxu0 0.0
    %3547 = vmatpush1.msra.mxu0 %v1981
    %3548 = vmatprep.subr.mxu0 0.0
    %3549 = vmatpush1.msra.mxu0 %v1982
    %3550 = vmatprep.subr.mxu0 0.0
    %3551 = vmatpush1.msra.mxu0 %v1983
    %3552 = vmatprep.subr.mxu0 0.0
    %3553 = vmatpush1.msra.mxu0 %v1984
    %3554 = vmatprep.subr.mxu0 0.0
    %3555 = vmatpush1.msra.mxu0 %v1985
    %3556 = vmatprep.subr.mxu0 0.0
    %3557 = vmatpush1.msra.mxu0 %v1986
    %3558 = vmatprep.subr.mxu0 0.0
    %3559 = vmatpush1.msra.mxu0 %v1987
    %3560 = vmatprep.subr.mxu0 0.0
    %3561 = vmatpush1.msra.mxu0 0.0
    %3562 = vmatprep.subr.mxu0 0.0
    %3563 = vmatpush1.msra.mxu0 0.0
    %3564 = vmatprep.subr.mxu0 0.0
    %3565 = vmatpush1.msra.mxu0 0.0
    %3566 = vmatprep.subr.mxu0 0.0
    %3567 = vmatpush1.msra.mxu0 0.0
    %3568 = vmatprep.subr.mxu0 0.0
    %3569 = vmatpush1.msra.mxu0 0.0
    %3570 = vmatprep.subr.mxu0 0.0
    %3571 = vmatpush1.msra.mxu0 0.0
    %3572 = vmatprep.subr.mxu0 0.0
    %3573 = vmatpush1.msra.mxu0 0.0
    %3574 = vmatprep.subr.mxu0 0.0
    %3575 = vmatpush1.msra.mxu0 0.0
    %3576 = vmatprep.subr.mxu0 0.0
    %3577 = vmatpush1.msra.mxu0 0.0
    %3578 = vmatprep.subr.mxu0 0.0
    %3579 = vmatpush1.msra.mxu0 0.0
    %3580 = vmatprep.subr.mxu0 0.0
    %3581 = vmatpush1.msra.mxu0 0.0
    %3582 = vmatprep.subr.mxu0 0.0
    %3583 = vmatpush1.msra.mxu0 0.0
    %3584 = vmatprep.subr.mxu0 0.0
    %3585 = vmatpush1.msra.mxu0 0.0
    %3586 = vmatprep.subr.mxu0 0.0
    %3587 = vmatpush1.msra.mxu0 0.0
    %3588 = vmatprep.subr.mxu0 0.0
    %3589 = vmatpush1.msra.mxu0 0.0
    %3590 = vmatprep.subr.mxu0 0.0
    %3591 = vmatpush1.msra.mxu0 0.0
    %3592 = vmatprep.mubr.f32.mxu0 0.0
    %3593 = vmatmul.mubr.f32.gmra.mrb[0].mxu0 %v1276
    %v3594 = vpop.f32.mrb[0].mxu0
    %v3595 = vadd.f32 %v3210, %v3594
    %v3596 = vpop.f32.mrb[0].mxu0
    %3597 = vmatprep.mubr.f32.mxu0 0.0
    %3598 = vmatmul.mubr.f32.gmra.mrb[0].mxu0 %v1285
    %v3599 = vpop.f32.mrb[0].mxu0
    %v3600 = vadd.f32 %v3215, %v3599
    %v3601 = vpop.f32.mrb[0].mxu0
    %3602 = vmatprep.mubr.f32.mxu0 0.0
    %3603 = vmatmul.mubr.f32.gmra.mrb[0].mxu0 %v1294
    %v3604 = vpop.f32.mrb[0].mxu0
    %v3605 = vadd.f32 %v3220, %v3604
    %v3606 = vpop.f32.mrb[0].mxu0
    %3607 = vmatprep.mubr.f32.mxu0 0.0
    %3608 = vmatmul.mubr.f32.gmra.mrb[0].mxu0 %v1303
    %v3609 = vpop.f32.mrb[0].mxu0
    %v3610 = vadd.f32 %v3225, %v3609
    %v3611 = vpop.f32.mrb[0].mxu0
    %3612 = vmatprep.mubr.f32.mxu0 0.0
    %3613 = vmatmul.mubr.f32.gmra.mrb[0].mxu0 %v1312
    %v3614 = vpop.f32.mrb[0].mxu0
    %v3615 = vadd.f32 %v3230, %v3614
    %v3616 = vpop.f32.mrb[0].mxu0
    %3617 = vmatprep.mubr.f32.mxu0 0.0
    %3618 = vmatmul.mubr.f32.gmra.mrb[0].mxu0 %v1321
    %v3619 = vpop.f32.mrb[0].mxu0
    %v3620 = vadd.f32 %v3235, %v3619
    %v3621 = vpop.f32.mrb[0].mxu0
    %3622 = vmatprep.mubr.f32.mxu0 0.0
    %3623 = vmatmul.mubr.f32.gmra.mrb[0].mxu0 %v1330
    %v3624 = vpop.f32.mrb[0].mxu0
    %v3625 = vadd.f32 %v3240, %v3624
    %v3626 = vpop.f32.mrb[0].mxu0
    %3627 = vmatprep.mubr.f32.mxu0 0.0
    %3628 = vmatmul.mubr.f32.gmra.mrb[0].mxu0 %v1339
    %v3629 = vpop.f32.mrb[0].mxu0
    %v3630 = vadd.f32 %v3245, %v3629
    %v3631 = vpop.f32.mrb[0].mxu0
    %3632 = vmatprep.mubr.f32.mxu0 0.0
    %3633 = vmatmul.mubr.f32.gmra.mrb[0].mxu0 %v1348
    %v3634 = vpop.f32.mrb[0].mxu0
    %v3635 = vadd.f32 %v3250, %v3634
    %v3636 = vpop.f32.mrb[0].mxu0
    %3637 = vmatprep.mubr.f32.mxu0 0.0
    %3638 = vmatmul.mubr.f32.gmra.mrb[0].mxu0 %v1357
    %v3639 = vpop.f32.mrb[0].mxu0
    %v3640 = vadd.f32 %v3255, %v3639
    %v3641 = vpop.f32.mrb[0].mxu0
    %3642 = vmatprep.mubr.f32.mxu0 0.0
    %3643 = vmatmul.mubr.f32.gmra.mrb[0].mxu0 %v1366
    %v3644 = vpop.f32.mrb[0].mxu0
    %v3645 = vadd.f32 %v3260, %v3644
    %v3646 = vpop.f32.mrb[0].mxu0
    %3647 = vmatprep.mubr.f32.mxu0 0.0
    %3648 = vmatmul.mubr.f32.gmra.mrb[0].mxu0 %v1375
    %v3649 = vpop.f32.mrb[0].mxu0
    %v3650 = vadd.f32 %v3265, %v3649
    %v3651 = vpop.f32.mrb[0].mxu0
    %3652 = vmatprep.mubr.f32.mxu0 0.0
    %3653 = vmatmul.mubr.f32.gmra.mrb[0].mxu0 %v1384
    %v3654 = vpop.f32.mrb[0].mxu0
    %v3655 = vadd.f32 %v3270, %v3654
    %v3656 = vpop.f32.mrb[0].mxu0
    %3657 = vmatprep.mubr.f32.mxu0 0.0
    %3658 = vmatmul.mubr.f32.gmra.mrb[0].mxu0 %v1393
    %v3659 = vpop.f32.mrb[0].mxu0
    %v3660 = vadd.f32 %v3275, %v3659
    %v3661 = vpop.f32.mrb[0].mxu0
    %3662 = vmatprep.mubr.f32.mxu0 0.0
    %3663 = vmatmul.mubr.f32.gmra.mrb[0].mxu0 %v1402
    %v3664 = vpop.f32.mrb[0].mxu0
    %v3665 = vadd.f32 %v3280, %v3664
    %v3666 = vpop.f32.mrb[0].mxu0
    %3667 = vmatprep.mubr.f32.mxu0 0.0
    %3668 = vmatmul.mubr.f32.gmra.mrb[0].mxu0 %v1411
    %v3669 = vpop.f32.mrb[0].mxu0
    %v3670 = vadd.f32 %v3285, %v3669
    %v3671 = vpop.f32.mrb[0].mxu0
    %3672 = vmatprep.mubr.f32.mxu0 0.0
    %3673 = vmatmul.mubr.f32.gmra.mrb[0].mxu0 %v1420
    %v3674 = vpop.f32.mrb[0].mxu0
    %v3675 = vadd.f32 %v3290, %v3674
    %v3676 = vpop.f32.mrb[0].mxu0
    %3677 = vmatprep.mubr.f32.mxu0 0.0
    %3678 = vmatmul.mubr.f32.gmra.mrb[0].mxu0 %v1429
    %v3679 = vpop.f32.mrb[0].mxu0
    %v3680 = vadd.f32 %v3295, %v3679
    %v3681 = vpop.f32.mrb[0].mxu0
    %3682 = vmatprep.mubr.f32.mxu0 0.0
    %3683 = vmatmul.mubr.f32.gmra.mrb[0].mxu0 %v1438
    %v3684 = vpop.f32.mrb[0].mxu0
    %v3685 = vadd.f32 %v3300, %v3684
    %v3686 = vpop.f32.mrb[0].mxu0
    %3687 = vmatprep.mubr.f32.mxu0 0.0
    %3688 = vmatmul.mubr.f32.gmra.mrb[0].mxu0 %v1447
    %v3689 = vpop.f32.mrb[0].mxu0
    %v3690 = vadd.f32 %v3305, %v3689
    %v3691 = vpop.f32.mrb[0].mxu0
    %3692 = vmatprep.mubr.f32.mxu0 0.0
    %3693 = vmatmul.mubr.f32.gmra.mrb[0].mxu0 %v1456
    %v3694 = vpop.f32.mrb[0].mxu0
    %v3695 = vadd.f32 %v3310, %v3694
    %v3696 = vpop.f32.mrb[0].mxu0
    %3697 = vmatprep.mubr.f32.mxu0 0.0
    %3698 = vmatmul.mubr.f32.gmra.mrb[0].mxu0 %v1465
    %v3699 = vpop.f32.mrb[0].mxu0
    %v3700 = vadd.f32 %v3315, %v3699
    %v3701 = vpop.f32.mrb[0].mxu0
    %3702 = vmatprep.mubr.f32.mxu0 0.0
    %3703 = vmatmul.mubr.f32.gmra.mrb[0].mxu0 %v1474
    %v3704 = vpop.f32.mrb[0].mxu0
    %v3705 = vadd.f32 %v3320, %v3704
    %v3706 = vpop.f32.mrb[0].mxu0
    %3707 = vmatprep.mubr.f32.mxu0 0.0
    %3708 = vmatmul.mubr.f32.gmra.mrb[0].mxu0 %v1483
    %v3709 = vpop.f32.mrb[0].mxu0
    %v3710 = vadd.f32 %v3325, %v3709
    %v3711 = vpop.f32.mrb[0].mxu0
    %3712 = vmatprep.mubr.f32.mxu0 0.0
    %3713 = vmatmul.mubr.f32.gmra.mrb[0].mxu0 %v1492
    %v3714 = vpop.f32.mrb[0].mxu0
    %v3715 = vadd.f32 %v3330, %v3714
    %v3716 = vpop.f32.mrb[0].mxu0
    %3717 = vmatprep.mubr.f32.mxu0 0.0
    %3718 = vmatmul.mubr.f32.gmra.mrb[0].mxu0 %v1501
    %v3719 = vpop.f32.mrb[0].mxu0
    %v3720 = vadd.f32 %v3335, %v3719
    %v3721 = vpop.f32.mrb[0].mxu0
    %3722 = vmatprep.mubr.f32.mxu0 0.0
    %3723 = vmatmul.mubr.f32.gmra.mrb[0].mxu0 %v1510
    %v3724 = vpop.f32.mrb[0].mxu0
    %v3725 = vadd.f32 %v3340, %v3724
    %v3726 = vpop.f32.mrb[0].mxu0
    %3727 = vmatprep.mubr.f32.mxu0 0.0
    %3728 = vmatmul.mubr.f32.gmra.mrb[0].mxu0 %v1519
    %v3729 = vpop.f32.mrb[0].mxu0
    %v3730 = vadd.f32 %v3345, %v3729
    %v3731 = vpop.f32.mrb[0].mxu0
    %3732 = vmatprep.mubr.f32.mxu0 0.0
    %3733 = vmatmul.mubr.f32.gmra.mrb[0].mxu0 %v1528
    %v3734 = vpop.f32.mrb[0].mxu0
    %v3735 = vadd.f32 %v3350, %v3734
    %v3736 = vpop.f32.mrb[0].mxu0
    %3737 = vmatprep.mubr.f32.mxu0 0.0
    %3738 = vmatmul.mubr.f32.gmra.mrb[0].mxu0 %v1537
    %v3739 = vpop.f32.mrb[0].mxu0
    %v3740 = vadd.f32 %v3355, %v3739
    %v3741 = vpop.f32.mrb[0].mxu0
    %3742 = vmatprep.mubr.f32.mxu0 0.0
    %3743 = vmatmul.mubr.f32.gmra.mrb[0].mxu0 %v1546
    %v3744 = vpop.f32.mrb[0].mxu0
    %v3745 = vadd.f32 %v3360, %v3744
    %v3746 = vpop.f32.mrb[0].mxu0
    %3747 = vmatprep.mubr.f32.mxu0 0.0
    %3748 = vmatmul.mubr.f32.gmra.mrb[0].mxu0 %v1555
    %v3749 = vpop.f32.mrb[0].mxu0
    %v3750 = vadd.f32 %v3365, %v3749
    %v3751 = vpop.f32.mrb[0].mxu0
    %3752 = vmatprep.mubr.f32.mxu0 0.0
    %3753 = vmatmul.mubr.f32.gmra.mrb[0].mxu0 %v1564
    %v3754 = vpop.f32.mrb[0].mxu0
    %v3755 = vadd.f32 %v3370, %v3754
    %v3756 = vpop.f32.mrb[0].mxu0
    %3757 = vmatprep.mubr.f32.mxu0 0.0
    %3758 = vmatmul.mubr.f32.gmra.mrb[0].mxu0 %v1573
    %v3759 = vpop.f32.mrb[0].mxu0
    %v3760 = vadd.f32 %v3375, %v3759
    %v3761 = vpop.f32.mrb[0].mxu0
    %3762 = vmatprep.mubr.f32.mxu0 0.0
    %3763 = vmatmul.mubr.f32.gmra.mrb[0].mxu0 %v1582
    %v3764 = vpop.f32.mrb[0].mxu0
    %v3765 = vadd.f32 %v3380, %v3764
    %v3766 = vpop.f32.mrb[0].mxu0
    %3767 = vmatprep.mubr.f32.mxu0 0.0
    %3768 = vmatmul.mubr.f32.gmra.mrb[0].mxu0 %v1591
    %v3769 = vpop.f32.mrb[0].mxu0
    %v3770 = vadd.f32 %v3385, %v3769
    %v3771 = vpop.f32.mrb[0].mxu0
    %3772 = vmatprep.mubr.f32.mxu0 0.0
    %3773 = vmatmul.mubr.f32.gmra.mrb[0].mxu0 %v1600
    %v3774 = vpop.f32.mrb[0].mxu0
    %v3775 = vadd.f32 %v3390, %v3774
    %v3776 = vpop.f32.mrb[0].mxu0
    %3777 = vmatprep.mubr.f32.mxu0 0.0
    %3778 = vmatmul.mubr.f32.gmra.mrb[0].mxu0 %v1609
    %v3779 = vpop.f32.mrb[0].mxu0
    %v3780 = vadd.f32 %v3395, %v3779
    %v3781 = vpop.f32.mrb[0].mxu0
    %3782 = vmatprep.mubr.f32.mxu0 0.0
    %3783 = vmatmul.mubr.f32.gmra.mrb[0].mxu0 %v1618
    %v3784 = vpop.f32.mrb[0].mxu0
    %v3785 = vadd.f32 %v3400, %v3784
    %v3786 = vpop.f32.mrb[0].mxu0
    %3787 = vmatprep.mubr.f32.mxu0 0.0
    %3788 = vmatmul.mubr.f32.gmra.mrb[0].mxu0 %v1627
    %v3789 = vpop.f32.mrb[0].mxu0
    %v3790 = vadd.f32 %v3405, %v3789
    %v3791 = vpop.f32.mrb[0].mxu0
    %3792 = vmatprep.mubr.f32.mxu0 0.0
    %3793 = vmatmul.mubr.f32.gmra.mrb[0].mxu0 %v1636
    %v3794 = vpop.f32.mrb[0].mxu0
    %v3795 = vadd.f32 %v3410, %v3794
    %v3796 = vpop.f32.mrb[0].mxu0
    %3797 = vmatprep.mubr.f32.mxu0 0.0
    %3798 = vmatmul.mubr.f32.gmra.mrb[0].mxu0 %v1645
    %v3799 = vpop.f32.mrb[0].mxu0
    %v3800 = vadd.f32 %v3415, %v3799
    %v3801 = vpop.f32.mrb[0].mxu0
    %3802 = vmatprep.mubr.f32.mxu0 0.0
    %3803 = vmatmul.mubr.f32.gmra.mrb[0].mxu0 %v1654
    %v3804 = vpop.f32.mrb[0].mxu0
    %v3805 = vadd.f32 %v3420, %v3804
    %v3806 = vpop.f32.mrb[0].mxu0
    %3807 = vmatprep.mubr.f32.mxu0 0.0
    %3808 = vmatmul.mubr.f32.gmra.mrb[0].mxu0 %v1663
    %v3809 = vpop.f32.mrb[0].mxu0
    %v3810 = vadd.f32 %v3425, %v3809
    %v3811 = vpop.f32.mrb[0].mxu0
    %3812 = vmatprep.mubr.f32.mxu0 0.0
    %3813 = vmatmul.mubr.f32.gmra.mrb[0].mxu0 %v1672
    %v3814 = vpop.f32.mrb[0].mxu0
    %v3815 = vadd.f32 %v3430, %v3814
    %v3816 = vpop.f32.mrb[0].mxu0
    %3817 = vmatprep.mubr.f32.mxu0 0.0
    %3818 = vmatmul.mubr.f32.gmra.mrb[0].mxu0 %v1681
    %v3819 = vpop.f32.mrb[0].mxu0
    %v3820 = vadd.f32 %v3435, %v3819
    %v3821 = vpop.f32.mrb[0].mxu0
    %3822 = vmatprep.mubr.f32.mxu0 0.0
    %3823 = vmatmul.mubr.f32.gmra.mrb[0].mxu0 %v1690
    %v3824 = vpop.f32.mrb[0].mxu0
    %v3825 = vadd.f32 %v3440, %v3824
    %v3826 = vpop.f32.mrb[0].mxu0
    %3827 = vmatprep.mubr.f32.mxu0 0.0
    %3828 = vmatmul.mubr.f32.gmra.mrb[0].mxu0 %v1699
    %v3829 = vpop.f32.mrb[0].mxu0
    %v3830 = vadd.f32 %v3445, %v3829
    %v3831 = vpop.f32.mrb[0].mxu0
    %3832 = vmatprep.mubr.f32.mxu0 0.0
    %3833 = vmatmul.mubr.f32.gmra.mrb[0].mxu0 %v1708
    %v3834 = vpop.f32.mrb[0].mxu0
    %v3835 = vadd.f32 %v3450, %v3834
    %v3836 = vpop.f32.mrb[0].mxu0
    %3837 = vmatprep.mubr.f32.mxu0 0.0
    %3838 = vmatmul.mubr.f32.gmra.mrb[0].mxu0 %v1717
    %v3839 = vpop.f32.mrb[0].mxu0
    %v3840 = vadd.f32 %v3455, %v3839
    %v3841 = vpop.f32.mrb[0].mxu0
    %3842 = vmatprep.mubr.f32.mxu0 0.0
    %3843 = vmatmul.mubr.f32.gmra.mrb[0].mxu0 %v1726
    %v3844 = vpop.f32.mrb[0].mxu0
    %v3845 = vadd.f32 %v3460, %v3844
    %v3846 = vpop.f32.mrb[0].mxu0
    %3847 = vmatprep.mubr.f32.mxu0 0.0
    %3848 = vmatmul.mubr.f32.gmra.mrb[0].mxu0 %v1735
    %v3849 = vpop.f32.mrb[0].mxu0
    %v3850 = vadd.f32 %v3465, %v3849
    %v3851 = vpop.f32.mrb[0].mxu0
    %3852 = vmatprep.mubr.f32.mxu0 0.0
    %3853 = vmatmul.mubr.f32.gmra.mrb[0].mxu0 %v1744
    %v3854 = vpop.f32.mrb[0].mxu0
    %v3855 = vadd.f32 %v3470, %v3854
    %v3856 = vpop.f32.mrb[0].mxu0
    %3857 = vmatprep.mubr.f32.mxu0 0.0
    %3858 = vmatmul.mubr.f32.gmra.mrb[0].mxu0 %v1753
    %v3859 = vpop.f32.mrb[0].mxu0
    %v3860 = vadd.f32 %v3475, %v3859
    %v3861 = vpop.f32.mrb[0].mxu0
    %3862 = vmatprep.mubr.f32.mxu0 0.0
    %3863 = vmatmul.mubr.f32.gmra.mrb[0].mxu0 %v1762
    %v3864 = vpop.f32.mrb[0].mxu0
    %v3865 = vadd.f32 %v3480, %v3864
    %v3866 = vpop.f32.mrb[0].mxu0
    %3867 = vmatprep.mubr.f32.mxu0 0.0
    %3868 = vmatmul.mubr.f32.gmra.mrb[0].mxu0 %v1771
    %v3869 = vpop.f32.mrb[0].mxu0
    %v3870 = vadd.f32 %v3485, %v3869
    %v3871 = vpop.f32.mrb[0].mxu0
    %3872 = vmatprep.mubr.f32.mxu0 0.0
    %3873 = vmatmul.mubr.f32.gmra.mrb[0].mxu0 %v1780
    %v3874 = vpop.f32.mrb[0].mxu0
    %v3875 = vadd.f32 %v3490, %v3874
    %v3876 = vpop.f32.mrb[0].mxu0
    %3877 = vmatprep.mubr.f32.mxu0 0.0
    %3878 = vmatmul.mubr.f32.gmra.mrb[0].mxu0 %v1789
    %v3879 = vpop.f32.mrb[0].mxu0
    %v3880 = vadd.f32 %v3495, %v3879
    %v3881 = vpop.f32.mrb[0].mxu0
    %3882 = vmatprep.mubr.f32.mxu0 0.0
    %3883 = vmatmul.mubr.f32.gmra.mrb[0].mxu0 %v1798
    %v3884 = vpop.f32.mrb[0].mxu0
    %v3885 = vadd.f32 %v3500, %v3884
    %v3886 = vpop.f32.mrb[0].mxu0
    %3887 = vmatprep.mubr.f32.mxu0 0.0
    %3888 = vmatmul.mubr.f32.gmra.mrb[0].mxu0 %v1807
    %v3889 = vpop.f32.mrb[0].mxu0
    %v3890 = vadd.f32 %v3505, %v3889
    %v3891 = vpop.f32.mrb[0].mxu0
    %3892 = vmatprep.mubr.f32.mxu0 0.0
    %3893 = vmatmul.mubr.f32.gmra.mrb[0].mxu0 %v1816
    %v3894 = vpop.f32.mrb[0].mxu0
    %v3895 = vadd.f32 %v3510, %v3894
    %v3896 = vpop.f32.mrb[0].mxu0
    %3897 = vmatprep.mubr.f32.mxu0 0.0
    %3898 = vmatmul.mubr.f32.gmra.mrb[0].mxu0 %v1825
    %v3899 = vpop.f32.mrb[0].mxu0
    %v3900 = vadd.f32 %v3515, %v3899
    %v3901 = vpop.f32.mrb[0].mxu0
    %3902 = vmatprep.mubr.f32.mxu0 0.0
    %3903 = vmatmul.mubr.f32.gmra.mrb[0].mxu0 %v1834
    %v3904 = vpop.f32.mrb[0].mxu0
    %v3905 = vadd.f32 %v3520, %v3904
    %v3906 = vpop.f32.mrb[0].mxu0
    %3907 = vmatprep.mubr.f32.mxu0 0.0
    %3908 = vmatmul.mubr.f32.gmra.mrb[0].mxu0 %v1843
    %v3909 = vpop.f32.mrb[0].mxu0
    %v3910 = vadd.f32 %v3525, %v3909
    %v3911 = vpop.f32.mrb[0].mxu0
    %3912 = vdwg.mxu0
    %v3913 = vadd.f32 %v3595, %v3600
    %v3914 = vadd.f32 %v3913, %v3605
    %v3915 = vadd.f32 %v3914, %v3610
    %v3916 = vadd.f32 %v3915, %v3615
    %v3917 = vadd.f32 %v3916, %v3620
    %v3918 = vadd.f32 %v3917, %v3625
    %v3919 = vadd.f32 %v3918, %v3630
    %v3920 = vadd.f32 %v3919, %v3635
    %v3921 = vadd.f32 %v3920, %v3640
    %v3922 = vadd.f32 %v3921, %v3645
    %v3923 = vadd.f32 %v3922, %v3650
    %v3924 = vadd.f32 %v3923, %v3655
    %v3925 = vadd.f32 %v3924, %v3660
    %v3926 = vadd.f32 %v3925, %v3665
    %v3927 = vadd.f32 %v3926, %v3670
    %v3928 = vadd.f32 %v3927, %v3675
    %v3929 = vadd.f32 %v3928, %v3680
    %v3930 = vadd.f32 %v3929, %v3685
    %v3931 = vadd.f32 %v3930, %v3690
    %v3932 = vadd.f32 %v3931, %v3695
    %v3933 = vadd.f32 %v3932, %v3700
    %v3934 = vadd.f32 %v3933, %v3705
    %v3935 = vadd.f32 %v3934, %v3710
    %v3936 = vadd.f32 %v3935, %v3715
    %v3937 = vadd.f32 %v3936, %v3720
    %v3938 = vadd.f32 %v3937, %v3725
    %v3939 = vadd.f32 %v3938, %v3730
    %v3940 = vadd.f32 %v3939, %v3735
    %v3941 = vadd.f32 %v3940, %v3740
    %v3942 = vadd.f32 %v3941, %v3745
    %v3943 = vadd.f32 %v3942, %v3750
    %v3944 = vadd.f32 %v3943, %v3755
    %v3945 = vadd.f32 %v3944, %v3760
    %v3946 = vadd.f32 %v3945, %v3765
    %v3947 = vadd.f32 %v3946, %v3770
    %v3948 = vadd.f32 %v3947, %v3775
    %v3949 = vadd.f32 %v3948, %v3780
    %v3950 = vadd.f32 %v3949, %v3785
    %v3951 = vadd.f32 %v3950, %v3790
    %v3952 = vadd.f32 %v3951, %v3795
    %v3953 = vadd.f32 %v3952, %v3800
    %v3954 = vadd.f32 %v3953, %v3805
    %v3955 = vadd.f32 %v3954, %v3810
    %v3956 = vadd.f32 %v3955, %v3815
    %v3957 = vadd.f32 %v3956, %v3820
    %v3958 = vadd.f32 %v3957, %v3825
    %v3959 = vadd.f32 %v3958, %v3830
    %v3960 = vadd.f32 %v3959, %v3835
    %v3961 = vadd.f32 %v3960, %v3840
    %v3962 = vadd.f32 %v3961, %v3845
    %v3963 = vadd.f32 %v3962, %v3850
    %v3964 = vadd.f32 %v3963, %v3855
    %v3965 = vadd.f32 %v3964, %v3860
    %v3966 = vadd.f32 %v3965, %v3865
    %v3967 = vadd.f32 %v3966, %v3870
    %v3968 = vadd.f32 %v3967, %v3875
    %v3969 = vadd.f32 %v3968, %v3880
    %v3970 = vadd.f32 %v3969, %v3885
    %v3971 = vadd.f32 %v3970, %v3890
    %v3972 = vadd.f32 %v3971, %v3895
    %v3973 = vadd.f32 %v3972, %v3900
    %v3974 = vadd.f32 %v3973, %v3905
    %v3975 = vadd.f32 %v3974, %v3910
    %v3976 = vrot.slane %v3975, 4
    %v3977 = vadd.f32 %v3975, %v3976
    %v3978 = vrot.slane %v3977, 2
    %v3979 = vadd.f32 %v3977, %v3978
    %v3980 = vrot.slane %v3979, 1
    %v3981 = vadd.f32 %v3979, %v3980
    %v3982 = vmul.f32 %v3595, %v3595
    %v3983 = vmul.f32 %v3600, %v3600
    %v3984 = vmul.f32 %v3605, %v3605
    %v3985 = vmul.f32 %v3610, %v3610
    %v3986 = vmul.f32 %v3615, %v3615
    %v3987 = vmul.f32 %v3620, %v3620
    %v3988 = vmul.f32 %v3625, %v3625
    %v3989 = vmul.f32 %v3630, %v3630
    %v3990 = vmul.f32 %v3635, %v3635
    %v3991 = vmul.f32 %v3640, %v3640
    %v3992 = vmul.f32 %v3645, %v3645
    %v3993 = vmul.f32 %v3650, %v3650
    %v3994 = vmul.f32 %v3655, %v3655
    %v3995 = vmul.f32 %v3660, %v3660
    %v3996 = vmul.f32 %v3665, %v3665
    %v3997 = vmul.f32 %v3670, %v3670
    %v3998 = vmul.f32 %v3675, %v3675
    %v3999 = vmul.f32 %v3680, %v3680
    %v4000 = vmul.f32 %v3685, %v3685
    %v4001 = vmul.f32 %v3690, %v3690
    %v4002 = vmul.f32 %v3695, %v3695
    %v4003 = vmul.f32 %v3700, %v3700
    %v4004 = vmul.f32 %v3705, %v3705
    %v4005 = vmul.f32 %v3710, %v3710
    %v4006 = vmul.f32 %v3715, %v3715
    %v4007 = vmul.f32 %v3720, %v3720
    %v4008 = vmul.f32 %v3725, %v3725
    %v4009 = vmul.f32 %v3730, %v3730
    %v4010 = vmul.f32 %v3735, %v3735
    %v4011 = vmul.f32 %v3740, %v3740
    %v4012 = vmul.f32 %v3745, %v3745
    %v4013 = vmul.f32 %v3750, %v3750
    %v4014 = vmul.f32 %v3755, %v3755
    %v4015 = vmul.f32 %v3760, %v3760
    %v4016 = vmul.f32 %v3765, %v3765
    %v4017 = vmul.f32 %v3770, %v3770
    %v4018 = vmul.f32 %v3775, %v3775
    %v4019 = vmul.f32 %v3780, %v3780
    %v4020 = vmul.f32 %v3785, %v3785
    %v4021 = vmul.f32 %v3790, %v3790
    %v4022 = vmul.f32 %v3795, %v3795
    %v4023 = vmul.f32 %v3800, %v3800
    %v4024 = vmul.f32 %v3805, %v3805
    %v4025 = vmul.f32 %v3810, %v3810
    %v4026 = vmul.f32 %v3815, %v3815
    %v4027 = vmul.f32 %v3820, %v3820
    %v4028 = vmul.f32 %v3825, %v3825
    %v4029 = vmul.f32 %v3830, %v3830
    %v4030 = vmul.f32 %v3835, %v3835
    %v4031 = vmul.f32 %v3840, %v3840
    %v4032 = vmul.f32 %v3845, %v3845
    %v4033 = vmul.f32 %v3850, %v3850
    %v4034 = vmul.f32 %v3855, %v3855
    %v4035 = vmul.f32 %v3860, %v3860
    %v4036 = vmul.f32 %v3865, %v3865
    %v4037 = vmul.f32 %v3870, %v3870
    %v4038 = vmul.f32 %v3875, %v3875
    %v4039 = vmul.f32 %v3880, %v3880
    %v4040 = vmul.f32 %v3885, %v3885
    %v4041 = vmul.f32 %v3890, %v3890
    %v4042 = vmul.f32 %v3895, %v3895
    %v4043 = vmul.f32 %v3900, %v3900
    %v4044 = vmul.f32 %v3905, %v3905
    %v4045 = vmul.f32 %v3910, %v3910
    %v4046 = vadd.f32 %v3982, %v3983
    %v4047 = vadd.f32 %v4046, %v3984
    %v4048 = vadd.f32 %v4047, %v3985
    %v4049 = vadd.f32 %v4048, %v3986
    %v4050 = vadd.f32 %v4049, %v3987
    %v4051 = vadd.f32 %v4050, %v3988
    %v4052 = vadd.f32 %v4051, %v3989
    %v4053 = vadd.f32 %v4052, %v3990
    %v4054 = vadd.f32 %v4053, %v3991
    %v4055 = vadd.f32 %v4054, %v3992
    %v4056 = vadd.f32 %v4055, %v3993
    %v4057 = vadd.f32 %v4056, %v3994
    %v4058 = vadd.f32 %v4057, %v3995
    %v4059 = vadd.f32 %v4058, %v3996
    %v4060 = vadd.f32 %v4059, %v3997
    %v4061 = vadd.f32 %v4060, %v3998
    %v4062 = vadd.f32 %v4061, %v3999
    %v4063 = vadd.f32 %v4062, %v4000
    %v4064 = vadd.f32 %v4063, %v4001
    %v4065 = vadd.f32 %v4064, %v4002
    %v4066 = vadd.f32 %v4065, %v4003
    %v4067 = vadd.f32 %v4066, %v4004
    %v4068 = vadd.f32 %v4067, %v4005
    %v4069 = vadd.f32 %v4068, %v4006
    %v4070 = vadd.f32 %v4069, %v4007
    %v4071 = vadd.f32 %v4070, %v4008
    %v4072 = vadd.f32 %v4071, %v4009
    %v4073 = vadd.f32 %v4072, %v4010
    %v4074 = vadd.f32 %v4073, %v4011
    %v4075 = vadd.f32 %v4074, %v4012
    %v4076 = vadd.f32 %v4075, %v4013
    %v4077 = vadd.f32 %v4076, %v4014
    %v4078 = vadd.f32 %v4077, %v4015
    %v4079 = vadd.f32 %v4078, %v4016
    %v4080 = vadd.f32 %v4079, %v4017
    %v4081 = vadd.f32 %v4080, %v4018
    %v4082 = vadd.f32 %v4081, %v4019
    %v4083 = vadd.f32 %v4082, %v4020
    %v4084 = vadd.f32 %v4083, %v4021
    %v4085 = vadd.f32 %v4084, %v4022
    %v4086 = vadd.f32 %v4085, %v4023
    %v4087 = vadd.f32 %v4086, %v4024
    %v4088 = vadd.f32 %v4087, %v4025
    %v4089 = vadd.f32 %v4088, %v4026
    %v4090 = vadd.f32 %v4089, %v4027
    %v4091 = vadd.f32 %v4090, %v4028
    %v4092 = vadd.f32 %v4091, %v4029
    %v4093 = vadd.f32 %v4092, %v4030
    %v4094 = vadd.f32 %v4093, %v4031
    %v4095 = vadd.f32 %v4094, %v4032
    %v4096 = vadd.f32 %v4095, %v4033
    %v4097 = vadd.f32 %v4096, %v4034
    %v4098 = vadd.f32 %v4097, %v4035
    %v4099 = vadd.f32 %v4098, %v4036
    %v4100 = vadd.f32 %v4099, %v4037
    %v4101 = vadd.f32 %v4100, %v4038
    %v4102 = vadd.f32 %v4101, %v4039
    %v4103 = vadd.f32 %v4102, %v4040
    %v4104 = vadd.f32 %v4103, %v4041
    %v4105 = vadd.f32 %v4104, %v4042
    %v4106 = vadd.f32 %v4105, %v4043
    %v4107 = vadd.f32 %v4106, %v4044
    %v4108 = vadd.f32 %v4107, %v4045
    %v4109 = vrot.slane %v4108, 4
    %v4110 = vadd.f32 %v4108, %v4109
    %v4111 = vrot.slane %v4110, 2
    %v4112 = vadd.f32 %v4110, %v4111
    %v4113 = vrot.slane %v4112, 1
    %v4114 = vadd.f32 %v4112, %v4113
    %v4115 = vmul.f32 %v3981, 0.001953125
    %v4116 = vmul.f32 %v4114, 0.001953125
    %v4117 = vmul.f32 %v4115, %v4115
    %v4118 = vsub.f32 %v4116, %v4117
    %v4119 = vmax.f32 %v4118, 0.0
    %v4120 = vld [vmem:[#allocation10] sm:$0x1]
    %v4121 = vadd.f32 %v4119, 1e-05
    %v4122 = vrsqrt.pop %v4121
    %v4123 = vmul.f32 %v4120, %v4122
    %v4124 = vld [vmem:[#allocation11] sm:$0x1]
    %v4125 = vmul.f32 %v4115, %v4123
    %v4126 = vsub.f32 %v4124, %v4125
    %v4128 = vlaneseq
    %v4129 = vshrl.u32 %v4128, 7
    %v4130 = vsub.s32 0, %v4129
    %v4131 = vrot.slane %v4123, %v4130
    %v4133 = vmul.f32 %v3595, %v4131
    %v4134 = vmul.f32 %v3600, %v4131
    %v4135 = vmul.f32 %v3605, %v4131
    %v4136 = vmul.f32 %v3610, %v4131
    %v4137 = vmul.f32 %v3615, %v4131
    %v4138 = vmul.f32 %v3620, %v4131
    %v4139 = vmul.f32 %v3625, %v4131
    %v4140 = vmul.f32 %v3630, %v4131
    %v4141 = vmul.f32 %v3635, %v4131
    %v4142 = vmul.f32 %v3640, %v4131
    %v4143 = vmul.f32 %v3645, %v4131
    %v4144 = vmul.f32 %v3650, %v4131
    %v4145 = vmul.f32 %v3655, %v4131
    %v4146 = vmul.f32 %v3660, %v4131
    %v4147 = vmul.f32 %v3665, %v4131
    %v4148 = vmul.f32 %v3670, %v4131
    %v4149 = vmul.f32 %v3675, %v4131
    %v4150 = vmul.f32 %v3680, %v4131
    %v4151 = vmul.f32 %v3685, %v4131
    %v4152 = vmul.f32 %v3690, %v4131
    %v4153 = vmul.f32 %v3695, %v4131
    %v4154 = vmul.f32 %v3700, %v4131
    %v4155 = vmul.f32 %v3705, %v4131
    %v4156 = vmul.f32 %v3710, %v4131
    %v4157 = vmul.f32 %v3715, %v4131
    %v4158 = vmul.f32 %v3720, %v4131
    %v4159 = vmul.f32 %v3725, %v4131
    %v4160 = vmul.f32 %v3730, %v4131
    %v4161 = vmul.f32 %v3735, %v4131
    %v4162 = vmul.f32 %v3740, %v4131
    %v4163 = vmul.f32 %v3745, %v4131
    %v4164 = vmul.f32 %v3750, %v4131
    %v4165 = vmul.f32 %v3755, %v4131
    %v4166 = vmul.f32 %v3760, %v4131
    %v4167 = vmul.f32 %v3765, %v4131
    %v4168 = vmul.f32 %v3770, %v4131
    %v4169 = vmul.f32 %v3775, %v4131
    %v4170 = vmul.f32 %v3780, %v4131
    %v4171 = vmul.f32 %v3785, %v4131
    %v4172 = vmul.f32 %v3790, %v4131
    %v4173 = vmul.f32 %v3795, %v4131
    %v4174 = vmul.f32 %v3800, %v4131
    %v4175 = vmul.f32 %v3805, %v4131
    %v4176 = vmul.f32 %v3810, %v4131
    %v4177 = vmul.f32 %v3815, %v4131
    %v4178 = vmul.f32 %v3820, %v4131
    %v4179 = vmul.f32 %v3825, %v4131
    %v4180 = vmul.f32 %v3830, %v4131
    %v4181 = vmul.f32 %v3835, %v4131
    %v4182 = vmul.f32 %v3840, %v4131
    %v4183 = vmul.f32 %v3845, %v4131
    %v4184 = vmul.f32 %v3850, %v4131
    %v4185 = vmul.f32 %v3855, %v4131
    %v4186 = vmul.f32 %v3860, %v4131
    %v4187 = vmul.f32 %v3865, %v4131
    %v4188 = vmul.f32 %v3870, %v4131
    %v4189 = vmul.f32 %v3875, %v4131
    %v4190 = vmul.f32 %v3880, %v4131
    %v4191 = vmul.f32 %v3885, %v4131
    %v4192 = vmul.f32 %v3890, %v4131
    %v4193 = vmul.f32 %v3895, %v4131
    %v4194 = vmul.f32 %v3900, %v4131
    %v4195 = vmul.f32 %v3905, %v4131
    %v4196 = vmul.f32 %v3910, %v4131
    %v4198 = vlaneseq
    %v4199 = vshrl.u32 %v4198, 7
    %v4200 = vsub.s32 0, %v4199
    %v4201 = vrot.slane %v4126, %v4200
    %v4203 = vadd.f32 %v4133, %v4201
    %v4204 = vadd.f32 %v4134, %v4201
    %v4205 = vadd.f32 %v4135, %v4201
    %v4206 = vadd.f32 %v4136, %v4201
    %v4207 = vadd.f32 %v4137, %v4201
    %v4208 = vadd.f32 %v4138, %v4201
    %v4209 = vadd.f32 %v4139, %v4201
    %v4210 = vadd.f32 %v4140, %v4201
    %v4211 = vadd.f32 %v4141, %v4201
    %v4212 = vadd.f32 %v4142, %v4201
    %v4213 = vadd.f32 %v4143, %v4201
    %v4214 = vadd.f32 %v4144, %v4201
    %v4215 = vadd.f32 %v4145, %v4201
    %v4216 = vadd.f32 %v4146, %v4201
    %v4217 = vadd.f32 %v4147, %v4201
    %v4218 = vadd.f32 %v4148, %v4201
    %v4219 = vadd.f32 %v4149, %v4201
    %v4220 = vadd.f32 %v4150, %v4201
    %v4221 = vadd.f32 %v4151, %v4201
    %v4222 = vadd.f32 %v4152, %v4201
    %v4223 = vadd.f32 %v4153, %v4201
    %v4224 = vadd.f32 %v4154, %v4201
    %v4225 = vadd.f32 %v4155, %v4201
    %v4226 = vadd.f32 %v4156, %v4201
    %v4227 = vadd.f32 %v4157, %v4201
    %v4228 = vadd.f32 %v4158, %v4201
    %v4229 = vadd.f32 %v4159, %v4201
    %v4230 = vadd.f32 %v4160, %v4201
    %v4231 = vadd.f32 %v4161, %v4201
    %v4232 = vadd.f32 %v4162, %v4201
    %v4233 = vadd.f32 %v4163, %v4201
    %v4234 = vadd.f32 %v4164, %v4201
    %v4235 = vadd.f32 %v4165, %v4201
    %v4236 = vadd.f32 %v4166, %v4201
    %v4237 = vadd.f32 %v4167, %v4201
    %v4238 = vadd.f32 %v4168, %v4201
    %v4239 = vadd.f32 %v4169, %v4201
    %v4240 = vadd.f32 %v4170, %v4201
    %v4241 = vadd.f32 %v4171, %v4201
    %v4242 = vadd.f32 %v4172, %v4201
    %v4243 = vadd.f32 %v4173, %v4201
    %v4244 = vadd.f32 %v4174, %v4201
    %v4245 = vadd.f32 %v4175, %v4201
    %v4246 = vadd.f32 %v4176, %v4201
    %v4247 = vadd.f32 %v4177, %v4201
    %v4248 = vadd.f32 %v4178, %v4201
    %v4249 = vadd.f32 %v4179, %v4201
    %v4250 = vadd.f32 %v4180, %v4201
    %v4251 = vadd.f32 %v4181, %v4201
    %v4252 = vadd.f32 %v4182, %v4201
    %v4253 = vadd.f32 %v4183, %v4201
    %v4254 = vadd.f32 %v4184, %v4201
    %v4255 = vadd.f32 %v4185, %v4201
    %v4256 = vadd.f32 %v4186, %v4201
    %v4257 = vadd.f32 %v4187, %v4201
    %v4258 = vadd.f32 %v4188, %v4201
    %v4259 = vadd.f32 %v4189, %v4201
    %v4260 = vadd.f32 %v4190, %v4201
    %v4261 = vadd.f32 %v4191, %v4201
    %v4262 = vadd.f32 %v4192, %v4201
    %v4263 = vadd.f32 %v4193, %v4201
    %v4264 = vadd.f32 %v4194, %v4201
    %v4265 = vadd.f32 %v4195, %v4201
    %v4266 = vadd.f32 %v4196, %v4201
    %v4267 = vmax.f32 %v4203, 0.0
    %v4268 = vmax.f32 %v4204, 0.0
    %v4269 = vmax.f32 %v4205, 0.0
    %v4270 = vmax.f32 %v4206, 0.0
    %v4271 = vmax.f32 %v4207, 0.0
    %v4272 = vmax.f32 %v4208, 0.0
    %v4273 = vmax.f32 %v4209, 0.0
    %v4274 = vmax.f32 %v4210, 0.0
    %v4275 = vmax.f32 %v4211, 0.0
    %v4276 = vmax.f32 %v4212, 0.0
    %v4277 = vmax.f32 %v4213, 0.0
    %v4278 = vmax.f32 %v4214, 0.0
    %v4279 = vmax.f32 %v4215, 0.0
    %v4280 = vmax.f32 %v4216, 0.0
    %v4281 = vmax.f32 %v4217, 0.0
    %v4282 = vmax.f32 %v4218, 0.0
    %v4283 = vmax.f32 %v4219, 0.0
    %v4284 = vmax.f32 %v4220, 0.0
    %v4285 = vmax.f32 %v4221, 0.0
    %v4286 = vmax.f32 %v4222, 0.0
    %v4287 = vmax.f32 %v4223, 0.0
    %v4288 = vmax.f32 %v4224, 0.0
    %v4289 = vmax.f32 %v4225, 0.0
    %v4290 = vmax.f32 %v4226, 0.0
    %v4291 = vmax.f32 %v4227, 0.0
    %v4292 = vmax.f32 %v4228, 0.0
    %v4293 = vmax.f32 %v4229, 0.0
    %v4294 = vmax.f32 %v4230, 0.0
    %v4295 = vmax.f32 %v4231, 0.0
    %v4296 = vmax.f32 %v4232, 0.0
    %v4297 = vmax.f32 %v4233, 0.0
    %v4298 = vmax.f32 %v4234, 0.0
    %v4299 = vmax.f32 %v4235, 0.0
    %v4300 = vmax.f32 %v4236, 0.0
    %v4301 = vmax.f32 %v4237, 0.0
    %v4302 = vmax.f32 %v4238, 0.0
    %v4303 = vmax.f32 %v4239, 0.0
    %v4304 = vmax.f32 %v4240, 0.0
    %v4305 = vmax.f32 %v4241, 0.0
    %v4306 = vmax.f32 %v4242, 0.0
    %v4307 = vmax.f32 %v4243, 0.0
    %v4308 = vmax.f32 %v4244, 0.0
    %v4309 = vmax.f32 %v4245, 0.0
    %v4310 = vmax.f32 %v4246, 0.0
    %v4311 = vmax.f32 %v4247, 0.0
    %v4312 = vmax.f32 %v4248, 0.0
    %v4313 = vmax.f32 %v4249, 0.0
    %v4314 = vmax.f32 %v4250, 0.0
    %v4315 = vmax.f32 %v4251, 0.0
    %v4316 = vmax.f32 %v4252, 0.0
    %v4317 = vmax.f32 %v4253, 0.0
    %v4318 = vmax.f32 %v4254, 0.0
    %v4319 = vmax.f32 %v4255, 0.0
    %v4320 = vmax.f32 %v4256, 0.0
    %v4321 = vmax.f32 %v4257, 0.0
    %v4322 = vmax.f32 %v4258, 0.0
    %v4323 = vmax.f32 %v4259, 0.0
    %v4324 = vmax.f32 %v4260, 0.0
    %v4325 = vmax.f32 %v4261, 0.0
    %v4326 = vmax.f32 %v4262, 0.0
    %v4327 = vmax.f32 %v4263, 0.0
    %v4328 = vmax.f32 %v4264, 0.0
    %v4329 = vmax.f32 %v4265, 0.0
    %v4330 = vmax.f32 %v4266, 0.0
    %4331 = vst [vmem:[#allocation3] sm:$0xff] 0.0
    %4332 = vst [vmem:[#allocation3 + $0x8] sm:$0xff] 0.0
    %4333 = vst [vmem:[#allocation3 + $0x10] sm:$0x3] 0.0
    %4334 = vst [vmem:[#allocation3 + $0x1b0] sm:$0xff] 0.0
    %4335 = vst [vmem:[#allocation3 + $0x1b8] sm:$0xff] 0.0
    %4336 = vst [vmem:[#allocation3 + $0x1c0] sm:$0x3] 0.0
    %s4337 = scalar_lea.vmem [#allocation3], 408
    %4338 = vst [vmem:[%s4337] sm:$0xff] 0.0
    %4339 = vst [vmem:[%s4337 + $0x8] sm:$0xff] 0.0
    %4340 = vst [vmem:[%s4337 + $0x10] sm:$0x3] 0.0
    %4341 = vst [vmem:[%s4337 + $0x1b0] sm:$0xff] 0.0
    %4342 = vst [vmem:[%s4337 + $0x1b8] sm:$0xff] 0.0
    %4343 = vst [vmem:[%s4337 + $0x1c0] sm:$0x3] 0.0
    %4344 = vst [vmem:[#allocation3] sm:$0x1] 0.0
    %4345 = vst [vmem:[#allocation3 + $0x18] sm:$0x1] 0.0
    %4346 = vst [vmem:[#allocation3 + $0x30] sm:$0x1] 0.0
    %4347 = vst [vmem:[#allocation3 + $0x48] sm:$0x1] 0.0
    %4348 = vst [vmem:[#allocation3 + $0x60] sm:$0x1] 0.0
    %4349 = vst [vmem:[#allocation3 + $0x78] sm:$0x1] 0.0
    %4350 = vst [vmem:[#allocation3 + $0x90] sm:$0x1] 0.0
    %4351 = vst [vmem:[#allocation3 + $0xa8] sm:$0x1] 0.0
    %4352 = vst [vmem:[#allocation3 + $0xc0] sm:$0x1] 0.0
    %4353 = vst [vmem:[#allocation3 + $0xd8] sm:$0x1] 0.0
    %4354 = vst [vmem:[#allocation3 + $0xf0] sm:$0x1] 0.0
    %4355 = vst [vmem:[#allocation3 + $0x108] sm:$0x1] 0.0
    %4356 = vst [vmem:[#allocation3 + $0x120] sm:$0x1] 0.0
    %4357 = vst [vmem:[#allocation3 + $0x138] sm:$0x1] 0.0
    %4358 = vst [vmem:[#allocation3 + $0x150] sm:$0x1] 0.0
    %4359 = vst [vmem:[#allocation3 + $0x168] sm:$0x1] 0.0
    %4360 = vst [vmem:[#allocation3 + $0x180] sm:$0x1] 0.0
    %4361 = vst [vmem:[#allocation3 + $0x198] sm:$0x1] 0.0
    %4362 = vst [vmem:[#allocation3 + $0x1b0] sm:$0x1] 0.0
    %4363 = vst [vmem:[#allocation3 + $0x1c8] sm:$0x1] 0.0
    %4364 = vst [vmem:[#allocation3 + $0x1e0] sm:$0x1] 0.0
    %4365 = vst [vmem:[#allocation3 + $0x1f8] sm:$0x1] 0.0
    %4366 = vst [vmem:[#allocation3 + $0x210] sm:$0x1] 0.0
    %4367 = vst [vmem:[#allocation3 + $0x228] sm:$0x1] 0.0
    %4368 = vst [vmem:[#allocation3 + $0x240] sm:$0x1] 0.0
    %4369 = vst [vmem:[#allocation3 + $0x258] sm:$0x1] 0.0
    %4370 = vst [vmem:[#allocation3 + $0x270] sm:$0x1] 0.0
    %4371 = vst [vmem:[#allocation3 + $0x288] sm:$0x1] 0.0
    %4372 = vst [vmem:[#allocation3 + $0x2a0] sm:$0x1] 0.0
    %4373 = vst [vmem:[#allocation3 + $0x2b8] sm:$0x1] 0.0
    %4374 = vst [vmem:[#allocation3 + $0x2d0] sm:$0x1] 0.0
    %4375 = vst [vmem:[#allocation3 + $0x2e8] sm:$0x1] 0.0
    %4376 = vst [vmem:[#allocation3 + $0x300] sm:$0x1] 0.0
    %4377 = vst [vmem:[#allocation3 + $0x318] sm:$0x1] 0.0
    %4378 = vst [vmem:[#allocation3 + $0x330] sm:$0x1] 0.0
    %4379 = vst [vmem:[#allocation3 + $0x348] sm:$0x1] 0.0
    %4380 = vst [vmem:[#allocation3 + $0x11] sm:$0x1] 0.0
    %4381 = vst [vmem:[#allocation3 + $0x29] sm:$0x1] 0.0
    %4382 = vst [vmem:[#allocation3 + $0x41] sm:$0x1] 0.0
    %4383 = vst [vmem:[#allocation3 + $0x59] sm:$0x1] 0.0
    %4384 = vst [vmem:[#allocation3 + $0x71] sm:$0x1] 0.0
    %4385 = vst [vmem:[#allocation3 + $0x89] sm:$0x1] 0.0
    %4386 = vst [vmem:[#allocation3 + $0xa1] sm:$0x1] 0.0
    %4387 = vst [vmem:[#allocation3 + $0xb9] sm:$0x1] 0.0
    %4388 = vst [vmem:[#allocation3 + $0xd1] sm:$0x1] 0.0
    %4389 = vst [vmem:[#allocation3 + $0xe9] sm:$0x1] 0.0
    %4390 = vst [vmem:[#allocation3 + $0x101] sm:$0x1] 0.0
    %4391 = vst [vmem:[#allocation3 + $0x119] sm:$0x1] 0.0
    %4392 = vst [vmem:[#allocation3 + $0x131] sm:$0x1] 0.0
    %4393 = vst [vmem:[#allocation3 + $0x149] sm:$0x1] 0.0
    %4394 = vst [vmem:[#allocation3 + $0x161] sm:$0x1] 0.0
    %4395 = vst [vmem:[#allocation3 + $0x179] sm:$0x1] 0.0
    %4396 = vst [vmem:[#allocation3 + $0x191] sm:$0x1] 0.0
    %4397 = vst [vmem:[#allocation3 + $0x1a9] sm:$0x1] 0.0
    %4398 = vst [vmem:[#allocation3 + $0x1c1] sm:$0x1] 0.0
    %4399 = vst [vmem:[#allocation3 + $0x1d9] sm:$0x1] 0.0
    %4400 = vst [vmem:[#allocation3 + $0x1f1] sm:$0x1] 0.0
    %4401 = vst [vmem:[#allocation3 + $0x209] sm:$0x1] 0.0
    %4402 = vst [vmem:[#allocation3 + $0x221] sm:$0x1] 0.0
    %4403 = vst [vmem:[#allocation3 + $0x239] sm:$0x1] 0.0
    %4404 = vst [vmem:[#allocation3 + $0x251] sm:$0x1] 0.0
    %4405 = vst [vmem:[#allocation3 + $0x269] sm:$0x1] 0.0
    %4406 = vst [vmem:[#allocation3 + $0x281] sm:$0x1] 0.0
    %4407 = vst [vmem:[#allocation3 + $0x299] sm:$0x1] 0.0
    %4408 = vst [vmem:[#allocation3 + $0x2b1] sm:$0x1] 0.0
    %4409 = vst [vmem:[#allocation3 + $0x2c9] sm:$0x1] 0.0
    %4410 = vst [vmem:[#allocation3 + $0x2e1] sm:$0x1] 0.0
    %4411 = vst [vmem:[#allocation3 + $0x2f9] sm:$0x1] 0.0
    %4412 = vst [vmem:[#allocation3 + $0x311] sm:$0x1] 0.0
    %4413 = vst [vmem:[#allocation3 + $0x329] sm:$0x1] 0.0
    %4414 = vst [vmem:[#allocation3 + $0x341] sm:$0x1] 0.0
    %4415 = vst [vmem:[#allocation3 + $0x359] sm:$0x1] 0.0
    %s4416 = scalar_lea.vmem [#allocation3], 24
    %4417 = vst [vmem:[%s4416 + $0x1] sm:$0xff] %v4267
    %4418 = vst [vmem:[%s4416 + $0x9] sm:$0xff] %v4268
    %4419 = vst [vmem:[%s4416 + $0x19] sm:$0xff] %v4269
    %4420 = vst [vmem:[%s4416 + $0x21] sm:$0xff] %v4270
    %4421 = vst [vmem:[%s4416 + $0x31] sm:$0xff] %v4271
    %4422 = vst [vmem:[%s4416 + $0x39] sm:$0xff] %v4272
    %4423 = vst [vmem:[%s4416 + $0x49] sm:$0xff] %v4273
    %4424 = vst [vmem:[%s4416 + $0x51] sm:$0xff] %v4274
    %4425 = vst [vmem:[%s4416 + $0x61] sm:$0xff] %v4275
    %4426 = vst [vmem:[%s4416 + $0x69] sm:$0xff] %v4276
    %4427 = vst [vmem:[%s4416 + $0x79] sm:$0xff] %v4277
    %4428 = vst [vmem:[%s4416 + $0x81] sm:$0xff] %v4278
    %4429 = vst [vmem:[%s4416 + $0x91] sm:$0xff] %v4279
    %4430 = vst [vmem:[%s4416 + $0x99] sm:$0xff] %v4280
    %4431 = vst [vmem:[%s4416 + $0xa9] sm:$0xff] %v4281
    %4432 = vst [vmem:[%s4416 + $0xb1] sm:$0xff] %v4282
    %4433 = vst [vmem:[%s4416 + $0xc1] sm:$0xff] %v4283
    %4434 = vst [vmem:[%s4416 + $0xc9] sm:$0xff] %v4284
    %4435 = vst [vmem:[%s4416 + $0xd9] sm:$0xff] %v4285
    %4436 = vst [vmem:[%s4416 + $0xe1] sm:$0xff] %v4286
    %4437 = vst [vmem:[%s4416 + $0xf1] sm:$0xff] %v4287
    %4438 = vst [vmem:[%s4416 + $0xf9] sm:$0xff] %v4288
    %4439 = vst [vmem:[%s4416 + $0x109] sm:$0xff] %v4289
    %4440 = vst [vmem:[%s4416 + $0x111] sm:$0xff] %v4290
    %4441 = vst [vmem:[%s4416 + $0x121] sm:$0xff] %v4291
    %4442 = vst [vmem:[%s4416 + $0x129] sm:$0xff] %v4292
    %4443 = vst [vmem:[%s4416 + $0x139] sm:$0xff] %v4293
    %4444 = vst [vmem:[%s4416 + $0x141] sm:$0xff] %v4294
    %4445 = vst [vmem:[%s4416 + $0x151] sm:$0xff] %v4295
    %4446 = vst [vmem:[%s4416 + $0x159] sm:$0xff] %v4296
    %4447 = vst [vmem:[%s4416 + $0x169] sm:$0xff] %v4297
    %4448 = vst [vmem:[%s4416 + $0x171] sm:$0xff] %v4298
    %4449 = vst [vmem:[%s4416 + $0x1b1] sm:$0xff] %v4299
    %4450 = vst [vmem:[%s4416 + $0x1b9] sm:$0xff] %v4300
    %4451 = vst [vmem:[%s4416 + $0x1c9] sm:$0xff] %v4301
    %4452 = vst [vmem:[%s4416 + $0x1d1] sm:$0xff] %v4302
    %4453 = vst [vmem:[%s4416 + $0x1e1] sm:$0xff] %v4303
    %4454 = vst [vmem:[%s4416 + $0x1e9] sm:$0xff] %v4304
    %4455 = vst [vmem:[%s4416 + $0x1f9] sm:$0xff] %v4305
    %4456 = vst [vmem:[%s4416 + $0x201] sm:$0xff] %v4306
    %4457 = vst [vmem:[%s4416 + $0x211] sm:$0xff] %v4307
    %4458 = vst [vmem:[%s4416 + $0x219] sm:$0xff] %v4308
    %4459 = vst [vmem:[%s4416 + $0x229] sm:$0xff] %v4309
    %4460 = vst [vmem:[%s4416 + $0x231] sm:$0xff] %v4310
    %4461 = vst [vmem:[%s4416 + $0x241] sm:$0xff] %v4311
    %4462 = vst [vmem:[%s4416 + $0x249] sm:$0xff] %v4312
    %4463 = vst [vmem:[%s4416 + $0x259] sm:$0xff] %v4313
    %4464 = vst [vmem:[%s4416 + $0x261] sm:$0xff] %v4314
    %4465 = vst [vmem:[%s4416 + $0x271] sm:$0xff] %v4315
    %4466 = vst [vmem:[%s4416 + $0x279] sm:$0xff] %v4316
    %4467 = vst [vmem:[%s4416 + $0x289] sm:$0xff] %v4317
    %4468 = vst [vmem:[%s4416 + $0x291] sm:$0xff] %v4318
    %4469 = vst [vmem:[%s4416 + $0x2a1] sm:$0xff] %v4319
    %4470 = vst [vmem:[%s4416 + $0x2a9] sm:$0xff] %v4320
    %4471 = vst [vmem:[%s4416 + $0x2b9] sm:$0xff] %v4321
    %4472 = vst [vmem:[%s4416 + $0x2c1] sm:$0xff] %v4322
    %4473 = vst [vmem:[%s4416 + $0x2d1] sm:$0xff] %v4323
    %4474 = vst [vmem:[%s4416 + $0x2d9] sm:$0xff] %v4324
    %4475 = vst [vmem:[%s4416 + $0x2e9] sm:$0xff] %v4325
    %4476 = vst [vmem:[%s4416 + $0x2f1] sm:$0xff] %v4326
    %4477 = vst [vmem:[%s4416 + $0x301] sm:$0xff] %v4327
    %4478 = vst [vmem:[%s4416 + $0x309] sm:$0xff] %v4328
    %4479 = vst [vmem:[%s4416 + $0x319] sm:$0xff] %v4329
    %4480 = vst [vmem:[%s4416 + $0x321] sm:$0xff] %v4330
    %v4481 = vld [vmem:[#allocation3] sm:$0xff]
    %v4482 = vld [vmem:[#allocation3 + $0x8] sm:$0xff]
    %v4483 = vld [vmem:[#allocation3 + $0x18] sm:$0xff]
    %v4484 = vld [vmem:[#allocation3 + $0x20] sm:$0xff]
    %v4485 = vld [vmem:[#allocation3 + $0x30] sm:$0xff]
    %v4486 = vld [vmem:[#allocation3 + $0x38] sm:$0xff]
    %v4487 = vld [vmem:[#allocation3 + $0x48] sm:$0xff]
    %v4488 = vld [vmem:[#allocation3 + $0x50] sm:$0xff]
    %v4489 = vld [vmem:[#allocation3 + $0x60] sm:$0xff]
    %v4490 = vld [vmem:[#allocation3 + $0x68] sm:$0xff]
    %v4491 = vld [vmem:[#allocation3 + $0x78] sm:$0xff]
    %v4492 = vld [vmem:[#allocation3 + $0x80] sm:$0xff]
    %v4493 = vld [vmem:[#allocation3 + $0x90] sm:$0xff]
    %v4494 = vld [vmem:[#allocation3 + $0x98] sm:$0xff]
    %v4495 = vld [vmem:[#allocation3 + $0xa8] sm:$0xff]
    %v4496 = vld [vmem:[#allocation3 + $0xb0] sm:$0xff]
    %v4497 = vld [vmem:[#allocation3 + $0xc0] sm:$0xff]
    %v4498 = vld [vmem:[#allocation3 + $0xc8] sm:$0xff]
    %v4499 = vld [vmem:[#allocation3 + $0xd8] sm:$0xff]
    %v4500 = vld [vmem:[#allocation3 + $0xe0] sm:$0xff]
    %v4501 = vld [vmem:[#allocation3 + $0xf0] sm:$0xff]
    %v4502 = vld [vmem:[#allocation3 + $0xf8] sm:$0xff]
    %v4503 = vld [vmem:[#allocation3 + $0x108] sm:$0xff]
    %v4504 = vld [vmem:[#allocation3 + $0x110] sm:$0xff]
    %v4505 = vld [vmem:[#allocation3 + $0x120] sm:$0xff]
    %v4506 = vld [vmem:[#allocation3 + $0x128] sm:$0xff]
    %v4507 = vld [vmem:[#allocation3 + $0x138] sm:$0xff]
    %v4508 = vld [vmem:[#allocation3 + $0x140] sm:$0xff]
    %v4509 = vld [vmem:[#allocation3 + $0x150] sm:$0xff]
    %v4510 = vld [vmem:[#allocation3 + $0x158] sm:$0xff]
    %v4511 = vld [vmem:[#allocation3 + $0x168] sm:$0xff]
    %v4512 = vld [vmem:[#allocation3 + $0x170] sm:$0xff]
    %v4513 = vld [vmem:[#allocation3 + $0x1b0] sm:$0xff]
    %v4514 = vld [vmem:[#allocation3 + $0x1b8] sm:$0xff]
    %v4515 = vld [vmem:[#allocation3 + $0x1c8] sm:$0xff]
    %v4516 = vld [vmem:[#allocation3 + $0x1d0] sm:$0xff]
    %v4517 = vld [vmem:[#allocation3 + $0x1e0] sm:$0xff]
    %v4518 = vld [vmem:[#allocation3 + $0x1e8] sm:$0xff]
    %v4519 = vld [vmem:[#allocation3 + $0x1f8] sm:$0xff]
    %v4520 = vld [vmem:[#allocation3 + $0x200] sm:$0xff]
    %v4521 = vld [vmem:[#allocation3 + $0x210] sm:$0xff]
    %v4522 = vld [vmem:[#allocation3 + $0x218] sm:$0xff]
    %v4523 = vld [vmem:[#allocation3 + $0x228] sm:$0xff]
    %v4524 = vld [vmem:[#allocation3 + $0x230] sm:$0xff]
    %v4525 = vld [vmem:[#allocation3 + $0x240] sm:$0xff]
    %v4526 = vld [vmem:[#allocation3 + $0x248] sm:$0xff]
    %v4527 = vld [vmem:[#allocation3 + $0x258] sm:$0xff]
    %v4528 = vld [vmem:[#allocation3 + $0x260] sm:$0xff]
    %v4529 = vld [vmem:[#allocation3 + $0x270] sm:$0xff]
    %v4530 = vld [vmem:[#allocation3 + $0x278] sm:$0xff]
    %v4531 = vld [vmem:[#allocation3 + $0x288] sm:$0xff]
    %v4532 = vld [vmem:[#allocation3 + $0x290] sm:$0xff]
    %v4533 = vld [vmem:[#allocation3 + $0x2a0] sm:$0xff]
    %v4534 = vld [vmem:[#allocation3 + $0x2a8] sm:$0xff]
    %v4535 = vld [vmem:[#allocation3 + $0x2b8] sm:$0xff]
    %v4536 = vld [vmem:[#allocation3 + $0x2c0] sm:$0xff]
    %v4537 = vld [vmem:[#allocation3 + $0x2d0] sm:$0xff]
    %v4538 = vld [vmem:[#allocation3 + $0x2d8] sm:$0xff]
    %v4539 = vld [vmem:[#allocation3 + $0x2e8] sm:$0xff]
    %v4540 = vld [vmem:[#allocation3 + $0x2f0] sm:$0xff]
    %v4541 = vld [vmem:[#allocation3 + $0x300] sm:$0xff]
    %v4542 = vld [vmem:[#allocation3 + $0x308] sm:$0xff]
    %v4543 = vld [vmem:[#allocation3 + $0x318] sm:$0xff]
    %v4544 = vld [vmem:[#allocation3 + $0x320] sm:$0xff]
    %4545 = vst [vmem:[#allocation4] sm:$0xff] %v4481
    %4546 = vst [vmem:[#allocation4 + $0x48] sm:$0xff] %v4482
    %4547 = vst [vmem:[#allocation4 + $0x90] sm:$0xff] %v4483
    %4548 = vst [vmem:[#allocation4 + $0xd8] sm:$0xff] %v4484
    %4549 = vst [vmem:[#allocation4 + $0x120] sm:$0xff] %v4485
    %4550 = vst [vmem:[#allocation4 + $0x168] sm:$0xff] %v4486
    %4551 = vst [vmem:[#allocation4 + $0x1b0] sm:$0xff] %v4487
    %4552 = vst [vmem:[#allocation4 + $0x1f8] sm:$0xff] %v4488
    %4553 = vst [vmem:[#allocation4 + $0x240] sm:$0xff] %v4489
    %4554 = vst [vmem:[#allocation4 + $0x288] sm:$0xff] %v4490
    %4555 = vst [vmem:[#allocation4 + $0x2d0] sm:$0xff] %v4491
    %4556 = vst [vmem:[#allocation4 + $0x318] sm:$0xff] %v4492
    %4557 = vst [vmem:[#allocation4 + $0x360] sm:$0xff] %v4493
    %4558 = vst [vmem:[#allocation4 + $0x3a8] sm:$0xff] %v4494
    %4559 = vst [vmem:[#allocation4 + $0x3f0] sm:$0xff] %v4495
    %4560 = vst [vmem:[#allocation4 + $0x438] sm:$0xff] %v4496
    %4561 = vst [vmem:[#allocation4 + $0x480] sm:$0xff] %v4497
    %4562 = vst [vmem:[#allocation4 + $0x4c8] sm:$0xff] %v4498
    %4563 = vst [vmem:[#allocation4 + $0x510] sm:$0xff] %v4499
    %4564 = vst [vmem:[#allocation4 + $0x558] sm:$0xff] %v4500
    %4565 = vst [vmem:[#allocation4 + $0x5a0] sm:$0xff] %v4501
    %4566 = vst [vmem:[#allocation4 + $0x5e8] sm:$0xff] %v4502
    %4567 = vst [vmem:[#allocation4 + $0x630] sm:$0xff] %v4503
    %4568 = vst [vmem:[#allocation4 + $0x678] sm:$0xff] %v4504
    %4569 = vst [vmem:[#allocation4 + $0x6c0] sm:$0xff] %v4505
    %4570 = vst [vmem:[#allocation4 + $0x708] sm:$0xff] %v4506
    %4571 = vst [vmem:[#allocation4 + $0x750] sm:$0xff] %v4507
    %4572 = vst [vmem:[#allocation4 + $0x798] sm:$0xff] %v4508
    %4573 = vst [vmem:[#allocation4 + $0x7e0] sm:$0xff] %v4509
    %4574 = vst [vmem:[#allocation4 + $0x828] sm:$0xff] %v4510
    %4575 = vst [vmem:[#allocation4 + $0x870] sm:$0xff] %v4511
    %4576 = vst [vmem:[#allocation4 + $0x8b8] sm:$0xff] %v4512
    %4577 = vst [vmem:[#allocation4 + $0x900] sm:$0xff] %v4513
    %4578 = vst [vmem:[#allocation4 + $0x948] sm:$0xff] %v4514
    %4579 = vst [vmem:[#allocation4 + $0x990] sm:$0xff] %v4515
    %4580 = vst [vmem:[#allocation4 + $0x9d8] sm:$0xff] %v4516
    %4581 = vst [vmem:[#allocation4 + $0xa20] sm:$0xff] %v4517
    %4582 = vst [vmem:[#allocation4 + $0xa68] sm:$0xff] %v4518
    %4583 = vst [vmem:[#allocation4 + $0xab0] sm:$0xff] %v4519
    %4584 = vst [vmem:[#allocation4 + $0xaf8] sm:$0xff] %v4520
    %4585 = vst [vmem:[#allocation4 + $0xb40] sm:$0xff] %v4521
    %4586 = vst [vmem:[#allocation4 + $0xb88] sm:$0xff] %v4522
    %4587 = vst [vmem:[#allocation4 + $0xbd0] sm:$0xff] %v4523
    %4588 = vst [vmem:[#allocation4 + $0xc18] sm:$0xff] %v4524
    %4589 = vst [vmem:[#allocation4 + $0xc60] sm:$0xff] %v4525
    %4590 = vst [vmem:[#allocation4 + $0xca8] sm:$0xff] %v4526
    %4591 = vst [vmem:[#allocation4 + $0xcf0] sm:$0xff] %v4527
    %4592 = vst [vmem:[#allocation4 + $0xd38] sm:$0xff] %v4528
    %4593 = vst [vmem:[#allocation4 + $0xd80] sm:$0xff] %v4529
    %4594 = vst [vmem:[#allocation4 + $0xdc8] sm:$0xff] %v4530
    %4595 = vst [vmem:[#allocation4 + $0xe10] sm:$0xff] %v4531
    %4596 = vst [vmem:[#allocation4 + $0xe58] sm:$0xff] %v4532
    %4597 = vst [vmem:[#allocation4 + $0xea0] sm:$0xff] %v4533
    %4598 = vst [vmem:[#allocation4 + $0xee8] sm:$0xff] %v4534
    %4599 = vst [vmem:[#allocation4 + $0xf30] sm:$0xff] %v4535
    %4600 = vst [vmem:[#allocation4 + $0xf78] sm:$0xff] %v4536
    %4601 = vst [vmem:[#allocation4 + $0xfc0] sm:$0xff] %v4537
    %4602 = vst [vmem:[#allocation4 + $0x1008] sm:$0xff] %v4538
    %4603 = vst [vmem:[#allocation4 + $0x1050] sm:$0xff] %v4539
    %4604 = vst [vmem:[#allocation4 + $0x1098] sm:$0xff] %v4540
    %4605 = vst [vmem:[#allocation4 + $0x10e0] sm:$0xff] %v4541
    %4606 = vst [vmem:[#allocation4 + $0x1128] sm:$0xff] %v4542
    %4607 = vst [vmem:[#allocation4 + $0x1170] sm:$0xff] %v4543
    %4608 = vst [vmem:[#allocation4 + $0x11b8] sm:$0xff] %v4544
    %v4609 = vld [vmem:[#allocation3 + $0x1] sm:$0xff]
    %v4610 = vld [vmem:[#allocation3 + $0x9] sm:$0xff]
    %v4611 = vld [vmem:[#allocation3 + $0x19] sm:$0xff]
    %v4612 = vld [vmem:[#allocation3 + $0x21] sm:$0xff]
    %v4613 = vld [vmem:[#allocation3 + $0x31] sm:$0xff]
    %v4614 = vld [vmem:[#allocation3 + $0x39] sm:$0xff]
    %v4615 = vld [vmem:[#allocation3 + $0x49] sm:$0xff]
    %v4616 = vld [vmem:[#allocation3 + $0x51] sm:$0xff]
    %v4617 = vld [vmem:[#allocation3 + $0x61] sm:$0xff]
    %v4618 = vld [vmem:[#allocation3 + $0x69] sm:$0xff]
    %v4619 = vld [vmem:[#allocation3 + $0x79] sm:$0xff]
    %v4620 = vld [vmem:[#allocation3 + $0x81] sm:$0xff]
    %v4621 = vld [vmem:[#allocation3 + $0x91] sm:$0xff]
    %v4622 = vld [vmem:[#allocation3 + $0x99] sm:$0xff]
    %v4623 = vld [vmem:[#allocation3 + $0xa9] sm:$0xff]
    %v4624 = vld [vmem:[#allocation3 + $0xb1] sm:$0xff]
    %v4625 = vld [vmem:[#allocation3 + $0xc1] sm:$0xff]
    %v4626 = vld [vmem:[#allocation3 + $0xc9] sm:$0xff]
    %v4627 = vld [vmem:[#allocation3 + $0xd9] sm:$0xff]
    %v4628 = vld [vmem:[#allocation3 + $0xe1] sm:$0xff]
    %v4629 = vld [vmem:[#allocation3 + $0xf1] sm:$0xff]
    %v4630 = vld [vmem:[#allocation3 + $0xf9] sm:$0xff]
    %v4631 = vld [vmem:[#allocation3 + $0x109] sm:$0xff]
    %v4632 = vld [vmem:[#allocation3 + $0x111] sm:$0xff]
    %v4633 = vld [vmem:[#allocation3 + $0x121] sm:$0xff]
    %v4634 = vld [vmem:[#allocation3 + $0x129] sm:$0xff]
    %v4635 = vld [vmem:[#allocation3 + $0x139] sm:$0xff]
    %v4636 = vld [vmem:[#allocation3 + $0x141] sm:$0xff]
    %v4637 = vld [vmem:[#allocation3 + $0x151] sm:$0xff]
    %v4638 = vld [vmem:[#allocation3 + $0x159] sm:$0xff]
    %v4639 = vld [vmem:[#allocation3 + $0x169] sm:$0xff]
    %v4640 = vld [vmem:[#allocation3 + $0x171] sm:$0xff]
    %v4641 = vld [vmem:[#allocation3 + $0x1b1] sm:$0xff]
    %v4642 = vld [vmem:[#allocation3 + $0x1b9] sm:$0xff]
    %v4643 = vld [vmem:[#allocation3 + $0x1c9] sm:$0xff]
    %v4644 = vld [vmem:[#allocation3 + $0x1d1] sm:$0xff]
    %v4645 = vld [vmem:[#allocation3 + $0x1e1] sm:$0xff]
    %v4646 = vld [vmem:[#allocation3 + $0x1e9] sm:$0xff]
    %v4647 = vld [vmem:[#allocation3 + $0x1f9] sm:$0xff]
    %v4648 = vld [vmem:[#allocation3 + $0x201] sm:$0xff]
    %v4649 = vld [vmem:[#allocation3 + $0x211] sm:$0xff]
    %v4650 = vld [vmem:[#allocation3 + $0x219] sm:$0xff]
    %v4651 = vld [vmem:[#allocation3 + $0x229] sm:$0xff]
    %v4652 = vld [vmem:[#allocation3 + $0x231] sm:$0xff]
    %v4653 = vld [vmem:[#allocation3 + $0x241] sm:$0xff]
    %v4654 = vld [vmem:[#allocation3 + $0x249] sm:$0xff]
    %v4655 = vld [vmem:[#allocation3 + $0x259] sm:$0xff]
    %v4656 = vld [vmem:[#allocation3 + $0x261] sm:$0xff]
    %v4657 = vld [vmem:[#allocation3 + $0x271] sm:$0xff]
    %v4658 = vld [vmem:[#allocation3 + $0x279] sm:$0xff]
    %v4659 = vld [vmem:[#allocation3 + $0x289] sm:$0xff]
    %v4660 = vld [vmem:[#allocation3 + $0x291] sm:$0xff]
    %v4661 = vld [vmem:[#allocation3 + $0x2a1] sm:$0xff]
    %v4662 = vld [vmem:[#allocation3 + $0x2a9] sm:$0xff]
    %v4663 = vld [vmem:[#allocation3 + $0x2b9] sm:$0xff]
    %v4664 = vld [vmem:[#allocation3 + $0x2c1] sm:$0xff]
    %v4665 = vld [vmem:[#allocation3 + $0x2d1] sm:$0xff]
    %v4666 = vld [vmem:[#allocation3 + $0x2d9] sm:$0xff]
    %v4667 = vld [vmem:[#allocation3 + $0x2e9] sm:$0xff]
    %v4668 = vld [vmem:[#allocation3 + $0x2f1] sm:$0xff]
    %v4669 = vld [vmem:[#allocation3 + $0x301] sm:$0xff]
    %v4670 = vld [vmem:[#allocation3 + $0x309] sm:$0xff]
    %v4671 = vld [vmem:[#allocation3 + $0x319] sm:$0xff]
    %v4672 = vld [vmem:[#allocation3 + $0x321] sm:$0xff]
    %4673 = vst [vmem:[#allocation4 + $0x8] sm:$0xff] %v4609
    %4674 = vst [vmem:[#allocation4 + $0x50] sm:$0xff] %v4610
    %4675 = vst [vmem:[#allocation4 + $0x98] sm:$0xff] %v4611
    %4676 = vst [vmem:[#allocation4 + $0xe0] sm:$0xff] %v4612
    %4677 = vst [vmem:[#allocation4 + $0x128] sm:$0xff] %v4613
    %4678 = vst [vmem:[#allocation4 + $0x170] sm:$0xff] %v4614
    %4679 = vst [vmem:[#allocation4 + $0x1b8] sm:$0xff] %v4615
    %4680 = vst [vmem:[#allocation4 + $0x200] sm:$0xff] %v4616
    %4681 = vst [vmem:[#allocation4 + $0x248] sm:$0xff] %v4617
    %4682 = vst [vmem:[#allocation4 + $0x290] sm:$0xff] %v4618
    %4683 = vst [vmem:[#allocation4 + $0x2d8] sm:$0xff] %v4619
    %4684 = vst [vmem:[#allocation4 + $0x320] sm:$0xff] %v4620
    %4685 = vst [vmem:[#allocation4 + $0x368] sm:$0xff] %v4621
    %4686 = vst [vmem:[#allocation4 + $0x3b0] sm:$0xff] %v4622
    %4687 = vst [vmem:[#allocation4 + $0x3f8] sm:$0xff] %v4623
    %4688 = vst [vmem:[#allocation4 + $0x440] sm:$0xff] %v4624
    %4689 = vst [vmem:[#allocation4 + $0x488] sm:$0xff] %v4625
    %4690 = vst [vmem:[#allocation4 + $0x4d0] sm:$0xff] %v4626
    %4691 = vst [vmem:[#allocation4 + $0x518] sm:$0xff] %v4627
    %4692 = vst [vmem:[#allocation4 + $0x560] sm:$0xff] %v4628
    %4693 = vst [vmem:[#allocation4 + $0x5a8] sm:$0xff] %v4629
    %4694 = vst [vmem:[#allocation4 + $0x5f0] sm:$0xff] %v4630
    %4695 = vst [vmem:[#allocation4 + $0x638] sm:$0xff] %v4631
    %4696 = vst [vmem:[#allocation4 + $0x680] sm:$0xff] %v4632
    %4697 = vst [vmem:[#allocation4 + $0x6c8] sm:$0xff] %v4633
    %4698 = vst [vmem:[#allocation4 + $0x710] sm:$0xff] %v4634
    %4699 = vst [vmem:[#allocation4 + $0x758] sm:$0xff] %v4635
    %4700 = vst [vmem:[#allocation4 + $0x7a0] sm:$0xff] %v4636
    %4701 = vst [vmem:[#allocation4 + $0x7e8] sm:$0xff] %v4637
    %4702 = vst [vmem:[#allocation4 + $0x830] sm:$0xff] %v4638
    %4703 = vst [vmem:[#allocation4 + $0x878] sm:$0xff] %v4639
    %4704 = vst [vmem:[#allocation4 + $0x8c0] sm:$0xff] %v4640
    %4705 = vst [vmem:[#allocation4 + $0x908] sm:$0xff] %v4641
    %4706 = vst [vmem:[#allocation4 + $0x950] sm:$0xff] %v4642
    %4707 = vst [vmem:[#allocation4 + $0x998] sm:$0xff] %v4643
    %4708 = vst [vmem:[#allocation4 + $0x9e0] sm:$0xff] %v4644
    %4709 = vst [vmem:[#allocation4 + $0xa28] sm:$0xff] %v4645
    %4710 = vst [vmem:[#allocation4 + $0xa70] sm:$0xff] %v4646
    %4711 = vst [vmem:[#allocation4 + $0xab8] sm:$0xff] %v4647
    %4712 = vst [vmem:[#allocation4 + $0xb00] sm:$0xff] %v4648
    %4713 = vst [vmem:[#allocation4 + $0xb48] sm:$0xff] %v4649
    %4714 = vst [vmem:[#allocation4 + $0xb90] sm:$0xff] %v4650
    %4715 = vst [vmem:[#allocation4 + $0xbd8] sm:$0xff] %v4651
    %4716 = vst [vmem:[#allocation4 + $0xc20] sm:$0xff] %v4652
    %4717 = vst [vmem:[#allocation4 + $0xc68] sm:$0xff] %v4653
    %4718 = vst [vmem:[#allocation4 + $0xcb0] sm:$0xff] %v4654
    %4719 = vst [vmem:[#allocation4 + $0xcf8] sm:$0xff] %v4655
    %4720 = vst [vmem:[#allocation4 + $0xd40] sm:$0xff] %v4656
    %4721 = vst [vmem:[#allocation4 + $0xd88] sm:$0xff] %v4657
    %4722 = vst [vmem:[#allocation4 + $0xdd0] sm:$0xff] %v4658
    %4723 = vst [vmem:[#allocation4 + $0xe18] sm:$0xff] %v4659
    %4724 = vst [vmem:[#allocation4 + $0xe60] sm:$0xff] %v4660
    %4725 = vst [vmem:[#allocation4 + $0xea8] sm:$0xff] %v4661
    %4726 = vst [vmem:[#allocation4 + $0xef0] sm:$0xff] %v4662
    %4727 = vst [vmem:[#allocation4 + $0xf38] sm:$0xff] %v4663
    %4728 = vst [vmem:[#allocation4 + $0xf80] sm:$0xff] %v4664
    %4729 = vst [vmem:[#allocation4 + $0xfc8] sm:$0xff] %v4665
    %4730 = vst [vmem:[#allocation4 + $0x1010] sm:$0xff] %v4666
    %4731 = vst [vmem:[#allocation4 + $0x1058] sm:$0xff] %v4667
    %4732 = vst [vmem:[#allocation4 + $0x10a0] sm:$0xff] %v4668
    %4733 = vst [vmem:[#allocation4 + $0x10e8] sm:$0xff] %v4669
    %4734 = vst [vmem:[#allocation4 + $0x1130] sm:$0xff] %v4670
    %4735 = vst [vmem:[#allocation4 + $0x1178] sm:$0xff] %v4671
    %4736 = vst [vmem:[#allocation4 + $0x11c0] sm:$0xff] %v4672
    %v4737 = vld [vmem:[#allocation3 + $0x2] sm:$0xff]
    %v4738 = vld [vmem:[#allocation3 + $0xa] sm:$0xff]
    %v4739 = vld [vmem:[#allocation3 + $0x1a] sm:$0xff]
    %v4740 = vld [vmem:[#allocation3 + $0x22] sm:$0xff]
    %v4741 = vld [vmem:[#allocation3 + $0x32] sm:$0xff]
    %v4742 = vld [vmem:[#allocation3 + $0x3a] sm:$0xff]
    %v4743 = vld [vmem:[#allocation3 + $0x4a] sm:$0xff]
    %v4744 = vld [vmem:[#allocation3 + $0x52] sm:$0xff]
    %v4745 = vld [vmem:[#allocation3 + $0x62] sm:$0xff]
    %v4746 = vld [vmem:[#allocation3 + $0x6a] sm:$0xff]
    %v4747 = vld [vmem:[#allocation3 + $0x7a] sm:$0xff]
    %v4748 = vld [vmem:[#allocation3 + $0x82] sm:$0xff]
    %v4749 = vld [vmem:[#allocation3 + $0x92] sm:$0xff]
    %v4750 = vld [vmem:[#allocation3 + $0x9a] sm:$0xff]
    %v4751 = vld [vmem:[#allocation3 + $0xaa] sm:$0xff]
    %v4752 = vld [vmem:[#allocation3 + $0xb2] sm:$0xff]
    %v4753 = vld [vmem:[#allocation3 + $0xc2] sm:$0xff]
    %v4754 = vld [vmem:[#allocation3 + $0xca] sm:$0xff]
    %v4755 = vld [vmem:[#allocation3 + $0xda] sm:$0xff]
    %v4756 = vld [vmem:[#allocation3 + $0xe2] sm:$0xff]
    %v4757 = vld [vmem:[#allocation3 + $0xf2] sm:$0xff]
    %v4758 = vld [vmem:[#allocation3 + $0xfa] sm:$0xff]
    %v4759 = vld [vmem:[#allocation3 + $0x10a] sm:$0xff]
    %v4760 = vld [vmem:[#allocation3 + $0x112] sm:$0xff]
    %v4761 = vld [vmem:[#allocation3 + $0x122] sm:$0xff]
    %v4762 = vld [vmem:[#allocation3 + $0x12a] sm:$0xff]
    %v4763 = vld [vmem:[#allocation3 + $0x13a] sm:$0xff]
    %v4764 = vld [vmem:[#allocation3 + $0x142] sm:$0xff]
    %v4765 = vld [vmem:[#allocation3 + $0x152] sm:$0xff]
    %v4766 = vld [vmem:[#allocation3 + $0x15a] sm:$0xff]
    %v4767 = vld [vmem:[#allocation3 + $0x16a] sm:$0xff]
    %v4768 = vld [vmem:[#allocation3 + $0x172] sm:$0xff]
    %v4769 = vld [vmem:[#allocation3 + $0x1b2] sm:$0xff]
    %v4770 = vld [vmem:[#allocation3 + $0x1ba] sm:$0xff]
    %v4771 = vld [vmem:[#allocation3 + $0x1ca] sm:$0xff]
    %v4772 = vld [vmem:[#allocation3 + $0x1d2] sm:$0xff]
    %v4773 = vld [vmem:[#allocation3 + $0x1e2] sm:$0xff]
    %v4774 = vld [vmem:[#allocation3 + $0x1ea] sm:$0xff]
    %v4775 = vld [vmem:[#allocation3 + $0x1fa] sm:$0xff]
    %v4776 = vld [vmem:[#allocation3 + $0x202] sm:$0xff]
    %v4777 = vld [vmem:[#allocation3 + $0x212] sm:$0xff]
    %v4778 = vld [vmem:[#allocation3 + $0x21a] sm:$0xff]
    %v4779 = vld [vmem:[#allocation3 + $0x22a] sm:$0xff]
    %v4780 = vld [vmem:[#allocation3 + $0x232] sm:$0xff]
    %v4781 = vld [vmem:[#allocation3 + $0x242] sm:$0xff]
    %v4782 = vld [vmem:[#allocation3 + $0x24a] sm:$0xff]
    %v4783 = vld [vmem:[#allocation3 + $0x25a] sm:$0xff]
    %v4784 = vld [vmem:[#allocation3 + $0x262] sm:$0xff]
    %v4785 = vld [vmem:[#allocation3 + $0x272] sm:$0xff]
    %v4786 = vld [vmem:[#allocation3 + $0x27a] sm:$0xff]
    %v4787 = vld [vmem:[#allocation3 + $0x28a] sm:$0xff]
    %v4788 = vld [vmem:[#allocation3 + $0x292] sm:$0xff]
    %v4789 = vld [vmem:[#allocation3 + $0x2a2] sm:$0xff]
    %v4790 = vld [vmem:[#allocation3 + $0x2aa] sm:$0xff]
    %v4791 = vld [vmem:[#allocation3 + $0x2ba] sm:$0xff]
    %v4792 = vld [vmem:[#allocation3 + $0x2c2] sm:$0xff]
    %v4793 = vld [vmem:[#allocation3 + $0x2d2] sm:$0xff]
    %v4794 = vld [vmem:[#allocation3 + $0x2da] sm:$0xff]
    %v4795 = vld [vmem:[#allocation3 + $0x2ea] sm:$0xff]
    %v4796 = vld [vmem:[#allocation3 + $0x2f2] sm:$0xff]
    %v4797 = vld [vmem:[#allocation3 + $0x302] sm:$0xff]
    %v4798 = vld [vmem:[#allocation3 + $0x30a] sm:$0xff]
    %v4799 = vld [vmem:[#allocation3 + $0x31a] sm:$0xff]
    %v4800 = vld [vmem:[#allocation3 + $0x322] sm:$0xff]
    %4801 = vst [vmem:[#allocation4 + $0x10] sm:$0xff] %v4737
    %4802 = vst [vmem:[#allocation4 + $0x58] sm:$0xff] %v4738
    %4803 = vst [vmem:[#allocation4 + $0xa0] sm:$0xff] %v4739
    %4804 = vst [vmem:[#allocation4 + $0xe8] sm:$0xff] %v4740
    %4805 = vst [vmem:[#allocation4 + $0x130] sm:$0xff] %v4741
    %4806 = vst [vmem:[#allocation4 + $0x178] sm:$0xff] %v4742
    %4807 = vst [vmem:[#allocation4 + $0x1c0] sm:$0xff] %v4743
    %4808 = vst [vmem:[#allocation4 + $0x208] sm:$0xff] %v4744
    %4809 = vst [vmem:[#allocation4 + $0x250] sm:$0xff] %v4745
    %4810 = vst [vmem:[#allocation4 + $0x298] sm:$0xff] %v4746
    %4811 = vst [vmem:[#allocation4 + $0x2e0] sm:$0xff] %v4747
    %4812 = vst [vmem:[#allocation4 + $0x328] sm:$0xff] %v4748
    %4813 = vst [vmem:[#allocation4 + $0x370] sm:$0xff] %v4749
    %4814 = vst [vmem:[#allocation4 + $0x3b8] sm:$0xff] %v4750
    %4815 = vst [vmem:[#allocation4 + $0x400] sm:$0xff] %v4751
    %4816 = vst [vmem:[#allocation4 + $0x448] sm:$0xff] %v4752
    %4817 = vst [vmem:[#allocation4 + $0x490] sm:$0xff] %v4753
    %4818 = vst [vmem:[#allocation4 + $0x4d8] sm:$0xff] %v4754
    %4819 = vst [vmem:[#allocation4 + $0x520] sm:$0xff] %v4755
    %4820 = vst [vmem:[#allocation4 + $0x568] sm:$0xff] %v4756
    %4821 = vst [vmem:[#allocation4 + $0x5b0] sm:$0xff] %v4757
    %4822 = vst [vmem:[#allocation4 + $0x5f8] sm:$0xff] %v4758
    %4823 = vst [vmem:[#allocation4 + $0x640] sm:$0xff] %v4759
    %4824 = vst [vmem:[#allocation4 + $0x688] sm:$0xff] %v4760
    %4825 = vst [vmem:[#allocation4 + $0x6d0] sm:$0xff] %v4761
    %4826 = vst [vmem:[#allocation4 + $0x718] sm:$0xff] %v4762
    %4827 = vst [vmem:[#allocation4 + $0x760] sm:$0xff] %v4763
    %4828 = vst [vmem:[#allocation4 + $0x7a8] sm:$0xff] %v4764
    %4829 = vst [vmem:[#allocation4 + $0x7f0] sm:$0xff] %v4765
    %4830 = vst [vmem:[#allocation4 + $0x838] sm:$0xff] %v4766
    %4831 = vst [vmem:[#allocation4 + $0x880] sm:$0xff] %v4767
    %4832 = vst [vmem:[#allocation4 + $0x8c8] sm:$0xff] %v4768
    %4833 = vst [vmem:[#allocation4 + $0x910] sm:$0xff] %v4769
    %4834 = vst [vmem:[#allocation4 + $0x958] sm:$0xff] %v4770
    %4835 = vst [vmem:[#allocation4 + $0x9a0] sm:$0xff] %v4771
    %4836 = vst [vmem:[#allocation4 + $0x9e8] sm:$0xff] %v4772
    %4837 = vst [vmem:[#allocation4 + $0xa30] sm:$0xff] %v4773
    %4838 = vst [vmem:[#allocation4 + $0xa78] sm:$0xff] %v4774
    %4839 = vst [vmem:[#allocation4 + $0xac0] sm:$0xff] %v4775
    %4840 = vst [vmem:[#allocation4 + $0xb08] sm:$0xff] %v4776
    %4841 = vst [vmem:[#allocation4 + $0xb50] sm:$0xff] %v4777
    %4842 = vst [vmem:[#allocation4 + $0xb98] sm:$0xff] %v4778
    %4843 = vst [vmem:[#allocation4 + $0xbe0] sm:$0xff] %v4779
    %4844 = vst [vmem:[#allocation4 + $0xc28] sm:$0xff] %v4780
    %4845 = vst [vmem:[#allocation4 + $0xc70] sm:$0xff] %v4781
    %4846 = vst [vmem:[#allocation4 + $0xcb8] sm:$0xff] %v4782
    %4847 = vst [vmem:[#allocation4 + $0xd00] sm:$0xff] %v4783
    %4848 = vst [vmem:[#allocation4 + $0xd48] sm:$0xff] %v4784
    %4849 = vst [vmem:[#allocation4 + $0xd90] sm:$0xff] %v4785
    %4850 = vst [vmem:[#allocation4 + $0xdd8] sm:$0xff] %v4786
    %4851 = vst [vmem:[#allocation4 + $0xe20] sm:$0xff] %v4787
    %4852 = vst [vmem:[#allocation4 + $0xe68] sm:$0xff] %v4788
    %4853 = vst [vmem:[#allocation4 + $0xeb0] sm:$0xff] %v4789
    %4854 = vst [vmem:[#allocation4 + $0xef8] sm:$0xff] %v4790
    %4855 = vst [vmem:[#allocation4 + $0xf40] sm:$0xff] %v4791
    %4856 = vst [vmem:[#allocation4 + $0xf88] sm:$0xff] %v4792
    %4857 = vst [vmem:[#allocation4 + $0xfd0] sm:$0xff] %v4793
    %4858 = vst [vmem:[#allocation4 + $0x1018] sm:$0xff] %v4794
    %4859 = vst [vmem:[#allocation4 + $0x1060] sm:$0xff] %v4795
    %4860 = vst [vmem:[#allocation4 + $0x10a8] sm:$0xff] %v4796
    %4861 = vst [vmem:[#allocation4 + $0x10f0] sm:$0xff] %v4797
    %4862 = vst [vmem:[#allocation4 + $0x1138] sm:$0xff] %v4798
    %4863 = vst [vmem:[#allocation4 + $0x1180] sm:$0xff] %v4799
    %4864 = vst [vmem:[#allocation4 + $0x11c8] sm:$0xff] %v4800
    %v4865 = vld [vmem:[%s4416] sm:$0xff]
    %v4866 = vld [vmem:[%s4416 + $0x8] sm:$0xff]
    %v4867 = vld [vmem:[%s4416 + $0x18] sm:$0xff]
    %v4868 = vld [vmem:[%s4416 + $0x20] sm:$0xff]
    %v4869 = vld [vmem:[%s4416 + $0x30] sm:$0xff]
    %v4870 = vld [vmem:[%s4416 + $0x38] sm:$0xff]
    %v4871 = vld [vmem:[%s4416 + $0x48] sm:$0xff]
    %v4872 = vld [vmem:[%s4416 + $0x50] sm:$0xff]
    %v4873 = vld [vmem:[%s4416 + $0x60] sm:$0xff]
    %v4874 = vld [vmem:[%s4416 + $0x68] sm:$0xff]
    %v4875 = vld [vmem:[%s4416 + $0x78] sm:$0xff]
    %v4876 = vld [vmem:[%s4416 + $0x80] sm:$0xff]
    %v4877 = vld [vmem:[%s4416 + $0x90] sm:$0xff]
    %v4878 = vld [vmem:[%s4416 + $0x98] sm:$0xff]
    %v4879 = vld [vmem:[%s4416 + $0xa8] sm:$0xff]
    %v4880 = vld [vmem:[%s4416 + $0xb0] sm:$0xff]
    %v4881 = vld [vmem:[%s4416 + $0xc0] sm:$0xff]
    %v4882 = vld [vmem:[%s4416 + $0xc8] sm:$0xff]
    %v4883 = vld [vmem:[%s4416 + $0xd8] sm:$0xff]
    %v4884 = vld [vmem:[%s4416 + $0xe0] sm:$0xff]
    %v4885 = vld [vmem:[%s4416 + $0xf0] sm:$0xff]
    %v4886 = vld [vmem:[%s4416 + $0xf8] sm:$0xff]
    %v4887 = vld [vmem:[%s4416 + $0x108] sm:$0xff]
    %v4888 = vld [vmem:[%s4416 + $0x110] sm:$0xff]
    %v4889 = vld [vmem:[%s4416 + $0x120] sm:$0xff]
    %v4890 = vld [vmem:[%s4416 + $0x128] sm:$0xff]
    %v4891 = vld [vmem:[%s4416 + $0x138] sm:$0xff]
    %v4892 = vld [vmem:[%s4416 + $0x140] sm:$0xff]
    %v4893 = vld [vmem:[%s4416 + $0x150] sm:$0xff]
    %v4894 = vld [vmem:[%s4416 + $0x158] sm:$0xff]
    %v4895 = vld [vmem:[%s4416 + $0x168] sm:$0xff]
    %v4896 = vld [vmem:[%s4416 + $0x170] sm:$0xff]
    %v4897 = vld [vmem:[%s4416 + $0x1b0] sm:$0xff]
    %v4898 = vld [vmem:[%s4416 + $0x1b8] sm:$0xff]
    %v4899 = vld [vmem:[%s4416 + $0x1c8] sm:$0xff]
    %v4900 = vld [vmem:[%s4416 + $0x1d0] sm:$0xff]
    %v4901 = vld [vmem:[%s4416 + $0x1e0] sm:$0xff]
    %v4902 = vld [vmem:[%s4416 + $0x1e8] sm:$0xff]
    %v4903 = vld [vmem:[%s4416 + $0x1f8] sm:$0xff]
    %v4904 = vld [vmem:[%s4416 + $0x200] sm:$0xff]
    %v4905 = vld [vmem:[%s4416 + $0x210] sm:$0xff]
    %v4906 = vld [vmem:[%s4416 + $0x218] sm:$0xff]
    %v4907 = vld [vmem:[%s4416 + $0x228] sm:$0xff]
    %v4908 = vld [vmem:[%s4416 + $0x230] sm:$0xff]
    %v4909 = vld [vmem:[%s4416 + $0x240] sm:$0xff]
    %v4910 = vld [vmem:[%s4416 + $0x248] sm:$0xff]
    %v4911 = vld [vmem:[%s4416 + $0x258] sm:$0xff]
    %v4912 = vld [vmem:[%s4416 + $0x260] sm:$0xff]
    %v4913 = vld [vmem:[%s4416 + $0x270] sm:$0xff]
    %v4914 = vld [vmem:[%s4416 + $0x278] sm:$0xff]
    %v4915 = vld [vmem:[%s4416 + $0x288] sm:$0xff]
    %v4916 = vld [vmem:[%s4416 + $0x290] sm:$0xff]
    %v4917 = vld [vmem:[%s4416 + $0x2a0] sm:$0xff]
    %v4918 = vld [vmem:[%s4416 + $0x2a8] sm:$0xff]
    %v4919 = vld [vmem:[%s4416 + $0x2b8] sm:$0xff]
    %v4920 = vld [vmem:[%s4416 + $0x2c0] sm:$0xff]
    %v4921 = vld [vmem:[%s4416 + $0x2d0] sm:$0xff]
    %v4922 = vld [vmem:[%s4416 + $0x2d8] sm:$0xff]
    %v4923 = vld [vmem:[%s4416 + $0x2e8] sm:$0xff]
    %v4924 = vld [vmem:[%s4416 + $0x2f0] sm:$0xff]
    %v4925 = vld [vmem:[%s4416 + $0x300] sm:$0xff]
    %v4926 = vld [vmem:[%s4416 + $0x308] sm:$0xff]
    %v4927 = vld [vmem:[%s4416 + $0x318] sm:$0xff]
    %v4928 = vld [vmem:[%s4416 + $0x320] sm:$0xff]
    %4929 = vst [vmem:[#allocation4 + $0x18] sm:$0xff] %v4865
    %4930 = vst [vmem:[#allocation4 + $0x60] sm:$0xff] %v4866
    %4931 = vst [vmem:[#allocation4 + $0xa8] sm:$0xff] %v4867
    %4932 = vst [vmem:[#allocation4 + $0xf0] sm:$0xff] %v4868
    %4933 = vst [vmem:[#allocation4 + $0x138] sm:$0xff] %v4869
    %4934 = vst [vmem:[#allocation4 + $0x180] sm:$0xff] %v4870
    %4935 = vst [vmem:[#allocation4 + $0x1c8] sm:$0xff] %v4871
    %4936 = vst [vmem:[#allocation4 + $0x210] sm:$0xff] %v4872
    %4937 = vst [vmem:[#allocation4 + $0x258] sm:$0xff] %v4873
    %4938 = vst [vmem:[#allocation4 + $0x2a0] sm:$0xff] %v4874
    %4939 = vst [vmem:[#allocation4 + $0x2e8] sm:$0xff] %v4875
    %4940 = vst [vmem:[#allocation4 + $0x330] sm:$0xff] %v4876
    %4941 = vst [vmem:[#allocation4 + $0x378] sm:$0xff] %v4877
    %4942 = vst [vmem:[#allocation4 + $0x3c0] sm:$0xff] %v4878
    %4943 = vst [vmem:[#allocation4 + $0x408] sm:$0xff] %v4879
    %4944 = vst [vmem:[#allocation4 + $0x450] sm:$0xff] %v4880
    %4945 = vst [vmem:[#allocation4 + $0x498] sm:$0xff] %v4881
    %4946 = vst [vmem:[#allocation4 + $0x4e0] sm:$0xff] %v4882
    %4947 = vst [vmem:[#allocation4 + $0x528] sm:$0xff] %v4883
    %4948 = vst [vmem:[#allocation4 + $0x570] sm:$0xff] %v4884
    %4949 = vst [vmem:[#allocation4 + $0x5b8] sm:$0xff] %v4885
    %4950 = vst [vmem:[#allocation4 + $0x600] sm:$0xff] %v4886
    %4951 = vst [vmem:[#allocation4 + $0x648] sm:$0xff] %v4887
    %4952 = vst [vmem:[#allocation4 + $0x690] sm:$0xff] %v4888
    %4953 = vst [vmem:[#allocation4 + $0x6d8] sm:$0xff] %v4889
    %4954 = vst [vmem:[#allocation4 + $0x720] sm:$0xff] %v4890
    %4955 = vst [vmem:[#allocation4 + $0x768] sm:$0xff] %v4891
    %4956 = vst [vmem:[#allocation4 + $0x7b0] sm:$0xff] %v4892
    %4957 = vst [vmem:[#allocation4 + $0x7f8] sm:$0xff] %v4893
    %4958 = vst [vmem:[#allocation4 + $0x840] sm:$0xff] %v4894
    %4959 = vst [vmem:[#allocation4 + $0x888] sm:$0xff] %v4895
    %4960 = vst [vmem:[#allocation4 + $0x8d0] sm:$0xff] %v4896
    %4961 = vst [vmem:[#allocation4 + $0x918] sm:$0xff] %v4897
    %4962 = vst [vmem:[#allocation4 + $0x960] sm:$0xff] %v4898
    %4963 = vst [vmem:[#allocation4 + $0x9a8] sm:$0xff] %v4899
    %4964 = vst [vmem:[#allocation4 + $0x9f0] sm:$0xff] %v4900
    %4965 = vst [vmem:[#allocation4 + $0xa38] sm:$0xff] %v4901
    %4966 = vst [vmem:[#allocation4 + $0xa80] sm:$0xff] %v4902
    %4967 = vst [vmem:[#allocation4 + $0xac8] sm:$0xff] %v4903
    %4968 = vst [vmem:[#allocation4 + $0xb10] sm:$0xff] %v4904
    %4969 = vst [vmem:[#allocation4 + $0xb58] sm:$0xff] %v4905
    %4970 = vst [vmem:[#allocation4 + $0xba0] sm:$0xff] %v4906
    %4971 = vst [vmem:[#allocation4 + $0xbe8] sm:$0xff] %v4907
    %4972 = vst [vmem:[#allocation4 + $0xc30] sm:$0xff] %v4908
    %4973 = vst [vmem:[#allocation4 + $0xc78] sm:$0xff] %v4909
    %4974 = vst [vmem:[#allocation4 + $0xcc0] sm:$0xff] %v4910
    %4975 = vst [vmem:[#allocation4 + $0xd08] sm:$0xff] %v4911
    %4976 = vst [vmem:[#allocation4 + $0xd50] sm:$0xff] %v4912
    %4977 = vst [vmem:[#allocation4 + $0xd98] sm:$0xff] %v4913
    %4978 = vst [vmem:[#allocation4 + $0xde0] sm:$0xff] %v4914
    %4979 = vst [vmem:[#allocation4 + $0xe28] sm:$0xff] %v4915
    %4980 = vst [vmem:[#allocation4 + $0xe70] sm:$0xff] %v4916
    %4981 = vst [vmem:[#allocation4 + $0xeb8] sm:$0xff] %v4917
    %4982 = vst [vmem:[#allocation4 + $0xf00] sm:$0xff] %v4918
    %4983 = vst [vmem:[#allocation4 + $0xf48] sm:$0xff] %v4919
    %4984 = vst [vmem:[#allocation4 + $0xf90] sm:$0xff] %v4920
    %4985 = vst [vmem:[#allocation4 + $0xfd8] sm:$0xff] %v4921
    %4986 = vst [vmem:[#allocation4 + $0x1020] sm:$0xff] %v4922
    %4987 = vst [vmem:[#allocation4 + $0x1068] sm:$0xff] %v4923
    %4988 = vst [vmem:[#allocation4 + $0x10b0] sm:$0xff] %v4924
    %4989 = vst [vmem:[#allocation4 + $0x10f8] sm:$0xff] %v4925
    %4990 = vst [vmem:[#allocation4 + $0x1140] sm:$0xff] %v4926
    %4991 = vst [vmem:[#allocation4 + $0x1188] sm:$0xff] %v4927
    %4992 = vst [vmem:[#allocation4 + $0x11d0] sm:$0xff] %v4928
    %v4993 = vld [vmem:[%s4416 + $0x1] sm:$0xff]
    %v4994 = vld [vmem:[%s4416 + $0x9] sm:$0xff]
    %v4995 = vld [vmem:[%s4416 + $0x19] sm:$0xff]
    %v4996 = vld [vmem:[%s4416 + $0x21] sm:$0xff]
    %v4997 = vld [vmem:[%s4416 + $0x31] sm:$0xff]
    %v4998 = vld [vmem:[%s4416 + $0x39] sm:$0xff]
    %v4999 = vld [vmem:[%s4416 + $0x49] sm:$0xff]
    %v5000 = vld [vmem:[%s4416 + $0x51] sm:$0xff]
    %v5001 = vld [vmem:[%s4416 + $0x61] sm:$0xff]
    %v5002 = vld [vmem:[%s4416 + $0x69] sm:$0xff]
    %v5003 = vld [vmem:[%s4416 + $0x79] sm:$0xff]
    %v5004 = vld [vmem:[%s4416 + $0x81] sm:$0xff]
    %v5005 = vld [vmem:[%s4416 + $0x91] sm:$0xff]
    %v5006 = vld [vmem:[%s4416 + $0x99] sm:$0xff]
    %v5007 = vld [vmem:[%s4416 + $0xa9] sm:$0xff]
    %v5008 = vld [vmem:[%s4416 + $0xb1] sm:$0xff]
    %v5009 = vld [vmem:[%s4416 + $0xc1] sm:$0xff]
    %v5010 = vld [vmem:[%s4416 + $0xc9] sm:$0xff]
    %v5011 = vld [vmem:[%s4416 + $0xd9] sm:$0xff]
    %v5012 = vld [vmem:[%s4416 + $0xe1] sm:$0xff]
    %v5013 = vld [vmem:[%s4416 + $0xf1] sm:$0xff]
    %v5014 = vld [vmem:[%s4416 + $0xf9] sm:$0xff]
    %v5015 = vld [vmem:[%s4416 + $0x109] sm:$0xff]
    %v5016 = vld [vmem:[%s4416 + $0x111] sm:$0xff]
    %v5017 = vld [vmem:[%s4416 + $0x121] sm:$0xff]
    %v5018 = vld [vmem:[%s4416 + $0x129] sm:$0xff]
    %v5019 = vld [vmem:[%s4416 + $0x139] sm:$0xff]
    %v5020 = vld [vmem:[%s4416 + $0x141] sm:$0xff]
    %v5021 = vld [vmem:[%s4416 + $0x151] sm:$0xff]
    %v5022 = vld [vmem:[%s4416 + $0x159] sm:$0xff]
    %v5023 = vld [vmem:[%s4416 + $0x169] sm:$0xff]
    %v5024 = vld [vmem:[%s4416 + $0x171] sm:$0xff]
    %v5025 = vld [vmem:[%s4416 + $0x1b1] sm:$0xff]
    %v5026 = vld [vmem:[%s4416 + $0x1b9] sm:$0xff]
    %v5027 = vld [vmem:[%s4416 + $0x1c9] sm:$0xff]
    %v5028 = vld [vmem:[%s4416 + $0x1d1] sm:$0xff]
    %v5029 = vld [vmem:[%s4416 + $0x1e1] sm:$0xff]
    %v5030 = vld [vmem:[%s4416 + $0x1e9] sm:$0xff]
    %v5031 = vld [vmem:[%s4416 + $0x1f9] sm:$0xff]
    %v5032 = vld [vmem:[%s4416 + $0x201] sm:$0xff]
    %v5033 = vld [vmem:[%s4416 + $0x211] sm:$0xff]
    %v5034 = vld [vmem:[%s4416 + $0x219] sm:$0xff]
    %v5035 = vld [vmem:[%s4416 + $0x229] sm:$0xff]
    %v5036 = vld [vmem:[%s4416 + $0x231] sm:$0xff]
    %v5037 = vld [vmem:[%s4416 + $0x241] sm:$0xff]
    %v5038 = vld [vmem:[%s4416 + $0x249] sm:$0xff]
    %v5039 = vld [vmem:[%s4416 + $0x259] sm:$0xff]
    %v5040 = vld [vmem:[%s4416 + $0x261] sm:$0xff]
    %v5041 = vld [vmem:[%s4416 + $0x271] sm:$0xff]
    %v5042 = vld [vmem:[%s4416 + $0x279] sm:$0xff]
    %v5043 = vld [vmem:[%s4416 + $0x289] sm:$0xff]
    %v5044 = vld [vmem:[%s4416 + $0x291] sm:$0xff]
    %v5045 = vld [vmem:[%s4416 + $0x2a1] sm:$0xff]
    %v5046 = vld [vmem:[%s4416 + $0x2a9] sm:$0xff]
    %v5047 = vld [vmem:[%s4416 + $0x2b9] sm:$0xff]
    %v5048 = vld [vmem:[%s4416 + $0x2c1] sm:$0xff]
    %v5049 = vld [vmem:[%s4416 + $0x2d1] sm:$0xff]
    %v5050 = vld [vmem:[%s4416 + $0x2d9] sm:$0xff]
    %v5051 = vld [vmem:[%s4416 + $0x2e9] sm:$0xff]
    %v5052 = vld [vmem:[%s4416 + $0x2f1] sm:$0xff]
    %v5053 = vld [vmem:[%s4416 + $0x301] sm:$0xff]
    %v5054 = vld [vmem:[%s4416 + $0x309] sm:$0xff]
    %v5055 = vld [vmem:[%s4416 + $0x319] sm:$0xff]
    %v5056 = vld [vmem:[%s4416 + $0x321] sm:$0xff]
    %5057 = vst [vmem:[#allocation4 + $0x20] sm:$0xff] %v4993
    %5058 = vst [vmem:[#allocation4 + $0x68] sm:$0xff] %v4994
    %5059 = vst [vmem:[#allocation4 + $0xb0] sm:$0xff] %v4995
    %5060 = vst [vmem:[#allocation4 + $0xf8] sm:$0xff] %v4996
    %5061 = vst [vmem:[#allocation4 + $0x140] sm:$0xff] %v4997
    %5062 = vst [vmem:[#allocation4 + $0x188] sm:$0xff] %v4998
    %5063 = vst [vmem:[#allocation4 + $0x1d0] sm:$0xff] %v4999
    %5064 = vst [vmem:[#allocation4 + $0x218] sm:$0xff] %v5000
    %5065 = vst [vmem:[#allocation4 + $0x260] sm:$0xff] %v5001
    %5066 = vst [vmem:[#allocation4 + $0x2a8] sm:$0xff] %v5002
    %5067 = vst [vmem:[#allocation4 + $0x2f0] sm:$0xff] %v5003
    %5068 = vst [vmem:[#allocation4 + $0x338] sm:$0xff] %v5004
    %5069 = vst [vmem:[#allocation4 + $0x380] sm:$0xff] %v5005
    %5070 = vst [vmem:[#allocation4 + $0x3c8] sm:$0xff] %v5006
    %5071 = vst [vmem:[#allocation4 + $0x410] sm:$0xff] %v5007
    %5072 = vst [vmem:[#allocation4 + $0x458] sm:$0xff] %v5008
    %5073 = vst [vmem:[#allocation4 + $0x4a0] sm:$0xff] %v5009
    %5074 = vst [vmem:[#allocation4 + $0x4e8] sm:$0xff] %v5010
    %5075 = vst [vmem:[#allocation4 + $0x530] sm:$0xff] %v5011
    %5076 = vst [vmem:[#allocation4 + $0x578] sm:$0xff] %v5012
    %5077 = vst [vmem:[#allocation4 + $0x5c0] sm:$0xff] %v5013
    %5078 = vst [vmem:[#allocation4 + $0x608] sm:$0xff] %v5014
    %5079 = vst [vmem:[#allocation4 + $0x650] sm:$0xff] %v5015
    %5080 = vst [vmem:[#allocation4 + $0x698] sm:$0xff] %v5016
    %5081 = vst [vmem:[#allocation4 + $0x6e0] sm:$0xff] %v5017
    %5082 = vst [vmem:[#allocation4 + $0x728] sm:$0xff] %v5018
    %5083 = vst [vmem:[#allocation4 + $0x770] sm:$0xff] %v5019
    %5084 = vst [vmem:[#allocation4 + $0x7b8] sm:$0xff] %v5020
    %5085 = vst [vmem:[#allocation4 + $0x800] sm:$0xff] %v5021
    %5086 = vst [vmem:[#allocation4 + $0x848] sm:$0xff] %v5022
    %5087 = vst [vmem:[#allocation4 + $0x890] sm:$0xff] %v5023
    %5088 = vst [vmem:[#allocation4 + $0x8d8] sm:$0xff] %v5024
    %5089 = vst [vmem:[#allocation4 + $0x920] sm:$0xff] %v5025
    %5090 = vst [vmem:[#allocation4 + $0x968] sm:$0xff] %v5026
    %5091 = vst [vmem:[#allocation4 + $0x9b0] sm:$0xff] %v5027
    %5092 = vst [vmem:[#allocation4 + $0x9f8] sm:$0xff] %v5028
    %5093 = vst [vmem:[#allocation4 + $0xa40] sm:$0xff] %v5029
    %5094 = vst [vmem:[#allocation4 + $0xa88] sm:$0xff] %v5030
    %5095 = vst [vmem:[#allocation4 + $0xad0] sm:$0xff] %v5031
    %5096 = vst [vmem:[#allocation4 + $0xb18] sm:$0xff] %v5032
    %5097 = vst [vmem:[#allocation4 + $0xb60] sm:$0xff] %v5033
    %5098 = vst [vmem:[#allocation4 + $0xba8] sm:$0xff] %v5034
    %5099 = vst [vmem:[#allocation4 + $0xbf0] sm:$0xff] %v5035
    %5100 = vst [vmem:[#allocation4 + $0xc38] sm:$0xff] %v5036
    %5101 = vst [vmem:[#allocation4 + $0xc80] sm:$0xff] %v5037
    %5102 = vst [vmem:[#allocation4 + $0xcc8] sm:$0xff] %v5038
    %5103 = vst [vmem:[#allocation4 + $0xd10] sm:$0xff] %v5039
    %5104 = vst [vmem:[#allocation4 + $0xd58] sm:$0xff] %v5040
    %5105 = vst [vmem:[#allocation4 + $0xda0] sm:$0xff] %v5041
    %5106 = vst [vmem:[#allocation4 + $0xde8] sm:$0xff] %v5042
    %5107 = vst [vmem:[#allocation4 + $0xe30] sm:$0xff] %v5043
    %5108 = vst [vmem:[#allocation4 + $0xe78] sm:$0xff] %v5044
    %5109 = vst [vmem:[#allocation4 + $0xec0] sm:$0xff] %v5045
    %5110 = vst [vmem:[#allocation4 + $0xf08] sm:$0xff] %v5046
    %5111 = vst [vmem:[#allocation4 + $0xf50] sm:$0xff] %v5047
    %5112 = vst [vmem:[#allocation4 + $0xf98] sm:$0xff] %v5048
    %5113 = vst [vmem:[#allocation4 + $0xfe0] sm:$0xff] %v5049
    %5114 = vst [vmem:[#allocation4 + $0x1028] sm:$0xff] %v5050
    %5115 = vst [vmem:[#allocation4 + $0x1070] sm:$0xff] %v5051
    %5116 = vst [vmem:[#allocation4 + $0x10b8] sm:$0xff] %v5052
    %5117 = vst [vmem:[#allocation4 + $0x1100] sm:$0xff] %v5053
    %5118 = vst [vmem:[#allocation4 + $0x1148] sm:$0xff] %v5054
    %5119 = vst [vmem:[#allocation4 + $0x1190] sm:$0xff] %v5055
    %5120 = vst [vmem:[#allocation4 + $0x11d8] sm:$0xff] %v5056
    %v5121 = vld [vmem:[%s4416 + $0x2] sm:$0xff]
    %v5122 = vld [vmem:[%s4416 + $0xa] sm:$0xff]
    %v5123 = vld [vmem:[%s4416 + $0x1a] sm:$0xff]
    %v5124 = vld [vmem:[%s4416 + $0x22] sm:$0xff]
    %v5125 = vld [vmem:[%s4416 + $0x32] sm:$0xff]
    %v5126 = vld [vmem:[%s4416 + $0x3a] sm:$0xff]
    %v5127 = vld [vmem:[%s4416 + $0x4a] sm:$0xff]
    %v5128 = vld [vmem:[%s4416 + $0x52] sm:$0xff]
    %v5129 = vld [vmem:[%s4416 + $0x62] sm:$0xff]
    %v5130 = vld [vmem:[%s4416 + $0x6a] sm:$0xff]
    %v5131 = vld [vmem:[%s4416 + $0x7a] sm:$0xff]
    %v5132 = vld [vmem:[%s4416 + $0x82] sm:$0xff]
    %v5133 = vld [vmem:[%s4416 + $0x92] sm:$0xff]
    %v5134 = vld [vmem:[%s4416 + $0x9a] sm:$0xff]
    %v5135 = vld [vmem:[%s4416 + $0xaa] sm:$0xff]
    %v5136 = vld [vmem:[%s4416 + $0xb2] sm:$0xff]
    %v5137 = vld [vmem:[%s4416 + $0xc2] sm:$0xff]
    %v5138 = vld [vmem:[%s4416 + $0xca] sm:$0xff]
    %v5139 = vld [vmem:[%s4416 + $0xda] sm:$0xff]
    %v5140 = vld [vmem:[%s4416 + $0xe2] sm:$0xff]
    %v5141 = vld [vmem:[%s4416 + $0xf2] sm:$0xff]
    %v5142 = vld [vmem:[%s4416 + $0xfa] sm:$0xff]
    %v5143 = vld [vmem:[%s4416 + $0x10a] sm:$0xff]
    %v5144 = vld [vmem:[%s4416 + $0x112] sm:$0xff]
    %v5145 = vld [vmem:[%s4416 + $0x122] sm:$0xff]
    %v5146 = vld [vmem:[%s4416 + $0x12a] sm:$0xff]
    %v5147 = vld [vmem:[%s4416 + $0x13a] sm:$0xff]
    %v5148 = vld [vmem:[%s4416 + $0x142] sm:$0xff]
    %v5149 = vld [vmem:[%s4416 + $0x152] sm:$0xff]
    %v5150 = vld [vmem:[%s4416 + $0x15a] sm:$0xff]
    %v5151 = vld [vmem:[%s4416 + $0x16a] sm:$0xff]
    %v5152 = vld [vmem:[%s4416 + $0x172] sm:$0xff]
    %v5153 = vld [vmem:[%s4416 + $0x1b2] sm:$0xff]
    %v5154 = vld [vmem:[%s4416 + $0x1ba] sm:$0xff]
    %v5155 = vld [vmem:[%s4416 + $0x1ca] sm:$0xff]
    %v5156 = vld [vmem:[%s4416 + $0x1d2] sm:$0xff]
    %v5157 = vld [vmem:[%s4416 + $0x1e2] sm:$0xff]
    %v5158 = vld [vmem:[%s4416 + $0x1ea] sm:$0xff]
    %v5159 = vld [vmem:[%s4416 + $0x1fa] sm:$0xff]
    %v5160 = vld [vmem:[%s4416 + $0x202] sm:$0xff]
    %v5161 = vld [vmem:[%s4416 + $0x212] sm:$0xff]
    %v5162 = vld [vmem:[%s4416 + $0x21a] sm:$0xff]
    %v5163 = vld [vmem:[%s4416 + $0x22a] sm:$0xff]
    %v5164 = vld [vmem:[%s4416 + $0x232] sm:$0xff]
    %v5165 = vld [vmem:[%s4416 + $0x242] sm:$0xff]
    %v5166 = vld [vmem:[%s4416 + $0x24a] sm:$0xff]
    %v5167 = vld [vmem:[%s4416 + $0x25a] sm:$0xff]
    %v5168 = vld [vmem:[%s4416 + $0x262] sm:$0xff]
    %v5169 = vld [vmem:[%s4416 + $0x272] sm:$0xff]
    %v5170 = vld [vmem:[%s4416 + $0x27a] sm:$0xff]
    %v5171 = vld [vmem:[%s4416 + $0x28a] sm:$0xff]
    %v5172 = vld [vmem:[%s4416 + $0x292] sm:$0xff]
    %v5173 = vld [vmem:[%s4416 + $0x2a2] sm:$0xff]
    %v5174 = vld [vmem:[%s4416 + $0x2aa] sm:$0xff]
    %v5175 = vld [vmem:[%s4416 + $0x2ba] sm:$0xff]
    %v5176 = vld [vmem:[%s4416 + $0x2c2] sm:$0xff]
    %v5177 = vld [vmem:[%s4416 + $0x2d2] sm:$0xff]
    %v5178 = vld [vmem:[%s4416 + $0x2da] sm:$0xff]
    %v5179 = vld [vmem:[%s4416 + $0x2ea] sm:$0xff]
    %v5180 = vld [vmem:[%s4416 + $0x2f2] sm:$0xff]
    %v5181 = vld [vmem:[%s4416 + $0x302] sm:$0xff]
    %v5182 = vld [vmem:[%s4416 + $0x30a] sm:$0xff]
    %v5183 = vld [vmem:[%s4416 + $0x31a] sm:$0xff]
    %v5184 = vld [vmem:[%s4416 + $0x322] sm:$0xff]
    %5185 = vst [vmem:[#allocation4 + $0x28] sm:$0xff] %v5121
    %5186 = vst [vmem:[#allocation4 + $0x70] sm:$0xff] %v5122
    %5187 = vst [vmem:[#allocation4 + $0xb8] sm:$0xff] %v5123
    %5188 = vst [vmem:[#allocation4 + $0x100] sm:$0xff] %v5124
    %5189 = vst [vmem:[#allocation4 + $0x148] sm:$0xff] %v5125
    %5190 = vst [vmem:[#allocation4 + $0x190] sm:$0xff] %v5126
    %5191 = vst [vmem:[#allocation4 + $0x1d8] sm:$0xff] %v5127
    %5192 = vst [vmem:[#allocation4 + $0x220] sm:$0xff] %v5128
    %5193 = vst [vmem:[#allocation4 + $0x268] sm:$0xff] %v5129
    %5194 = vst [vmem:[#allocation4 + $0x2b0] sm:$0xff] %v5130
    %5195 = vst [vmem:[#allocation4 + $0x2f8] sm:$0xff] %v5131
    %5196 = vst [vmem:[#allocation4 + $0x340] sm:$0xff] %v5132
    %5197 = vst [vmem:[#allocation4 + $0x388] sm:$0xff] %v5133
    %5198 = vst [vmem:[#allocation4 + $0x3d0] sm:$0xff] %v5134
    %5199 = vst [vmem:[#allocation4 + $0x418] sm:$0xff] %v5135
    %5200 = vst [vmem:[#allocation4 + $0x460] sm:$0xff] %v5136
    %5201 = vst [vmem:[#allocation4 + $0x4a8] sm:$0xff] %v5137
    %5202 = vst [vmem:[#allocation4 + $0x4f0] sm:$0xff] %v5138
    %5203 = vst [vmem:[#allocation4 + $0x538] sm:$0xff] %v5139
    %5204 = vst [vmem:[#allocation4 + $0x580] sm:$0xff] %v5140
    %5205 = vst [vmem:[#allocation4 + $0x5c8] sm:$0xff] %v5141
    %5206 = vst [vmem:[#allocation4 + $0x610] sm:$0xff] %v5142
    %5207 = vst [vmem:[#allocation4 + $0x658] sm:$0xff] %v5143
    %5208 = vst [vmem:[#allocation4 + $0x6a0] sm:$0xff] %v5144
    %5209 = vst [vmem:[#allocation4 + $0x6e8] sm:$0xff] %v5145
    %5210 = vst [vmem:[#allocation4 + $0x730] sm:$0xff] %v5146
    %5211 = vst [vmem:[#allocation4 + $0x778] sm:$0xff] %v5147
    %5212 = vst [vmem:[#allocation4 + $0x7c0] sm:$0xff] %v5148
    %5213 = vst [vmem:[#allocation4 + $0x808] sm:$0xff] %v5149
    %5214 = vst [vmem:[#allocation4 + $0x850] sm:$0xff] %v5150
    %5215 = vst [vmem:[#allocation4 + $0x898] sm:$0xff] %v5151
    %5216 = vst [vmem:[#allocation4 + $0x8e0] sm:$0xff] %v5152
    %5217 = vst [vmem:[#allocation4 + $0x928] sm:$0xff] %v5153
    %5218 = vst [vmem:[#allocation4 + $0x970] sm:$0xff] %v5154
    %5219 = vst [vmem:[#allocation4 + $0x9b8] sm:$0xff] %v5155
    %5220 = vst [vmem:[#allocation4 + $0xa00] sm:$0xff] %v5156
    %5221 = vst [vmem:[#allocation4 + $0xa48] sm:$0xff] %v5157
    %5222 = vst [vmem:[#allocation4 + $0xa90] sm:$0xff] %v5158
    %5223 = vst [vmem:[#allocation4 + $0xad8] sm:$0xff] %v5159
    %5224 = vst [vmem:[#allocation4 + $0xb20] sm:$0xff] %v5160
    %5225 = vst [vmem:[#allocation4 + $0xb68] sm:$0xff] %v5161
    %5226 = vst [vmem:[#allocation4 + $0xbb0] sm:$0xff] %v5162
    %5227 = vst [vmem:[#allocation4 + $0xbf8] sm:$0xff] %v5163
    %5228 = vst [vmem:[#allocation4 + $0xc40] sm:$0xff] %v5164
    %5229 = vst [vmem:[#allocation4 + $0xc88] sm:$0xff] %v5165
    %5230 = vst [vmem:[#allocation4 + $0xcd0] sm:$0xff] %v5166
    %5231 = vst [vmem:[#allocation4 + $0xd18] sm:$0xff] %v5167
    %5232 = vst [vmem:[#allocation4 + $0xd60] sm:$0xff] %v5168
    %5233 = vst [vmem:[#allocation4 + $0xda8] sm:$0xff] %v5169
    %5234 = vst [vmem:[#allocation4 + $0xdf0] sm:$0xff] %v5170
    %5235 = vst [vmem:[#allocation4 + $0xe38] sm:$0xff] %v5171
    %5236 = vst [vmem:[#allocation4 + $0xe80] sm:$0xff] %v5172
    %5237 = vst [vmem:[#allocation4 + $0xec8] sm:$0xff] %v5173
    %5238 = vst [vmem:[#allocation4 + $0xf10] sm:$0xff] %v5174
    %5239 = vst [vmem:[#allocation4 + $0xf58] sm:$0xff] %v5175
    %5240 = vst [vmem:[#allocation4 + $0xfa0] sm:$0xff] %v5176
    %5241 = vst [vmem:[#allocation4 + $0xfe8] sm:$0xff] %v5177
    %5242 = vst [vmem:[#allocation4 + $0x1030] sm:$0xff] %v5178
    %5243 = vst [vmem:[#allocation4 + $0x1078] sm:$0xff] %v5179
    %5244 = vst [vmem:[#allocation4 + $0x10c0] sm:$0xff] %v5180
    %5245 = vst [vmem:[#allocation4 + $0x1108] sm:$0xff] %v5181
    %5246 = vst [vmem:[#allocation4 + $0x1150] sm:$0xff] %v5182
    %5247 = vst [vmem:[#allocation4 + $0x1198] sm:$0xff] %v5183
    %5248 = vst [vmem:[#allocation4 + $0x11e0] sm:$0xff] %v5184
    %s5249 = scalar_lea.vmem [#allocation3], 48
    %v5250 = vld [vmem:[%s5249] sm:$0xff]
    %v5251 = vld [vmem:[%s5249 + $0x8] sm:$0xff]
    %v5252 = vld [vmem:[%s5249 + $0x18] sm:$0xff]
    %v5253 = vld [vmem:[%s5249 + $0x20] sm:$0xff]
    %v5254 = vld [vmem:[%s5249 + $0x30] sm:$0xff]
    %v5255 = vld [vmem:[%s5249 + $0x38] sm:$0xff]
    %v5256 = vld [vmem:[%s5249 + $0x48] sm:$0xff]
    %v5257 = vld [vmem:[%s5249 + $0x50] sm:$0xff]
    %v5258 = vld [vmem:[%s5249 + $0x60] sm:$0xff]
    %v5259 = vld [vmem:[%s5249 + $0x68] sm:$0xff]
    %v5260 = vld [vmem:[%s5249 + $0x78] sm:$0xff]
    %v5261 = vld [vmem:[%s5249 + $0x80] sm:$0xff]
    %v5262 = vld [vmem:[%s5249 + $0x90] sm:$0xff]
    %v5263 = vld [vmem:[%s5249 + $0x98] sm:$0xff]
    %v5264 = vld [vmem:[%s5249 + $0xa8] sm:$0xff]
    %v5265 = vld [vmem:[%s5249 + $0xb0] sm:$0xff]
    %v5266 = vld [vmem:[%s5249 + $0xc0] sm:$0xff]
    %v5267 = vld [vmem:[%s5249 + $0xc8] sm:$0xff]
    %v5268 = vld [vmem:[%s5249 + $0xd8] sm:$0xff]
    %v5269 = vld [vmem:[%s5249 + $0xe0] sm:$0xff]
    %v5270 = vld [vmem:[%s5249 + $0xf0] sm:$0xff]
    %v5271 = vld [vmem:[%s5249 + $0xf8] sm:$0xff]
    %v5272 = vld [vmem:[%s5249 + $0x108] sm:$0xff]
    %v5273 = vld [vmem:[%s5249 + $0x110] sm:$0xff]
    %v5274 = vld [vmem:[%s5249 + $0x120] sm:$0xff]
    %v5275 = vld [vmem:[%s5249 + $0x128] sm:$0xff]
    %v5276 = vld [vmem:[%s5249 + $0x138] sm:$0xff]
    %v5277 = vld [vmem:[%s5249 + $0x140] sm:$0xff]
    %v5278 = vld [vmem:[%s5249 + $0x150] sm:$0xff]
    %v5279 = vld [vmem:[%s5249 + $0x158] sm:$0xff]
    %v5280 = vld [vmem:[%s5249 + $0x168] sm:$0xff]
    %v5281 = vld [vmem:[%s5249 + $0x170] sm:$0xff]
    %v5282 = vld [vmem:[%s5249 + $0x1b0] sm:$0xff]
    %v5283 = vld [vmem:[%s5249 + $0x1b8] sm:$0xff]
    %v5284 = vld [vmem:[%s5249 + $0x1c8] sm:$0xff]
    %v5285 = vld [vmem:[%s5249 + $0x1d0] sm:$0xff]
    %v5286 = vld [vmem:[%s5249 + $0x1e0] sm:$0xff]
    %v5287 = vld [vmem:[%s5249 + $0x1e8] sm:$0xff]
    %v5288 = vld [vmem:[%s5249 + $0x1f8] sm:$0xff]
    %v5289 = vld [vmem:[%s5249 + $0x200] sm:$0xff]
    %v5290 = vld [vmem:[%s5249 + $0x210] sm:$0xff]
    %v5291 = vld [vmem:[%s5249 + $0x218] sm:$0xff]
    %v5292 = vld [vmem:[%s5249 + $0x228] sm:$0xff]
    %v5293 = vld [vmem:[%s5249 + $0x230] sm:$0xff]
    %v5294 = vld [vmem:[%s5249 + $0x240] sm:$0xff]
    %v5295 = vld [vmem:[%s5249 + $0x248] sm:$0xff]
    %v5296 = vld [vmem:[%s5249 + $0x258] sm:$0xff]
    %v5297 = vld [vmem:[%s5249 + $0x260] sm:$0xff]
    %v5298 = vld [vmem:[%s5249 + $0x270] sm:$0xff]
    %v5299 = vld [vmem:[%s5249 + $0x278] sm:$0xff]
    %v5300 = vld [vmem:[%s5249 + $0x288] sm:$0xff]
    %v5301 = vld [vmem:[%s5249 + $0x290] sm:$0xff]
    %v5302 = vld [vmem:[%s5249 + $0x2a0] sm:$0xff]
    %v5303 = vld [vmem:[%s5249 + $0x2a8] sm:$0xff]
    %v5304 = vld [vmem:[%s5249 + $0x2b8] sm:$0xff]
    %v5305 = vld [vmem:[%s5249 + $0x2c0] sm:$0xff]
    %v5306 = vld [vmem:[%s5249 + $0x2d0] sm:$0xff]
    %v5307 = vld [vmem:[%s5249 + $0x2d8] sm:$0xff]
    %v5308 = vld [vmem:[%s5249 + $0x2e8] sm:$0xff]
    %v5309 = vld [vmem:[%s5249 + $0x2f0] sm:$0xff]
    %v5310 = vld [vmem:[%s5249 + $0x300] sm:$0xff]
    %v5311 = vld [vmem:[%s5249 + $0x308] sm:$0xff]
    %v5312 = vld [vmem:[%s5249 + $0x318] sm:$0xff]
    %v5313 = vld [vmem:[%s5249 + $0x320] sm:$0xff]
    %5314 = vst [vmem:[#allocation4 + $0x30] sm:$0xff] %v5250
    %5315 = vst [vmem:[#allocation4 + $0x78] sm:$0xff] %v5251
    %5316 = vst [vmem:[#allocation4 + $0xc0] sm:$0xff] %v5252
    %5317 = vst [vmem:[#allocation4 + $0x108] sm:$0xff] %v5253
    %5318 = vst [vmem:[#allocation4 + $0x150] sm:$0xff] %v5254
    %5319 = vst [vmem:[#allocation4 + $0x198] sm:$0xff] %v5255
    %5320 = vst [vmem:[#allocation4 + $0x1e0] sm:$0xff] %v5256
    %5321 = vst [vmem:[#allocation4 + $0x228] sm:$0xff] %v5257
    %5322 = vst [vmem:[#allocation4 + $0x270] sm:$0xff] %v5258
    %5323 = vst [vmem:[#allocation4 + $0x2b8] sm:$0xff] %v5259
    %5324 = vst [vmem:[#allocation4 + $0x300] sm:$0xff] %v5260
    %5325 = vst [vmem:[#allocation4 + $0x348] sm:$0xff] %v5261
    %5326 = vst [vmem:[#allocation4 + $0x390] sm:$0xff] %v5262
    %5327 = vst [vmem:[#allocation4 + $0x3d8] sm:$0xff] %v5263
    %5328 = vst [vmem:[#allocation4 + $0x420] sm:$0xff] %v5264
    %5329 = vst [vmem:[#allocation4 + $0x468] sm:$0xff] %v5265
    %5330 = vst [vmem:[#allocation4 + $0x4b0] sm:$0xff] %v5266
    %5331 = vst [vmem:[#allocation4 + $0x4f8] sm:$0xff] %v5267
    %5332 = vst [vmem:[#allocation4 + $0x540] sm:$0xff] %v5268
    %5333 = vst [vmem:[#allocation4 + $0x588] sm:$0xff] %v5269
    %5334 = vst [vmem:[#allocation4 + $0x5d0] sm:$0xff] %v5270
    %5335 = vst [vmem:[#allocation4 + $0x618] sm:$0xff] %v5271
    %5336 = vst [vmem:[#allocation4 + $0x660] sm:$0xff] %v5272
    %5337 = vst [vmem:[#allocation4 + $0x6a8] sm:$0xff] %v5273
    %5338 = vst [vmem:[#allocation4 + $0x6f0] sm:$0xff] %v5274
    %5339 = vst [vmem:[#allocation4 + $0x738] sm:$0xff] %v5275
    %5340 = vst [vmem:[#allocation4 + $0x780] sm:$0xff] %v5276
    %5341 = vst [vmem:[#allocation4 + $0x7c8] sm:$0xff] %v5277
    %5342 = vst [vmem:[#allocation4 + $0x810] sm:$0xff] %v5278
    %5343 = vst [vmem:[#allocation4 + $0x858] sm:$0xff] %v5279
    %5344 = vst [vmem:[#allocation4 + $0x8a0] sm:$0xff] %v5280
    %5345 = vst [vmem:[#allocation4 + $0x8e8] sm:$0xff] %v5281
    %5346 = vst [vmem:[#allocation4 + $0x930] sm:$0xff] %v5282
    %5347 = vst [vmem:[#allocation4 + $0x978] sm:$0xff] %v5283
    %5348 = vst [vmem:[#allocation4 + $0x9c0] sm:$0xff] %v5284
    %5349 = vst [vmem:[#allocation4 + $0xa08] sm:$0xff] %v5285
    %5350 = vst [vmem:[#allocation4 + $0xa50] sm:$0xff] %v5286
    %5351 = vst [vmem:[#allocation4 + $0xa98] sm:$0xff] %v5287
    %5352 = vst [vmem:[#allocation4 + $0xae0] sm:$0xff] %v5288
    %5353 = vst [vmem:[#allocation4 + $0xb28] sm:$0xff] %v5289
    %5354 = vst [vmem:[#allocation4 + $0xb70] sm:$0xff] %v5290
    %5355 = vst [vmem:[#allocation4 + $0xbb8] sm:$0xff] %v5291
    %5356 = vst [vmem:[#allocation4 + $0xc00] sm:$0xff] %v5292
    %5357 = vst [vmem:[#allocation4 + $0xc48] sm:$0xff] %v5293
    %5358 = vst [vmem:[#allocation4 + $0xc90] sm:$0xff] %v5294
    %5359 = vst [vmem:[#allocation4 + $0xcd8] sm:$0xff] %v5295
    %5360 = vst [vmem:[#allocation4 + $0xd20] sm:$0xff] %v5296
    %5361 = vst [vmem:[#allocation4 + $0xd68] sm:$0xff] %v5297
    %5362 = vst [vmem:[#allocation4 + $0xdb0] sm:$0xff] %v5298
    %5363 = vst [vmem:[#allocation4 + $0xdf8] sm:$0xff] %v5299
    %5364 = vst [vmem:[#allocation4 + $0xe40] sm:$0xff] %v5300
    %5365 = vst [vmem:[#allocation4 + $0xe88] sm:$0xff] %v5301
    %5366 = vst [vmem:[#allocation4 + $0xed0] sm:$0xff] %v5302
    %5367 = vst [vmem:[#allocation4 + $0xf18] sm:$0xff] %v5303
    %5368 = vst [vmem:[#allocation4 + $0xf60] sm:$0xff] %v5304
    %5369 = vst [vmem:[#allocation4 + $0xfa8] sm:$0xff] %v5305
    %5370 = vst [vmem:[#allocation4 + $0xff0] sm:$0xff] %v5306
    %5371 = vst [vmem:[#allocation4 + $0x1038] sm:$0xff] %v5307
    %5372 = vst [vmem:[#allocation4 + $0x1080] sm:$0xff] %v5308
    %5373 = vst [vmem:[#allocation4 + $0x10c8] sm:$0xff] %v5309
    %5374 = vst [vmem:[#allocation4 + $0x1110] sm:$0xff] %v5310
    %5375 = vst [vmem:[#allocation4 + $0x1158] sm:$0xff] %v5311
    %5376 = vst [vmem:[#allocation4 + $0x11a0] sm:$0xff] %v5312
    %5377 = vst [vmem:[#allocation4 + $0x11e8] sm:$0xff] %v5313
    %v5378 = vld [vmem:[%s5249 + $0x1] sm:$0xff]
    %v5379 = vld [vmem:[%s5249 + $0x9] sm:$0xff]
    %v5380 = vld [vmem:[%s5249 + $0x19] sm:$0xff]
    %v5381 = vld [vmem:[%s5249 + $0x21] sm:$0xff]
    %v5382 = vld [vmem:[%s5249 + $0x31] sm:$0xff]
    %v5383 = vld [vmem:[%s5249 + $0x39] sm:$0xff]
    %v5384 = vld [vmem:[%s5249 + $0x49] sm:$0xff]
    %v5385 = vld [vmem:[%s5249 + $0x51] sm:$0xff]
    %v5386 = vld [vmem:[%s5249 + $0x61] sm:$0xff]
    %v5387 = vld [vmem:[%s5249 + $0x69] sm:$0xff]
    %v5388 = vld [vmem:[%s5249 + $0x79] sm:$0xff]
    %v5389 = vld [vmem:[%s5249 + $0x81] sm:$0xff]
    %v5390 = vld [vmem:[%s5249 + $0x91] sm:$0xff]
    %v5391 = vld [vmem:[%s5249 + $0x99] sm:$0xff]
    %v5392 = vld [vmem:[%s5249 + $0xa9] sm:$0xff]
    %v5393 = vld [vmem:[%s5249 + $0xb1] sm:$0xff]
    %v5394 = vld [vmem:[%s5249 + $0xc1] sm:$0xff]
    %v5395 = vld [vmem:[%s5249 + $0xc9] sm:$0xff]
    %v5396 = vld [vmem:[%s5249 + $0xd9] sm:$0xff]
    %v5397 = vld [vmem:[%s5249 + $0xe1] sm:$0xff]
    %v5398 = vld [vmem:[%s5249 + $0xf1] sm:$0xff]
    %v5399 = vld [vmem:[%s5249 + $0xf9] sm:$0xff]
    %v5400 = vld [vmem:[%s5249 + $0x109] sm:$0xff]
    %v5401 = vld [vmem:[%s5249 + $0x111] sm:$0xff]
    %v5402 = vld [vmem:[%s5249 + $0x121] sm:$0xff]
    %v5403 = vld [vmem:[%s5249 + $0x129] sm:$0xff]
    %v5404 = vld [vmem:[%s5249 + $0x139] sm:$0xff]
    %v5405 = vld [vmem:[%s5249 + $0x141] sm:$0xff]
    %v5406 = vld [vmem:[%s5249 + $0x151] sm:$0xff]
    %v5407 = vld [vmem:[%s5249 + $0x159] sm:$0xff]
    %v5408 = vld [vmem:[%s5249 + $0x169] sm:$0xff]
    %v5409 = vld [vmem:[%s5249 + $0x171] sm:$0xff]
    %v5410 = vld [vmem:[%s5249 + $0x1b1] sm:$0xff]
    %v5411 = vld [vmem:[%s5249 + $0x1b9] sm:$0xff]
    %v5412 = vld [vmem:[%s5249 + $0x1c9] sm:$0xff]
    %v5413 = vld [vmem:[%s5249 + $0x1d1] sm:$0xff]
    %v5414 = vld [vmem:[%s5249 + $0x1e1] sm:$0xff]
    %v5415 = vld [vmem:[%s5249 + $0x1e9] sm:$0xff]
    %v5416 = vld [vmem:[%s5249 + $0x1f9] sm:$0xff]
    %v5417 = vld [vmem:[%s5249 + $0x201] sm:$0xff]
    %v5418 = vld [vmem:[%s5249 + $0x211] sm:$0xff]
    %v5419 = vld [vmem:[%s5249 + $0x219] sm:$0xff]
    %v5420 = vld [vmem:[%s5249 + $0x229] sm:$0xff]
    %v5421 = vld [vmem:[%s5249 + $0x231] sm:$0xff]
    %v5422 = vld [vmem:[%s5249 + $0x241] sm:$0xff]
    %v5423 = vld [vmem:[%s5249 + $0x249] sm:$0xff]
    %v5424 = vld [vmem:[%s5249 + $0x259] sm:$0xff]
    %v5425 = vld [vmem:[%s5249 + $0x261] sm:$0xff]
    %v5426 = vld [vmem:[%s5249 + $0x271] sm:$0xff]
    %v5427 = vld [vmem:[%s5249 + $0x279] sm:$0xff]
    %v5428 = vld [vmem:[%s5249 + $0x289] sm:$0xff]
    %v5429 = vld [vmem:[%s5249 + $0x291] sm:$0xff]
    %v5430 = vld [vmem:[%s5249 + $0x2a1] sm:$0xff]
    %v5431 = vld [vmem:[%s5249 + $0x2a9] sm:$0xff]
    %v5432 = vld [vmem:[%s5249 + $0x2b9] sm:$0xff]
    %v5433 = vld [vmem:[%s5249 + $0x2c1] sm:$0xff]
    %v5434 = vld [vmem:[%s5249 + $0x2d1] sm:$0xff]
    %v5435 = vld [vmem:[%s5249 + $0x2d9] sm:$0xff]
    %v5436 = vld [vmem:[%s5249 + $0x2e9] sm:$0xff]
    %v5437 = vld [vmem:[%s5249 + $0x2f1] sm:$0xff]
    %v5438 = vld [vmem:[%s5249 + $0x301] sm:$0xff]
    %v5439 = vld [vmem:[%s5249 + $0x309] sm:$0xff]
    %v5440 = vld [vmem:[%s5249 + $0x319] sm:$0xff]
    %v5441 = vld [vmem:[%s5249 + $0x321] sm:$0xff]
    %5442 = vst [vmem:[#allocation4 + $0x38] sm:$0xff] %v5378
    %5443 = vst [vmem:[#allocation4 + $0x80] sm:$0xff] %v5379
    %5444 = vst [vmem:[#allocation4 + $0xc8] sm:$0xff] %v5380
    %5445 = vst [vmem:[#allocation4 + $0x110] sm:$0xff] %v5381
    %5446 = vst [vmem:[#allocation4 + $0x158] sm:$0xff] %v5382
    %5447 = vst [vmem:[#allocation4 + $0x1a0] sm:$0xff] %v5383
    %5448 = vst [vmem:[#allocation4 + $0x1e8] sm:$0xff] %v5384
    %5449 = vst [vmem:[#allocation4 + $0x230] sm:$0xff] %v5385
    %5450 = vst [vmem:[#allocation4 + $0x278] sm:$0xff] %v5386
    %5451 = vst [vmem:[#allocation4 + $0x2c0] sm:$0xff] %v5387
    %5452 = vst [vmem:[#allocation4 + $0x308] sm:$0xff] %v5388
    %5453 = vst [vmem:[#allocation4 + $0x350] sm:$0xff] %v5389
    %5454 = vst [vmem:[#allocation4 + $0x398] sm:$0xff] %v5390
    %5455 = vst [vmem:[#allocation4 + $0x3e0] sm:$0xff] %v5391
    %5456 = vst [vmem:[#allocation4 + $0x428] sm:$0xff] %v5392
    %5457 = vst [vmem:[#allocation4 + $0x470] sm:$0xff] %v5393
    %5458 = vst [vmem:[#allocation4 + $0x4b8] sm:$0xff] %v5394
    %5459 = vst [vmem:[#allocation4 + $0x500] sm:$0xff] %v5395
    %5460 = vst [vmem:[#allocation4 + $0x548] sm:$0xff] %v5396
    %5461 = vst [vmem:[#allocation4 + $0x590] sm:$0xff] %v5397
    %5462 = vst [vmem:[#allocation4 + $0x5d8] sm:$0xff] %v5398
    %5463 = vst [vmem:[#allocation4 + $0x620] sm:$0xff] %v5399
    %5464 = vst [vmem:[#allocation4 + $0x668] sm:$0xff] %v5400
    %5465 = vst [vmem:[#allocation4 + $0x6b0] sm:$0xff] %v5401
    %5466 = vst [vmem:[#allocation4 + $0x6f8] sm:$0xff] %v5402
    %5467 = vst [vmem:[#allocation4 + $0x740] sm:$0xff] %v5403
    %5468 = vst [vmem:[#allocation4 + $0x788] sm:$0xff] %v5404
    %5469 = vst [vmem:[#allocation4 + $0x7d0] sm:$0xff] %v5405
    %5470 = vst [vmem:[#allocation4 + $0x818] sm:$0xff] %v5406
    %5471 = vst [vmem:[#allocation4 + $0x860] sm:$0xff] %v5407
    %5472 = vst [vmem:[#allocation4 + $0x8a8] sm:$0xff] %v5408
    %5473 = vst [vmem:[#allocation4 + $0x8f0] sm:$0xff] %v5409
    %5474 = vst [vmem:[#allocation4 + $0x938] sm:$0xff] %v5410
    %5475 = vst [vmem:[#allocation4 + $0x980] sm:$0xff] %v5411
    %5476 = vst [vmem:[#allocation4 + $0x9c8] sm:$0xff] %v5412
    %5477 = vst [vmem:[#allocation4 + $0xa10] sm:$0xff] %v5413
    %5478 = vst [vmem:[#allocation4 + $0xa58] sm:$0xff] %v5414
    %5479 = vst [vmem:[#allocation4 + $0xaa0] sm:$0xff] %v5415
    %5480 = vst [vmem:[#allocation4 + $0xae8] sm:$0xff] %v5416
    %5481 = vst [vmem:[#allocation4 + $0xb30] sm:$0xff] %v5417
    %5482 = vst [vmem:[#allocation4 + $0xb78] sm:$0xff] %v5418
    %5483 = vst [vmem:[#allocation4 + $0xbc0] sm:$0xff] %v5419
    %5484 = vst [vmem:[#allocation4 + $0xc08] sm:$0xff] %v5420
    %5485 = vst [vmem:[#allocation4 + $0xc50] sm:$0xff] %v5421
    %5486 = vst [vmem:[#allocation4 + $0xc98] sm:$0xff] %v5422
    %5487 = vst [vmem:[#allocation4 + $0xce0] sm:$0xff] %v5423
    %5488 = vst [vmem:[#allocation4 + $0xd28] sm:$0xff] %v5424
    %5489 = vst [vmem:[#allocation4 + $0xd70] sm:$0xff] %v5425
    %5490 = vst [vmem:[#allocation4 + $0xdb8] sm:$0xff] %v5426
    %5491 = vst [vmem:[#allocation4 + $0xe00] sm:$0xff] %v5427
    %5492 = vst [vmem:[#allocation4 + $0xe48] sm:$0xff] %v5428
    %5493 = vst [vmem:[#allocation4 + $0xe90] sm:$0xff] %v5429
    %5494 = vst [vmem:[#allocation4 + $0xed8] sm:$0xff] %v5430
    %5495 = vst [vmem:[#allocation4 + $0xf20] sm:$0xff] %v5431
    %5496 = vst [vmem:[#allocation4 + $0xf68] sm:$0xff] %v5432
    %5497 = vst [vmem:[#allocation4 + $0xfb0] sm:$0xff] %v5433
    %5498 = vst [vmem:[#allocation4 + $0xff8] sm:$0xff] %v5434
    %5499 = vst [vmem:[#allocation4 + $0x1040] sm:$0xff] %v5435
    %5500 = vst [vmem:[#allocation4 + $0x1088] sm:$0xff] %v5436
    %5501 = vst [vmem:[#allocation4 + $0x10d0] sm:$0xff] %v5437
    %5502 = vst [vmem:[#allocation4 + $0x1118] sm:$0xff] %v5438
    %5503 = vst [vmem:[#allocation4 + $0x1160] sm:$0xff] %v5439
    %5504 = vst [vmem:[#allocation4 + $0x11a8] sm:$0xff] %v5440
    %5505 = vst [vmem:[#allocation4 + $0x11f0] sm:$0xff] %v5441
    %v5506 = vld [vmem:[%s5249 + $0x2] sm:$0xff]
    %v5507 = vld [vmem:[%s5249 + $0xa] sm:$0xff]
    %v5508 = vld [vmem:[%s5249 + $0x1a] sm:$0xff]
    %v5509 = vld [vmem:[%s5249 + $0x22] sm:$0xff]
    %v5510 = vld [vmem:[%s5249 + $0x32] sm:$0xff]
    %v5511 = vld [vmem:[%s5249 + $0x3a] sm:$0xff]
    %v5512 = vld [vmem:[%s5249 + $0x4a] sm:$0xff]
    %v5513 = vld [vmem:[%s5249 + $0x52] sm:$0xff]
    %v5514 = vld [vmem:[%s5249 + $0x62] sm:$0xff]
    %v5515 = vld [vmem:[%s5249 + $0x6a] sm:$0xff]
    %v5516 = vld [vmem:[%s5249 + $0x7a] sm:$0xff]
    %v5517 = vld [vmem:[%s5249 + $0x82] sm:$0xff]
    %v5518 = vld [vmem:[%s5249 + $0x92] sm:$0xff]
    %v5519 = vld [vmem:[%s5249 + $0x9a] sm:$0xff]
    %v5520 = vld [vmem:[%s5249 + $0xaa] sm:$0xff]
    %v5521 = vld [vmem:[%s5249 + $0xb2] sm:$0xff]
    %v5522 = vld [vmem:[%s5249 + $0xc2] sm:$0xff]
    %v5523 = vld [vmem:[%s5249 + $0xca] sm:$0xff]
    %v5524 = vld [vmem:[%s5249 + $0xda] sm:$0xff]
    %v5525 = vld [vmem:[%s5249 + $0xe2] sm:$0xff]
    %v5526 = vld [vmem:[%s5249 + $0xf2] sm:$0xff]
    %v5527 = vld [vmem:[%s5249 + $0xfa] sm:$0xff]
    %v5528 = vld [vmem:[%s5249 + $0x10a] sm:$0xff]
    %v5529 = vld [vmem:[%s5249 + $0x112] sm:$0xff]
    %v5530 = vld [vmem:[%s5249 + $0x122] sm:$0xff]
    %v5531 = vld [vmem:[%s5249 + $0x12a] sm:$0xff]
    %v5532 = vld [vmem:[%s5249 + $0x13a] sm:$0xff]
    %v5533 = vld [vmem:[%s5249 + $0x142] sm:$0xff]
    %v5534 = vld [vmem:[%s5249 + $0x152] sm:$0xff]
    %v5535 = vld [vmem:[%s5249 + $0x15a] sm:$0xff]
    %v5536 = vld [vmem:[%s5249 + $0x16a] sm:$0xff]
    %v5537 = vld [vmem:[%s5249 + $0x172] sm:$0xff]
    %v5538 = vld [vmem:[%s5249 + $0x1b2] sm:$0xff]
    %v5539 = vld [vmem:[%s5249 + $0x1ba] sm:$0xff]
    %v5540 = vld [vmem:[%s5249 + $0x1ca] sm:$0xff]
    %v5541 = vld [vmem:[%s5249 + $0x1d2] sm:$0xff]
    %v5542 = vld [vmem:[%s5249 + $0x1e2] sm:$0xff]
    %v5543 = vld [vmem:[%s5249 + $0x1ea] sm:$0xff]
    %v5544 = vld [vmem:[%s5249 + $0x1fa] sm:$0xff]
    %v5545 = vld [vmem:[%s5249 + $0x202] sm:$0xff]
    %v5546 = vld [vmem:[%s5249 + $0x212] sm:$0xff]
    %v5547 = vld [vmem:[%s5249 + $0x21a] sm:$0xff]
    %v5548 = vld [vmem:[%s5249 + $0x22a] sm:$0xff]
    %v5549 = vld [vmem:[%s5249 + $0x232] sm:$0xff]
    %v5550 = vld [vmem:[%s5249 + $0x242] sm:$0xff]
    %v5551 = vld [vmem:[%s5249 + $0x24a] sm:$0xff]
    %v5552 = vld [vmem:[%s5249 + $0x25a] sm:$0xff]
    %v5553 = vld [vmem:[%s5249 + $0x262] sm:$0xff]
    %v5554 = vld [vmem:[%s5249 + $0x272] sm:$0xff]
    %v5555 = vld [vmem:[%s5249 + $0x27a] sm:$0xff]
    %v5556 = vld [vmem:[%s5249 + $0x28a] sm:$0xff]
    %v5557 = vld [vmem:[%s5249 + $0x292] sm:$0xff]
    %v5558 = vld [vmem:[%s5249 + $0x2a2] sm:$0xff]
    %v5559 = vld [vmem:[%s5249 + $0x2aa] sm:$0xff]
    %v5560 = vld [vmem:[%s5249 + $0x2ba] sm:$0xff]
    %v5561 = vld [vmem:[%s5249 + $0x2c2] sm:$0xff]
    %v5562 = vld [vmem:[%s5249 + $0x2d2] sm:$0xff]
    %v5563 = vld [vmem:[%s5249 + $0x2da] sm:$0xff]
    %v5564 = vld [vmem:[%s5249 + $0x2ea] sm:$0xff]
    %v5565 = vld [vmem:[%s5249 + $0x2f2] sm:$0xff]
    %v5566 = vld [vmem:[%s5249 + $0x302] sm:$0xff]
    %v5567 = vld [vmem:[%s5249 + $0x30a] sm:$0xff]
    %v5568 = vld [vmem:[%s5249 + $0x31a] sm:$0xff]
    %v5569 = vld [vmem:[%s5249 + $0x322] sm:$0xff]
    %5570 = vst [vmem:[#allocation4 + $0x40] sm:$0xff] %v5506
    %5571 = vst [vmem:[#allocation4 + $0x88] sm:$0xff] %v5507
    %5572 = vst [vmem:[#allocation4 + $0xd0] sm:$0xff] %v5508
    %5573 = vst [vmem:[#allocation4 + $0x118] sm:$0xff] %v5509
    %5574 = vst [vmem:[#allocation4 + $0x160] sm:$0xff] %v5510
    %5575 = vst [vmem:[#allocation4 + $0x1a8] sm:$0xff] %v5511
    %5576 = vst [vmem:[#allocation4 + $0x1f0] sm:$0xff] %v5512
    %5577 = vst [vmem:[#allocation4 + $0x238] sm:$0xff] %v5513
    %5578 = vst [vmem:[#allocation4 + $0x280] sm:$0xff] %v5514
    %5579 = vst [vmem:[#allocation4 + $0x2c8] sm:$0xff] %v5515
    %5580 = vst [vmem:[#allocation4 + $0x310] sm:$0xff] %v5516
    %5581 = vst [vmem:[#allocation4 + $0x358] sm:$0xff] %v5517
    %5582 = vst [vmem:[#allocation4 + $0x3a0] sm:$0xff] %v5518
    %5583 = vst [vmem:[#allocation4 + $0x3e8] sm:$0xff] %v5519
    %5584 = vst [vmem:[#allocation4 + $0x430] sm:$0xff] %v5520
    %5585 = vst [vmem:[#allocation4 + $0x478] sm:$0xff] %v5521
    %5586 = vst [vmem:[#allocation4 + $0x4c0] sm:$0xff] %v5522
    %5587 = vst [vmem:[#allocation4 + $0x508] sm:$0xff] %v5523
    %5588 = vst [vmem:[#allocation4 + $0x550] sm:$0xff] %v5524
    %5589 = vst [vmem:[#allocation4 + $0x598] sm:$0xff] %v5525
    %5590 = vst [vmem:[#allocation4 + $0x5e0] sm:$0xff] %v5526
    %5591 = vst [vmem:[#allocation4 + $0x628] sm:$0xff] %v5527
    %5592 = vst [vmem:[#allocation4 + $0x670] sm:$0xff] %v5528
    %5593 = vst [vmem:[#allocation4 + $0x6b8] sm:$0xff] %v5529
    %5594 = vst [vmem:[#allocation4 + $0x700] sm:$0xff] %v5530
    %5595 = vst [vmem:[#allocation4 + $0x748] sm:$0xff] %v5531
    %5596 = vst [vmem:[#allocation4 + $0x790] sm:$0xff] %v5532
    %5597 = vst [vmem:[#allocation4 + $0x7d8] sm:$0xff] %v5533
    %5598 = vst [vmem:[#allocation4 + $0x820] sm:$0xff] %v5534
    %5599 = vst [vmem:[#allocation4 + $0x868] sm:$0xff] %v5535
    %5600 = vst [vmem:[#allocation4 + $0x8b0] sm:$0xff] %v5536
    %5601 = vst [vmem:[#allocation4 + $0x8f8] sm:$0xff] %v5537
    %5602 = vst [vmem:[#allocation4 + $0x940] sm:$0xff] %v5538
    %5603 = vst [vmem:[#allocation4 + $0x988] sm:$0xff] %v5539
    %5604 = vst [vmem:[#allocation4 + $0x9d0] sm:$0xff] %v5540
    %5605 = vst [vmem:[#allocation4 + $0xa18] sm:$0xff] %v5541
    %5606 = vst [vmem:[#allocation4 + $0xa60] sm:$0xff] %v5542
    %5607 = vst [vmem:[#allocation4 + $0xaa8] sm:$0xff] %v5543
    %5608 = vst [vmem:[#allocation4 + $0xaf0] sm:$0xff] %v5544
    %5609 = vst [vmem:[#allocation4 + $0xb38] sm:$0xff] %v5545
    %5610 = vst [vmem:[#allocation4 + $0xb80] sm:$0xff] %v5546
    %5611 = vst [vmem:[#allocation4 + $0xbc8] sm:$0xff] %v5547
    %5612 = vst [vmem:[#allocation4 + $0xc10] sm:$0xff] %v5548
    %5613 = vst [vmem:[#allocation4 + $0xc58] sm:$0xff] %v5549
    %5614 = vst [vmem:[#allocation4 + $0xca0] sm:$0xff] %v5550
    %5615 = vst [vmem:[#allocation4 + $0xce8] sm:$0xff] %v5551
    %5616 = vst [vmem:[#allocation4 + $0xd30] sm:$0xff] %v5552
    %5617 = vst [vmem:[#allocation4 + $0xd78] sm:$0xff] %v5553
    %5618 = vst [vmem:[#allocation4 + $0xdc0] sm:$0xff] %v5554
    %5619 = vst [vmem:[#allocation4 + $0xe08] sm:$0xff] %v5555
    %5620 = vst [vmem:[#allocation4 + $0xe50] sm:$0xff] %v5556
    %5621 = vst [vmem:[#allocation4 + $0xe98] sm:$0xff] %v5557
    %5622 = vst [vmem:[#allocation4 + $0xee0] sm:$0xff] %v5558
    %5623 = vst [vmem:[#allocation4 + $0xf28] sm:$0xff] %v5559
    %5624 = vst [vmem:[#allocation4 + $0xf70] sm:$0xff] %v5560
    %5625 = vst [vmem:[#allocation4 + $0xfb8] sm:$0xff] %v5561
    %5626 = vst [vmem:[#allocation4 + $0x1000] sm:$0xff] %v5562
    %5627 = vst [vmem:[#allocation4 + $0x1048] sm:$0xff] %v5563
    %5628 = vst [vmem:[#allocation4 + $0x1090] sm:$0xff] %v5564
    %5629 = vst [vmem:[#allocation4 + $0x10d8] sm:$0xff] %v5565
    %5630 = vst [vmem:[#allocation4 + $0x1120] sm:$0xff] %v5566
    %5631 = vst [vmem:[#allocation4 + $0x1168] sm:$0xff] %v5567
    %5632 = vst [vmem:[#allocation4 + $0x11b0] sm:$0xff] %v5568
    %5633 = vst [vmem:[#allocation4 + $0x11f8] sm:$0xff] %v5569
    %v5634 = vld [vmem:[#allocation4] sm:$0xff]
    %v5635 = vld [vmem:[#allocation4 + $0x8] sm:$0xff]
    %v5636 = vld [vmem:[#allocation4 + $0x10] sm:$0xff]
    %v5637 = vld [vmem:[#allocation4 + $0x18] sm:$0xff]
    %v5638 = vld [vmem:[#allocation4 + $0x20] sm:$0xff]
    %v5639 = vld [vmem:[#allocation4 + $0x28] sm:$0xff]
    %v5640 = vld [vmem:[#allocation4 + $0x30] sm:$0xff]
    %v5641 = vld [vmem:[#allocation4 + $0x38] sm:$0xff]
    %v5642 = vld [vmem:[#allocation4 + $0x40] sm:$0xff]
    %v5643 = vld [vmem:[#allocation4 + $0x48] sm:$0xff]
    %v5644 = vld [vmem:[#allocation4 + $0x50] sm:$0xff]
    %v5645 = vld [vmem:[#allocation4 + $0x58] sm:$0xff]
    %v5646 = vld [vmem:[#allocation4 + $0x60] sm:$0xff]
    %v5647 = vld [vmem:[#allocation4 + $0x68] sm:$0xff]
    %v5648 = vld [vmem:[#allocation4 + $0x70] sm:$0xff]
    %v5649 = vld [vmem:[#allocation4 + $0x78] sm:$0xff]
    %v5650 = vld [vmem:[#allocation4 + $0x80] sm:$0xff]
    %v5651 = vld [vmem:[#allocation4 + $0x88] sm:$0xff]
    %v5652 = vld [vmem:[#allocation4 + $0x90] sm:$0xff]
    %v5653 = vld [vmem:[#allocation4 + $0x98] sm:$0xff]
    %v5654 = vld [vmem:[#allocation4 + $0xa0] sm:$0xff]
    %v5655 = vld [vmem:[#allocation4 + $0xa8] sm:$0xff]
    %v5656 = vld [vmem:[#allocation4 + $0xb0] sm:$0xff]
    %v5657 = vld [vmem:[#allocation4 + $0xb8] sm:$0xff]
    %v5658 = vld [vmem:[#allocation4 + $0xc0] sm:$0xff]
    %v5659 = vld [vmem:[#allocation4 + $0xc8] sm:$0xff]
    %v5660 = vld [vmem:[#allocation4 + $0xd0] sm:$0xff]
    %v5661 = vld [vmem:[#allocation4 + $0xd8] sm:$0xff]
    %v5662 = vld [vmem:[#allocation4 + $0xe0] sm:$0xff]
    %v5663 = vld [vmem:[#allocation4 + $0xe8] sm:$0xff]
    %v5664 = vld [vmem:[#allocation4 + $0xf0] sm:$0xff]
    %v5665 = vld [vmem:[#allocation4 + $0xf8] sm:$0xff]
    %v5666 = vld [vmem:[#allocation4 + $0x100] sm:$0xff]
    %v5667 = vld [vmem:[#allocation4 + $0x108] sm:$0xff]
    %v5668 = vld [vmem:[#allocation4 + $0x110] sm:$0xff]
    %v5669 = vld [vmem:[#allocation4 + $0x118] sm:$0xff]
    %v5670 = vld [vmem:[#allocation4 + $0x120] sm:$0xff]
    %v5671 = vld [vmem:[#allocation4 + $0x128] sm:$0xff]
    %v5672 = vld [vmem:[#allocation4 + $0x130] sm:$0xff]
    %v5673 = vld [vmem:[#allocation4 + $0x138] sm:$0xff]
    %v5674 = vld [vmem:[#allocation4 + $0x140] sm:$0xff]
    %v5675 = vld [vmem:[#allocation4 + $0x148] sm:$0xff]
    %v5676 = vld [vmem:[#allocation4 + $0x150] sm:$0xff]
    %v5677 = vld [vmem:[#allocation4 + $0x158] sm:$0xff]
    %v5678 = vld [vmem:[#allocation4 + $0x160] sm:$0xff]
    %v5679 = vld [vmem:[#allocation4 + $0x168] sm:$0xff]
    %v5680 = vld [vmem:[#allocation4 + $0x170] sm:$0xff]
    %v5681 = vld [vmem:[#allocation4 + $0x178] sm:$0xff]
    %v5682 = vld [vmem:[#allocation4 + $0x180] sm:$0xff]
    %v5683 = vld [vmem:[#allocation4 + $0x188] sm:$0xff]
    %v5684 = vld [vmem:[#allocation4 + $0x190] sm:$0xff]
    %v5685 = vld [vmem:[#allocation4 + $0x198] sm:$0xff]
    %v5686 = vld [vmem:[#allocation4 + $0x1a0] sm:$0xff]
    %v5687 = vld [vmem:[#allocation4 + $0x1a8] sm:$0xff]
    %v5688 = vld [vmem:[#allocation4 + $0x1b0] sm:$0xff]
    %v5689 = vld [vmem:[#allocation4 + $0x1b8] sm:$0xff]
    %v5690 = vld [vmem:[#allocation4 + $0x1c0] sm:$0xff]
    %v5691 = vld [vmem:[#allocation4 + $0x1c8] sm:$0xff]
    %v5692 = vld [vmem:[#allocation4 + $0x1d0] sm:$0xff]
    %v5693 = vld [vmem:[#allocation4 + $0x1d8] sm:$0xff]
    %v5694 = vld [vmem:[#allocation4 + $0x1e0] sm:$0xff]
    %v5695 = vld [vmem:[#allocation4 + $0x1e8] sm:$0xff]
    %v5696 = vld [vmem:[#allocation4 + $0x1f0] sm:$0xff]
    %v5697 = vld [vmem:[#allocation4 + $0x1f8] sm:$0xff]
    %v5698 = vld [vmem:[#allocation4 + $0x200] sm:$0xff]
    %v5699 = vld [vmem:[#allocation4 + $0x208] sm:$0xff]
    %v5700 = vld [vmem:[#allocation4 + $0x210] sm:$0xff]
    %v5701 = vld [vmem:[#allocation4 + $0x218] sm:$0xff]
    %v5702 = vld [vmem:[#allocation4 + $0x220] sm:$0xff]
    %v5703 = vld [vmem:[#allocation4 + $0x228] sm:$0xff]
    %v5704 = vld [vmem:[#allocation4 + $0x230] sm:$0xff]
    %v5705 = vld [vmem:[#allocation4 + $0x238] sm:$0xff]
    %v5706 = vld [vmem:[#allocation4 + $0x240] sm:$0xff]
    %v5707 = vld [vmem:[#allocation4 + $0x248] sm:$0xff]
    %v5708 = vld [vmem:[#allocation4 + $0x250] sm:$0xff]
    %v5709 = vld [vmem:[#allocation4 + $0x258] sm:$0xff]
    %v5710 = vld [vmem:[#allocation4 + $0x260] sm:$0xff]
    %v5711 = vld [vmem:[#allocation4 + $0x268] sm:$0xff]
    %v5712 = vld [vmem:[#allocation4 + $0x270] sm:$0xff]
    %v5713 = vld [vmem:[#allocation4 + $0x278] sm:$0xff]
    %v5714 = vld [vmem:[#allocation4 + $0x280] sm:$0xff]
    %v5715 = vld [vmem:[#allocation4 + $0x288] sm:$0xff]
    %v5716 = vld [vmem:[#allocation4 + $0x290] sm:$0xff]
    %v5717 = vld [vmem:[#allocation4 + $0x298] sm:$0xff]
    %v5718 = vld [vmem:[#allocation4 + $0x2a0] sm:$0xff]
    %v5719 = vld [vmem:[#allocation4 + $0x2a8] sm:$0xff]
    %v5720 = vld [vmem:[#allocation4 + $0x2b0] sm:$0xff]
    %v5721 = vld [vmem:[#allocation4 + $0x2b8] sm:$0xff]
    %v5722 = vld [vmem:[#allocation4 + $0x2c0] sm:$0xff]
    %v5723 = vld [vmem:[#allocation4 + $0x2c8] sm:$0xff]
    %v5724 = vld [vmem:[#allocation4 + $0x2d0] sm:$0xff]
    %v5725 = vld [vmem:[#allocation4 + $0x2d8] sm:$0xff]
    %v5726 = vld [vmem:[#allocation4 + $0x2e0] sm:$0xff]
    %v5727 = vld [vmem:[#allocation4 + $0x2e8] sm:$0xff]
    %v5728 = vld [vmem:[#allocation4 + $0x2f0] sm:$0xff]
    %v5729 = vld [vmem:[#allocation4 + $0x2f8] sm:$0xff]
    %v5730 = vld [vmem:[#allocation4 + $0x300] sm:$0xff]
    %v5731 = vld [vmem:[#allocation4 + $0x308] sm:$0xff]
    %v5732 = vld [vmem:[#allocation4 + $0x310] sm:$0xff]
    %v5733 = vld [vmem:[#allocation4 + $0x318] sm:$0xff]
    %v5734 = vld [vmem:[#allocation4 + $0x320] sm:$0xff]
    %v5735 = vld [vmem:[#allocation4 + $0x328] sm:$0xff]
    %v5736 = vld [vmem:[#allocation4 + $0x330] sm:$0xff]
    %v5737 = vld [vmem:[#allocation4 + $0x338] sm:$0xff]
    %v5738 = vld [vmem:[#allocation4 + $0x340] sm:$0xff]
    %v5739 = vld [vmem:[#allocation4 + $0x348] sm:$0xff]
    %v5740 = vld [vmem:[#allocation4 + $0x350] sm:$0xff]
    %v5741 = vld [vmem:[#allocation4 + $0x358] sm:$0xff]
    %v5742 = vld [vmem:[#allocation4 + $0x360] sm:$0xff]
    %v5743 = vld [vmem:[#allocation4 + $0x368] sm:$0xff]
    %v5744 = vld [vmem:[#allocation4 + $0x370] sm:$0xff]
    %v5745 = vld [vmem:[#allocation4 + $0x378] sm:$0xff]
    %v5746 = vld [vmem:[#allocation4 + $0x380] sm:$0xff]
    %v5747 = vld [vmem:[#allocation4 + $0x388] sm:$0xff]
    %v5748 = vld [vmem:[#allocation4 + $0x390] sm:$0xff]
    %v5749 = vld [vmem:[#allocation4 + $0x398] sm:$0xff]
    %v5750 = vld [vmem:[#allocation4 + $0x3a0] sm:$0xff]
    %v5751 = vld [vmem:[#allocation4 + $0x3a8] sm:$0xff]
    %v5752 = vld [vmem:[#allocation4 + $0x3b0] sm:$0xff]
    %v5753 = vld [vmem:[#allocation4 + $0x3b8] sm:$0xff]
    %v5754 = vld [vmem:[#allocation4 + $0x3c0] sm:$0xff]
    %v5755 = vld [vmem:[#allocation4 + $0x3c8] sm:$0xff]
    %v5756 = vld [vmem:[#allocation4 + $0x3d0] sm:$0xff]
    %v5757 = vld [vmem:[#allocation4 + $0x3d8] sm:$0xff]
    %v5758 = vld [vmem:[#allocation4 + $0x3e0] sm:$0xff]
    %v5759 = vld [vmem:[#allocation4 + $0x3e8] sm:$0xff]
    %v5760 = vld [vmem:[#allocation4 + $0x3f0] sm:$0xff]
    %v5761 = vld [vmem:[#allocation4 + $0x3f8] sm:$0xff]
    %v5762 = vld [vmem:[#allocation4 + $0x400] sm:$0xff]
    %v5763 = vld [vmem:[#allocation4 + $0x408] sm:$0xff]
    %v5764 = vld [vmem:[#allocation4 + $0x410] sm:$0xff]
    %v5765 = vld [vmem:[#allocation4 + $0x418] sm:$0xff]
    %v5766 = vld [vmem:[#allocation4 + $0x420] sm:$0xff]
    %v5767 = vld [vmem:[#allocation4 + $0x428] sm:$0xff]
    %v5768 = vld [vmem:[#allocation4 + $0x430] sm:$0xff]
    %v5769 = vld [vmem:[#allocation4 + $0x438] sm:$0xff]
    %v5770 = vld [vmem:[#allocation4 + $0x440] sm:$0xff]
    %v5771 = vld [vmem:[#allocation4 + $0x448] sm:$0xff]
    %v5772 = vld [vmem:[#allocation4 + $0x450] sm:$0xff]
    %v5773 = vld [vmem:[#allocation4 + $0x458] sm:$0xff]
    %v5774 = vld [vmem:[#allocation4 + $0x460] sm:$0xff]
    %v5775 = vld [vmem:[#allocation4 + $0x468] sm:$0xff]
    %v5776 = vld [vmem:[#allocation4 + $0x470] sm:$0xff]
    %v5777 = vld [vmem:[#allocation4 + $0x478] sm:$0xff]
    %v5778 = vld [vmem:[#allocation4 + $0x480] sm:$0xff]
    %v5779 = vld [vmem:[#allocation4 + $0x488] sm:$0xff]
    %v5780 = vld [vmem:[#allocation4 + $0x490] sm:$0xff]
    %v5781 = vld [vmem:[#allocation4 + $0x498] sm:$0xff]
    %v5782 = vld [vmem:[#allocation4 + $0x4a0] sm:$0xff]
    %v5783 = vld [vmem:[#allocation4 + $0x4a8] sm:$0xff]
    %v5784 = vld [vmem:[#allocation4 + $0x4b0] sm:$0xff]
    %v5785 = vld [vmem:[#allocation4 + $0x4b8] sm:$0xff]
    %v5786 = vld [vmem:[#allocation4 + $0x4c0] sm:$0xff]
    %v5787 = vld [vmem:[#allocation4 + $0x4c8] sm:$0xff]
    %v5788 = vld [vmem:[#allocation4 + $0x4d0] sm:$0xff]
    %v5789 = vld [vmem:[#allocation4 + $0x4d8] sm:$0xff]
    %v5790 = vld [vmem:[#allocation4 + $0x4e0] sm:$0xff]
    %v5791 = vld [vmem:[#allocation4 + $0x4e8] sm:$0xff]
    %v5792 = vld [vmem:[#allocation4 + $0x4f0] sm:$0xff]
    %v5793 = vld [vmem:[#allocation4 + $0x4f8] sm:$0xff]
    %v5794 = vld [vmem:[#allocation4 + $0x500] sm:$0xff]
    %v5795 = vld [vmem:[#allocation4 + $0x508] sm:$0xff]
    %v5796 = vld [vmem:[#allocation4 + $0x510] sm:$0xff]
    %v5797 = vld [vmem:[#allocation4 + $0x518] sm:$0xff]
    %v5798 = vld [vmem:[#allocation4 + $0x520] sm:$0xff]
    %v5799 = vld [vmem:[#allocation4 + $0x528] sm:$0xff]
    %v5800 = vld [vmem:[#allocation4 + $0x530] sm:$0xff]
    %v5801 = vld [vmem:[#allocation4 + $0x538] sm:$0xff]
    %v5802 = vld [vmem:[#allocation4 + $0x540] sm:$0xff]
    %v5803 = vld [vmem:[#allocation4 + $0x548] sm:$0xff]
    %v5804 = vld [vmem:[#allocation4 + $0x550] sm:$0xff]
    %v5805 = vld [vmem:[#allocation4 + $0x558] sm:$0xff]
    %v5806 = vld [vmem:[#allocation4 + $0x560] sm:$0xff]
    %v5807 = vld [vmem:[#allocation4 + $0x568] sm:$0xff]
    %v5808 = vld [vmem:[#allocation4 + $0x570] sm:$0xff]
    %v5809 = vld [vmem:[#allocation4 + $0x578] sm:$0xff]
    %v5810 = vld [vmem:[#allocation4 + $0x580] sm:$0xff]
    %v5811 = vld [vmem:[#allocation4 + $0x588] sm:$0xff]
    %v5812 = vld [vmem:[#allocation4 + $0x590] sm:$0xff]
    %v5813 = vld [vmem:[#allocation4 + $0x598] sm:$0xff]
    %v5814 = vld [vmem:[#allocation4 + $0x5a0] sm:$0xff]
    %v5815 = vld [vmem:[#allocation4 + $0x5a8] sm:$0xff]
    %v5816 = vld [vmem:[#allocation4 + $0x5b0] sm:$0xff]
    %v5817 = vld [vmem:[#allocation4 + $0x5b8] sm:$0xff]
    %v5818 = vld [vmem:[#allocation4 + $0x5c0] sm:$0xff]
    %v5819 = vld [vmem:[#allocation4 + $0x5c8] sm:$0xff]
    %v5820 = vld [vmem:[#allocation4 + $0x5d0] sm:$0xff]
    %v5821 = vld [vmem:[#allocation4 + $0x5d8] sm:$0xff]
    %v5822 = vld [vmem:[#allocation4 + $0x5e0] sm:$0xff]
    %v5823 = vld [vmem:[#allocation4 + $0x5e8] sm:$0xff]
    %v5824 = vld [vmem:[#allocation4 + $0x5f0] sm:$0xff]
    %v5825 = vld [vmem:[#allocation4 + $0x5f8] sm:$0xff]
    %v5826 = vld [vmem:[#allocation4 + $0x600] sm:$0xff]
    %v5827 = vld [vmem:[#allocation4 + $0x608] sm:$0xff]
    %v5828 = vld [vmem:[#allocation4 + $0x610] sm:$0xff]
    %v5829 = vld [vmem:[#allocation4 + $0x618] sm:$0xff]
    %v5830 = vld [vmem:[#allocation4 + $0x620] sm:$0xff]
    %v5831 = vld [vmem:[#allocation4 + $0x628] sm:$0xff]
    %v5832 = vld [vmem:[#allocation4 + $0x630] sm:$0xff]
    %v5833 = vld [vmem:[#allocation4 + $0x638] sm:$0xff]
    %v5834 = vld [vmem:[#allocation4 + $0x640] sm:$0xff]
    %v5835 = vld [vmem:[#allocation4 + $0x648] sm:$0xff]
    %v5836 = vld [vmem:[#allocation4 + $0x650] sm:$0xff]
    %v5837 = vld [vmem:[#allocation4 + $0x658] sm:$0xff]
    %v5838 = vld [vmem:[#allocation4 + $0x660] sm:$0xff]
    %v5839 = vld [vmem:[#allocation4 + $0x668] sm:$0xff]
    %v5840 = vld [vmem:[#allocation4 + $0x670] sm:$0xff]
    %v5841 = vld [vmem:[#allocation4 + $0x678] sm:$0xff]
    %v5842 = vld [vmem:[#allocation4 + $0x680] sm:$0xff]
    %v5843 = vld [vmem:[#allocation4 + $0x688] sm:$0xff]
    %v5844 = vld [vmem:[#allocation4 + $0x690] sm:$0xff]
    %v5845 = vld [vmem:[#allocation4 + $0x698] sm:$0xff]
    %v5846 = vld [vmem:[#allocation4 + $0x6a0] sm:$0xff]
    %v5847 = vld [vmem:[#allocation4 + $0x6a8] sm:$0xff]
    %v5848 = vld [vmem:[#allocation4 + $0x6b0] sm:$0xff]
    %v5849 = vld [vmem:[#allocation4 + $0x6b8] sm:$0xff]
    %v5850 = vld [vmem:[#allocation4 + $0x6c0] sm:$0xff]
    %v5851 = vld [vmem:[#allocation4 + $0x6c8] sm:$0xff]
    %v5852 = vld [vmem:[#allocation4 + $0x6d0] sm:$0xff]
    %v5853 = vld [vmem:[#allocation4 + $0x6d8] sm:$0xff]
    %v5854 = vld [vmem:[#allocation4 + $0x6e0] sm:$0xff]
    %v5855 = vld [vmem:[#allocation4 + $0x6e8] sm:$0xff]
    %v5856 = vld [vmem:[#allocation4 + $0x6f0] sm:$0xff]
    %v5857 = vld [vmem:[#allocation4 + $0x6f8] sm:$0xff]
    %v5858 = vld [vmem:[#allocation4 + $0x700] sm:$0xff]
    %v5859 = vld [vmem:[#allocation4 + $0x708] sm:$0xff]
    %v5860 = vld [vmem:[#allocation4 + $0x710] sm:$0xff]
    %v5861 = vld [vmem:[#allocation4 + $0x718] sm:$0xff]
    %v5862 = vld [vmem:[#allocation4 + $0x720] sm:$0xff]
    %v5863 = vld [vmem:[#allocation4 + $0x728] sm:$0xff]
    %v5864 = vld [vmem:[#allocation4 + $0x730] sm:$0xff]
    %v5865 = vld [vmem:[#allocation4 + $0x738] sm:$0xff]
    %v5866 = vld [vmem:[#allocation4 + $0x740] sm:$0xff]
    %v5867 = vld [vmem:[#allocation4 + $0x748] sm:$0xff]
    %v5868 = vld [vmem:[#allocation4 + $0x750] sm:$0xff]
    %v5869 = vld [vmem:[#allocation4 + $0x758] sm:$0xff]
    %v5870 = vld [vmem:[#allocation4 + $0x760] sm:$0xff]
    %v5871 = vld [vmem:[#allocation4 + $0x768] sm:$0xff]
    %v5872 = vld [vmem:[#allocation4 + $0x770] sm:$0xff]
    %v5873 = vld [vmem:[#allocation4 + $0x778] sm:$0xff]
    %v5874 = vld [vmem:[#allocation4 + $0x780] sm:$0xff]
    %v5875 = vld [vmem:[#allocation4 + $0x788] sm:$0xff]
    %v5876 = vld [vmem:[#allocation4 + $0x790] sm:$0xff]
    %v5877 = vld [vmem:[#allocation4 + $0x798] sm:$0xff]
    %v5878 = vld [vmem:[#allocation4 + $0x7a0] sm:$0xff]
    %v5879 = vld [vmem:[#allocation4 + $0x7a8] sm:$0xff]
    %v5880 = vld [vmem:[#allocation4 + $0x7b0] sm:$0xff]
    %v5881 = vld [vmem:[#allocation4 + $0x7b8] sm:$0xff]
    %v5882 = vld [vmem:[#allocation4 + $0x7c0] sm:$0xff]
    %v5883 = vld [vmem:[#allocation4 + $0x7c8] sm:$0xff]
    %v5884 = vld [vmem:[#allocation4 + $0x7d0] sm:$0xff]
    %v5885 = vld [vmem:[#allocation4 + $0x7d8] sm:$0xff]
    %v5886 = vld [vmem:[#allocation4 + $0x7e0] sm:$0xff]
    %v5887 = vld [vmem:[#allocation4 + $0x7e8] sm:$0xff]
    %v5888 = vld [vmem:[#allocation4 + $0x7f0] sm:$0xff]
    %v5889 = vld [vmem:[#allocation4 + $0x7f8] sm:$0xff]
    %v5890 = vld [vmem:[#allocation4 + $0x800] sm:$0xff]
    %v5891 = vld [vmem:[#allocation4 + $0x808] sm:$0xff]
    %v5892 = vld [vmem:[#allocation4 + $0x810] sm:$0xff]
    %v5893 = vld [vmem:[#allocation4 + $0x818] sm:$0xff]
    %v5894 = vld [vmem:[#allocation4 + $0x820] sm:$0xff]
    %v5895 = vld [vmem:[#allocation4 + $0x828] sm:$0xff]
    %v5896 = vld [vmem:[#allocation4 + $0x830] sm:$0xff]
    %v5897 = vld [vmem:[#allocation4 + $0x838] sm:$0xff]
    %v5898 = vld [vmem:[#allocation4 + $0x840] sm:$0xff]
    %v5899 = vld [vmem:[#allocation4 + $0x848] sm:$0xff]
    %v5900 = vld [vmem:[#allocation4 + $0x850] sm:$0xff]
    %v5901 = vld [vmem:[#allocation4 + $0x858] sm:$0xff]
    %v5902 = vld [vmem:[#allocation4 + $0x860] sm:$0xff]
    %v5903 = vld [vmem:[#allocation4 + $0x868] sm:$0xff]
    %v5904 = vld [vmem:[#allocation4 + $0x870] sm:$0xff]
    %v5905 = vld [vmem:[#allocation4 + $0x878] sm:$0xff]
    %v5906 = vld [vmem:[#allocation4 + $0x880] sm:$0xff]
    %v5907 = vld [vmem:[#allocation4 + $0x888] sm:$0xff]
    %v5908 = vld [vmem:[#allocation4 + $0x890] sm:$0xff]
    %v5909 = vld [vmem:[#allocation4 + $0x898] sm:$0xff]
    %v5910 = vld [vmem:[#allocation4 + $0x8a0] sm:$0xff]
    %v5911 = vld [vmem:[#allocation4 + $0x8a8] sm:$0xff]
    %v5912 = vld [vmem:[#allocation4 + $0x8b0] sm:$0xff]
    %v5913 = vld [vmem:[#allocation4 + $0x8b8] sm:$0xff]
    %v5914 = vld [vmem:[#allocation4 + $0x8c0] sm:$0xff]
    %v5915 = vld [vmem:[#allocation4 + $0x8c8] sm:$0xff]
    %v5916 = vld [vmem:[#allocation4 + $0x8d0] sm:$0xff]
    %v5917 = vld [vmem:[#allocation4 + $0x8d8] sm:$0xff]
    %v5918 = vld [vmem:[#allocation4 + $0x8e0] sm:$0xff]
    %v5919 = vld [vmem:[#allocation4 + $0x8e8] sm:$0xff]
    %v5920 = vld [vmem:[#allocation4 + $0x8f0] sm:$0xff]
    %v5921 = vld [vmem:[#allocation4 + $0x8f8] sm:$0xff]
    %v5922 = vld [vmem:[#allocation4 + $0x900] sm:$0xff]
    %v5923 = vld [vmem:[#allocation4 + $0x908] sm:$0xff]
    %v5924 = vld [vmem:[#allocation4 + $0x910] sm:$0xff]
    %v5925 = vld [vmem:[#allocation4 + $0x918] sm:$0xff]
    %v5926 = vld [vmem:[#allocation4 + $0x920] sm:$0xff]
    %v5927 = vld [vmem:[#allocation4 + $0x928] sm:$0xff]
    %v5928 = vld [vmem:[#allocation4 + $0x930] sm:$0xff]
    %v5929 = vld [vmem:[#allocation4 + $0x938] sm:$0xff]
    %v5930 = vld [vmem:[#allocation4 + $0x940] sm:$0xff]
    %v5931 = vld [vmem:[#allocation4 + $0x948] sm:$0xff]
    %v5932 = vld [vmem:[#allocation4 + $0x950] sm:$0xff]
    %v5933 = vld [vmem:[#allocation4 + $0x958] sm:$0xff]
    %v5934 = vld [vmem:[#allocation4 + $0x960] sm:$0xff]
    %v5935 = vld [vmem:[#allocation4 + $0x968] sm:$0xff]
    %v5936 = vld [vmem:[#allocation4 + $0x970] sm:$0xff]
    %v5937 = vld [vmem:[#allocation4 + $0x978] sm:$0xff]
    %v5938 = vld [vmem:[#allocation4 + $0x980] sm:$0xff]
    %v5939 = vld [vmem:[#allocation4 + $0x988] sm:$0xff]
    %v5940 = vld [vmem:[#allocation4 + $0x990] sm:$0xff]
    %v5941 = vld [vmem:[#allocation4 + $0x998] sm:$0xff]
    %v5942 = vld [vmem:[#allocation4 + $0x9a0] sm:$0xff]
    %v5943 = vld [vmem:[#allocation4 + $0x9a8] sm:$0xff]
    %v5944 = vld [vmem:[#allocation4 + $0x9b0] sm:$0xff]
    %v5945 = vld [vmem:[#allocation4 + $0x9b8] sm:$0xff]
    %v5946 = vld [vmem:[#allocation4 + $0x9c0] sm:$0xff]
    %v5947 = vld [vmem:[#allocation4 + $0x9c8] sm:$0xff]
    %v5948 = vld [vmem:[#allocation4 + $0x9d0] sm:$0xff]
    %v5949 = vld [vmem:[#allocation4 + $0x9d8] sm:$0xff]
    %v5950 = vld [vmem:[#allocation4 + $0x9e0] sm:$0xff]
    %v5951 = vld [vmem:[#allocation4 + $0x9e8] sm:$0xff]
    %v5952 = vld [vmem:[#allocation4 + $0x9f0] sm:$0xff]
    %v5953 = vld [vmem:[#allocation4 + $0x9f8] sm:$0xff]
    %v5954 = vld [vmem:[#allocation4 + $0xa00] sm:$0xff]
    %v5955 = vld [vmem:[#allocation4 + $0xa08] sm:$0xff]
    %v5956 = vld [vmem:[#allocation4 + $0xa10] sm:$0xff]
    %v5957 = vld [vmem:[#allocation4 + $0xa18] sm:$0xff]
    %v5958 = vld [vmem:[#allocation4 + $0xa20] sm:$0xff]
    %v5959 = vld [vmem:[#allocation4 + $0xa28] sm:$0xff]
    %v5960 = vld [vmem:[#allocation4 + $0xa30] sm:$0xff]
    %v5961 = vld [vmem:[#allocation4 + $0xa38] sm:$0xff]
    %v5962 = vld [vmem:[#allocation4 + $0xa40] sm:$0xff]
    %v5963 = vld [vmem:[#allocation4 + $0xa48] sm:$0xff]
    %v5964 = vld [vmem:[#allocation4 + $0xa50] sm:$0xff]
    %v5965 = vld [vmem:[#allocation4 + $0xa58] sm:$0xff]
    %v5966 = vld [vmem:[#allocation4 + $0xa60] sm:$0xff]
    %v5967 = vld [vmem:[#allocation4 + $0xa68] sm:$0xff]
    %v5968 = vld [vmem:[#allocation4 + $0xa70] sm:$0xff]
    %v5969 = vld [vmem:[#allocation4 + $0xa78] sm:$0xff]
    %v5970 = vld [vmem:[#allocation4 + $0xa80] sm:$0xff]
    %v5971 = vld [vmem:[#allocation4 + $0xa88] sm:$0xff]
    %v5972 = vld [vmem:[#allocation4 + $0xa90] sm:$0xff]
    %v5973 = vld [vmem:[#allocation4 + $0xa98] sm:$0xff]
    %v5974 = vld [vmem:[#allocation4 + $0xaa0] sm:$0xff]
    %v5975 = vld [vmem:[#allocation4 + $0xaa8] sm:$0xff]
    %v5976 = vld [vmem:[#allocation4 + $0xab0] sm:$0xff]
    %v5977 = vld [vmem:[#allocation4 + $0xab8] sm:$0xff]
    %v5978 = vld [vmem:[#allocation4 + $0xac0] sm:$0xff]
    %v5979 = vld [vmem:[#allocation4 + $0xac8] sm:$0xff]
    %v5980 = vld [vmem:[#allocation4 + $0xad0] sm:$0xff]
    %v5981 = vld [vmem:[#allocation4 + $0xad8] sm:$0xff]
    %v5982 = vld [vmem:[#allocation4 + $0xae0] sm:$0xff]
    %v5983 = vld [vmem:[#allocation4 + $0xae8] sm:$0xff]
    %v5984 = vld [vmem:[#allocation4 + $0xaf0] sm:$0xff]
    %v5985 = vld [vmem:[#allocation4 + $0xaf8] sm:$0xff]
    %v5986 = vld [vmem:[#allocation4 + $0xb00] sm:$0xff]
    %v5987 = vld [vmem:[#allocation4 + $0xb08] sm:$0xff]
    %v5988 = vld [vmem:[#allocation4 + $0xb10] sm:$0xff]
    %v5989 = vld [vmem:[#allocation4 + $0xb18] sm:$0xff]
    %v5990 = vld [vmem:[#allocation4 + $0xb20] sm:$0xff]
    %v5991 = vld [vmem:[#allocation4 + $0xb28] sm:$0xff]
    %v5992 = vld [vmem:[#allocation4 + $0xb30] sm:$0xff]
    %v5993 = vld [vmem:[#allocation4 + $0xb38] sm:$0xff]
    %v5994 = vld [vmem:[#allocation4 + $0xb40] sm:$0xff]
    %v5995 = vld [vmem:[#allocation4 + $0xb48] sm:$0xff]
    %v5996 = vld [vmem:[#allocation4 + $0xb50] sm:$0xff]
    %v5997 = vld [vmem:[#allocation4 + $0xb58] sm:$0xff]
    %v5998 = vld [vmem:[#allocation4 + $0xb60] sm:$0xff]
    %v5999 = vld [vmem:[#allocation4 + $0xb68] sm:$0xff]
    %v6000 = vld [vmem:[#allocation4 + $0xb70] sm:$0xff]
    %v6001 = vld [vmem:[#allocation4 + $0xb78] sm:$0xff]
    %v6002 = vld [vmem:[#allocation4 + $0xb80] sm:$0xff]
    %v6003 = vld [vmem:[#allocation4 + $0xb88] sm:$0xff]
    %v6004 = vld [vmem:[#allocation4 + $0xb90] sm:$0xff]
    %v6005 = vld [vmem:[#allocation4 + $0xb98] sm:$0xff]
    %v6006 = vld [vmem:[#allocation4 + $0xba0] sm:$0xff]
    %v6007 = vld [vmem:[#allocation4 + $0xba8] sm:$0xff]
    %v6008 = vld [vmem:[#allocation4 + $0xbb0] sm:$0xff]
    %v6009 = vld [vmem:[#allocation4 + $0xbb8] sm:$0xff]
    %v6010 = vld [vmem:[#allocation4 + $0xbc0] sm:$0xff]
    %v6011 = vld [vmem:[#allocation4 + $0xbc8] sm:$0xff]
    %v6012 = vld [vmem:[#allocation4 + $0xbd0] sm:$0xff]
    %v6013 = vld [vmem:[#allocation4 + $0xbd8] sm:$0xff]
    %v6014 = vld [vmem:[#allocation4 + $0xbe0] sm:$0xff]
    %v6015 = vld [vmem:[#allocation4 + $0xbe8] sm:$0xff]
    %v6016 = vld [vmem:[#allocation4 + $0xbf0] sm:$0xff]
    %v6017 = vld [vmem:[#allocation4 + $0xbf8] sm:$0xff]
    %v6018 = vld [vmem:[#allocation4 + $0xc00] sm:$0xff]
    %v6019 = vld [vmem:[#allocation4 + $0xc08] sm:$0xff]
    %v6020 = vld [vmem:[#allocation4 + $0xc10] sm:$0xff]
    %v6021 = vld [vmem:[#allocation4 + $0xc18] sm:$0xff]
    %v6022 = vld [vmem:[#allocation4 + $0xc20] sm:$0xff]
    %v6023 = vld [vmem:[#allocation4 + $0xc28] sm:$0xff]
    %v6024 = vld [vmem:[#allocation4 + $0xc30] sm:$0xff]
    %v6025 = vld [vmem:[#allocation4 + $0xc38] sm:$0xff]
    %v6026 = vld [vmem:[#allocation4 + $0xc40] sm:$0xff]
    %v6027 = vld [vmem:[#allocation4 + $0xc48] sm:$0xff]
    %v6028 = vld [vmem:[#allocation4 + $0xc50] sm:$0xff]
    %v6029 = vld [vmem:[#allocation4 + $0xc58] sm:$0xff]
    %v6030 = vld [vmem:[#allocation4 + $0xc60] sm:$0xff]
    %v6031 = vld [vmem:[#allocation4 + $0xc68] sm:$0xff]
    %v6032 = vld [vmem:[#allocation4 + $0xc70] sm:$0xff]
    %v6033 = vld [vmem:[#allocation4 + $0xc78] sm:$0xff]
    %v6034 = vld [vmem:[#allocation4 + $0xc80] sm:$0xff]
    %v6035 = vld [vmem:[#allocation4 + $0xc88] sm:$0xff]
    %v6036 = vld [vmem:[#allocation4 + $0xc90] sm:$0xff]
    %v6037 = vld [vmem:[#allocation4 + $0xc98] sm:$0xff]
    %v6038 = vld [vmem:[#allocation4 + $0xca0] sm:$0xff]
    %v6039 = vld [vmem:[#allocation4 + $0xca8] sm:$0xff]
    %v6040 = vld [vmem:[#allocation4 + $0xcb0] sm:$0xff]
    %v6041 = vld [vmem:[#allocation4 + $0xcb8] sm:$0xff]
    %v6042 = vld [vmem:[#allocation4 + $0xcc0] sm:$0xff]
    %v6043 = vld [vmem:[#allocation4 + $0xcc8] sm:$0xff]
    %v6044 = vld [vmem:[#allocation4 + $0xcd0] sm:$0xff]
    %v6045 = vld [vmem:[#allocation4 + $0xcd8] sm:$0xff]
    %v6046 = vld [vmem:[#allocation4 + $0xce0] sm:$0xff]
    %v6047 = vld [vmem:[#allocation4 + $0xce8] sm:$0xff]
    %v6048 = vld [vmem:[#allocation4 + $0xcf0] sm:$0xff]
    %v6049 = vld [vmem:[#allocation4 + $0xcf8] sm:$0xff]
    %v6050 = vld [vmem:[#allocation4 + $0xd00] sm:$0xff]
    %v6051 = vld [vmem:[#allocation4 + $0xd08] sm:$0xff]
    %v6052 = vld [vmem:[#allocation4 + $0xd10] sm:$0xff]
    %v6053 = vld [vmem:[#allocation4 + $0xd18] sm:$0xff]
    %v6054 = vld [vmem:[#allocation4 + $0xd20] sm:$0xff]
    %v6055 = vld [vmem:[#allocation4 + $0xd28] sm:$0xff]
    %v6056 = vld [vmem:[#allocation4 + $0xd30] sm:$0xff]
    %v6057 = vld [vmem:[#allocation4 + $0xd38] sm:$0xff]
    %v6058 = vld [vmem:[#allocation4 + $0xd40] sm:$0xff]
    %v6059 = vld [vmem:[#allocation4 + $0xd48] sm:$0xff]
    %v6060 = vld [vmem:[#allocation4 + $0xd50] sm:$0xff]
    %v6061 = vld [vmem:[#allocation4 + $0xd58] sm:$0xff]
    %v6062 = vld [vmem:[#allocation4 + $0xd60] sm:$0xff]
    %v6063 = vld [vmem:[#allocation4 + $0xd68] sm:$0xff]
    %v6064 = vld [vmem:[#allocation4 + $0xd70] sm:$0xff]
    %v6065 = vld [vmem:[#allocation4 + $0xd78] sm:$0xff]
    %v6066 = vld [vmem:[#allocation4 + $0xd80] sm:$0xff]
    %v6067 = vld [vmem:[#allocation4 + $0xd88] sm:$0xff]
    %v6068 = vld [vmem:[#allocation4 + $0xd90] sm:$0xff]
    %v6069 = vld [vmem:[#allocation4 + $0xd98] sm:$0xff]
    %v6070 = vld [vmem:[#allocation4 + $0xda0] sm:$0xff]
    %v6071 = vld [vmem:[#allocation4 + $0xda8] sm:$0xff]
    %v6072 = vld [vmem:[#allocation4 + $0xdb0] sm:$0xff]
    %v6073 = vld [vmem:[#allocation4 + $0xdb8] sm:$0xff]
    %v6074 = vld [vmem:[#allocation4 + $0xdc0] sm:$0xff]
    %v6075 = vld [vmem:[#allocation4 + $0xdc8] sm:$0xff]
    %v6076 = vld [vmem:[#allocation4 + $0xdd0] sm:$0xff]
    %v6077 = vld [vmem:[#allocation4 + $0xdd8] sm:$0xff]
    %v6078 = vld [vmem:[#allocation4 + $0xde0] sm:$0xff]
    %v6079 = vld [vmem:[#allocation4 + $0xde8] sm:$0xff]
    %v6080 = vld [vmem:[#allocation4 + $0xdf0] sm:$0xff]
    %v6081 = vld [vmem:[#allocation4 + $0xdf8] sm:$0xff]
    %v6082 = vld [vmem:[#allocation4 + $0xe00] sm:$0xff]
    %v6083 = vld [vmem:[#allocation4 + $0xe08] sm:$0xff]
    %v6084 = vld [vmem:[#allocation4 + $0xe10] sm:$0xff]
    %v6085 = vld [vmem:[#allocation4 + $0xe18] sm:$0xff]
    %v6086 = vld [vmem:[#allocation4 + $0xe20] sm:$0xff]
    %v6087 = vld [vmem:[#allocation4 + $0xe28] sm:$0xff]
    %v6088 = vld [vmem:[#allocation4 + $0xe30] sm:$0xff]
    %v6089 = vld [vmem:[#allocation4 + $0xe38] sm:$0xff]
    %v6090 = vld [vmem:[#allocation4 + $0xe40] sm:$0xff]
    %v6091 = vld [vmem:[#allocation4 + $0xe48] sm:$0xff]
    %v6092 = vld [vmem:[#allocation4 + $0xe50] sm:$0xff]
    %v6093 = vld [vmem:[#allocation4 + $0xe58] sm:$0xff]
    %v6094 = vld [vmem:[#allocation4 + $0xe60] sm:$0xff]
    %v6095 = vld [vmem:[#allocation4 + $0xe68] sm:$0xff]
    %v6096 = vld [vmem:[#allocation4 + $0xe70] sm:$0xff]
    %v6097 = vld [vmem:[#allocation4 + $0xe78] sm:$0xff]
    %v6098 = vld [vmem:[#allocation4 + $0xe80] sm:$0xff]
    %v6099 = vld [vmem:[#allocation4 + $0xe88] sm:$0xff]
    %v6100 = vld [vmem:[#allocation4 + $0xe90] sm:$0xff]
    %v6101 = vld [vmem:[#allocation4 + $0xe98] sm:$0xff]
    %v6102 = vld [vmem:[#allocation4 + $0xea0] sm:$0xff]
    %v6103 = vld [vmem:[#allocation4 + $0xea8] sm:$0xff]
    %v6104 = vld [vmem:[#allocation4 + $0xeb0] sm:$0xff]
    %v6105 = vld [vmem:[#allocation4 + $0xeb8] sm:$0xff]
    %v6106 = vld [vmem:[#allocation4 + $0xec0] sm:$0xff]
    %v6107 = vld [vmem:[#allocation4 + $0xec8] sm:$0xff]
    %v6108 = vld [vmem:[#allocation4 + $0xed0] sm:$0xff]
    %v6109 = vld [vmem:[#allocation4 + $0xed8] sm:$0xff]
    %v6110 = vld [vmem:[#allocation4 + $0xee0] sm:$0xff]
    %v6111 = vld [vmem:[#allocation4 + $0xee8] sm:$0xff]
    %v6112 = vld [vmem:[#allocation4 + $0xef0] sm:$0xff]
    %v6113 = vld [vmem:[#allocation4 + $0xef8] sm:$0xff]
    %v6114 = vld [vmem:[#allocation4 + $0xf00] sm:$0xff]
    %v6115 = vld [vmem:[#allocation4 + $0xf08] sm:$0xff]
    %v6116 = vld [vmem:[#allocation4 + $0xf10] sm:$0xff]
    %v6117 = vld [vmem:[#allocation4 + $0xf18] sm:$0xff]
    %v6118 = vld [vmem:[#allocation4 + $0xf20] sm:$0xff]
    %v6119 = vld [vmem:[#allocation4 + $0xf28] sm:$0xff]
    %v6120 = vld [vmem:[#allocation4 + $0xf30] sm:$0xff]
    %v6121 = vld [vmem:[#allocation4 + $0xf38] sm:$0xff]
    %v6122 = vld [vmem:[#allocation4 + $0xf40] sm:$0xff]
    %v6123 = vld [vmem:[#allocation4 + $0xf48] sm:$0xff]
    %v6124 = vld [vmem:[#allocation4 + $0xf50] sm:$0xff]
    %v6125 = vld [vmem:[#allocation4 + $0xf58] sm:$0xff]
    %v6126 = vld [vmem:[#allocation4 + $0xf60] sm:$0xff]
    %v6127 = vld [vmem:[#allocation4 + $0xf68] sm:$0xff]
    %v6128 = vld [vmem:[#allocation4 + $0xf70] sm:$0xff]
    %v6129 = vld [vmem:[#allocation4 + $0xf78] sm:$0xff]
    %v6130 = vld [vmem:[#allocation4 + $0xf80] sm:$0xff]
    %v6131 = vld [vmem:[#allocation4 + $0xf88] sm:$0xff]
    %v6132 = vld [vmem:[#allocation4 + $0xf90] sm:$0xff]
    %v6133 = vld [vmem:[#allocation4 + $0xf98] sm:$0xff]
    %v6134 = vld [vmem:[#allocation4 + $0xfa0] sm:$0xff]
    %v6135 = vld [vmem:[#allocation4 + $0xfa8] sm:$0xff]
    %v6136 = vld [vmem:[#allocation4 + $0xfb0] sm:$0xff]
    %v6137 = vld [vmem:[#allocation4 + $0xfb8] sm:$0xff]
    %v6138 = vld [vmem:[#allocation4 + $0xfc0] sm:$0xff]
    %v6139 = vld [vmem:[#allocation4 + $0xfc8] sm:$0xff]
    %v6140 = vld [vmem:[#allocation4 + $0xfd0] sm:$0xff]
    %v6141 = vld [vmem:[#allocation4 + $0xfd8] sm:$0xff]
    %v6142 = vld [vmem:[#allocation4 + $0xfe0] sm:$0xff]
    %v6143 = vld [vmem:[#allocation4 + $0xfe8] sm:$0xff]
    %v6144 = vld [vmem:[#allocation4 + $0xff0] sm:$0xff]
    %v6145 = vld [vmem:[#allocation4 + $0xff8] sm:$0xff]
    %v6146 = vld [vmem:[#allocation4 + $0x1000] sm:$0xff]
    %v6147 = vld [vmem:[#allocation4 + $0x1008] sm:$0xff]
    %v6148 = vld [vmem:[#allocation4 + $0x1010] sm:$0xff]
    %v6149 = vld [vmem:[#allocation4 + $0x1018] sm:$0xff]
    %v6150 = vld [vmem:[#allocation4 + $0x1020] sm:$0xff]
    %v6151 = vld [vmem:[#allocation4 + $0x1028] sm:$0xff]
    %v6152 = vld [vmem:[#allocation4 + $0x1030] sm:$0xff]
    %v6153 = vld [vmem:[#allocation4 + $0x1038] sm:$0xff]
    %v6154 = vld [vmem:[#allocation4 + $0x1040] sm:$0xff]
    %v6155 = vld [vmem:[#allocation4 + $0x1048] sm:$0xff]
    %v6156 = vld [vmem:[#allocation4 + $0x1050] sm:$0xff]
    %v6157 = vld [vmem:[#allocation4 + $0x1058] sm:$0xff]
    %v6158 = vld [vmem:[#allocation4 + $0x1060] sm:$0xff]
    %v6159 = vld [vmem:[#allocation4 + $0x1068] sm:$0xff]
    %v6160 = vld [vmem:[#allocation4 + $0x1070] sm:$0xff]
    %v6161 = vld [vmem:[#allocation4 + $0x1078] sm:$0xff]
    %v6162 = vld [vmem:[#allocation4 + $0x1080] sm:$0xff]
    %v6163 = vld [vmem:[#allocation4 + $0x1088] sm:$0xff]
    %v6164 = vld [vmem:[#allocation4 + $0x1090] sm:$0xff]
    %v6165 = vld [vmem:[#allocation4 + $0x1098] sm:$0xff]
    %v6166 = vld [vmem:[#allocation4 + $0x10a0] sm:$0xff]
    %v6167 = vld [vmem:[#allocation4 + $0x10a8] sm:$0xff]
    %v6168 = vld [vmem:[#allocation4 + $0x10b0] sm:$0xff]
    %v6169 = vld [vmem:[#allocation4 + $0x10b8] sm:$0xff]
    %v6170 = vld [vmem:[#allocation4 + $0x10c0] sm:$0xff]
    %v6171 = vld [vmem:[#allocation4 + $0x10c8] sm:$0xff]
    %v6172 = vld [vmem:[#allocation4 + $0x10d0] sm:$0xff]
    %v6173 = vld [vmem:[#allocation4 + $0x10d8] sm:$0xff]
    %v6174 = vld [vmem:[#allocation4 + $0x10e0] sm:$0xff]
    %v6175 = vld [vmem:[#allocation4 + $0x10e8] sm:$0xff]
    %v6176 = vld [vmem:[#allocation4 + $0x10f0] sm:$0xff]
    %v6177 = vld [vmem:[#allocation4 + $0x10f8] sm:$0xff]
    %v6178 = vld [vmem:[#allocation4 + $0x1100] sm:$0xff]
    %v6179 = vld [vmem:[#allocation4 + $0x1108] sm:$0xff]
    %v6180 = vld [vmem:[#allocation4 + $0x1110] sm:$0xff]
    %v6181 = vld [vmem:[#allocation4 + $0x1118] sm:$0xff]
    %v6182 = vld [vmem:[#allocation4 + $0x1120] sm:$0xff]
    %v6183 = vld [vmem:[#allocation4 + $0x1128] sm:$0xff]
    %v6184 = vld [vmem:[#allocation4 + $0x1130] sm:$0xff]
    %v6185 = vld [vmem:[#allocation4 + $0x1138] sm:$0xff]
    %v6186 = vld [vmem:[#allocation4 + $0x1140] sm:$0xff]
    %v6187 = vld [vmem:[#allocation4 + $0x1148] sm:$0xff]
    %v6188 = vld [vmem:[#allocation4 + $0x1150] sm:$0xff]
    %v6189 = vld [vmem:[#allocation4 + $0x1158] sm:$0xff]
    %v6190 = vld [vmem:[#allocation4 + $0x1160] sm:$0xff]
    %v6191 = vld [vmem:[#allocation4 + $0x1168] sm:$0xff]
    %v6192 = vld [vmem:[#allocation4 + $0x1170] sm:$0xff]
    %v6193 = vld [vmem:[#allocation4 + $0x1178] sm:$0xff]
    %v6194 = vld [vmem:[#allocation4 + $0x1180] sm:$0xff]
    %v6195 = vld [vmem:[#allocation4 + $0x1188] sm:$0xff]
    %v6196 = vld [vmem:[#allocation4 + $0x1190] sm:$0xff]
    %v6197 = vld [vmem:[#allocation4 + $0x1198] sm:$0xff]
    %v6198 = vld [vmem:[#allocation4 + $0x11a0] sm:$0xff]
    %v6199 = vld [vmem:[#allocation4 + $0x11a8] sm:$0xff]
    %v6200 = vld [vmem:[#allocation4 + $0x11b0] sm:$0xff]
    %v6201 = vld [vmem:[#allocation4 + $0x11b8] sm:$0xff]
    %v6202 = vld [vmem:[#allocation4 + $0x11c0] sm:$0xff]
    %v6203 = vld [vmem:[#allocation4 + $0x11c8] sm:$0xff]
    %v6204 = vld [vmem:[#allocation4 + $0x11d0] sm:$0xff]
    %v6205 = vld [vmem:[#allocation4 + $0x11d8] sm:$0xff]
    %v6206 = vld [vmem:[#allocation4 + $0x11e0] sm:$0xff]
    %v6207 = vld [vmem:[#allocation4 + $0x11e8] sm:$0xff]
    %v6208 = vld [vmem:[#allocation4 + $0x11f0] sm:$0xff]
    %v6209 = vld [vmem:[#allocation4 + $0x11f8] sm:$0xff]
    %v6210 = vld [vmem:[#allocation13] sm:$0xff]
    %v6211 = vld [vmem:[#allocation13 + $0x8] sm:$0xff]
    %v6212 = vld [vmem:[#allocation13 + $0x10] sm:$0xff]
    %v6213 = vld [vmem:[#allocation13 + $0x18] sm:$0xff]
    %v6214 = vld [vmem:[#allocation13 + $0x20] sm:$0xff]
    %v6215 = vld [vmem:[#allocation13 + $0x28] sm:$0xff]
    %v6216 = vld [vmem:[#allocation13 + $0x30] sm:$0xff]
    %v6217 = vld [vmem:[#allocation13 + $0x38] sm:$0xff]
    %v6218 = vld [vmem:[#allocation13 + $0x40] sm:$0xff]
    %v6219 = vld [vmem:[#allocation13 + $0x48] sm:$0xff]
    %v6220 = vld [vmem:[#allocation13 + $0x50] sm:$0xff]
    %v6221 = vld [vmem:[#allocation13 + $0x58] sm:$0xff]
    %v6222 = vld [vmem:[#allocation13 + $0x60] sm:$0xff]
    %v6223 = vld [vmem:[#allocation13 + $0x68] sm:$0xff]
    %v6224 = vld [vmem:[#allocation13 + $0x70] sm:$0xff]
    %v6225 = vld [vmem:[#allocation13 + $0x78] sm:$0xff]
    %v6226 = vld [vmem:[#allocation13 + $0x80] sm:$0xff]
    %v6227 = vld [vmem:[#allocation13 + $0x88] sm:$0xff]
    %v6228 = vld [vmem:[#allocation13 + $0x90] sm:$0xff]
    %v6229 = vld [vmem:[#allocation13 + $0x98] sm:$0xff]
    %v6230 = vld [vmem:[#allocation13 + $0xa0] sm:$0xff]
    %v6231 = vld [vmem:[#allocation13 + $0xa8] sm:$0xff]
    %v6232 = vld [vmem:[#allocation13 + $0xb0] sm:$0xff]
    %v6233 = vld [vmem:[#allocation13 + $0xb8] sm:$0xff]
    %v6234 = vld [vmem:[#allocation13 + $0xc0] sm:$0xff]
    %v6235 = vld [vmem:[#allocation13 + $0xc8] sm:$0xff]
    %v6236 = vld [vmem:[#allocation13 + $0xd0] sm:$0xff]
    %v6237 = vld [vmem:[#allocation13 + $0xd8] sm:$0xff]
    %v6238 = vld [vmem:[#allocation13 + $0xe0] sm:$0xff]
    %v6239 = vld [vmem:[#allocation13 + $0xe8] sm:$0xff]
    %v6240 = vld [vmem:[#allocation13 + $0xf0] sm:$0xff]
    %v6241 = vld [vmem:[#allocation13 + $0xf8] sm:$0xff]
    %v6242 = vld [vmem:[#allocation13 + $0x100] sm:$0xff]
    %v6243 = vld [vmem:[#allocation13 + $0x108] sm:$0xff]
    %v6244 = vld [vmem:[#allocation13 + $0x110] sm:$0xff]
    %v6245 = vld [vmem:[#allocation13 + $0x118] sm:$0xff]
    %v6246 = vld [vmem:[#allocation13 + $0x120] sm:$0xff]
    %v6247 = vld [vmem:[#allocation13 + $0x128] sm:$0xff]
    %v6248 = vld [vmem:[#allocation13 + $0x130] sm:$0xff]
    %v6249 = vld [vmem:[#allocation13 + $0x138] sm:$0xff]
    %v6250 = vld [vmem:[#allocation13 + $0x140] sm:$0xff]
    %v6251 = vld [vmem:[#allocation13 + $0x148] sm:$0xff]
    %v6252 = vld [vmem:[#allocation13 + $0x150] sm:$0xff]
    %v6253 = vld [vmem:[#allocation13 + $0x158] sm:$0xff]
    %v6254 = vld [vmem:[#allocation13 + $0x160] sm:$0xff]
    %v6255 = vld [vmem:[#allocation13 + $0x168] sm:$0xff]
    %v6256 = vld [vmem:[#allocation13 + $0x170] sm:$0xff]
    %v6257 = vld [vmem:[#allocation13 + $0x178] sm:$0xff]
    %v6258 = vld [vmem:[#allocation13 + $0x180] sm:$0xff]
    %v6259 = vld [vmem:[#allocation13 + $0x188] sm:$0xff]
    %v6260 = vld [vmem:[#allocation13 + $0x190] sm:$0xff]
    %v6261 = vld [vmem:[#allocation13 + $0x198] sm:$0xff]
    %v6262 = vld [vmem:[#allocation13 + $0x1a0] sm:$0xff]
    %v6263 = vld [vmem:[#allocation13 + $0x1a8] sm:$0xff]
    %v6264 = vld [vmem:[#allocation13 + $0x1b0] sm:$0xff]
    %v6265 = vld [vmem:[#allocation13 + $0x1b8] sm:$0xff]
    %v6266 = vld [vmem:[#allocation13 + $0x1c0] sm:$0xff]
    %v6267 = vld [vmem:[#allocation13 + $0x1c8] sm:$0xff]
    %v6268 = vld [vmem:[#allocation13 + $0x1d0] sm:$0xff]
    %v6269 = vld [vmem:[#allocation13 + $0x1d8] sm:$0xff]
    %v6270 = vld [vmem:[#allocation13 + $0x1e0] sm:$0xff]
    %v6271 = vld [vmem:[#allocation13 + $0x1e8] sm:$0xff]
    %v6272 = vld [vmem:[#allocation13 + $0x1f0] sm:$0xff]
    %v6273 = vld [vmem:[#allocation13 + $0x1f8] sm:$0xff]
    %v6274 = vld [vmem:[#allocation13 + $0x200] sm:$0xff]
    %v6275 = vld [vmem:[#allocation13 + $0x208] sm:$0xff]
    %v6276 = vld [vmem:[#allocation13 + $0x210] sm:$0xff]
    %v6277 = vld [vmem:[#allocation13 + $0x218] sm:$0xff]
    %v6278 = vld [vmem:[#allocation13 + $0x220] sm:$0xff]
    %v6279 = vld [vmem:[#allocation13 + $0x228] sm:$0xff]
    %v6280 = vld [vmem:[#allocation13 + $0x230] sm:$0xff]
    %v6281 = vld [vmem:[#allocation13 + $0x238] sm:$0xff]
    %v6282 = vld [vmem:[#allocation13 + $0x240] sm:$0xff]
    %v6283 = vld [vmem:[#allocation13 + $0x248] sm:$0xff]
    %v6284 = vld [vmem:[#allocation13 + $0x250] sm:$0xff]
    %v6285 = vld [vmem:[#allocation13 + $0x258] sm:$0xff]
    %v6286 = vld [vmem:[#allocation13 + $0x260] sm:$0xff]
    %v6287 = vld [vmem:[#allocation13 + $0x268] sm:$0xff]
    %v6288 = vld [vmem:[#allocation13 + $0x270] sm:$0xff]
    %v6289 = vld [vmem:[#allocation13 + $0x278] sm:$0xff]
    %v6290 = vld [vmem:[#allocation13 + $0x280] sm:$0xff]
    %v6291 = vld [vmem:[#allocation13 + $0x288] sm:$0xff]
    %v6292 = vld [vmem:[#allocation13 + $0x290] sm:$0xff]
    %v6293 = vld [vmem:[#allocation13 + $0x298] sm:$0xff]
    %v6294 = vld [vmem:[#allocation13 + $0x2a0] sm:$0xff]
    %v6295 = vld [vmem:[#allocation13 + $0x2a8] sm:$0xff]
    %v6296 = vld [vmem:[#allocation13 + $0x2b0] sm:$0xff]
    %v6297 = vld [vmem:[#allocation13 + $0x2b8] sm:$0xff]
    %v6298 = vld [vmem:[#allocation13 + $0x2c0] sm:$0xff]
    %v6299 = vld [vmem:[#allocation13 + $0x2c8] sm:$0xff]
    %v6300 = vld [vmem:[#allocation13 + $0x2d0] sm:$0xff]
    %v6301 = vld [vmem:[#allocation13 + $0x2d8] sm:$0xff]
    %v6302 = vld [vmem:[#allocation13 + $0x2e0] sm:$0xff]
    %v6303 = vld [vmem:[#allocation13 + $0x2e8] sm:$0xff]
    %v6304 = vld [vmem:[#allocation13 + $0x2f0] sm:$0xff]
    %v6305 = vld [vmem:[#allocation13 + $0x2f8] sm:$0xff]
    %v6306 = vld [vmem:[#allocation13 + $0x300] sm:$0xff]
    %v6307 = vld [vmem:[#allocation13 + $0x308] sm:$0xff]
    %v6308 = vld [vmem:[#allocation13 + $0x310] sm:$0xff]
    %v6309 = vld [vmem:[#allocation13 + $0x318] sm:$0xff]
    %v6310 = vld [vmem:[#allocation13 + $0x320] sm:$0xff]
    %v6311 = vld [vmem:[#allocation13 + $0x328] sm:$0xff]
    %v6312 = vld [vmem:[#allocation13 + $0x330] sm:$0xff]
    %v6313 = vld [vmem:[#allocation13 + $0x338] sm:$0xff]
    %v6314 = vld [vmem:[#allocation13 + $0x340] sm:$0xff]
    %v6315 = vld [vmem:[#allocation13 + $0x348] sm:$0xff]
    %v6316 = vld [vmem:[#allocation13 + $0x350] sm:$0xff]
    %v6317 = vld [vmem:[#allocation13 + $0x358] sm:$0xff]
    %v6318 = vld [vmem:[#allocation13 + $0x360] sm:$0xff]
    %v6319 = vld [vmem:[#allocation13 + $0x368] sm:$0xff]
    %v6320 = vld [vmem:[#allocation13 + $0x370] sm:$0xff]
    %v6321 = vld [vmem:[#allocation13 + $0x378] sm:$0xff]
    %v6322 = vld [vmem:[#allocation13 + $0x380] sm:$0xff]
    %v6323 = vld [vmem:[#allocation13 + $0x388] sm:$0xff]
    %v6324 = vld [vmem:[#allocation13 + $0x390] sm:$0xff]
    %v6325 = vld [vmem:[#allocation13 + $0x398] sm:$0xff]
    %v6326 = vld [vmem:[#allocation13 + $0x3a0] sm:$0xff]
    %v6327 = vld [vmem:[#allocation13 + $0x3a8] sm:$0xff]
    %v6328 = vld [vmem:[#allocation13 + $0x3b0] sm:$0xff]
    %v6329 = vld [vmem:[#allocation13 + $0x3b8] sm:$0xff]
    %v6330 = vld [vmem:[#allocation13 + $0x3c0] sm:$0xff]
    %v6331 = vld [vmem:[#allocation13 + $0x3c8] sm:$0xff]
    %v6332 = vld [vmem:[#allocation13 + $0x3d0] sm:$0xff]
    %v6333 = vld [vmem:[#allocation13 + $0x3d8] sm:$0xff]
    %v6334 = vld [vmem:[#allocation13 + $0x3e0] sm:$0xff]
    %v6335 = vld [vmem:[#allocation13 + $0x3e8] sm:$0xff]
    %v6336 = vld [vmem:[#allocation13 + $0x3f0] sm:$0xff]
    %v6337 = vld [vmem:[#allocation13 + $0x3f8] sm:$0xff]
    %v6338 = vld [vmem:[#allocation13 + $0x400] sm:$0xff]
    %v6339 = vld [vmem:[#allocation13 + $0x408] sm:$0xff]
    %v6340 = vld [vmem:[#allocation13 + $0x410] sm:$0xff]
    %v6341 = vld [vmem:[#allocation13 + $0x418] sm:$0xff]
    %v6342 = vld [vmem:[#allocation13 + $0x420] sm:$0xff]
    %v6343 = vld [vmem:[#allocation13 + $0x428] sm:$0xff]
    %v6344 = vld [vmem:[#allocation13 + $0x430] sm:$0xff]
    %v6345 = vld [vmem:[#allocation13 + $0x438] sm:$0xff]
    %v6346 = vld [vmem:[#allocation13 + $0x440] sm:$0xff]
    %v6347 = vld [vmem:[#allocation13 + $0x448] sm:$0xff]
    %v6348 = vld [vmem:[#allocation13 + $0x450] sm:$0xff]
    %v6349 = vld [vmem:[#allocation13 + $0x458] sm:$0xff]
    %v6350 = vld [vmem:[#allocation13 + $0x460] sm:$0xff]
    %v6351 = vld [vmem:[#allocation13 + $0x468] sm:$0xff]
    %v6352 = vld [vmem:[#allocation13 + $0x470] sm:$0xff]
    %v6353 = vld [vmem:[#allocation13 + $0x478] sm:$0xff]
    %6354 = vmatprep.subr.mxu0 0.0
    %6355 = vmatpush1.msra.mxu0 %v6210
    %6356 = vmatprep.subr.mxu0 0.0
    %6357 = vmatpush1.msra.mxu0 %v6211
    %6358 = vmatprep.subr.mxu0 0.0
    %6359 = vmatpush1.msra.mxu0 %v6212
    %6360 = vmatprep.subr.mxu0 0.0
    %6361 = vmatpush1.msra.mxu0 %v6213
    %6362 = vmatprep.subr.mxu0 0.0
    %6363 = vmatpush1.msra.mxu0 %v6214
    %6364 = vmatprep.subr.mxu0 0.0
    %6365 = vmatpush1.msra.mxu0 %v6215
    %6366 = vmatprep.subr.mxu0 0.0
    %6367 = vmatpush1.msra.mxu0 %v6216
    %6368 = vmatprep.subr.mxu0 0.0
    %6369 = vmatpush1.msra.mxu0 %v6217
    %6370 = vmatprep.subr.mxu0 0.0
    %6371 = vmatpush1.msra.mxu0 %v6218
    %6372 = vmatprep.subr.mxu0 0.0
    %6373 = vmatpush1.msra.mxu0 %v6219
    %6374 = vmatprep.subr.mxu0 0.0
    %6375 = vmatpush1.msra.mxu0 %v6220
    %6376 = vmatprep.subr.mxu0 0.0
    %6377 = vmatpush1.msra.mxu0 %v6221
    %6378 = vmatprep.subr.mxu0 0.0
    %6379 = vmatpush1.msra.mxu0 %v6222
    %6380 = vmatprep.subr.mxu0 0.0
    %6381 = vmatpush1.msra.mxu0 %v6223
    %6382 = vmatprep.subr.mxu0 0.0
    %6383 = vmatpush1.msra.mxu0 %v6224
    %6384 = vmatprep.subr.mxu0 0.0
    %6385 = vmatpush1.msra.mxu0 %v6225
    %6386 = vmatprep.subr.mxu0 0.0
    %6387 = vmatpush1.msra.mxu0 %v6226
    %6388 = vmatprep.subr.mxu0 0.0
    %6389 = vmatpush1.msra.mxu0 %v6227
    %6390 = vmatprep.subr.mxu0 0.0
    %6391 = vmatpush1.msra.mxu0 %v6228
    %6392 = vmatprep.subr.mxu0 0.0
    %6393 = vmatpush1.msra.mxu0 %v6229
    %6394 = vmatprep.subr.mxu0 0.0
    %6395 = vmatpush1.msra.mxu0 %v6230
    %6396 = vmatprep.subr.mxu0 0.0
    %6397 = vmatpush1.msra.mxu0 %v6231
    %6398 = vmatprep.subr.mxu0 0.0
    %6399 = vmatpush1.msra.mxu0 %v6232
    %6400 = vmatprep.subr.mxu0 0.0
    %6401 = vmatpush1.msra.mxu0 %v6233
    %6402 = vmatprep.subr.mxu0 0.0
    %6403 = vmatpush1.msra.mxu0 %v6234
    %6404 = vmatprep.subr.mxu0 0.0
    %6405 = vmatpush1.msra.mxu0 %v6235
    %6406 = vmatprep.subr.mxu0 0.0
    %6407 = vmatpush1.msra.mxu0 %v6236
    %6408 = vmatprep.subr.mxu0 0.0
    %6409 = vmatpush1.msra.mxu0 %v6237
    %6410 = vmatprep.subr.mxu0 0.0
    %6411 = vmatpush1.msra.mxu0 %v6238
    %6412 = vmatprep.subr.mxu0 0.0
    %6413 = vmatpush1.msra.mxu0 %v6239
    %6414 = vmatprep.subr.mxu0 0.0
    %6415 = vmatpush1.msra.mxu0 %v6240
    %6416 = vmatprep.subr.mxu0 0.0
    %6417 = vmatpush1.msra.mxu0 %v6241
    %6418 = vmatprep.mubr.f32.mxu0 %v5635
    %6419 = vmatmul.mubr.f32.gmra.mrb[0].mxu0 %v5634
    %v6420 = vpop.f32.mrb[0].mxu0
    %v6421 = vadd.f32 0.0, %v6420
    %v6422 = vpop.f32.mrb[0].mxu0
    %6423 = vmatprep.mubr.f32.mxu0 %v5644
    %6424 = vmatmul.mubr.f32.gmra.mrb[0].mxu0 %v5643
    %v6425 = vpop.f32.mrb[0].mxu0
    %v6426 = vadd.f32 0.0, %v6425
    %v6427 = vpop.f32.mrb[0].mxu0
    %6428 = vmatprep.mubr.f32.mxu0 %v5653
    %6429 = vmatmul.mubr.f32.gmra.mrb[0].mxu0 %v5652
    %v6430 = vpop.f32.mrb[0].mxu0
    %v6431 = vadd.f32 0.0, %v6430
    %v6432 = vpop.f32.mrb[0].mxu0
    %6433 = vmatprep.mubr.f32.mxu0 %v5662
    %6434 = vmatmul.mubr.f32.gmra.mrb[0].mxu0 %v5661
    %v6435 = vpop.f32.mrb[0].mxu0
    %v6436 = vadd.f32 0.0, %v6435
    %v6437 = vpop.f32.mrb[0].mxu0
    %6438 = vmatprep.mubr.f32.mxu0 %v5671
    %6439 = vmatmul.mubr.f32.gmra.mrb[0].mxu0 %v5670
    %v6440 = vpop.f32.mrb[0].mxu0
    %v6441 = vadd.f32 0.0, %v6440
    %v6442 = vpop.f32.mrb[0].mxu0
    %6443 = vmatprep.mubr.f32.mxu0 %v5680
    %6444 = vmatmul.mubr.f32.gmra.mrb[0].mxu0 %v5679
    %v6445 = vpop.f32.mrb[0].mxu0
    %v6446 = vadd.f32 0.0, %v6445
    %v6447 = vpop.f32.mrb[0].mxu0
    %6448 = vmatprep.mubr.f32.mxu0 %v5689
    %6449 = vmatmul.mubr.f32.gmra.mrb[0].mxu0 %v5688
    %v6450 = vpop.f32.mrb[0].mxu0
    %v6451 = vadd.f32 0.0, %v6450
    %v6452 = vpop.f32.mrb[0].mxu0
    %6453 = vmatprep.mubr.f32.mxu0 %v5698
    %6454 = vmatmul.mubr.f32.gmra.mrb[0].mxu0 %v5697
    %v6455 = vpop.f32.mrb[0].mxu0
    %v6456 = vadd.f32 0.0, %v6455
    %v6457 = vpop.f32.mrb[0].mxu0
    %6458 = vmatprep.mubr.f32.mxu0 %v5707
    %6459 = vmatmul.mubr.f32.gmra.mrb[0].mxu0 %v5706
    %v6460 = vpop.f32.mrb[0].mxu0
    %v6461 = vadd.f32 0.0, %v6460
    %v6462 = vpop.f32.mrb[0].mxu0
    %6463 = vmatprep.mubr.f32.mxu0 %v5716
    %6464 = vmatmul.mubr.f32.gmra.mrb[0].mxu0 %v5715
    %v6465 = vpop.f32.mrb[0].mxu0
    %v6466 = vadd.f32 0.0, %v6465
    %v6467 = vpop.f32.mrb[0].mxu0
    %6468 = vmatprep.mubr.f32.mxu0 %v5725
    %6469 = vmatmul.mubr.f32.gmra.mrb[0].mxu0 %v5724
    %v6470 = vpop.f32.mrb[0].mxu0
    %v6471 = vadd.f32 0.0, %v6470
    %v6472 = vpop.f32.mrb[0].mxu0
    %6473 = vmatprep.mubr.f32.mxu0 %v5734
    %6474 = vmatmul.mubr.f32.gmra.mrb[0].mxu0 %v5733
    %v6475 = vpop.f32.mrb[0].mxu0
    %v6476 = vadd.f32 0.0, %v6475
    %v6477 = vpop.f32.mrb[0].mxu0
    %6478 = vmatprep.mubr.f32.mxu0 %v5743
    %6479 = vmatmul.mubr.f32.gmra.mrb[0].mxu0 %v5742
    %v6480 = vpop.f32.mrb[0].mxu0
    %v6481 = vadd.f32 0.0, %v6480
    %v6482 = vpop.f32.mrb[0].mxu0
    %6483 = vmatprep.mubr.f32.mxu0 %v5752
    %6484 = vmatmul.mubr.f32.gmra.mrb[0].mxu0 %v5751
    %v6485 = vpop.f32.mrb[0].mxu0
    %v6486 = vadd.f32 0.0, %v6485
    %v6487 = vpop.f32.mrb[0].mxu0
    %6488 = vmatprep.mubr.f32.mxu0 %v5761
    %6489 = vmatmul.mubr.f32.gmra.mrb[0].mxu0 %v5760
    %v6490 = vpop.f32.mrb[0].mxu0
    %v6491 = vadd.f32 0.0, %v6490
    %v6492 = vpop.f32.mrb[0].mxu0
    %6493 = vmatprep.mubr.f32.mxu0 %v5770
    %6494 = vmatmul.mubr.f32.gmra.mrb[0].mxu0 %v5769
    %v6495 = vpop.f32.mrb[0].mxu0
    %v6496 = vadd.f32 0.0, %v6495
    %v6497 = vpop.f32.mrb[0].mxu0
    %6498 = vmatprep.mubr.f32.mxu0 %v5779
    %6499 = vmatmul.mubr.f32.gmra.mrb[0].mxu0 %v5778
    %v6500 = vpop.f32.mrb[0].mxu0
    %v6501 = vadd.f32 0.0, %v6500
    %v6502 = vpop.f32.mrb[0].mxu0
    %6503 = vmatprep.mubr.f32.mxu0 %v5788
    %6504 = vmatmul.mubr.f32.gmra.mrb[0].mxu0 %v5787
    %v6505 = vpop.f32.mrb[0].mxu0
    %v6506 = vadd.f32 0.0, %v6505
    %v6507 = vpop.f32.mrb[0].mxu0
    %6508 = vmatprep.mubr.f32.mxu0 %v5797
    %6509 = vmatmul.mubr.f32.gmra.mrb[0].mxu0 %v5796
    %v6510 = vpop.f32.mrb[0].mxu0
    %v6511 = vadd.f32 0.0, %v6510
    %v6512 = vpop.f32.mrb[0].mxu0
    %6513 = vmatprep.mubr.f32.mxu0 %v5806
    %6514 = vmatmul.mubr.f32.gmra.mrb[0].mxu0 %v5805
    %v6515 = vpop.f32.mrb[0].mxu0
    %v6516 = vadd.f32 0.0, %v6515
    %v6517 = vpop.f32.mrb[0].mxu0
    %6518 = vmatprep.mubr.f32.mxu0 %v5815
    %6519 = vmatmul.mubr.f32.gmra.mrb[0].mxu0 %v5814
    %v6520 = vpop.f32.mrb[0].mxu0
    %v6521 = vadd.f32 0.0, %v6520
    %v6522 = vpop.f32.mrb[0].mxu0
    %6523 = vmatprep.mubr.f32.mxu0 %v5824
    %6524 = vmatmul.mubr.f32.gmra.mrb[0].mxu0 %v5823
    %v6525 = vpop.f32.mrb[0].mxu0
    %v6526 = vadd.f32 0.0, %v6525
    %v6527 = vpop.f32.mrb[0].mxu0
    %6528 = vmatprep.mubr.f32.mxu0 %v5833
    %6529 = vmatmul.mubr.f32.gmra.mrb[0].mxu0 %v5832
    %v6530 = vpop.f32.mrb[0].mxu0
    %v6531 = vadd.f32 0.0, %v6530
    %v6532 = vpop.f32.mrb[0].mxu0
    %6533 = vmatprep.mubr.f32.mxu0 %v5842
    %6534 = vmatmul.mubr.f32.gmra.mrb[0].mxu0 %v5841
    %v6535 = vpop.f32.mrb[0].mxu0
    %v6536 = vadd.f32 0.0, %v6535
    %v6537 = vpop.f32.mrb[0].mxu0
    %6538 = vmatprep.mubr.f32.mxu0 %v5851
    %6539 = vmatmul.mubr.f32.gmra.mrb[0].mxu0 %v5850
    %v6540 = vpop.f32.mrb[0].mxu0
    %v6541 = vadd.f32 0.0, %v6540
    %v6542 = vpop.f32.mrb[0].mxu0
    %6543 = vmatprep.mubr.f32.mxu0 %v5860
    %6544 = vmatmul.mubr.f32.gmra.mrb[0].mxu0 %v5859
    %v6545 = vpop.f32.mrb[0].mxu0
    %v6546 = vadd.f32 0.0, %v6545
    %v6547 = vpop.f32.mrb[0].mxu0
    %6548 = vmatprep.mubr.f32.mxu0 %v5869
    %6549 = vmatmul.mubr.f32.gmra.mrb[0].mxu0 %v5868
    %v6550 = vpop.f32.mrb[0].mxu0
    %v6551 = vadd.f32 0.0, %v6550
    %v6552 = vpop.f32.mrb[0].mxu0
    %6553 = vmatprep.mubr.f32.mxu0 %v5878
    %6554 = vmatmul.mubr.f32.gmra.mrb[0].mxu0 %v5877
    %v6555 = vpop.f32.mrb[0].mxu0
    %v6556 = vadd.f32 0.0, %v6555
    %v6557 = vpop.f32.mrb[0].mxu0
    %6558 = vmatprep.mubr.f32.mxu0 %v5887
    %6559 = vmatmul.mubr.f32.gmra.mrb[0].mxu0 %v5886
    %v6560 = vpop.f32.mrb[0].mxu0
    %v6561 = vadd.f32 0.0, %v6560
    %v6562 = vpop.f32.mrb[0].mxu0
    %6563 = vmatprep.mubr.f32.mxu0 %v5896
    %6564 = vmatmul.mubr.f32.gmra.mrb[0].mxu0 %v5895
    %v6565 = vpop.f32.mrb[0].mxu0
    %v6566 = vadd.f32 0.0, %v6565
    %v6567 = vpop.f32.mrb[0].mxu0
    %6568 = vmatprep.mubr.f32.mxu0 %v5905
    %6569 = vmatmul.mubr.f32.gmra.mrb[0].mxu0 %v5904
    %v6570 = vpop.f32.mrb[0].mxu0
    %v6571 = vadd.f32 0.0, %v6570
    %v6572 = vpop.f32.mrb[0].mxu0
    %6573 = vmatprep.mubr.f32.mxu0 %v5914
    %6574 = vmatmul.mubr.f32.gmra.mrb[0].mxu0 %v5913
    %v6575 = vpop.f32.mrb[0].mxu0
    %v6576 = vadd.f32 0.0, %v6575
    %v6577 = vpop.f32.mrb[0].mxu0
    %6578 = vmatprep.mubr.f32.mxu0 %v5923
    %6579 = vmatmul.mubr.f32.gmra.mrb[0].mxu0 %v5922
    %v6580 = vpop.f32.mrb[0].mxu0
    %v6581 = vadd.f32 0.0, %v6580
    %v6582 = vpop.f32.mrb[0].mxu0
    %6583 = vmatprep.mubr.f32.mxu0 %v5932
    %6584 = vmatmul.mubr.f32.gmra.mrb[0].mxu0 %v5931
    %v6585 = vpop.f32.mrb[0].mxu0
    %v6586 = vadd.f32 0.0, %v6585
    %v6587 = vpop.f32.mrb[0].mxu0
    %6588 = vmatprep.mubr.f32.mxu0 %v5941
    %6589 = vmatmul.mubr.f32.gmra.mrb[0].mxu0 %v5940
    %v6590 = vpop.f32.mrb[0].mxu0
    %v6591 = vadd.f32 0.0, %v6590
    %v6592 = vpop.f32.mrb[0].mxu0
    %6593 = vmatprep.mubr.f32.mxu0 %v5950
    %6594 = vmatmul.mubr.f32.gmra.mrb[0].mxu0 %v5949
    %v6595 = vpop.f32.mrb[0].mxu0
    %v6596 = vadd.f32 0.0, %v6595
    %v6597 = vpop.f32.mrb[0].mxu0
    %6598 = vmatprep.mubr.f32.mxu0 %v5959
    %6599 = vmatmul.mubr.f32.gmra.mrb[0].mxu0 %v5958
    %v6600 = vpop.f32.mrb[0].mxu0
    %v6601 = vadd.f32 0.0, %v6600
    %v6602 = vpop.f32.mrb[0].mxu0
    %6603 = vmatprep.mubr.f32.mxu0 %v5968
    %6604 = vmatmul.mubr.f32.gmra.mrb[0].mxu0 %v5967
    %v6605 = vpop.f32.mrb[0].mxu0
    %v6606 = vadd.f32 0.0, %v6605
    %v6607 = vpop.f32.mrb[0].mxu0
    %6608 = vmatprep.mubr.f32.mxu0 %v5977
    %6609 = vmatmul.mubr.f32.gmra.mrb[0].mxu0 %v5976
    %v6610 = vpop.f32.mrb[0].mxu0
    %v6611 = vadd.f32 0.0, %v6610
    %v6612 = vpop.f32.mrb[0].mxu0
    %6613 = vmatprep.mubr.f32.mxu0 %v5986
    %6614 = vmatmul.mubr.f32.gmra.mrb[0].mxu0 %v5985
    %v6615 = vpop.f32.mrb[0].mxu0
    %v6616 = vadd.f32 0.0, %v6615
    %v6617 = vpop.f32.mrb[0].mxu0
    %6618 = vmatprep.mubr.f32.mxu0 %v5995
    %6619 = vmatmul.mubr.f32.gmra.mrb[0].mxu0 %v5994
    %v6620 = vpop.f32.mrb[0].mxu0
    %v6621 = vadd.f32 0.0, %v6620
    %v6622 = vpop.f32.mrb[0].mxu0
    %6623 = vmatprep.mubr.f32.mxu0 %v6004
    %6624 = vmatmul.mubr.f32.gmra.mrb[0].mxu0 %v6003
    %v6625 = vpop.f32.mrb[0].mxu0
    %v6626 = vadd.f32 0.0, %v6625
    %v6627 = vpop.f32.mrb[0].mxu0
    %6628 = vmatprep.mubr.f32.mxu0 %v6013
    %6629 = vmatmul.mubr.f32.gmra.mrb[0].mxu0 %v6012
    %v6630 = vpop.f32.mrb[0].mxu0
    %v6631 = vadd.f32 0.0, %v6630
    %v6632 = vpop.f32.mrb[0].mxu0
    %6633 = vmatprep.mubr.f32.mxu0 %v6022
    %6634 = vmatmul.mubr.f32.gmra.mrb[0].mxu0 %v6021
    %v6635 = vpop.f32.mrb[0].mxu0
    %v6636 = vadd.f32 0.0, %v6635
    %v6637 = vpop.f32.mrb[0].mxu0
    %6638 = vmatprep.mubr.f32.mxu0 %v6031
    %6639 = vmatmul.mubr.f32.gmra.mrb[0].mxu0 %v6030
    %v6640 = vpop.f32.mrb[0].mxu0
    %v6641 = vadd.f32 0.0, %v6640
    %v6642 = vpop.f32.mrb[0].mxu0
    %6643 = vmatprep.mubr.f32.mxu0 %v6040
    %6644 = vmatmul.mubr.f32.gmra.mrb[0].mxu0 %v6039
    %v6645 = vpop.f32.mrb[0].mxu0
    %v6646 = vadd.f32 0.0, %v6645
    %v6647 = vpop.f32.mrb[0].mxu0
    %6648 = vmatprep.mubr.f32.mxu0 %v6049
    %6649 = vmatmul.mubr.f32.gmra.mrb[0].mxu0 %v6048
    %v6650 = vpop.f32.mrb[0].mxu0
    %v6651 = vadd.f32 0.0, %v6650
    %v6652 = vpop.f32.mrb[0].mxu0
    %6653 = vmatprep.mubr.f32.mxu0 %v6058
    %6654 = vmatmul.mubr.f32.gmra.mrb[0].mxu0 %v6057
    %v6655 = vpop.f32.mrb[0].mxu0
    %v6656 = vadd.f32 0.0, %v6655
    %v6657 = vpop.f32.mrb[0].mxu0
    %6658 = vmatprep.mubr.f32.mxu0 %v6067
    %6659 = vmatmul.mubr.f32.gmra.mrb[0].mxu0 %v6066
    %v6660 = vpop.f32.mrb[0].mxu0
    %v6661 = vadd.f32 0.0, %v6660
    %v6662 = vpop.f32.mrb[0].mxu0
    %6663 = vmatprep.mubr.f32.mxu0 %v6076
    %6664 = vmatmul.mubr.f32.gmra.mrb[0].mxu0 %v6075
    %v6665 = vpop.f32.mrb[0].mxu0
    %v6666 = vadd.f32 0.0, %v6665
    %v6667 = vpop.f32.mrb[0].mxu0
    %6668 = vmatprep.mubr.f32.mxu0 %v6085
    %6669 = vmatmul.mubr.f32.gmra.mrb[0].mxu0 %v6084
    %v6670 = vpop.f32.mrb[0].mxu0
    %v6671 = vadd.f32 0.0, %v6670
    %v6672 = vpop.f32.mrb[0].mxu0
    %6673 = vmatprep.mubr.f32.mxu0 %v6094
    %6674 = vmatmul.mubr.f32.gmra.mrb[0].mxu0 %v6093
    %v6675 = vpop.f32.mrb[0].mxu0
    %v6676 = vadd.f32 0.0, %v6675
    %v6677 = vpop.f32.mrb[0].mxu0
    %6678 = vmatprep.mubr.f32.mxu0 %v6103
    %6679 = vmatmul.mubr.f32.gmra.mrb[0].mxu0 %v6102
    %v6680 = vpop.f32.mrb[0].mxu0
    %v6681 = vadd.f32 0.0, %v6680
    %v6682 = vpop.f32.mrb[0].mxu0
    %6683 = vmatprep.mubr.f32.mxu0 %v6112
    %6684 = vmatmul.mubr.f32.gmra.mrb[0].mxu0 %v6111
    %v6685 = vpop.f32.mrb[0].mxu0
    %v6686 = vadd.f32 0.0, %v6685
    %v6687 = vpop.f32.mrb[0].mxu0
    %6688 = vmatprep.mubr.f32.mxu0 %v6121
    %6689 = vmatmul.mubr.f32.gmra.mrb[0].mxu0 %v6120
    %v6690 = vpop.f32.mrb[0].mxu0
    %v6691 = vadd.f32 0.0, %v6690
    %v6692 = vpop.f32.mrb[0].mxu0
    %6693 = vmatprep.mubr.f32.mxu0 %v6130
    %6694 = vmatmul.mubr.f32.gmra.mrb[0].mxu0 %v6129
    %v6695 = vpop.f32.mrb[0].mxu0
    %v6696 = vadd.f32 0.0, %v6695
    %v6697 = vpop.f32.mrb[0].mxu0
    %6698 = vmatprep.mubr.f32.mxu0 %v6139
    %6699 = vmatmul.mubr.f32.gmra.mrb[0].mxu0 %v6138
    %v6700 = vpop.f32.mrb[0].mxu0
    %v6701 = vadd.f32 0.0, %v6700
    %v6702 = vpop.f32.mrb[0].mxu0
    %6703 = vmatprep.mubr.f32.mxu0 %v6148
    %6704 = vmatmul.mubr.f32.gmra.mrb[0].mxu0 %v6147
    %v6705 = vpop.f32.mrb[0].mxu0
    %v6706 = vadd.f32 0.0, %v6705
    %v6707 = vpop.f32.mrb[0].mxu0
    %6708 = vmatprep.mubr.f32.mxu0 %v6157
    %6709 = vmatmul.mubr.f32.gmra.mrb[0].mxu0 %v6156
    %v6710 = vpop.f32.mrb[0].mxu0
    %v6711 = vadd.f32 0.0, %v6710
    %v6712 = vpop.f32.mrb[0].mxu0
    %6713 = vmatprep.mubr.f32.mxu0 %v6166
    %6714 = vmatmul.mubr.f32.gmra.mrb[0].mxu0 %v6165
    %v6715 = vpop.f32.mrb[0].mxu0
    %v6716 = vadd.f32 0.0, %v6715
    %v6717 = vpop.f32.mrb[0].mxu0
    %6718 = vmatprep.mubr.f32.mxu0 %v6175
    %6719 = vmatmul.mubr.f32.gmra.mrb[0].mxu0 %v6174
    %v6720 = vpop.f32.mrb[0].mxu0
    %v6721 = vadd.f32 0.0, %v6720
    %v6722 = vpop.f32.mrb[0].mxu0
    %6723 = vmatprep.mubr.f32.mxu0 %v6184
    %6724 = vmatmul.mubr.f32.gmra.mrb[0].mxu0 %v6183
    %v6725 = vpop.f32.mrb[0].mxu0
    %v6726 = vadd.f32 0.0, %v6725
    %v6727 = vpop.f32.mrb[0].mxu0
    %6728 = vmatprep.mubr.f32.mxu0 %v6193
    %6729 = vmatmul.mubr.f32.gmra.mrb[0].mxu0 %v6192
    %v6730 = vpop.f32.mrb[0].mxu0
    %v6731 = vadd.f32 0.0, %v6730
    %v6732 = vpop.f32.mrb[0].mxu0
    %6733 = vmatprep.mubr.f32.mxu0 %v6202
    %6734 = vmatmul.mubr.f32.gmra.mrb[0].mxu0 %v6201
    %v6735 = vpop.f32.mrb[0].mxu0
    %v6736 = vadd.f32 0.0, %v6735
    %v6737 = vpop.f32.mrb[0].mxu0
    %6738 = vdwg.mxu0
    %6739 = vmatprep.subr.mxu0 0.0
    %6740 = vmatpush1.msra.mxu0 %v6242
    %6741 = vmatprep.subr.mxu0 0.0
    %6742 = vmatpush1.msra.mxu0 %v6243
    %6743 = vmatprep.subr.mxu0 0.0
    %6744 = vmatpush1.msra.mxu0 %v6244
    %6745 = vmatprep.subr.mxu0 0.0
    %6746 = vmatpush1.msra.mxu0 %v6245
    %6747 = vmatprep.subr.mxu0 0.0
    %6748 = vmatpush1.msra.mxu0 %v6246
    %6749 = vmatprep.subr.mxu0 0.0
    %6750 = vmatpush1.msra.mxu0 %v6247
    %6751 = vmatprep.subr.mxu0 0.0
    %6752 = vmatpush1.msra.mxu0 %v6248
    %6753 = vmatprep.subr.mxu0 0.0
    %6754 = vmatpush1.msra.mxu0 %v6249
    %6755 = vmatprep.subr.mxu0 0.0
    %6756 = vmatpush1.msra.mxu0 %v6250
    %6757 = vmatprep.subr.mxu0 0.0
    %6758 = vmatpush1.msra.mxu0 %v6251
    %6759 = vmatprep.subr.mxu0 0.0
    %6760 = vmatpush1.msra.mxu0 %v6252
    %6761 = vmatprep.subr.mxu0 0.0
    %6762 = vmatpush1.msra.mxu0 %v6253
    %6763 = vmatprep.subr.mxu0 0.0
    %6764 = vmatpush1.msra.mxu0 %v6254
    %6765 = vmatprep.subr.mxu0 0.0
    %6766 = vmatpush1.msra.mxu0 %v6255
    %6767 = vmatprep.subr.mxu0 0.0
    %6768 = vmatpush1.msra.mxu0 %v6256
    %6769 = vmatprep.subr.mxu0 0.0
    %6770 = vmatpush1.msra.mxu0 %v6257
    %6771 = vmatprep.subr.mxu0 0.0
    %6772 = vmatpush1.msra.mxu0 %v6258
    %6773 = vmatprep.subr.mxu0 0.0
    %6774 = vmatpush1.msra.mxu0 %v6259
    %6775 = vmatprep.subr.mxu0 0.0
    %6776 = vmatpush1.msra.mxu0 %v6260
    %6777 = vmatprep.subr.mxu0 0.0
    %6778 = vmatpush1.msra.mxu0 %v6261
    %6779 = vmatprep.subr.mxu0 0.0
    %6780 = vmatpush1.msra.mxu0 %v6262
    %6781 = vmatprep.subr.mxu0 0.0
    %6782 = vmatpush1.msra.mxu0 %v6263
    %6783 = vmatprep.subr.mxu0 0.0
    %6784 = vmatpush1.msra.mxu0 %v6264
    %6785 = vmatprep.subr.mxu0 0.0
    %6786 = vmatpush1.msra.mxu0 %v6265
    %6787 = vmatprep.subr.mxu0 0.0
    %6788 = vmatpush1.msra.mxu0 %v6266
    %6789 = vmatprep.subr.mxu0 0.0
    %6790 = vmatpush1.msra.mxu0 %v6267
    %6791 = vmatprep.subr.mxu0 0.0
    %6792 = vmatpush1.msra.mxu0 %v6268
    %6793 = vmatprep.subr.mxu0 0.0
    %6794 = vmatpush1.msra.mxu0 %v6269
    %6795 = vmatprep.subr.mxu0 0.0
    %6796 = vmatpush1.msra.mxu0 %v6270
    %6797 = vmatprep.subr.mxu0 0.0
    %6798 = vmatpush1.msra.mxu0 %v6271
    %6799 = vmatprep.subr.mxu0 0.0
    %6800 = vmatpush1.msra.mxu0 %v6272
    %6801 = vmatprep.subr.mxu0 0.0
    %6802 = vmatpush1.msra.mxu0 %v6273
    %6803 = vmatprep.mubr.f32.mxu0 %v5637
    %6804 = vmatmul.mubr.f32.gmra.mrb[0].mxu0 %v5636
    %v6805 = vpop.f32.mrb[0].mxu0
    %v6806 = vadd.f32 %v6421, %v6805
    %v6807 = vpop.f32.mrb[0].mxu0
    %6808 = vmatprep.mubr.f32.mxu0 %v5646
    %6809 = vmatmul.mubr.f32.gmra.mrb[0].mxu0 %v5645
    %v6810 = vpop.f32.mrb[0].mxu0
    %v6811 = vadd.f32 %v6426, %v6810
    %v6812 = vpop.f32.mrb[0].mxu0
    %6813 = vmatprep.mubr.f32.mxu0 %v5655
    %6814 = vmatmul.mubr.f32.gmra.mrb[0].mxu0 %v5654
    %v6815 = vpop.f32.mrb[0].mxu0
    %v6816 = vadd.f32 %v6431, %v6815
    %v6817 = vpop.f32.mrb[0].mxu0
    %6818 = vmatprep.mubr.f32.mxu0 %v5664
    %6819 = vmatmul.mubr.f32.gmra.mrb[0].mxu0 %v5663
    %v6820 = vpop.f32.mrb[0].mxu0
    %v6821 = vadd.f32 %v6436, %v6820
    %v6822 = vpop.f32.mrb[0].mxu0
    %6823 = vmatprep.mubr.f32.mxu0 %v5673
    %6824 = vmatmul.mubr.f32.gmra.mrb[0].mxu0 %v5672
    %v6825 = vpop.f32.mrb[0].mxu0
    %v6826 = vadd.f32 %v6441, %v6825
    %v6827 = vpop.f32.mrb[0].mxu0
    %6828 = vmatprep.mubr.f32.mxu0 %v5682
    %6829 = vmatmul.mubr.f32.gmra.mrb[0].mxu0 %v5681
    %v6830 = vpop.f32.mrb[0].mxu0
    %v6831 = vadd.f32 %v6446, %v6830
    %v6832 = vpop.f32.mrb[0].mxu0
    %6833 = vmatprep.mubr.f32.mxu0 %v5691
    %6834 = vmatmul.mubr.f32.gmra.mrb[0].mxu0 %v5690
    %v6835 = vpop.f32.mrb[0].mxu0
    %v6836 = vadd.f32 %v6451, %v6835
    %v6837 = vpop.f32.mrb[0].mxu0
    %6838 = vmatprep.mubr.f32.mxu0 %v5700
    %6839 = vmatmul.mubr.f32.gmra.mrb[0].mxu0 %v5699
    %v6840 = vpop.f32.mrb[0].mxu0
    %v6841 = vadd.f32 %v6456, %v6840
    %v6842 = vpop.f32.mrb[0].mxu0
    %6843 = vmatprep.mubr.f32.mxu0 %v5709
    %6844 = vmatmul.mubr.f32.gmra.mrb[0].mxu0 %v5708
    %v6845 = vpop.f32.mrb[0].mxu0
    %v6846 = vadd.f32 %v6461, %v6845
    %v6847 = vpop.f32.mrb[0].mxu0
    %6848 = vmatprep.mubr.f32.mxu0 %v5718
    %6849 = vmatmul.mubr.f32.gmra.mrb[0].mxu0 %v5717
    %v6850 = vpop.f32.mrb[0].mxu0
    %v6851 = vadd.f32 %v6466, %v6850
    %v6852 = vpop.f32.mrb[0].mxu0
    %6853 = vmatprep.mubr.f32.mxu0 %v5727
    %6854 = vmatmul.mubr.f32.gmra.mrb[0].mxu0 %v5726
    %v6855 = vpop.f32.mrb[0].mxu0
    %v6856 = vadd.f32 %v6471, %v6855
    %v6857 = vpop.f32.mrb[0].mxu0
    %6858 = vmatprep.mubr.f32.mxu0 %v5736
    %6859 = vmatmul.mubr.f32.gmra.mrb[0].mxu0 %v5735
    %v6860 = vpop.f32.mrb[0].mxu0
    %v6861 = vadd.f32 %v6476, %v6860
    %v6862 = vpop.f32.mrb[0].mxu0
    %6863 = vmatprep.mubr.f32.mxu0 %v5745
    %6864 = vmatmul.mubr.f32.gmra.mrb[0].mxu0 %v5744
    %v6865 = vpop.f32.mrb[0].mxu0
    %v6866 = vadd.f32 %v6481, %v6865
    %v6867 = vpop.f32.mrb[0].mxu0
    %6868 = vmatprep.mubr.f32.mxu0 %v5754
    %6869 = vmatmul.mubr.f32.gmra.mrb[0].mxu0 %v5753
    %v6870 = vpop.f32.mrb[0].mxu0
    %v6871 = vadd.f32 %v6486, %v6870
    %v6872 = vpop.f32.mrb[0].mxu0
    %6873 = vmatprep.mubr.f32.mxu0 %v5763
    %6874 = vmatmul.mubr.f32.gmra.mrb[0].mxu0 %v5762
    %v6875 = vpop.f32.mrb[0].mxu0
    %v6876 = vadd.f32 %v6491, %v6875
    %v6877 = vpop.f32.mrb[0].mxu0
    %6878 = vmatprep.mubr.f32.mxu0 %v5772
    %6879 = vmatmul.mubr.f32.gmra.mrb[0].mxu0 %v5771
    %v6880 = vpop.f32.mrb[0].mxu0
    %v6881 = vadd.f32 %v6496, %v6880
    %v6882 = vpop.f32.mrb[0].mxu0
    %6883 = vmatprep.mubr.f32.mxu0 %v5781
    %6884 = vmatmul.mubr.f32.gmra.mrb[0].mxu0 %v5780
    %v6885 = vpop.f32.mrb[0].mxu0
    %v6886 = vadd.f32 %v6501, %v6885
    %v6887 = vpop.f32.mrb[0].mxu0
    %6888 = vmatprep.mubr.f32.mxu0 %v5790
    %6889 = vmatmul.mubr.f32.gmra.mrb[0].mxu0 %v5789
    %v6890 = vpop.f32.mrb[0].mxu0
    %v6891 = vadd.f32 %v6506, %v6890
    %v6892 = vpop.f32.mrb[0].mxu0
    %6893 = vmatprep.mubr.f32.mxu0 %v5799
    %6894 = vmatmul.mubr.f32.gmra.mrb[0].mxu0 %v5798
    %v6895 = vpop.f32.mrb[0].mxu0
    %v6896 = vadd.f32 %v6511, %v6895
    %v6897 = vpop.f32.mrb[0].mxu0
    %6898 = vmatprep.mubr.f32.mxu0 %v5808
    %6899 = vmatmul.mubr.f32.gmra.mrb[0].mxu0 %v5807
    %v6900 = vpop.f32.mrb[0].mxu0
    %v6901 = vadd.f32 %v6516, %v6900
    %v6902 = vpop.f32.mrb[0].mxu0
    %6903 = vmatprep.mubr.f32.mxu0 %v5817
    %6904 = vmatmul.mubr.f32.gmra.mrb[0].mxu0 %v5816
    %v6905 = vpop.f32.mrb[0].mxu0
    %v6906 = vadd.f32 %v6521, %v6905
    %v6907 = vpop.f32.mrb[0].mxu0
    %6908 = vmatprep.mubr.f32.mxu0 %v5826
    %6909 = vmatmul.mubr.f32.gmra.mrb[0].mxu0 %v5825
    %v6910 = vpop.f32.mrb[0].mxu0
    %v6911 = vadd.f32 %v6526, %v6910
    %v6912 = vpop.f32.mrb[0].mxu0
    %6913 = vmatprep.mubr.f32.mxu0 %v5835
    %6914 = vmatmul.mubr.f32.gmra.mrb[0].mxu0 %v5834
    %v6915 = vpop.f32.mrb[0].mxu0
    %v6916 = vadd.f32 %v6531, %v6915
    %v6917 = vpop.f32.mrb[0].mxu0
    %6918 = vmatprep.mubr.f32.mxu0 %v5844
    %6919 = vmatmul.mubr.f32.gmra.mrb[0].mxu0 %v5843
    %v6920 = vpop.f32.mrb[0].mxu0
    %v6921 = vadd.f32 %v6536, %v6920
    %v6922 = vpop.f32.mrb[0].mxu0
    %6923 = vmatprep.mubr.f32.mxu0 %v5853
    %6924 = vmatmul.mubr.f32.gmra.mrb[0].mxu0 %v5852
    %v6925 = vpop.f32.mrb[0].mxu0
    %v6926 = vadd.f32 %v6541, %v6925
    %v6927 = vpop.f32.mrb[0].mxu0
    %6928 = vmatprep.mubr.f32.mxu0 %v5862
    %6929 = vmatmul.mubr.f32.gmra.mrb[0].mxu0 %v5861
    %v6930 = vpop.f32.mrb[0].mxu0
    %v6931 = vadd.f32 %v6546, %v6930
    %v6932 = vpop.f32.mrb[0].mxu0
    %6933 = vmatprep.mubr.f32.mxu0 %v5871
    %6934 = vmatmul.mubr.f32.gmra.mrb[0].mxu0 %v5870
    %v6935 = vpop.f32.mrb[0].mxu0
    %v6936 = vadd.f32 %v6551, %v6935
    %v6937 = vpop.f32.mrb[0].mxu0
    %6938 = vmatprep.mubr.f32.mxu0 %v5880
    %6939 = vmatmul.mubr.f32.gmra.mrb[0].mxu0 %v5879
    %v6940 = vpop.f32.mrb[0].mxu0
    %v6941 = vadd.f32 %v6556, %v6940
    %v6942 = vpop.f32.mrb[0].mxu0
    %6943 = vmatprep.mubr.f32.mxu0 %v5889
    %6944 = vmatmul.mubr.f32.gmra.mrb[0].mxu0 %v5888
    %v6945 = vpop.f32.mrb[0].mxu0
    %v6946 = vadd.f32 %v6561, %v6945
    %v6947 = vpop.f32.mrb[0].mxu0
    %6948 = vmatprep.mubr.f32.mxu0 %v5898
    %6949 = vmatmul.mubr.f32.gmra.mrb[0].mxu0 %v5897
    %v6950 = vpop.f32.mrb[0].mxu0
    %v6951 = vadd.f32 %v6566, %v6950
    %v6952 = vpop.f32.mrb[0].mxu0
    %6953 = vmatprep.mubr.f32.mxu0 %v5907
    %6954 = vmatmul.mubr.f32.gmra.mrb[0].mxu0 %v5906
    %v6955 = vpop.f32.mrb[0].mxu0
    %v6956 = vadd.f32 %v6571, %v6955
    %v6957 = vpop.f32.mrb[0].mxu0
    %6958 = vmatprep.mubr.f32.mxu0 %v5916
    %6959 = vmatmul.mubr.f32.gmra.mrb[0].mxu0 %v5915
    %v6960 = vpop.f32.mrb[0].mxu0
    %v6961 = vadd.f32 %v6576, %v6960
    %v6962 = vpop.f32.mrb[0].mxu0
    %6963 = vmatprep.mubr.f32.mxu0 %v5925
    %6964 = vmatmul.mubr.f32.gmra.mrb[0].mxu0 %v5924
    %v6965 = vpop.f32.mrb[0].mxu0
    %v6966 = vadd.f32 %v6581, %v6965
    %v6967 = vpop.f32.mrb[0].mxu0
    %6968 = vmatprep.mubr.f32.mxu0 %v5934
    %6969 = vmatmul.mubr.f32.gmra.mrb[0].mxu0 %v5933
    %v6970 = vpop.f32.mrb[0].mxu0
    %v6971 = vadd.f32 %v6586, %v6970
    %v6972 = vpop.f32.mrb[0].mxu0
    %6973 = vmatprep.mubr.f32.mxu0 %v5943
    %6974 = vmatmul.mubr.f32.gmra.mrb[0].mxu0 %v5942
    %v6975 = vpop.f32.mrb[0].mxu0
    %v6976 = vadd.f32 %v6591, %v6975
    %v6977 = vpop.f32.mrb[0].mxu0
    %6978 = vmatprep.mubr.f32.mxu0 %v5952
    %6979 = vmatmul.mubr.f32.gmra.mrb[0].mxu0 %v5951
    %v6980 = vpop.f32.mrb[0].mxu0
    %v6981 = vadd.f32 %v6596, %v6980
    %v6982 = vpop.f32.mrb[0].mxu0
    %6983 = vmatprep.mubr.f32.mxu0 %v5961
    %6984 = vmatmul.mubr.f32.gmra.mrb[0].mxu0 %v5960
    %v6985 = vpop.f32.mrb[0].mxu0
    %v6986 = vadd.f32 %v6601, %v6985
    %v6987 = vpop.f32.mrb[0].mxu0
    %6988 = vmatprep.mubr.f32.mxu0 %v5970
    %6989 = vmatmul.mubr.f32.gmra.mrb[0].mxu0 %v5969
    %v6990 = vpop.f32.mrb[0].mxu0
    %v6991 = vadd.f32 %v6606, %v6990
    %v6992 = vpop.f32.mrb[0].mxu0
    %6993 = vmatprep.mubr.f32.mxu0 %v5979
    %6994 = vmatmul.mubr.f32.gmra.mrb[0].mxu0 %v5978
    %v6995 = vpop.f32.mrb[0].mxu0
    %v6996 = vadd.f32 %v6611, %v6995
    %v6997 = vpop.f32.mrb[0].mxu0
    %6998 = vmatprep.mubr.f32.mxu0 %v5988
    %6999 = vmatmul.mubr.f32.gmra.mrb[0].mxu0 %v5987
    %v7000 = vpop.f32.mrb[0].mxu0
    %v7001 = vadd.f32 %v6616, %v7000
    %v7002 = vpop.f32.mrb[0].mxu0
    %7003 = vmatprep.mubr.f32.mxu0 %v5997
    %7004 = vmatmul.mubr.f32.gmra.mrb[0].mxu0 %v5996
    %v7005 = vpop.f32.mrb[0].mxu0
    %v7006 = vadd.f32 %v6621, %v7005
    %v7007 = vpop.f32.mrb[0].mxu0
    %7008 = vmatprep.mubr.f32.mxu0 %v6006
    %7009 = vmatmul.mubr.f32.gmra.mrb[0].mxu0 %v6005
    %v7010 = vpop.f32.mrb[0].mxu0
    %v7011 = vadd.f32 %v6626, %v7010
    %v7012 = vpop.f32.mrb[0].mxu0
    %7013 = vmatprep.mubr.f32.mxu0 %v6015
    %7014 = vmatmul.mubr.f32.gmra.mrb[0].mxu0 %v6014
    %v7015 = vpop.f32.mrb[0].mxu0
    %v7016 = vadd.f32 %v6631, %v7015
    %v7017 = vpop.f32.mrb[0].mxu0
    %7018 = vmatprep.mubr.f32.mxu0 %v6024
    %7019 = vmatmul.mubr.f32.gmra.mrb[0].mxu0 %v6023
    %v7020 = vpop.f32.mrb[0].mxu0
    %v7021 = vadd.f32 %v6636, %v7020
    %v7022 = vpop.f32.mrb[0].mxu0
    %7023 = vmatprep.mubr.f32.mxu0 %v6033
    %7024 = vmatmul.mubr.f32.gmra.mrb[0].mxu0 %v6032
    %v7025 = vpop.f32.mrb[0].mxu0
    %v7026 = vadd.f32 %v6641, %v7025
    %v7027 = vpop.f32.mrb[0].mxu0
    %7028 = vmatprep.mubr.f32.mxu0 %v6042
    %7029 = vmatmul.mubr.f32.gmra.mrb[0].mxu0 %v6041
    %v7030 = vpop.f32.mrb[0].mxu0
    %v7031 = vadd.f32 %v6646, %v7030
    %v7032 = vpop.f32.mrb[0].mxu0
    %7033 = vmatprep.mubr.f32.mxu0 %v6051
    %7034 = vmatmul.mubr.f32.gmra.mrb[0].mxu0 %v6050
    %v7035 = vpop.f32.mrb[0].mxu0
    %v7036 = vadd.f32 %v6651, %v7035
    %v7037 = vpop.f32.mrb[0].mxu0
    %7038 = vmatprep.mubr.f32.mxu0 %v6060
    %7039 = vmatmul.mubr.f32.gmra.mrb[0].mxu0 %v6059
    %v7040 = vpop.f32.mrb[0].mxu0
    %v7041 = vadd.f32 %v6656, %v7040
    %v7042 = vpop.f32.mrb[0].mxu0
    %7043 = vmatprep.mubr.f32.mxu0 %v6069
    %7044 = vmatmul.mubr.f32.gmra.mrb[0].mxu0 %v6068
    %v7045 = vpop.f32.mrb[0].mxu0
    %v7046 = vadd.f32 %v6661, %v7045
    %v7047 = vpop.f32.mrb[0].mxu0
    %7048 = vmatprep.mubr.f32.mxu0 %v6078
    %7049 = vmatmul.mubr.f32.gmra.mrb[0].mxu0 %v6077
    %v7050 = vpop.f32.mrb[0].mxu0
    %v7051 = vadd.f32 %v6666, %v7050
    %v7052 = vpop.f32.mrb[0].mxu0
    %7053 = vmatprep.mubr.f32.mxu0 %v6087
    %7054 = vmatmul.mubr.f32.gmra.mrb[0].mxu0 %v6086
    %v7055 = vpop.f32.mrb[0].mxu0
    %v7056 = vadd.f32 %v6671, %v7055
    %v7057 = vpop.f32.mrb[0].mxu0
    %7058 = vmatprep.mubr.f32.mxu0 %v6096
    %7059 = vmatmul.mubr.f32.gmra.mrb[0].mxu0 %v6095
    %v7060 = vpop.f32.mrb[0].mxu0
    %v7061 = vadd.f32 %v6676, %v7060
    %v7062 = vpop.f32.mrb[0].mxu0
    %7063 = vmatprep.mubr.f32.mxu0 %v6105
    %7064 = vmatmul.mubr.f32.gmra.mrb[0].mxu0 %v6104
    %v7065 = vpop.f32.mrb[0].mxu0
    %v7066 = vadd.f32 %v6681, %v7065
    %v7067 = vpop.f32.mrb[0].mxu0
    %7068 = vmatprep.mubr.f32.mxu0 %v6114
    %7069 = vmatmul.mubr.f32.gmra.mrb[0].mxu0 %v6113
    %v7070 = vpop.f32.mrb[0].mxu0
    %v7071 = vadd.f32 %v6686, %v7070
    %v7072 = vpop.f32.mrb[0].mxu0
    %7073 = vmatprep.mubr.f32.mxu0 %v6123
    %7074 = vmatmul.mubr.f32.gmra.mrb[0].mxu0 %v6122
    %v7075 = vpop.f32.mrb[0].mxu0
    %v7076 = vadd.f32 %v6691, %v7075
    %v7077 = vpop.f32.mrb[0].mxu0
    %7078 = vmatprep.mubr.f32.mxu0 %v6132
    %7079 = vmatmul.mubr.f32.gmra.mrb[0].mxu0 %v6131
    %v7080 = vpop.f32.mrb[0].mxu0
    %v7081 = vadd.f32 %v6696, %v7080
    %v7082 = vpop.f32.mrb[0].mxu0
    %7083 = vmatprep.mubr.f32.mxu0 %v6141
    %7084 = vmatmul.mubr.f32.gmra.mrb[0].mxu0 %v6140
    %v7085 = vpop.f32.mrb[0].mxu0
    %v7086 = vadd.f32 %v6701, %v7085
    %v7087 = vpop.f32.mrb[0].mxu0
    %7088 = vmatprep.mubr.f32.mxu0 %v6150
    %7089 = vmatmul.mubr.f32.gmra.mrb[0].mxu0 %v6149
    %v7090 = vpop.f32.mrb[0].mxu0
    %v7091 = vadd.f32 %v6706, %v7090
    %v7092 = vpop.f32.mrb[0].mxu0
    %7093 = vmatprep.mubr.f32.mxu0 %v6159
    %7094 = vmatmul.mubr.f32.gmra.mrb[0].mxu0 %v6158
    %v7095 = vpop.f32.mrb[0].mxu0
    %v7096 = vadd.f32 %v6711, %v7095
    %v7097 = vpop.f32.mrb[0].mxu0
    %7098 = vmatprep.mubr.f32.mxu0 %v6168
    %7099 = vmatmul.mubr.f32.gmra.mrb[0].mxu0 %v6167
    %v7100 = vpop.f32.mrb[0].mxu0
    %v7101 = vadd.f32 %v6716, %v7100
    %v7102 = vpop.f32.mrb[0].mxu0
    %7103 = vmatprep.mubr.f32.mxu0 %v6177
    %7104 = vmatmul.mubr.f32.gmra.mrb[0].mxu0 %v6176
    %v7105 = vpop.f32.mrb[0].mxu0
    %v7106 = vadd.f32 %v6721, %v7105
    %v7107 = vpop.f32.mrb[0].mxu0
    %7108 = vmatprep.mubr.f32.mxu0 %v6186
    %7109 = vmatmul.mubr.f32.gmra.mrb[0].mxu0 %v6185
    %v7110 = vpop.f32.mrb[0].mxu0
    %v7111 = vadd.f32 %v6726, %v7110
    %v7112 = vpop.f32.mrb[0].mxu0
    %7113 = vmatprep.mubr.f32.mxu0 %v6195
    %7114 = vmatmul.mubr.f32.gmra.mrb[0].mxu0 %v6194
    %v7115 = vpop.f32.mrb[0].mxu0
    %v7116 = vadd.f32 %v6731, %v7115
    %v7117 = vpop.f32.mrb[0].mxu0
    %7118 = vmatprep.mubr.f32.mxu0 %v6204
    %7119 = vmatmul.mubr.f32.gmra.mrb[0].mxu0 %v6203
    %v7120 = vpop.f32.mrb[0].mxu0
    %v7121 = vadd.f32 %v6736, %v7120
    %v7122 = vpop.f32.mrb[0].mxu0
    %7123 = vdwg.mxu0
    %7124 = vmatprep.subr.mxu0 0.0
    %7125 = vmatpush1.msra.mxu0 %v6274
    %7126 = vmatprep.subr.mxu0 0.0
    %7127 = vmatpush1.msra.mxu0 %v6275
    %7128 = vmatprep.subr.mxu0 0.0
    %7129 = vmatpush1.msra.mxu0 %v6276
    %7130 = vmatprep.subr.mxu0 0.0
    %7131 = vmatpush1.msra.mxu0 %v6277
    %7132 = vmatprep.subr.mxu0 0.0
    %7133 = vmatpush1.msra.mxu0 %v6278
    %7134 = vmatprep.subr.mxu0 0.0
    %7135 = vmatpush1.msra.mxu0 %v6279
    %7136 = vmatprep.subr.mxu0 0.0
    %7137 = vmatpush1.msra.mxu0 %v6280
    %7138 = vmatprep.subr.mxu0 0.0
    %7139 = vmatpush1.msra.mxu0 %v6281
    %7140 = vmatprep.subr.mxu0 0.0
    %7141 = vmatpush1.msra.mxu0 %v6282
    %7142 = vmatprep.subr.mxu0 0.0
    %7143 = vmatpush1.msra.mxu0 %v6283
    %7144 = vmatprep.subr.mxu0 0.0
    %7145 = vmatpush1.msra.mxu0 %v6284
    %7146 = vmatprep.subr.mxu0 0.0
    %7147 = vmatpush1.msra.mxu0 %v6285
    %7148 = vmatprep.subr.mxu0 0.0
    %7149 = vmatpush1.msra.mxu0 %v6286
    %7150 = vmatprep.subr.mxu0 0.0
    %7151 = vmatpush1.msra.mxu0 %v6287
    %7152 = vmatprep.subr.mxu0 0.0
    %7153 = vmatpush1.msra.mxu0 %v6288
    %7154 = vmatprep.subr.mxu0 0.0
    %7155 = vmatpush1.msra.mxu0 %v6289
    %7156 = vmatprep.subr.mxu0 0.0
    %7157 = vmatpush1.msra.mxu0 %v6290
    %7158 = vmatprep.subr.mxu0 0.0
    %7159 = vmatpush1.msra.mxu0 %v6291
    %7160 = vmatprep.subr.mxu0 0.0
    %7161 = vmatpush1.msra.mxu0 %v6292
    %7162 = vmatprep.subr.mxu0 0.0
    %7163 = vmatpush1.msra.mxu0 %v6293
    %7164 = vmatprep.subr.mxu0 0.0
    %7165 = vmatpush1.msra.mxu0 %v6294
    %7166 = vmatprep.subr.mxu0 0.0
    %7167 = vmatpush1.msra.mxu0 %v6295
    %7168 = vmatprep.subr.mxu0 0.0
    %7169 = vmatpush1.msra.mxu0 %v6296
    %7170 = vmatprep.subr.mxu0 0.0
    %7171 = vmatpush1.msra.mxu0 %v6297
    %7172 = vmatprep.subr.mxu0 0.0
    %7173 = vmatpush1.msra.mxu0 %v6298
    %7174 = vmatprep.subr.mxu0 0.0
    %7175 = vmatpush1.msra.mxu0 %v6299
    %7176 = vmatprep.subr.mxu0 0.0
    %7177 = vmatpush1.msra.mxu0 %v6300
    %7178 = vmatprep.subr.mxu0 0.0
    %7179 = vmatpush1.msra.mxu0 %v6301
    %7180 = vmatprep.subr.mxu0 0.0
    %7181 = vmatpush1.msra.mxu0 %v6302
    %7182 = vmatprep.subr.mxu0 0.0
    %7183 = vmatpush1.msra.mxu0 %v6303
    %7184 = vmatprep.subr.mxu0 0.0
    %7185 = vmatpush1.msra.mxu0 %v6304
    %7186 = vmatprep.subr.mxu0 0.0
    %7187 = vmatpush1.msra.mxu0 %v6305
    %7188 = vmatprep.mubr.f32.mxu0 %v5639
    %7189 = vmatmul.mubr.f32.gmra.mrb[0].mxu0 %v5638
    %v7190 = vpop.f32.mrb[0].mxu0
    %v7191 = vadd.f32 %v6806, %v7190
    %v7192 = vpop.f32.mrb[0].mxu0
    %7193 = vmatprep.mubr.f32.mxu0 %v5648
    %7194 = vmatmul.mubr.f32.gmra.mrb[0].mxu0 %v5647
    %v7195 = vpop.f32.mrb[0].mxu0
    %v7196 = vadd.f32 %v6811, %v7195
    %v7197 = vpop.f32.mrb[0].mxu0
    %7198 = vmatprep.mubr.f32.mxu0 %v5657
    %7199 = vmatmul.mubr.f32.gmra.mrb[0].mxu0 %v5656
    %v7200 = vpop.f32.mrb[0].mxu0
    %v7201 = vadd.f32 %v6816, %v7200
    %v7202 = vpop.f32.mrb[0].mxu0
    %7203 = vmatprep.mubr.f32.mxu0 %v5666
    %7204 = vmatmul.mubr.f32.gmra.mrb[0].mxu0 %v5665
    %v7205 = vpop.f32.mrb[0].mxu0
    %v7206 = vadd.f32 %v6821, %v7205
    %v7207 = vpop.f32.mrb[0].mxu0
    %7208 = vmatprep.mubr.f32.mxu0 %v5675
    %7209 = vmatmul.mubr.f32.gmra.mrb[0].mxu0 %v5674
    %v7210 = vpop.f32.mrb[0].mxu0
    %v7211 = vadd.f32 %v6826, %v7210
    %v7212 = vpop.f32.mrb[0].mxu0
    %7213 = vmatprep.mubr.f32.mxu0 %v5684
    %7214 = vmatmul.mubr.f32.gmra.mrb[0].mxu0 %v5683
    %v7215 = vpop.f32.mrb[0].mxu0
    %v7216 = vadd.f32 %v6831, %v7215
    %v7217 = vpop.f32.mrb[0].mxu0
    %7218 = vmatprep.mubr.f32.mxu0 %v5693
    %7219 = vmatmul.mubr.f32.gmra.mrb[0].mxu0 %v5692
    %v7220 = vpop.f32.mrb[0].mxu0
    %v7221 = vadd.f32 %v6836, %v7220
    %v7222 = vpop.f32.mrb[0].mxu0
    %7223 = vmatprep.mubr.f32.mxu0 %v5702
    %7224 = vmatmul.mubr.f32.gmra.mrb[0].mxu0 %v5701
    %v7225 = vpop.f32.mrb[0].mxu0
    %v7226 = vadd.f32 %v6841, %v7225
    %v7227 = vpop.f32.mrb[0].mxu0
    %7228 = vmatprep.mubr.f32.mxu0 %v5711
    %7229 = vmatmul.mubr.f32.gmra.mrb[0].mxu0 %v5710
    %v7230 = vpop.f32.mrb[0].mxu0
    %v7231 = vadd.f32 %v6846, %v7230
    %v7232 = vpop.f32.mrb[0].mxu0
    %7233 = vmatprep.mubr.f32.mxu0 %v5720
    %7234 = vmatmul.mubr.f32.gmra.mrb[0].mxu0 %v5719
    %v7235 = vpop.f32.mrb[0].mxu0
    %v7236 = vadd.f32 %v6851, %v7235
    %v7237 = vpop.f32.mrb[0].mxu0
    %7238 = vmatprep.mubr.f32.mxu0 %v5729
    %7239 = vmatmul.mubr.f32.gmra.mrb[0].mxu0 %v5728
    %v7240 = vpop.f32.mrb[0].mxu0
    %v7241 = vadd.f32 %v6856, %v7240
    %v7242 = vpop.f32.mrb[0].mxu0
    %7243 = vmatprep.mubr.f32.mxu0 %v5738
    %7244 = vmatmul.mubr.f32.gmra.mrb[0].mxu0 %v5737
    %v7245 = vpop.f32.mrb[0].mxu0
    %v7246 = vadd.f32 %v6861, %v7245
    %v7247 = vpop.f32.mrb[0].mxu0
    %7248 = vmatprep.mubr.f32.mxu0 %v5747
    %7249 = vmatmul.mubr.f32.gmra.mrb[0].mxu0 %v5746
    %v7250 = vpop.f32.mrb[0].mxu0
    %v7251 = vadd.f32 %v6866, %v7250
    %v7252 = vpop.f32.mrb[0].mxu0
    %7253 = vmatprep.mubr.f32.mxu0 %v5756
    %7254 = vmatmul.mubr.f32.gmra.mrb[0].mxu0 %v5755
    %v7255 = vpop.f32.mrb[0].mxu0
    %v7256 = vadd.f32 %v6871, %v7255
    %v7257 = vpop.f32.mrb[0].mxu0
    %7258 = vmatprep.mubr.f32.mxu0 %v5765
    %7259 = vmatmul.mubr.f32.gmra.mrb[0].mxu0 %v5764
    %v7260 = vpop.f32.mrb[0].mxu0
    %v7261 = vadd.f32 %v6876, %v7260
    %v7262 = vpop.f32.mrb[0].mxu0
    %7263 = vmatprep.mubr.f32.mxu0 %v5774
    %7264 = vmatmul.mubr.f32.gmra.mrb[0].mxu0 %v5773
    %v7265 = vpop.f32.mrb[0].mxu0
    %v7266 = vadd.f32 %v6881, %v7265
    %v7267 = vpop.f32.mrb[0].mxu0
    %7268 = vmatprep.mubr.f32.mxu0 %v5783
    %7269 = vmatmul.mubr.f32.gmra.mrb[0].mxu0 %v5782
    %v7270 = vpop.f32.mrb[0].mxu0
    %v7271 = vadd.f32 %v6886, %v7270
    %v7272 = vpop.f32.mrb[0].mxu0
    %7273 = vmatprep.mubr.f32.mxu0 %v5792
    %7274 = vmatmul.mubr.f32.gmra.mrb[0].mxu0 %v5791
    %v7275 = vpop.f32.mrb[0].mxu0
    %v7276 = vadd.f32 %v6891, %v7275
    %v7277 = vpop.f32.mrb[0].mxu0
    %7278 = vmatprep.mubr.f32.mxu0 %v5801
    %7279 = vmatmul.mubr.f32.gmra.mrb[0].mxu0 %v5800
    %v7280 = vpop.f32.mrb[0].mxu0
    %v7281 = vadd.f32 %v6896, %v7280
    %v7282 = vpop.f32.mrb[0].mxu0
    %7283 = vmatprep.mubr.f32.mxu0 %v5810
    %7284 = vmatmul.mubr.f32.gmra.mrb[0].mxu0 %v5809
    %v7285 = vpop.f32.mrb[0].mxu0
    %v7286 = vadd.f32 %v6901, %v7285
    %v7287 = vpop.f32.mrb[0].mxu0
    %7288 = vmatprep.mubr.f32.mxu0 %v5819
    %7289 = vmatmul.mubr.f32.gmra.mrb[0].mxu0 %v5818
    %v7290 = vpop.f32.mrb[0].mxu0
    %v7291 = vadd.f32 %v6906, %v7290
    %v7292 = vpop.f32.mrb[0].mxu0
    %7293 = vmatprep.mubr.f32.mxu0 %v5828
    %7294 = vmatmul.mubr.f32.gmra.mrb[0].mxu0 %v5827
    %v7295 = vpop.f32.mrb[0].mxu0
    %v7296 = vadd.f32 %v6911, %v7295
    %v7297 = vpop.f32.mrb[0].mxu0
    %7298 = vmatprep.mubr.f32.mxu0 %v5837
    %7299 = vmatmul.mubr.f32.gmra.mrb[0].mxu0 %v5836
    %v7300 = vpop.f32.mrb[0].mxu0
    %v7301 = vadd.f32 %v6916, %v7300
    %v7302 = vpop.f32.mrb[0].mxu0
    %7303 = vmatprep.mubr.f32.mxu0 %v5846
    %7304 = vmatmul.mubr.f32.gmra.mrb[0].mxu0 %v5845
    %v7305 = vpop.f32.mrb[0].mxu0
    %v7306 = vadd.f32 %v6921, %v7305
    %v7307 = vpop.f32.mrb[0].mxu0
    %7308 = vmatprep.mubr.f32.mxu0 %v5855
    %7309 = vmatmul.mubr.f32.gmra.mrb[0].mxu0 %v5854
    %v7310 = vpop.f32.mrb[0].mxu0
    %v7311 = vadd.f32 %v6926, %v7310
    %v7312 = vpop.f32.mrb[0].mxu0
    %7313 = vmatprep.mubr.f32.mxu0 %v5864
    %7314 = vmatmul.mubr.f32.gmra.mrb[0].mxu0 %v5863
    %v7315 = vpop.f32.mrb[0].mxu0
    %v7316 = vadd.f32 %v6931, %v7315
    %v7317 = vpop.f32.mrb[0].mxu0
    %7318 = vmatprep.mubr.f32.mxu0 %v5873
    %7319 = vmatmul.mubr.f32.gmra.mrb[0].mxu0 %v5872
    %v7320 = vpop.f32.mrb[0].mxu0
    %v7321 = vadd.f32 %v6936, %v7320
    %v7322 = vpop.f32.mrb[0].mxu0
    %7323 = vmatprep.mubr.f32.mxu0 %v5882
    %7324 = vmatmul.mubr.f32.gmra.mrb[0].mxu0 %v5881
    %v7325 = vpop.f32.mrb[0].mxu0
    %v7326 = vadd.f32 %v6941, %v7325
    %v7327 = vpop.f32.mrb[0].mxu0
    %7328 = vmatprep.mubr.f32.mxu0 %v5891
    %7329 = vmatmul.mubr.f32.gmra.mrb[0].mxu0 %v5890
    %v7330 = vpop.f32.mrb[0].mxu0
    %v7331 = vadd.f32 %v6946, %v7330
    %v7332 = vpop.f32.mrb[0].mxu0
    %7333 = vmatprep.mubr.f32.mxu0 %v5900
    %7334 = vmatmul.mubr.f32.gmra.mrb[0].mxu0 %v5899
    %v7335 = vpop.f32.mrb[0].mxu0
    %v7336 = vadd.f32 %v6951, %v7335
    %v7337 = vpop.f32.mrb[0].mxu0
    %7338 = vmatprep.mubr.f32.mxu0 %v5909
    %7339 = vmatmul.mubr.f32.gmra.mrb[0].mxu0 %v5908
    %v7340 = vpop.f32.mrb[0].mxu0
    %v7341 = vadd.f32 %v6956, %v7340
    %v7342 = vpop.f32.mrb[0].mxu0
    %7343 = vmatprep.mubr.f32.mxu0 %v5918
    %7344 = vmatmul.mubr.f32.gmra.mrb[0].mxu0 %v5917
    %v7345 = vpop.f32.mrb[0].mxu0
    %v7346 = vadd.f32 %v6961, %v7345
    %v7347 = vpop.f32.mrb[0].mxu0
    %7348 = vmatprep.mubr.f32.mxu0 %v5927
    %7349 = vmatmul.mubr.f32.gmra.mrb[0].mxu0 %v5926
    %v7350 = vpop.f32.mrb[0].mxu0
    %v7351 = vadd.f32 %v6966, %v7350
    %v7352 = vpop.f32.mrb[0].mxu0
    %7353 = vmatprep.mubr.f32.mxu0 %v5936
    %7354 = vmatmul.mubr.f32.gmra.mrb[0].mxu0 %v5935
    %v7355 = vpop.f32.mrb[0].mxu0
    %v7356 = vadd.f32 %v6971, %v7355
    %v7357 = vpop.f32.mrb[0].mxu0
    %7358 = vmatprep.mubr.f32.mxu0 %v5945
    %7359 = vmatmul.mubr.f32.gmra.mrb[0].mxu0 %v5944
    %v7360 = vpop.f32.mrb[0].mxu0
    %v7361 = vadd.f32 %v6976, %v7360
    %v7362 = vpop.f32.mrb[0].mxu0
    %7363 = vmatprep.mubr.f32.mxu0 %v5954
    %7364 = vmatmul.mubr.f32.gmra.mrb[0].mxu0 %v5953
    %v7365 = vpop.f32.mrb[0].mxu0
    %v7366 = vadd.f32 %v6981, %v7365
    %v7367 = vpop.f32.mrb[0].mxu0
    %7368 = vmatprep.mubr.f32.mxu0 %v5963
    %7369 = vmatmul.mubr.f32.gmra.mrb[0].mxu0 %v5962
    %v7370 = vpop.f32.mrb[0].mxu0
    %v7371 = vadd.f32 %v6986, %v7370
    %v7372 = vpop.f32.mrb[0].mxu0
    %7373 = vmatprep.mubr.f32.mxu0 %v5972
    %7374 = vmatmul.mubr.f32.gmra.mrb[0].mxu0 %v5971
    %v7375 = vpop.f32.mrb[0].mxu0
    %v7376 = vadd.f32 %v6991, %v7375
    %v7377 = vpop.f32.mrb[0].mxu0
    %7378 = vmatprep.mubr.f32.mxu0 %v5981
    %7379 = vmatmul.mubr.f32.gmra.mrb[0].mxu0 %v5980
    %v7380 = vpop.f32.mrb[0].mxu0
    %v7381 = vadd.f32 %v6996, %v7380
    %v7382 = vpop.f32.mrb[0].mxu0
    %7383 = vmatprep.mubr.f32.mxu0 %v5990
    %7384 = vmatmul.mubr.f32.gmra.mrb[0].mxu0 %v5989
    %v7385 = vpop.f32.mrb[0].mxu0
    %v7386 = vadd.f32 %v7001, %v7385
    %v7387 = vpop.f32.mrb[0].mxu0
    %7388 = vmatprep.mubr.f32.mxu0 %v5999
    %7389 = vmatmul.mubr.f32.gmra.mrb[0].mxu0 %v5998
    %v7390 = vpop.f32.mrb[0].mxu0
    %v7391 = vadd.f32 %v7006, %v7390
    %v7392 = vpop.f32.mrb[0].mxu0
    %7393 = vmatprep.mubr.f32.mxu0 %v6008
    %7394 = vmatmul.mubr.f32.gmra.mrb[0].mxu0 %v6007
    %v7395 = vpop.f32.mrb[0].mxu0
    %v7396 = vadd.f32 %v7011, %v7395
    %v7397 = vpop.f32.mrb[0].mxu0
    %7398 = vmatprep.mubr.f32.mxu0 %v6017
    %7399 = vmatmul.mubr.f32.gmra.mrb[0].mxu0 %v6016
    %v7400 = vpop.f32.mrb[0].mxu0
    %v7401 = vadd.f32 %v7016, %v7400
    %v7402 = vpop.f32.mrb[0].mxu0
    %7403 = vmatprep.mubr.f32.mxu0 %v6026
    %7404 = vmatmul.mubr.f32.gmra.mrb[0].mxu0 %v6025
    %v7405 = vpop.f32.mrb[0].mxu0
    %v7406 = vadd.f32 %v7021, %v7405
    %v7407 = vpop.f32.mrb[0].mxu0
    %7408 = vmatprep.mubr.f32.mxu0 %v6035
    %7409 = vmatmul.mubr.f32.gmra.mrb[0].mxu0 %v6034
    %v7410 = vpop.f32.mrb[0].mxu0
    %v7411 = vadd.f32 %v7026, %v7410
    %v7412 = vpop.f32.mrb[0].mxu0
    %7413 = vmatprep.mubr.f32.mxu0 %v6044
    %7414 = vmatmul.mubr.f32.gmra.mrb[0].mxu0 %v6043
    %v7415 = vpop.f32.mrb[0].mxu0
    %v7416 = vadd.f32 %v7031, %v7415
    %v7417 = vpop.f32.mrb[0].mxu0
    %7418 = vmatprep.mubr.f32.mxu0 %v6053
    %7419 = vmatmul.mubr.f32.gmra.mrb[0].mxu0 %v6052
    %v7420 = vpop.f32.mrb[0].mxu0
    %v7421 = vadd.f32 %v7036, %v7420
    %v7422 = vpop.f32.mrb[0].mxu0
    %7423 = vmatprep.mubr.f32.mxu0 %v6062
    %7424 = vmatmul.mubr.f32.gmra.mrb[0].mxu0 %v6061
    %v7425 = vpop.f32.mrb[0].mxu0
    %v7426 = vadd.f32 %v7041, %v7425
    %v7427 = vpop.f32.mrb[0].mxu0
    %7428 = vmatprep.mubr.f32.mxu0 %v6071
    %7429 = vmatmul.mubr.f32.gmra.mrb[0].mxu0 %v6070
    %v7430 = vpop.f32.mrb[0].mxu0
    %v7431 = vadd.f32 %v7046, %v7430
    %v7432 = vpop.f32.mrb[0].mxu0
    %7433 = vmatprep.mubr.f32.mxu0 %v6080
    %7434 = vmatmul.mubr.f32.gmra.mrb[0].mxu0 %v6079
    %v7435 = vpop.f32.mrb[0].mxu0
    %v7436 = vadd.f32 %v7051, %v7435
    %v7437 = vpop.f32.mrb[0].mxu0
    %7438 = vmatprep.mubr.f32.mxu0 %v6089
    %7439 = vmatmul.mubr.f32.gmra.mrb[0].mxu0 %v6088
    %v7440 = vpop.f32.mrb[0].mxu0
    %v7441 = vadd.f32 %v7056, %v7440
    %v7442 = vpop.f32.mrb[0].mxu0
    %7443 = vmatprep.mubr.f32.mxu0 %v6098
    %7444 = vmatmul.mubr.f32.gmra.mrb[0].mxu0 %v6097
    %v7445 = vpop.f32.mrb[0].mxu0
    %v7446 = vadd.f32 %v7061, %v7445
    %v7447 = vpop.f32.mrb[0].mxu0
    %7448 = vmatprep.mubr.f32.mxu0 %v6107
    %7449 = vmatmul.mubr.f32.gmra.mrb[0].mxu0 %v6106
    %v7450 = vpop.f32.mrb[0].mxu0
    %v7451 = vadd.f32 %v7066, %v7450
    %v7452 = vpop.f32.mrb[0].mxu0
    %7453 = vmatprep.mubr.f32.mxu0 %v6116
    %7454 = vmatmul.mubr.f32.gmra.mrb[0].mxu0 %v6115
    %v7455 = vpop.f32.mrb[0].mxu0
    %v7456 = vadd.f32 %v7071, %v7455
    %v7457 = vpop.f32.mrb[0].mxu0
    %7458 = vmatprep.mubr.f32.mxu0 %v6125
    %7459 = vmatmul.mubr.f32.gmra.mrb[0].mxu0 %v6124
    %v7460 = vpop.f32.mrb[0].mxu0
    %v7461 = vadd.f32 %v7076, %v7460
    %v7462 = vpop.f32.mrb[0].mxu0
    %7463 = vmatprep.mubr.f32.mxu0 %v6134
    %7464 = vmatmul.mubr.f32.gmra.mrb[0].mxu0 %v6133
    %v7465 = vpop.f32.mrb[0].mxu0
    %v7466 = vadd.f32 %v7081, %v7465
    %v7467 = vpop.f32.mrb[0].mxu0
    %7468 = vmatprep.mubr.f32.mxu0 %v6143
    %7469 = vmatmul.mubr.f32.gmra.mrb[0].mxu0 %v6142
    %v7470 = vpop.f32.mrb[0].mxu0
    %v7471 = vadd.f32 %v7086, %v7470
    %v7472 = vpop.f32.mrb[0].mxu0
    %7473 = vmatprep.mubr.f32.mxu0 %v6152
    %7474 = vmatmul.mubr.f32.gmra.mrb[0].mxu0 %v6151
    %v7475 = vpop.f32.mrb[0].mxu0
    %v7476 = vadd.f32 %v7091, %v7475
    %v7477 = vpop.f32.mrb[0].mxu0
    %7478 = vmatprep.mubr.f32.mxu0 %v6161
    %7479 = vmatmul.mubr.f32.gmra.mrb[0].mxu0 %v6160
    %v7480 = vpop.f32.mrb[0].mxu0
    %v7481 = vadd.f32 %v7096, %v7480
    %v7482 = vpop.f32.mrb[0].mxu0
    %7483 = vmatprep.mubr.f32.mxu0 %v6170
    %7484 = vmatmul.mubr.f32.gmra.mrb[0].mxu0 %v6169
    %v7485 = vpop.f32.mrb[0].mxu0
    %v7486 = vadd.f32 %v7101, %v7485
    %v7487 = vpop.f32.mrb[0].mxu0
    %7488 = vmatprep.mubr.f32.mxu0 %v6179
    %7489 = vmatmul.mubr.f32.gmra.mrb[0].mxu0 %v6178
    %v7490 = vpop.f32.mrb[0].mxu0
    %v7491 = vadd.f32 %v7106, %v7490
    %v7492 = vpop.f32.mrb[0].mxu0
    %7493 = vmatprep.mubr.f32.mxu0 %v6188
    %7494 = vmatmul.mubr.f32.gmra.mrb[0].mxu0 %v6187
    %v7495 = vpop.f32.mrb[0].mxu0
    %v7496 = vadd.f32 %v7111, %v7495
    %v7497 = vpop.f32.mrb[0].mxu0
    %7498 = vmatprep.mubr.f32.mxu0 %v6197
    %7499 = vmatmul.mubr.f32.gmra.mrb[0].mxu0 %v6196
    %v7500 = vpop.f32.mrb[0].mxu0
    %v7501 = vadd.f32 %v7116, %v7500
    %v7502 = vpop.f32.mrb[0].mxu0
    %7503 = vmatprep.mubr.f32.mxu0 %v6206
    %7504 = vmatmul.mubr.f32.gmra.mrb[0].mxu0 %v6205
    %v7505 = vpop.f32.mrb[0].mxu0
    %v7506 = vadd.f32 %v7121, %v7505
    %v7507 = vpop.f32.mrb[0].mxu0
    %7508 = vdwg.mxu0
    %7509 = vmatprep.subr.mxu0 0.0
    %7510 = vmatpush1.msra.mxu0 %v6306
    %7511 = vmatprep.subr.mxu0 0.0
    %7512 = vmatpush1.msra.mxu0 %v6307
    %7513 = vmatprep.subr.mxu0 0.0
    %7514 = vmatpush1.msra.mxu0 %v6308
    %7515 = vmatprep.subr.mxu0 0.0
    %7516 = vmatpush1.msra.mxu0 %v6309
    %7517 = vmatprep.subr.mxu0 0.0
    %7518 = vmatpush1.msra.mxu0 %v6310
    %7519 = vmatprep.subr.mxu0 0.0
    %7520 = vmatpush1.msra.mxu0 %v6311
    %7521 = vmatprep.subr.mxu0 0.0
    %7522 = vmatpush1.msra.mxu0 %v6312
    %7523 = vmatprep.subr.mxu0 0.0
    %7524 = vmatpush1.msra.mxu0 %v6313
    %7525 = vmatprep.subr.mxu0 0.0
    %7526 = vmatpush1.msra.mxu0 %v6314
    %7527 = vmatprep.subr.mxu0 0.0
    %7528 = vmatpush1.msra.mxu0 %v6315
    %7529 = vmatprep.subr.mxu0 0.0
    %7530 = vmatpush1.msra.mxu0 %v6316
    %7531 = vmatprep.subr.mxu0 0.0
    %7532 = vmatpush1.msra.mxu0 %v6317
    %7533 = vmatprep.subr.mxu0 0.0
    %7534 = vmatpush1.msra.mxu0 %v6318
    %7535 = vmatprep.subr.mxu0 0.0
    %7536 = vmatpush1.msra.mxu0 %v6319
    %7537 = vmatprep.subr.mxu0 0.0
    %7538 = vmatpush1.msra.mxu0 %v6320
    %7539 = vmatprep.subr.mxu0 0.0
    %7540 = vmatpush1.msra.mxu0 %v6321
    %7541 = vmatprep.subr.mxu0 0.0
    %7542 = vmatpush1.msra.mxu0 %v6322
    %7543 = vmatprep.subr.mxu0 0.0
    %7544 = vmatpush1.msra.mxu0 %v6323
    %7545 = vmatprep.subr.mxu0 0.0
    %7546 = vmatpush1.msra.mxu0 %v6324
    %7547 = vmatprep.subr.mxu0 0.0
    %7548 = vmatpush1.msra.mxu0 %v6325
    %7549 = vmatprep.subr.mxu0 0.0
    %7550 = vmatpush1.msra.mxu0 %v6326
    %7551 = vmatprep.subr.mxu0 0.0
    %7552 = vmatpush1.msra.mxu0 %v6327
    %7553 = vmatprep.subr.mxu0 0.0
    %7554 = vmatpush1.msra.mxu0 %v6328
    %7555 = vmatprep.subr.mxu0 0.0
    %7556 = vmatpush1.msra.mxu0 %v6329
    %7557 = vmatprep.subr.mxu0 0.0
    %7558 = vmatpush1.msra.mxu0 %v6330
    %7559 = vmatprep.subr.mxu0 0.0
    %7560 = vmatpush1.msra.mxu0 %v6331
    %7561 = vmatprep.subr.mxu0 0.0
    %7562 = vmatpush1.msra.mxu0 %v6332
    %7563 = vmatprep.subr.mxu0 0.0
    %7564 = vmatpush1.msra.mxu0 %v6333
    %7565 = vmatprep.subr.mxu0 0.0
    %7566 = vmatpush1.msra.mxu0 %v6334
    %7567 = vmatprep.subr.mxu0 0.0
    %7568 = vmatpush1.msra.mxu0 %v6335
    %7569 = vmatprep.subr.mxu0 0.0
    %7570 = vmatpush1.msra.mxu0 %v6336
    %7571 = vmatprep.subr.mxu0 0.0
    %7572 = vmatpush1.msra.mxu0 %v6337
    %7573 = vmatprep.mubr.f32.mxu0 %v5641
    %7574 = vmatmul.mubr.f32.gmra.mrb[0].mxu0 %v5640
    %v7575 = vpop.f32.mrb[0].mxu0
    %v7576 = vadd.f32 %v7191, %v7575
    %v7577 = vpop.f32.mrb[0].mxu0
    %7578 = vmatprep.mubr.f32.mxu0 %v5650
    %7579 = vmatmul.mubr.f32.gmra.mrb[0].mxu0 %v5649
    %v7580 = vpop.f32.mrb[0].mxu0
    %v7581 = vadd.f32 %v7196, %v7580
    %v7582 = vpop.f32.mrb[0].mxu0
    %7583 = vmatprep.mubr.f32.mxu0 %v5659
    %7584 = vmatmul.mubr.f32.gmra.mrb[0].mxu0 %v5658
    %v7585 = vpop.f32.mrb[0].mxu0
    %v7586 = vadd.f32 %v7201, %v7585
    %v7587 = vpop.f32.mrb[0].mxu0
    %7588 = vmatprep.mubr.f32.mxu0 %v5668
    %7589 = vmatmul.mubr.f32.gmra.mrb[0].mxu0 %v5667
    %v7590 = vpop.f32.mrb[0].mxu0
    %v7591 = vadd.f32 %v7206, %v7590
    %v7592 = vpop.f32.mrb[0].mxu0
    %7593 = vmatprep.mubr.f32.mxu0 %v5677
    %7594 = vmatmul.mubr.f32.gmra.mrb[0].mxu0 %v5676
    %v7595 = vpop.f32.mrb[0].mxu0
    %v7596 = vadd.f32 %v7211, %v7595
    %v7597 = vpop.f32.mrb[0].mxu0
    %7598 = vmatprep.mubr.f32.mxu0 %v5686
    %7599 = vmatmul.mubr.f32.gmra.mrb[0].mxu0 %v5685
    %v7600 = vpop.f32.mrb[0].mxu0
    %v7601 = vadd.f32 %v7216, %v7600
    %v7602 = vpop.f32.mrb[0].mxu0
    %7603 = vmatprep.mubr.f32.mxu0 %v5695
    %7604 = vmatmul.mubr.f32.gmra.mrb[0].mxu0 %v5694
    %v7605 = vpop.f32.mrb[0].mxu0
    %v7606 = vadd.f32 %v7221, %v7605
    %v7607 = vpop.f32.mrb[0].mxu0
    %7608 = vmatprep.mubr.f32.mxu0 %v5704
    %7609 = vmatmul.mubr.f32.gmra.mrb[0].mxu0 %v5703
    %v7610 = vpop.f32.mrb[0].mxu0
    %v7611 = vadd.f32 %v7226, %v7610
    %v7612 = vpop.f32.mrb[0].mxu0
    %7613 = vmatprep.mubr.f32.mxu0 %v5713
    %7614 = vmatmul.mubr.f32.gmra.mrb[0].mxu0 %v5712
    %v7615 = vpop.f32.mrb[0].mxu0
    %v7616 = vadd.f32 %v7231, %v7615
    %v7617 = vpop.f32.mrb[0].mxu0
    %7618 = vmatprep.mubr.f32.mxu0 %v5722
    %7619 = vmatmul.mubr.f32.gmra.mrb[0].mxu0 %v5721
    %v7620 = vpop.f32.mrb[0].mxu0
    %v7621 = vadd.f32 %v7236, %v7620
    %v7622 = vpop.f32.mrb[0].mxu0
    %7623 = vmatprep.mubr.f32.mxu0 %v5731
    %7624 = vmatmul.mubr.f32.gmra.mrb[0].mxu0 %v5730
    %v7625 = vpop.f32.mrb[0].mxu0
    %v7626 = vadd.f32 %v7241, %v7625
    %v7627 = vpop.f32.mrb[0].mxu0
    %7628 = vmatprep.mubr.f32.mxu0 %v5740
    %7629 = vmatmul.mubr.f32.gmra.mrb[0].mxu0 %v5739
    %v7630 = vpop.f32.mrb[0].mxu0
    %v7631 = vadd.f32 %v7246, %v7630
    %v7632 = vpop.f32.mrb[0].mxu0
    %7633 = vmatprep.mubr.f32.mxu0 %v5749
    %7634 = vmatmul.mubr.f32.gmra.mrb[0].mxu0 %v5748
    %v7635 = vpop.f32.mrb[0].mxu0
    %v7636 = vadd.f32 %v7251, %v7635
    %v7637 = vpop.f32.mrb[0].mxu0
    %7638 = vmatprep.mubr.f32.mxu0 %v5758
    %7639 = vmatmul.mubr.f32.gmra.mrb[0].mxu0 %v5757
    %v7640 = vpop.f32.mrb[0].mxu0
    %v7641 = vadd.f32 %v7256, %v7640
    %v7642 = vpop.f32.mrb[0].mxu0
    %7643 = vmatprep.mubr.f32.mxu0 %v5767
    %7644 = vmatmul.mubr.f32.gmra.mrb[0].mxu0 %v5766
    %v7645 = vpop.f32.mrb[0].mxu0
    %v7646 = vadd.f32 %v7261, %v7645
    %v7647 = vpop.f32.mrb[0].mxu0
    %7648 = vmatprep.mubr.f32.mxu0 %v5776
    %7649 = vmatmul.mubr.f32.gmra.mrb[0].mxu0 %v5775
    %v7650 = vpop.f32.mrb[0].mxu0
    %v7651 = vadd.f32 %v7266, %v7650
    %v7652 = vpop.f32.mrb[0].mxu0
    %7653 = vmatprep.mubr.f32.mxu0 %v5785
    %7654 = vmatmul.mubr.f32.gmra.mrb[0].mxu0 %v5784
    %v7655 = vpop.f32.mrb[0].mxu0
    %v7656 = vadd.f32 %v7271, %v7655
    %v7657 = vpop.f32.mrb[0].mxu0
    %7658 = vmatprep.mubr.f32.mxu0 %v5794
    %7659 = vmatmul.mubr.f32.gmra.mrb[0].mxu0 %v5793
    %v7660 = vpop.f32.mrb[0].mxu0
    %v7661 = vadd.f32 %v7276, %v7660
    %v7662 = vpop.f32.mrb[0].mxu0
    %7663 = vmatprep.mubr.f32.mxu0 %v5803
    %7664 = vmatmul.mubr.f32.gmra.mrb[0].mxu0 %v5802
    %v7665 = vpop.f32.mrb[0].mxu0
    %v7666 = vadd.f32 %v7281, %v7665
    %v7667 = vpop.f32.mrb[0].mxu0
    %7668 = vmatprep.mubr.f32.mxu0 %v5812
    %7669 = vmatmul.mubr.f32.gmra.mrb[0].mxu0 %v5811
    %v7670 = vpop.f32.mrb[0].mxu0
    %v7671 = vadd.f32 %v7286, %v7670
    %v7672 = vpop.f32.mrb[0].mxu0
    %7673 = vmatprep.mubr.f32.mxu0 %v5821
    %7674 = vmatmul.mubr.f32.gmra.mrb[0].mxu0 %v5820
    %v7675 = vpop.f32.mrb[0].mxu0
    %v7676 = vadd.f32 %v7291, %v7675
    %v7677 = vpop.f32.mrb[0].mxu0
    %7678 = vmatprep.mubr.f32.mxu0 %v5830
    %7679 = vmatmul.mubr.f32.gmra.mrb[0].mxu0 %v5829
    %v7680 = vpop.f32.mrb[0].mxu0
    %v7681 = vadd.f32 %v7296, %v7680
    %v7682 = vpop.f32.mrb[0].mxu0
    %7683 = vmatprep.mubr.f32.mxu0 %v5839
    %7684 = vmatmul.mubr.f32.gmra.mrb[0].mxu0 %v5838
    %v7685 = vpop.f32.mrb[0].mxu0
    %v7686 = vadd.f32 %v7301, %v7685
    %v7687 = vpop.f32.mrb[0].mxu0
    %7688 = vmatprep.mubr.f32.mxu0 %v5848
    %7689 = vmatmul.mubr.f32.gmra.mrb[0].mxu0 %v5847
    %v7690 = vpop.f32.mrb[0].mxu0
    %v7691 = vadd.f32 %v7306, %v7690
    %v7692 = vpop.f32.mrb[0].mxu0
    %7693 = vmatprep.mubr.f32.mxu0 %v5857
    %7694 = vmatmul.mubr.f32.gmra.mrb[0].mxu0 %v5856
    %v7695 = vpop.f32.mrb[0].mxu0
    %v7696 = vadd.f32 %v7311, %v7695
    %v7697 = vpop.f32.mrb[0].mxu0
    %7698 = vmatprep.mubr.f32.mxu0 %v5866
    %7699 = vmatmul.mubr.f32.gmra.mrb[0].mxu0 %v5865
    %v7700 = vpop.f32.mrb[0].mxu0
    %v7701 = vadd.f32 %v7316, %v7700
    %v7702 = vpop.f32.mrb[0].mxu0
    %7703 = vmatprep.mubr.f32.mxu0 %v5875
    %7704 = vmatmul.mubr.f32.gmra.mrb[0].mxu0 %v5874
    %v7705 = vpop.f32.mrb[0].mxu0
    %v7706 = vadd.f32 %v7321, %v7705
    %v7707 = vpop.f32.mrb[0].mxu0
    %7708 = vmatprep.mubr.f32.mxu0 %v5884
    %7709 = vmatmul.mubr.f32.gmra.mrb[0].mxu0 %v5883
    %v7710 = vpop.f32.mrb[0].mxu0
    %v7711 = vadd.f32 %v7326, %v7710
    %v7712 = vpop.f32.mrb[0].mxu0
    %7713 = vmatprep.mubr.f32.mxu0 %v5893
    %7714 = vmatmul.mubr.f32.gmra.mrb[0].mxu0 %v5892
    %v7715 = vpop.f32.mrb[0].mxu0
    %v7716 = vadd.f32 %v7331, %v7715
    %v7717 = vpop.f32.mrb[0].mxu0
    %7718 = vmatprep.mubr.f32.mxu0 %v5902
    %7719 = vmatmul.mubr.f32.gmra.mrb[0].mxu0 %v5901
    %v7720 = vpop.f32.mrb[0].mxu0
    %v7721 = vadd.f32 %v7336, %v7720
    %v7722 = vpop.f32.mrb[0].mxu0
    %7723 = vmatprep.mubr.f32.mxu0 %v5911
    %7724 = vmatmul.mubr.f32.gmra.mrb[0].mxu0 %v5910
    %v7725 = vpop.f32.mrb[0].mxu0
    %v7726 = vadd.f32 %v7341, %v7725
    %v7727 = vpop.f32.mrb[0].mxu0
    %7728 = vmatprep.mubr.f32.mxu0 %v5920
    %7729 = vmatmul.mubr.f32.gmra.mrb[0].mxu0 %v5919
    %v7730 = vpop.f32.mrb[0].mxu0
    %v7731 = vadd.f32 %v7346, %v7730
    %v7732 = vpop.f32.mrb[0].mxu0
    %7733 = vmatprep.mubr.f32.mxu0 %v5929
    %7734 = vmatmul.mubr.f32.gmra.mrb[0].mxu0 %v5928
    %v7735 = vpop.f32.mrb[0].mxu0
    %v7736 = vadd.f32 %v7351, %v7735
    %v7737 = vpop.f32.mrb[0].mxu0
    %7738 = vmatprep.mubr.f32.mxu0 %v5938
    %7739 = vmatmul.mubr.f32.gmra.mrb[0].mxu0 %v5937
    %v7740 = vpop.f32.mrb[0].mxu0
    %v7741 = vadd.f32 %v7356, %v7740
    %v7742 = vpop.f32.mrb[0].mxu0
    %7743 = vmatprep.mubr.f32.mxu0 %v5947
    %7744 = vmatmul.mubr.f32.gmra.mrb[0].mxu0 %v5946
    %v7745 = vpop.f32.mrb[0].mxu0
    %v7746 = vadd.f32 %v7361, %v7745
    %v7747 = vpop.f32.mrb[0].mxu0
    %7748 = vmatprep.mubr.f32.mxu0 %v5956
    %7749 = vmatmul.mubr.f32.gmra.mrb[0].mxu0 %v5955
    %v7750 = vpop.f32.mrb[0].mxu0
    %v7751 = vadd.f32 %v7366, %v7750
    %v7752 = vpop.f32.mrb[0].mxu0
    %7753 = vmatprep.mubr.f32.mxu0 %v5965
    %7754 = vmatmul.mubr.f32.gmra.mrb[0].mxu0 %v5964
    %v7755 = vpop.f32.mrb[0].mxu0
    %v7756 = vadd.f32 %v7371, %v7755
    %v7757 = vpop.f32.mrb[0].mxu0
    %7758 = vmatprep.mubr.f32.mxu0 %v5974
    %7759 = vmatmul.mubr.f32.gmra.mrb[0].mxu0 %v5973
    %v7760 = vpop.f32.mrb[0].mxu0
    %v7761 = vadd.f32 %v7376, %v7760
    %v7762 = vpop.f32.mrb[0].mxu0
    %7763 = vmatprep.mubr.f32.mxu0 %v5983
    %7764 = vmatmul.mubr.f32.gmra.mrb[0].mxu0 %v5982
    %v7765 = vpop.f32.mrb[0].mxu0
    %v7766 = vadd.f32 %v7381, %v7765
    %v7767 = vpop.f32.mrb[0].mxu0
    %7768 = vmatprep.mubr.f32.mxu0 %v5992
    %7769 = vmatmul.mubr.f32.gmra.mrb[0].mxu0 %v5991
    %v7770 = vpop.f32.mrb[0].mxu0
    %v7771 = vadd.f32 %v7386, %v7770
    %v7772 = vpop.f32.mrb[0].mxu0
    %7773 = vmatprep.mubr.f32.mxu0 %v6001
    %7774 = vmatmul.mubr.f32.gmra.mrb[0].mxu0 %v6000
    %v7775 = vpop.f32.mrb[0].mxu0
    %v7776 = vadd.f32 %v7391, %v7775
    %v7777 = vpop.f32.mrb[0].mxu0
    %7778 = vmatprep.mubr.f32.mxu0 %v6010
    %7779 = vmatmul.mubr.f32.gmra.mrb[0].mxu0 %v6009
    %v7780 = vpop.f32.mrb[0].mxu0
    %v7781 = vadd.f32 %v7396, %v7780
    %v7782 = vpop.f32.mrb[0].mxu0
    %7783 = vmatprep.mubr.f32.mxu0 %v6019
    %7784 = vmatmul.mubr.f32.gmra.mrb[0].mxu0 %v6018
    %v7785 = vpop.f32.mrb[0].mxu0
    %v7786 = vadd.f32 %v7401, %v7785
    %v7787 = vpop.f32.mrb[0].mxu0
    %7788 = vmatprep.mubr.f32.mxu0 %v6028
    %7789 = vmatmul.mubr.f32.gmra.mrb[0].mxu0 %v6027
    %v7790 = vpop.f32.mrb[0].mxu0
    %v7791 = vadd.f32 %v7406, %v7790
    %v7792 = vpop.f32.mrb[0].mxu0
    %7793 = vmatprep.mubr.f32.mxu0 %v6037
    %7794 = vmatmul.mubr.f32.gmra.mrb[0].mxu0 %v6036
    %v7795 = vpop.f32.mrb[0].mxu0
    %v7796 = vadd.f32 %v7411, %v7795
    %v7797 = vpop.f32.mrb[0].mxu0
    %7798 = vmatprep.mubr.f32.mxu0 %v6046
    %7799 = vmatmul.mubr.f32.gmra.mrb[0].mxu0 %v6045
    %v7800 = vpop.f32.mrb[0].mxu0
    %v7801 = vadd.f32 %v7416, %v7800
    %v7802 = vpop.f32.mrb[0].mxu0
    %7803 = vmatprep.mubr.f32.mxu0 %v6055
    %7804 = vmatmul.mubr.f32.gmra.mrb[0].mxu0 %v6054
    %v7805 = vpop.f32.mrb[0].mxu0
    %v7806 = vadd.f32 %v7421, %v7805
    %v7807 = vpop.f32.mrb[0].mxu0
    %7808 = vmatprep.mubr.f32.mxu0 %v6064
    %7809 = vmatmul.mubr.f32.gmra.mrb[0].mxu0 %v6063
    %v7810 = vpop.f32.mrb[0].mxu0
    %v7811 = vadd.f32 %v7426, %v7810
    %v7812 = vpop.f32.mrb[0].mxu0
    %7813 = vmatprep.mubr.f32.mxu0 %v6073
    %7814 = vmatmul.mubr.f32.gmra.mrb[0].mxu0 %v6072
    %v7815 = vpop.f32.mrb[0].mxu0
    %v7816 = vadd.f32 %v7431, %v7815
    %v7817 = vpop.f32.mrb[0].mxu0
    %7818 = vmatprep.mubr.f32.mxu0 %v6082
    %7819 = vmatmul.mubr.f32.gmra.mrb[0].mxu0 %v6081
    %v7820 = vpop.f32.mrb[0].mxu0
    %v7821 = vadd.f32 %v7436, %v7820
    %v7822 = vpop.f32.mrb[0].mxu0
    %7823 = vmatprep.mubr.f32.mxu0 %v6091
    %7824 = vmatmul.mubr.f32.gmra.mrb[0].mxu0 %v6090
    %v7825 = vpop.f32.mrb[0].mxu0
    %v7826 = vadd.f32 %v7441, %v7825
    %v7827 = vpop.f32.mrb[0].mxu0
    %7828 = vmatprep.mubr.f32.mxu0 %v6100
    %7829 = vmatmul.mubr.f32.gmra.mrb[0].mxu0 %v6099
    %v7830 = vpop.f32.mrb[0].mxu0
    %v7831 = vadd.f32 %v7446, %v7830
    %v7832 = vpop.f32.mrb[0].mxu0
    %7833 = vmatprep.mubr.f32.mxu0 %v6109
    %7834 = vmatmul.mubr.f32.gmra.mrb[0].mxu0 %v6108
    %v7835 = vpop.f32.mrb[0].mxu0
    %v7836 = vadd.f32 %v7451, %v7835
    %v7837 = vpop.f32.mrb[0].mxu0
    %7838 = vmatprep.mubr.f32.mxu0 %v6118
    %7839 = vmatmul.mubr.f32.gmra.mrb[0].mxu0 %v6117
    %v7840 = vpop.f32.mrb[0].mxu0
    %v7841 = vadd.f32 %v7456, %v7840
    %v7842 = vpop.f32.mrb[0].mxu0
    %7843 = vmatprep.mubr.f32.mxu0 %v6127
    %7844 = vmatmul.mubr.f32.gmra.mrb[0].mxu0 %v6126
    %v7845 = vpop.f32.mrb[0].mxu0
    %v7846 = vadd.f32 %v7461, %v7845
    %v7847 = vpop.f32.mrb[0].mxu0
    %7848 = vmatprep.mubr.f32.mxu0 %v6136
    %7849 = vmatmul.mubr.f32.gmra.mrb[0].mxu0 %v6135
    %v7850 = vpop.f32.mrb[0].mxu0
    %v7851 = vadd.f32 %v7466, %v7850
    %v7852 = vpop.f32.mrb[0].mxu0
    %7853 = vmatprep.mubr.f32.mxu0 %v6145
    %7854 = vmatmul.mubr.f32.gmra.mrb[0].mxu0 %v6144
    %v7855 = vpop.f32.mrb[0].mxu0
    %v7856 = vadd.f32 %v7471, %v7855
    %v7857 = vpop.f32.mrb[0].mxu0
    %7858 = vmatprep.mubr.f32.mxu0 %v6154
    %7859 = vmatmul.mubr.f32.gmra.mrb[0].mxu0 %v6153
    %v7860 = vpop.f32.mrb[0].mxu0
    %v7861 = vadd.f32 %v7476, %v7860
    %v7862 = vpop.f32.mrb[0].mxu0
    %7863 = vmatprep.mubr.f32.mxu0 %v6163
    %7864 = vmatmul.mubr.f32.gmra.mrb[0].mxu0 %v6162
    %v7865 = vpop.f32.mrb[0].mxu0
    %v7866 = vadd.f32 %v7481, %v7865
    %v7867 = vpop.f32.mrb[0].mxu0
    %7868 = vmatprep.mubr.f32.mxu0 %v6172
    %7869 = vmatmul.mubr.f32.gmra.mrb[0].mxu0 %v6171
    %v7870 = vpop.f32.mrb[0].mxu0
    %v7871 = vadd.f32 %v7486, %v7870
    %v7872 = vpop.f32.mrb[0].mxu0
    %7873 = vmatprep.mubr.f32.mxu0 %v6181
    %7874 = vmatmul.mubr.f32.gmra.mrb[0].mxu0 %v6180
    %v7875 = vpop.f32.mrb[0].mxu0
    %v7876 = vadd.f32 %v7491, %v7875
    %v7877 = vpop.f32.mrb[0].mxu0
    %7878 = vmatprep.mubr.f32.mxu0 %v6190
    %7879 = vmatmul.mubr.f32.gmra.mrb[0].mxu0 %v6189
    %v7880 = vpop.f32.mrb[0].mxu0
    %v7881 = vadd.f32 %v7496, %v7880
    %v7882 = vpop.f32.mrb[0].mxu0
    %7883 = vmatprep.mubr.f32.mxu0 %v6199
    %7884 = vmatmul.mubr.f32.gmra.mrb[0].mxu0 %v6198
    %v7885 = vpop.f32.mrb[0].mxu0
    %v7886 = vadd.f32 %v7501, %v7885
    %v7887 = vpop.f32.mrb[0].mxu0
    %7888 = vmatprep.mubr.f32.mxu0 %v6208
    %7889 = vmatmul.mubr.f32.gmra.mrb[0].mxu0 %v6207
    %v7890 = vpop.f32.mrb[0].mxu0
    %v7891 = vadd.f32 %v7506, %v7890
    %v7892 = vpop.f32.mrb[0].mxu0
    %7893 = vdwg.mxu0
    %7894 = vmatprep.subr.mxu0 0.0
    %7895 = vmatpush1.msra.mxu0 %v6338
    %7896 = vmatprep.subr.mxu0 0.0
    %7897 = vmatpush1.msra.mxu0 %v6339
    %7898 = vmatprep.subr.mxu0 0.0
    %7899 = vmatpush1.msra.mxu0 %v6340
    %7900 = vmatprep.subr.mxu0 0.0
    %7901 = vmatpush1.msra.mxu0 %v6341
    %7902 = vmatprep.subr.mxu0 0.0
    %7903 = vmatpush1.msra.mxu0 %v6342
    %7904 = vmatprep.subr.mxu0 0.0
    %7905 = vmatpush1.msra.mxu0 %v6343
    %7906 = vmatprep.subr.mxu0 0.0
    %7907 = vmatpush1.msra.mxu0 %v6344
    %7908 = vmatprep.subr.mxu0 0.0
    %7909 = vmatpush1.msra.mxu0 %v6345
    %7910 = vmatprep.subr.mxu0 0.0
    %7911 = vmatpush1.msra.mxu0 %v6346
    %7912 = vmatprep.subr.mxu0 0.0
    %7913 = vmatpush1.msra.mxu0 %v6347
    %7914 = vmatprep.subr.mxu0 0.0
    %7915 = vmatpush1.msra.mxu0 %v6348
    %7916 = vmatprep.subr.mxu0 0.0
    %7917 = vmatpush1.msra.mxu0 %v6349
    %7918 = vmatprep.subr.mxu0 0.0
    %7919 = vmatpush1.msra.mxu0 %v6350
    %7920 = vmatprep.subr.mxu0 0.0
    %7921 = vmatpush1.msra.mxu0 %v6351
    %7922 = vmatprep.subr.mxu0 0.0
    %7923 = vmatpush1.msra.mxu0 %v6352
    %7924 = vmatprep.subr.mxu0 0.0
    %7925 = vmatpush1.msra.mxu0 %v6353
    %7926 = vmatprep.subr.mxu0 0.0
    %7927 = vmatpush1.msra.mxu0 0.0
    %7928 = vmatprep.subr.mxu0 0.0
    %7929 = vmatpush1.msra.mxu0 0.0
    %7930 = vmatprep.subr.mxu0 0.0
    %7931 = vmatpush1.msra.mxu0 0.0
    %7932 = vmatprep.subr.mxu0 0.0
    %7933 = vmatpush1.msra.mxu0 0.0
    %7934 = vmatprep.subr.mxu0 0.0
    %7935 = vmatpush1.msra.mxu0 0.0
    %7936 = vmatprep.subr.mxu0 0.0
    %7937 = vmatpush1.msra.mxu0 0.0
    %7938 = vmatprep.subr.mxu0 0.0
    %7939 = vmatpush1.msra.mxu0 0.0
    %7940 = vmatprep.subr.mxu0 0.0
    %7941 = vmatpush1.msra.mxu0 0.0
    %7942 = vmatprep.subr.mxu0 0.0
    %7943 = vmatpush1.msra.mxu0 0.0
    %7944 = vmatprep.subr.mxu0 0.0
    %7945 = vmatpush1.msra.mxu0 0.0
    %7946 = vmatprep.subr.mxu0 0.0
    %7947 = vmatpush1.msra.mxu0 0.0
    %7948 = vmatprep.subr.mxu0 0.0
    %7949 = vmatpush1.msra.mxu0 0.0
    %7950 = vmatprep.subr.mxu0 0.0
    %7951 = vmatpush1.msra.mxu0 0.0
    %7952 = vmatprep.subr.mxu0 0.0
    %7953 = vmatpush1.msra.mxu0 0.0
    %7954 = vmatprep.subr.mxu0 0.0
    %7955 = vmatpush1.msra.mxu0 0.0
    %7956 = vmatprep.subr.mxu0 0.0
    %7957 = vmatpush1.msra.mxu0 0.0
    %7958 = vmatprep.mubr.f32.mxu0 0.0
    %7959 = vmatmul.mubr.f32.gmra.mrb[0].mxu0 %v5642
    %v7960 = vpop.f32.mrb[0].mxu0
    %v7961 = vadd.f32 %v7576, %v7960
    %v7962 = vpop.f32.mrb[0].mxu0
    %7963 = vmatprep.mubr.f32.mxu0 0.0
    %7964 = vmatmul.mubr.f32.gmra.mrb[0].mxu0 %v5651
    %v7965 = vpop.f32.mrb[0].mxu0
    %v7966 = vadd.f32 %v7581, %v7965
    %v7967 = vpop.f32.mrb[0].mxu0
    %7968 = vmatprep.mubr.f32.mxu0 0.0
    %7969 = vmatmul.mubr.f32.gmra.mrb[0].mxu0 %v5660
    %v7970 = vpop.f32.mrb[0].mxu0
    %v7971 = vadd.f32 %v7586, %v7970
    %v7972 = vpop.f32.mrb[0].mxu0
    %7973 = vmatprep.mubr.f32.mxu0 0.0
    %7974 = vmatmul.mubr.f32.gmra.mrb[0].mxu0 %v5669
    %v7975 = vpop.f32.mrb[0].mxu0
    %v7976 = vadd.f32 %v7591, %v7975
    %v7977 = vpop.f32.mrb[0].mxu0
    %7978 = vmatprep.mubr.f32.mxu0 0.0
    %7979 = vmatmul.mubr.f32.gmra.mrb[0].mxu0 %v5678
    %v7980 = vpop.f32.mrb[0].mxu0
    %v7981 = vadd.f32 %v7596, %v7980
    %v7982 = vpop.f32.mrb[0].mxu0
    %7983 = vmatprep.mubr.f32.mxu0 0.0
    %7984 = vmatmul.mubr.f32.gmra.mrb[0].mxu0 %v5687
    %v7985 = vpop.f32.mrb[0].mxu0
    %v7986 = vadd.f32 %v7601, %v7985
    %v7987 = vpop.f32.mrb[0].mxu0
    %7988 = vmatprep.mubr.f32.mxu0 0.0
    %7989 = vmatmul.mubr.f32.gmra.mrb[0].mxu0 %v5696
    %v7990 = vpop.f32.mrb[0].mxu0
    %v7991 = vadd.f32 %v7606, %v7990
    %v7992 = vpop.f32.mrb[0].mxu0
    %7993 = vmatprep.mubr.f32.mxu0 0.0
    %7994 = vmatmul.mubr.f32.gmra.mrb[0].mxu0 %v5705
    %v7995 = vpop.f32.mrb[0].mxu0
    %v7996 = vadd.f32 %v7611, %v7995
    %v7997 = vpop.f32.mrb[0].mxu0
    %7998 = vmatprep.mubr.f32.mxu0 0.0
    %7999 = vmatmul.mubr.f32.gmra.mrb[0].mxu0 %v5714
    %v8000 = vpop.f32.mrb[0].mxu0
    %v8001 = vadd.f32 %v7616, %v8000
    %v8002 = vpop.f32.mrb[0].mxu0
    %8003 = vmatprep.mubr.f32.mxu0 0.0
    %8004 = vmatmul.mubr.f32.gmra.mrb[0].mxu0 %v5723
    %v8005 = vpop.f32.mrb[0].mxu0
    %v8006 = vadd.f32 %v7621, %v8005
    %v8007 = vpop.f32.mrb[0].mxu0
    %8008 = vmatprep.mubr.f32.mxu0 0.0
    %8009 = vmatmul.mubr.f32.gmra.mrb[0].mxu0 %v5732
    %v8010 = vpop.f32.mrb[0].mxu0
    %v8011 = vadd.f32 %v7626, %v8010
    %v8012 = vpop.f32.mrb[0].mxu0
    %8013 = vmatprep.mubr.f32.mxu0 0.0
    %8014 = vmatmul.mubr.f32.gmra.mrb[0].mxu0 %v5741
    %v8015 = vpop.f32.mrb[0].mxu0
    %v8016 = vadd.f32 %v7631, %v8015
    %v8017 = vpop.f32.mrb[0].mxu0
    %8018 = vmatprep.mubr.f32.mxu0 0.0
    %8019 = vmatmul.mubr.f32.gmra.mrb[0].mxu0 %v5750
    %v8020 = vpop.f32.mrb[0].mxu0
    %v8021 = vadd.f32 %v7636, %v8020
    %v8022 = vpop.f32.mrb[0].mxu0
    %8023 = vmatprep.mubr.f32.mxu0 0.0
    %8024 = vmatmul.mubr.f32.gmra.mrb[0].mxu0 %v5759
    %v8025 = vpop.f32.mrb[0].mxu0
    %v8026 = vadd.f32 %v7641, %v8025
    %v8027 = vpop.f32.mrb[0].mxu0
    %8028 = vmatprep.mubr.f32.mxu0 0.0
    %8029 = vmatmul.mubr.f32.gmra.mrb[0].mxu0 %v5768
    %v8030 = vpop.f32.mrb[0].mxu0
    %v8031 = vadd.f32 %v7646, %v8030
    %v8032 = vpop.f32.mrb[0].mxu0
    %8033 = vmatprep.mubr.f32.mxu0 0.0
    %8034 = vmatmul.mubr.f32.gmra.mrb[0].mxu0 %v5777
    %v8035 = vpop.f32.mrb[0].mxu0
    %v8036 = vadd.f32 %v7651, %v8035
    %v8037 = vpop.f32.mrb[0].mxu0
    %8038 = vmatprep.mubr.f32.mxu0 0.0
    %8039 = vmatmul.mubr.f32.gmra.mrb[0].mxu0 %v5786
    %v8040 = vpop.f32.mrb[0].mxu0
    %v8041 = vadd.f32 %v7656, %v8040
    %v8042 = vpop.f32.mrb[0].mxu0
    %8043 = vmatprep.mubr.f32.mxu0 0.0
    %8044 = vmatmul.mubr.f32.gmra.mrb[0].mxu0 %v5795
    %v8045 = vpop.f32.mrb[0].mxu0
    %v8046 = vadd.f32 %v7661, %v8045
    %v8047 = vpop.f32.mrb[0].mxu0
    %8048 = vmatprep.mubr.f32.mxu0 0.0
    %8049 = vmatmul.mubr.f32.gmra.mrb[0].mxu0 %v5804
    %v8050 = vpop.f32.mrb[0].mxu0
    %v8051 = vadd.f32 %v7666, %v8050
    %v8052 = vpop.f32.mrb[0].mxu0
    %8053 = vmatprep.mubr.f32.mxu0 0.0
    %8054 = vmatmul.mubr.f32.gmra.mrb[0].mxu0 %v5813
    %v8055 = vpop.f32.mrb[0].mxu0
    %v8056 = vadd.f32 %v7671, %v8055
    %v8057 = vpop.f32.mrb[0].mxu0
    %8058 = vmatprep.mubr.f32.mxu0 0.0
    %8059 = vmatmul.mubr.f32.gmra.mrb[0].mxu0 %v5822
    %v8060 = vpop.f32.mrb[0].mxu0
    %v8061 = vadd.f32 %v7676, %v8060
    %v8062 = vpop.f32.mrb[0].mxu0
    %8063 = vmatprep.mubr.f32.mxu0 0.0
    %8064 = vmatmul.mubr.f32.gmra.mrb[0].mxu0 %v5831
    %v8065 = vpop.f32.mrb[0].mxu0
    %v8066 = vadd.f32 %v7681, %v8065
    %v8067 = vpop.f32.mrb[0].mxu0
    %8068 = vmatprep.mubr.f32.mxu0 0.0
    %8069 = vmatmul.mubr.f32.gmra.mrb[0].mxu0 %v5840
    %v8070 = vpop.f32.mrb[0].mxu0
    %v8071 = vadd.f32 %v7686, %v8070
    %v8072 = vpop.f32.mrb[0].mxu0
    %8073 = vmatprep.mubr.f32.mxu0 0.0
    %8074 = vmatmul.mubr.f32.gmra.mrb[0].mxu0 %v5849
    %v8075 = vpop.f32.mrb[0].mxu0
    %v8076 = vadd.f32 %v7691, %v8075
    %v8077 = vpop.f32.mrb[0].mxu0
    %8078 = vmatprep.mubr.f32.mxu0 0.0
    %8079 = vmatmul.mubr.f32.gmra.mrb[0].mxu0 %v5858
    %v8080 = vpop.f32.mrb[0].mxu0
    %v8081 = vadd.f32 %v7696, %v8080
    %v8082 = vpop.f32.mrb[0].mxu0
    %8083 = vmatprep.mubr.f32.mxu0 0.0
    %8084 = vmatmul.mubr.f32.gmra.mrb[0].mxu0 %v5867
    %v8085 = vpop.f32.mrb[0].mxu0
    %v8086 = vadd.f32 %v7701, %v8085
    %v8087 = vpop.f32.mrb[0].mxu0
    %8088 = vmatprep.mubr.f32.mxu0 0.0
    %8089 = vmatmul.mubr.f32.gmra.mrb[0].mxu0 %v5876
    %v8090 = vpop.f32.mrb[0].mxu0
    %v8091 = vadd.f32 %v7706, %v8090
    %v8092 = vpop.f32.mrb[0].mxu0
    %8093 = vmatprep.mubr.f32.mxu0 0.0
    %8094 = vmatmul.mubr.f32.gmra.mrb[0].mxu0 %v5885
    %v8095 = vpop.f32.mrb[0].mxu0
    %v8096 = vadd.f32 %v7711, %v8095
    %v8097 = vpop.f32.mrb[0].mxu0
    %8098 = vmatprep.mubr.f32.mxu0 0.0
    %8099 = vmatmul.mubr.f32.gmra.mrb[0].mxu0 %v5894
    %v8100 = vpop.f32.mrb[0].mxu0
    %v8101 = vadd.f32 %v7716, %v8100
    %v8102 = vpop.f32.mrb[0].mxu0
    %8103 = vmatprep.mubr.f32.mxu0 0.0
    %8104 = vmatmul.mubr.f32.gmra.mrb[0].mxu0 %v5903
    %v8105 = vpop.f32.mrb[0].mxu0
    %v8106 = vadd.f32 %v7721, %v8105
    %v8107 = vpop.f32.mrb[0].mxu0
    %8108 = vmatprep.mubr.f32.mxu0 0.0
    %8109 = vmatmul.mubr.f32.gmra.mrb[0].mxu0 %v5912
    %v8110 = vpop.f32.mrb[0].mxu0
    %v8111 = vadd.f32 %v7726, %v8110
    %v8112 = vpop.f32.mrb[0].mxu0
    %8113 = vmatprep.mubr.f32.mxu0 0.0
    %8114 = vmatmul.mubr.f32.gmra.mrb[0].mxu0 %v5921
    %v8115 = vpop.f32.mrb[0].mxu0
    %v8116 = vadd.f32 %v7731, %v8115
    %v8117 = vpop.f32.mrb[0].mxu0
    %8118 = vmatprep.mubr.f32.mxu0 0.0
    %8119 = vmatmul.mubr.f32.gmra.mrb[0].mxu0 %v5930
    %v8120 = vpop.f32.mrb[0].mxu0
    %v8121 = vadd.f32 %v7736, %v8120
    %v8122 = vpop.f32.mrb[0].mxu0
    %8123 = vmatprep.mubr.f32.mxu0 0.0
    %8124 = vmatmul.mubr.f32.gmra.mrb[0].mxu0 %v5939
    %v8125 = vpop.f32.mrb[0].mxu0
    %v8126 = vadd.f32 %v7741, %v8125
    %v8127 = vpop.f32.mrb[0].mxu0
    %8128 = vmatprep.mubr.f32.mxu0 0.0
    %8129 = vmatmul.mubr.f32.gmra.mrb[0].mxu0 %v5948
    %v8130 = vpop.f32.mrb[0].mxu0
    %v8131 = vadd.f32 %v7746, %v8130
    %v8132 = vpop.f32.mrb[0].mxu0
    %8133 = vmatprep.mubr.f32.mxu0 0.0
    %8134 = vmatmul.mubr.f32.gmra.mrb[0].mxu0 %v5957
    %v8135 = vpop.f32.mrb[0].mxu0
    %v8136 = vadd.f32 %v7751, %v8135
    %v8137 = vpop.f32.mrb[0].mxu0
    %8138 = vmatprep.mubr.f32.mxu0 0.0
    %8139 = vmatmul.mubr.f32.gmra.mrb[0].mxu0 %v5966
    %v8140 = vpop.f32.mrb[0].mxu0
    %v8141 = vadd.f32 %v7756, %v8140
    %v8142 = vpop.f32.mrb[0].mxu0
    %8143 = vmatprep.mubr.f32.mxu0 0.0
    %8144 = vmatmul.mubr.f32.gmra.mrb[0].mxu0 %v5975
    %v8145 = vpop.f32.mrb[0].mxu0
    %v8146 = vadd.f32 %v7761, %v8145
    %v8147 = vpop.f32.mrb[0].mxu0
    %8148 = vmatprep.mubr.f32.mxu0 0.0
    %8149 = vmatmul.mubr.f32.gmra.mrb[0].mxu0 %v5984
    %v8150 = vpop.f32.mrb[0].mxu0
    %v8151 = vadd.f32 %v7766, %v8150
    %v8152 = vpop.f32.mrb[0].mxu0
    %8153 = vmatprep.mubr.f32.mxu0 0.0
    %8154 = vmatmul.mubr.f32.gmra.mrb[0].mxu0 %v5993
    %v8155 = vpop.f32.mrb[0].mxu0
    %v8156 = vadd.f32 %v7771, %v8155
    %v8157 = vpop.f32.mrb[0].mxu0
    %8158 = vmatprep.mubr.f32.mxu0 0.0
    %8159 = vmatmul.mubr.f32.gmra.mrb[0].mxu0 %v6002
    %v8160 = vpop.f32.mrb[0].mxu0
    %v8161 = vadd.f32 %v7776, %v8160
    %v8162 = vpop.f32.mrb[0].mxu0
    %8163 = vmatprep.mubr.f32.mxu0 0.0
    %8164 = vmatmul.mubr.f32.gmra.mrb[0].mxu0 %v6011
    %v8165 = vpop.f32.mrb[0].mxu0
    %v8166 = vadd.f32 %v7781, %v8165
    %v8167 = vpop.f32.mrb[0].mxu0
    %8168 = vmatprep.mubr.f32.mxu0 0.0
    %8169 = vmatmul.mubr.f32.gmra.mrb[0].mxu0 %v6020
    %v8170 = vpop.f32.mrb[0].mxu0
    %v8171 = vadd.f32 %v7786, %v8170
    %v8172 = vpop.f32.mrb[0].mxu0
    %8173 = vmatprep.mubr.f32.mxu0 0.0
    %8174 = vmatmul.mubr.f32.gmra.mrb[0].mxu0 %v6029
    %v8175 = vpop.f32.mrb[0].mxu0
    %v8176 = vadd.f32 %v7791, %v8175
    %v8177 = vpop.f32.mrb[0].mxu0
    %8178 = vmatprep.mubr.f32.mxu0 0.0
    %8179 = vmatmul.mubr.f32.gmra.mrb[0].mxu0 %v6038
    %v8180 = vpop.f32.mrb[0].mxu0
    %v8181 = vadd.f32 %v7796, %v8180
    %v8182 = vpop.f32.mrb[0].mxu0
    %8183 = vmatprep.mubr.f32.mxu0 0.0
    %8184 = vmatmul.mubr.f32.gmra.mrb[0].mxu0 %v6047
    %v8185 = vpop.f32.mrb[0].mxu0
    %v8186 = vadd.f32 %v7801, %v8185
    %v8187 = vpop.f32.mrb[0].mxu0
    %8188 = vmatprep.mubr.f32.mxu0 0.0
    %8189 = vmatmul.mubr.f32.gmra.mrb[0].mxu0 %v6056
    %v8190 = vpop.f32.mrb[0].mxu0
    %v8191 = vadd.f32 %v7806, %v8190
    %v8192 = vpop.f32.mrb[0].mxu0
    %8193 = vmatprep.mubr.f32.mxu0 0.0
    %8194 = vmatmul.mubr.f32.gmra.mrb[0].mxu0 %v6065
    %v8195 = vpop.f32.mrb[0].mxu0
    %v8196 = vadd.f32 %v7811, %v8195
    %v8197 = vpop.f32.mrb[0].mxu0
    %8198 = vmatprep.mubr.f32.mxu0 0.0
    %8199 = vmatmul.mubr.f32.gmra.mrb[0].mxu0 %v6074
    %v8200 = vpop.f32.mrb[0].mxu0
    %v8201 = vadd.f32 %v7816, %v8200
    %v8202 = vpop.f32.mrb[0].mxu0
    %8203 = vmatprep.mubr.f32.mxu0 0.0
    %8204 = vmatmul.mubr.f32.gmra.mrb[0].mxu0 %v6083
    %v8205 = vpop.f32.mrb[0].mxu0
    %v8206 = vadd.f32 %v7821, %v8205
    %v8207 = vpop.f32.mrb[0].mxu0
    %8208 = vmatprep.mubr.f32.mxu0 0.0
    %8209 = vmatmul.mubr.f32.gmra.mrb[0].mxu0 %v6092
    %v8210 = vpop.f32.mrb[0].mxu0
    %v8211 = vadd.f32 %v7826, %v8210
    %v8212 = vpop.f32.mrb[0].mxu0
    %8213 = vmatprep.mubr.f32.mxu0 0.0
    %8214 = vmatmul.mubr.f32.gmra.mrb[0].mxu0 %v6101
    %v8215 = vpop.f32.mrb[0].mxu0
    %v8216 = vadd.f32 %v7831, %v8215
    %v8217 = vpop.f32.mrb[0].mxu0
    %8218 = vmatprep.mubr.f32.mxu0 0.0
    %8219 = vmatmul.mubr.f32.gmra.mrb[0].mxu0 %v6110
    %v8220 = vpop.f32.mrb[0].mxu0
    %v8221 = vadd.f32 %v7836, %v8220
    %v8222 = vpop.f32.mrb[0].mxu0
    %8223 = vmatprep.mubr.f32.mxu0 0.0
    %8224 = vmatmul.mubr.f32.gmra.mrb[0].mxu0 %v6119
    %v8225 = vpop.f32.mrb[0].mxu0
    %v8226 = vadd.f32 %v7841, %v8225
    %v8227 = vpop.f32.mrb[0].mxu0
    %8228 = vmatprep.mubr.f32.mxu0 0.0
    %8229 = vmatmul.mubr.f32.gmra.mrb[0].mxu0 %v6128
    %v8230 = vpop.f32.mrb[0].mxu0
    %v8231 = vadd.f32 %v7846, %v8230
    %v8232 = vpop.f32.mrb[0].mxu0
    %8233 = vmatprep.mubr.f32.mxu0 0.0
    %8234 = vmatmul.mubr.f32.gmra.mrb[0].mxu0 %v6137
    %v8235 = vpop.f32.mrb[0].mxu0
    %v8236 = vadd.f32 %v7851, %v8235
    %v8237 = vpop.f32.mrb[0].mxu0
    %8238 = vmatprep.mubr.f32.mxu0 0.0
    %8239 = vmatmul.mubr.f32.gmra.mrb[0].mxu0 %v6146
    %v8240 = vpop.f32.mrb[0].mxu0
    %v8241 = vadd.f32 %v7856, %v8240
    %v8242 = vpop.f32.mrb[0].mxu0
    %8243 = vmatprep.mubr.f32.mxu0 0.0
    %8244 = vmatmul.mubr.f32.gmra.mrb[0].mxu0 %v6155
    %v8245 = vpop.f32.mrb[0].mxu0
    %v8246 = vadd.f32 %v7861, %v8245
    %v8247 = vpop.f32.mrb[0].mxu0
    %8248 = vmatprep.mubr.f32.mxu0 0.0
    %8249 = vmatmul.mubr.f32.gmra.mrb[0].mxu0 %v6164
    %v8250 = vpop.f32.mrb[0].mxu0
    %v8251 = vadd.f32 %v7866, %v8250
    %v8252 = vpop.f32.mrb[0].mxu0
    %8253 = vmatprep.mubr.f32.mxu0 0.0
    %8254 = vmatmul.mubr.f32.gmra.mrb[0].mxu0 %v6173
    %v8255 = vpop.f32.mrb[0].mxu0
    %v8256 = vadd.f32 %v7871, %v8255
    %v8257 = vpop.f32.mrb[0].mxu0
    %8258 = vmatprep.mubr.f32.mxu0 0.0
    %8259 = vmatmul.mubr.f32.gmra.mrb[0].mxu0 %v6182
    %v8260 = vpop.f32.mrb[0].mxu0
    %v8261 = vadd.f32 %v7876, %v8260
    %v8262 = vpop.f32.mrb[0].mxu0
    %8263 = vmatprep.mubr.f32.mxu0 0.0
    %8264 = vmatmul.mubr.f32.gmra.mrb[0].mxu0 %v6191
    %v8265 = vpop.f32.mrb[0].mxu0
    %v8266 = vadd.f32 %v7881, %v8265
    %v8267 = vpop.f32.mrb[0].mxu0
    %8268 = vmatprep.mubr.f32.mxu0 0.0
    %8269 = vmatmul.mubr.f32.gmra.mrb[0].mxu0 %v6200
    %v8270 = vpop.f32.mrb[0].mxu0
    %v8271 = vadd.f32 %v7886, %v8270
    %v8272 = vpop.f32.mrb[0].mxu0
    %8273 = vmatprep.mubr.f32.mxu0 0.0
    %8274 = vmatmul.mubr.f32.gmra.mrb[0].mxu0 %v6209
    %v8275 = vpop.f32.mrb[0].mxu0
    %v8276 = vadd.f32 %v7891, %v8275
    %v8277 = vpop.f32.mrb[0].mxu0
    %8278 = vdwg.mxu0
    %v8279 = vadd.f32 %v7961, %v7966
    %v8280 = vadd.f32 %v8279, %v7971
    %v8281 = vadd.f32 %v8280, %v7976
    %v8282 = vadd.f32 %v8281, %v7981
    %v8283 = vadd.f32 %v8282, %v7986
    %v8284 = vadd.f32 %v8283, %v7991
    %v8285 = vadd.f32 %v8284, %v7996
    %v8286 = vadd.f32 %v8285, %v8001
    %v8287 = vadd.f32 %v8286, %v8006
    %v8288 = vadd.f32 %v8287, %v8011
    %v8289 = vadd.f32 %v8288, %v8016
    %v8290 = vadd.f32 %v8289, %v8021
    %v8291 = vadd.f32 %v8290, %v8026
    %v8292 = vadd.f32 %v8291, %v8031
    %v8293 = vadd.f32 %v8292, %v8036
    %v8294 = vadd.f32 %v8293, %v8041
    %v8295 = vadd.f32 %v8294, %v8046
    %v8296 = vadd.f32 %v8295, %v8051
    %v8297 = vadd.f32 %v8296, %v8056
    %v8298 = vadd.f32 %v8297, %v8061
    %v8299 = vadd.f32 %v8298, %v8066
    %v8300 = vadd.f32 %v8299, %v8071
    %v8301 = vadd.f32 %v8300, %v8076
    %v8302 = vadd.f32 %v8301, %v8081
    %v8303 = vadd.f32 %v8302, %v8086
    %v8304 = vadd.f32 %v8303, %v8091
    %v8305 = vadd.f32 %v8304, %v8096
    %v8306 = vadd.f32 %v8305, %v8101
    %v8307 = vadd.f32 %v8306, %v8106
    %v8308 = vadd.f32 %v8307, %v8111
    %v8309 = vadd.f32 %v8308, %v8116
    %v8310 = vadd.f32 %v8309, %v8121
    %v8311 = vadd.f32 %v8310, %v8126
    %v8312 = vadd.f32 %v8311, %v8131
    %v8313 = vadd.f32 %v8312, %v8136
    %v8314 = vadd.f32 %v8313, %v8141
    %v8315 = vadd.f32 %v8314, %v8146
    %v8316 = vadd.f32 %v8315, %v8151
    %v8317 = vadd.f32 %v8316, %v8156
    %v8318 = vadd.f32 %v8317, %v8161
    %v8319 = vadd.f32 %v8318, %v8166
    %v8320 = vadd.f32 %v8319, %v8171
    %v8321 = vadd.f32 %v8320, %v8176
    %v8322 = vadd.f32 %v8321, %v8181
    %v8323 = vadd.f32 %v8322, %v8186
    %v8324 = vadd.f32 %v8323, %v8191
    %v8325 = vadd.f32 %v8324, %v8196
    %v8326 = vadd.f32 %v8325, %v8201
    %v8327 = vadd.f32 %v8326, %v8206
    %v8328 = vadd.f32 %v8327, %v8211
    %v8329 = vadd.f32 %v8328, %v8216
    %v8330 = vadd.f32 %v8329, %v8221
    %v8331 = vadd.f32 %v8330, %v8226
    %v8332 = vadd.f32 %v8331, %v8231
    %v8333 = vadd.f32 %v8332, %v8236
    %v8334 = vadd.f32 %v8333, %v8241
    %v8335 = vadd.f32 %v8334, %v8246
    %v8336 = vadd.f32 %v8335, %v8251
    %v8337 = vadd.f32 %v8336, %v8256
    %v8338 = vadd.f32 %v8337, %v8261
    %v8339 = vadd.f32 %v8338, %v8266
    %v8340 = vadd.f32 %v8339, %v8271
    %v8341 = vadd.f32 %v8340, %v8276
    %v8342 = vrot.slane %v8341, 4
    %v8343 = vadd.f32 %v8341, %v8342
    %v8344 = vrot.slane %v8343, 2
    %v8345 = vadd.f32 %v8343, %v8344
    %v8346 = vrot.slane %v8345, 1
    %v8347 = vadd.f32 %v8345, %v8346
    %v8348 = vmul.f32 %v7961, %v7961
    %v8349 = vmul.f32 %v7966, %v7966
    %v8350 = vmul.f32 %v7971, %v7971
    %v8351 = vmul.f32 %v7976, %v7976
    %v8352 = vmul.f32 %v7981, %v7981
    %v8353 = vmul.f32 %v7986, %v7986
    %v8354 = vmul.f32 %v7991, %v7991
    %v8355 = vmul.f32 %v7996, %v7996
    %v8356 = vmul.f32 %v8001, %v8001
    %v8357 = vmul.f32 %v8006, %v8006
    %v8358 = vmul.f32 %v8011, %v8011
    %v8359 = vmul.f32 %v8016, %v8016
    %v8360 = vmul.f32 %v8021, %v8021
    %v8361 = vmul.f32 %v8026, %v8026
    %v8362 = vmul.f32 %v8031, %v8031
    %v8363 = vmul.f32 %v8036, %v8036
    %v8364 = vmul.f32 %v8041, %v8041
    %v8365 = vmul.f32 %v8046, %v8046
    %v8366 = vmul.f32 %v8051, %v8051
    %v8367 = vmul.f32 %v8056, %v8056
    %v8368 = vmul.f32 %v8061, %v8061
    %v8369 = vmul.f32 %v8066, %v8066
    %v8370 = vmul.f32 %v8071, %v8071
    %v8371 = vmul.f32 %v8076, %v8076
    %v8372 = vmul.f32 %v8081, %v8081
    %v8373 = vmul.f32 %v8086, %v8086
    %v8374 = vmul.f32 %v8091, %v8091
    %v8375 = vmul.f32 %v8096, %v8096
    %v8376 = vmul.f32 %v8101, %v8101
    %v8377 = vmul.f32 %v8106, %v8106
    %v8378 = vmul.f32 %v8111, %v8111
    %v8379 = vmul.f32 %v8116, %v8116
    %v8380 = vmul.f32 %v8121, %v8121
    %v8381 = vmul.f32 %v8126, %v8126
    %v8382 = vmul.f32 %v8131, %v8131
    %v8383 = vmul.f32 %v8136, %v8136
    %v8384 = vmul.f32 %v8141, %v8141
    %v8385 = vmul.f32 %v8146, %v8146
    %v8386 = vmul.f32 %v8151, %v8151
    %v8387 = vmul.f32 %v8156, %v8156
    %v8388 = vmul.f32 %v8161, %v8161
    %v8389 = vmul.f32 %v8166, %v8166
    %v8390 = vmul.f32 %v8171, %v8171
    %v8391 = vmul.f32 %v8176, %v8176
    %v8392 = vmul.f32 %v8181, %v8181
    %v8393 = vmul.f32 %v8186, %v8186
    %v8394 = vmul.f32 %v8191, %v8191
    %v8395 = vmul.f32 %v8196, %v8196
    %v8396 = vmul.f32 %v8201, %v8201
    %v8397 = vmul.f32 %v8206, %v8206
    %v8398 = vmul.f32 %v8211, %v8211
    %v8399 = vmul.f32 %v8216, %v8216
    %v8400 = vmul.f32 %v8221, %v8221
    %v8401 = vmul.f32 %v8226, %v8226
    %v8402 = vmul.f32 %v8231, %v8231
    %v8403 = vmul.f32 %v8236, %v8236
    %v8404 = vmul.f32 %v8241, %v8241
    %v8405 = vmul.f32 %v8246, %v8246
    %v8406 = vmul.f32 %v8251, %v8251
    %v8407 = vmul.f32 %v8256, %v8256
    %v8408 = vmul.f32 %v8261, %v8261
    %v8409 = vmul.f32 %v8266, %v8266
    %v8410 = vmul.f32 %v8271, %v8271
    %v8411 = vmul.f32 %v8276, %v8276
    %v8412 = vadd.f32 %v8348, %v8349
    %v8413 = vadd.f32 %v8412, %v8350
    %v8414 = vadd.f32 %v8413, %v8351
    %v8415 = vadd.f32 %v8414, %v8352
    %v8416 = vadd.f32 %v8415, %v8353
    %v8417 = vadd.f32 %v8416, %v8354
    %v8418 = vadd.f32 %v8417, %v8355
    %v8419 = vadd.f32 %v8418, %v8356
    %v8420 = vadd.f32 %v8419, %v8357
    %v8421 = vadd.f32 %v8420, %v8358
    %v8422 = vadd.f32 %v8421, %v8359
    %v8423 = vadd.f32 %v8422, %v8360
    %v8424 = vadd.f32 %v8423, %v8361
    %v8425 = vadd.f32 %v8424, %v8362
    %v8426 = vadd.f32 %v8425, %v8363
    %v8427 = vadd.f32 %v8426, %v8364
    %v8428 = vadd.f32 %v8427, %v8365
    %v8429 = vadd.f32 %v8428, %v8366
    %v8430 = vadd.f32 %v8429, %v8367
    %v8431 = vadd.f32 %v8430, %v8368
    %v8432 = vadd.f32 %v8431, %v8369
    %v8433 = vadd.f32 %v8432, %v8370
    %v8434 = vadd.f32 %v8433, %v8371
    %v8435 = vadd.f32 %v8434, %v8372
    %v8436 = vadd.f32 %v8435, %v8373
    %v8437 = vadd.f32 %v8436, %v8374
    %v8438 = vadd.f32 %v8437, %v8375
    %v8439 = vadd.f32 %v8438, %v8376
    %v8440 = vadd.f32 %v8439, %v8377
    %v8441 = vadd.f32 %v8440, %v8378
    %v8442 = vadd.f32 %v8441, %v8379
    %v8443 = vadd.f32 %v8442, %v8380
    %v8444 = vadd.f32 %v8443, %v8381
    %v8445 = vadd.f32 %v8444, %v8382
    %v8446 = vadd.f32 %v8445, %v8383
    %v8447 = vadd.f32 %v8446, %v8384
    %v8448 = vadd.f32 %v8447, %v8385
    %v8449 = vadd.f32 %v8448, %v8386
    %v8450 = vadd.f32 %v8449, %v8387
    %v8451 = vadd.f32 %v8450, %v8388
    %v8452 = vadd.f32 %v8451, %v8389
    %v8453 = vadd.f32 %v8452, %v8390
    %v8454 = vadd.f32 %v8453, %v8391
    %v8455 = vadd.f32 %v8454, %v8392
    %v8456 = vadd.f32 %v8455, %v8393
    %v8457 = vadd.f32 %v8456, %v8394
    %v8458 = vadd.f32 %v8457, %v8395
    %v8459 = vadd.f32 %v8458, %v8396
    %v8460 = vadd.f32 %v8459, %v8397
    %v8461 = vadd.f32 %v8460, %v8398
    %v8462 = vadd.f32 %v8461, %v8399
    %v8463 = vadd.f32 %v8462, %v8400
    %v8464 = vadd.f32 %v8463, %v8401
    %v8465 = vadd.f32 %v8464, %v8402
    %v8466 = vadd.f32 %v8465, %v8403
    %v8467 = vadd.f32 %v8466, %v8404
    %v8468 = vadd.f32 %v8467, %v8405
    %v8469 = vadd.f32 %v8468, %v8406
    %v8470 = vadd.f32 %v8469, %v8407
    %v8471 = vadd.f32 %v8470, %v8408
    %v8472 = vadd.f32 %v8471, %v8409
    %v8473 = vadd.f32 %v8472, %v8410
    %v8474 = vadd.f32 %v8473, %v8411
    %v8475 = vrot.slane %v8474, 4
    %v8476 = vadd.f32 %v8474, %v8475
    %v8477 = vrot.slane %v8476, 2
    %v8478 = vadd.f32 %v8476, %v8477
    %v8479 = vrot.slane %v8478, 1
    %v8480 = vadd.f32 %v8478, %v8479
    %v8481 = vmul.f32 %v8347, 0.001953125
    %v8482 = vmul.f32 %v8480, 0.001953125
    %v8483 = vmul.f32 %v8481, %v8481
    %v8484 = vsub.f32 %v8482, %v8483
    %v8485 = vmax.f32 %v8484, 0.0
    %v8486 = vld [vmem:[#allocation14] sm:$0x1]
    %v8487 = vadd.f32 %v8485, 1e-05
    %v8488 = vrsqrt.pop %v8487
    %v8489 = vmul.f32 %v8486, %v8488
    %v8490 = vld [vmem:[#allocation16] sm:$0x1]
    %v8491 = vmul.f32 %v8481, %v8489
    %v8492 = vsub.f32 %v8490, %v8491
    %v8494 = vlaneseq
    %v8495 = vshrl.u32 %v8494, 7
    %v8496 = vsub.s32 0, %v8495
    %v8497 = vrot.slane %v8489, %v8496
    %v8499 = vmul.f32 %v7961, %v8497
    %v8500 = vmul.f32 %v7966, %v8497
    %v8501 = vmul.f32 %v7971, %v8497
    %v8502 = vmul.f32 %v7976, %v8497
    %v8503 = vmul.f32 %v7981, %v8497
    %v8504 = vmul.f32 %v7986, %v8497
    %v8505 = vmul.f32 %v7991, %v8497
    %v8506 = vmul.f32 %v7996, %v8497
    %v8507 = vmul.f32 %v8001, %v8497
    %v8508 = vmul.f32 %v8006, %v8497
    %v8509 = vmul.f32 %v8011, %v8497
    %v8510 = vmul.f32 %v8016, %v8497
    %v8511 = vmul.f32 %v8021, %v8497
    %v8512 = vmul.f32 %v8026, %v8497
    %v8513 = vmul.f32 %v8031, %v8497
    %v8514 = vmul.f32 %v8036, %v8497
    %v8515 = vmul.f32 %v8041, %v8497
    %v8516 = vmul.f32 %v8046, %v8497
    %v8517 = vmul.f32 %v8051, %v8497
    %v8518 = vmul.f32 %v8056, %v8497
    %v8519 = vmul.f32 %v8061, %v8497
    %v8520 = vmul.f32 %v8066, %v8497
    %v8521 = vmul.f32 %v8071, %v8497
    %v8522 = vmul.f32 %v8076, %v8497
    %v8523 = vmul.f32 %v8081, %v8497
    %v8524 = vmul.f32 %v8086, %v8497
    %v8525 = vmul.f32 %v8091, %v8497
    %v8526 = vmul.f32 %v8096, %v8497
    %v8527 = vmul.f32 %v8101, %v8497
    %v8528 = vmul.f32 %v8106, %v8497
    %v8529 = vmul.f32 %v8111, %v8497
    %v8530 = vmul.f32 %v8116, %v8497
    %v8531 = vmul.f32 %v8121, %v8497
    %v8532 = vmul.f32 %v8126, %v8497
    %v8533 = vmul.f32 %v8131, %v8497
    %v8534 = vmul.f32 %v8136, %v8497
    %v8535 = vmul.f32 %v8141, %v8497
    %v8536 = vmul.f32 %v8146, %v8497
    %v8537 = vmul.f32 %v8151, %v8497
    %v8538 = vmul.f32 %v8156, %v8497
    %v8539 = vmul.f32 %v8161, %v8497
    %v8540 = vmul.f32 %v8166, %v8497
    %v8541 = vmul.f32 %v8171, %v8497
    %v8542 = vmul.f32 %v8176, %v8497
    %v8543 = vmul.f32 %v8181, %v8497
    %v8544 = vmul.f32 %v8186, %v8497
    %v8545 = vmul.f32 %v8191, %v8497
    %v8546 = vmul.f32 %v8196, %v8497
    %v8547 = vmul.f32 %v8201, %v8497
    %v8548 = vmul.f32 %v8206, %v8497
    %v8549 = vmul.f32 %v8211, %v8497
    %v8550 = vmul.f32 %v8216, %v8497
    %v8551 = vmul.f32 %v8221, %v8497
    %v8552 = vmul.f32 %v8226, %v8497
    %v8553 = vmul.f32 %v8231, %v8497
    %v8554 = vmul.f32 %v8236, %v8497
    %v8555 = vmul.f32 %v8241, %v8497
    %v8556 = vmul.f32 %v8246, %v8497
    %v8557 = vmul.f32 %v8251, %v8497
    %v8558 = vmul.f32 %v8256, %v8497
    %v8559 = vmul.f32 %v8261, %v8497
    %v8560 = vmul.f32 %v8266, %v8497
    %v8561 = vmul.f32 %v8271, %v8497
    %v8562 = vmul.f32 %v8276, %v8497
    %v8564 = vlaneseq
    %v8565 = vshrl.u32 %v8564, 7
    %v8566 = vsub.s32 0, %v8565
    %v8567 = vrot.slane %v8492, %v8566
    %v8569 = vadd.f32 %v8499, %v8567
    %v8570 = vadd.f32 %v8500, %v8567
    %v8571 = vadd.f32 %v8501, %v8567
    %v8572 = vadd.f32 %v8502, %v8567
    %v8573 = vadd.f32 %v8503, %v8567
    %v8574 = vadd.f32 %v8504, %v8567
    %v8575 = vadd.f32 %v8505, %v8567
    %v8576 = vadd.f32 %v8506, %v8567
    %v8577 = vadd.f32 %v8507, %v8567
    %v8578 = vadd.f32 %v8508, %v8567
    %v8579 = vadd.f32 %v8509, %v8567
    %v8580 = vadd.f32 %v8510, %v8567
    %v8581 = vadd.f32 %v8511, %v8567
    %v8582 = vadd.f32 %v8512, %v8567
    %v8583 = vadd.f32 %v8513, %v8567
    %v8584 = vadd.f32 %v8514, %v8567
    %v8585 = vadd.f32 %v8515, %v8567
    %v8586 = vadd.f32 %v8516, %v8567
    %v8587 = vadd.f32 %v8517, %v8567
    %v8588 = vadd.f32 %v8518, %v8567
    %v8589 = vadd.f32 %v8519, %v8567
    %v8590 = vadd.f32 %v8520, %v8567
    %v8591 = vadd.f32 %v8521, %v8567
    %v8592 = vadd.f32 %v8522, %v8567
    %v8593 = vadd.f32 %v8523, %v8567
    %v8594 = vadd.f32 %v8524, %v8567
    %v8595 = vadd.f32 %v8525, %v8567
    %v8596 = vadd.f32 %v8526, %v8567
    %v8597 = vadd.f32 %v8527, %v8567
    %v8598 = vadd.f32 %v8528, %v8567
    %v8599 = vadd.f32 %v8529, %v8567
    %v8600 = vadd.f32 %v8530, %v8567
    %v8601 = vadd.f32 %v8531, %v8567
    %v8602 = vadd.f32 %v8532, %v8567
    %v8603 = vadd.f32 %v8533, %v8567
    %v8604 = vadd.f32 %v8534, %v8567
    %v8605 = vadd.f32 %v8535, %v8567
    %v8606 = vadd.f32 %v8536, %v8567
    %v8607 = vadd.f32 %v8537, %v8567
    %v8608 = vadd.f32 %v8538, %v8567
    %v8609 = vadd.f32 %v8539, %v8567
    %v8610 = vadd.f32 %v8540, %v8567
    %v8611 = vadd.f32 %v8541, %v8567
    %v8612 = vadd.f32 %v8542, %v8567
    %v8613 = vadd.f32 %v8543, %v8567
    %v8614 = vadd.f32 %v8544, %v8567
    %v8615 = vadd.f32 %v8545, %v8567
    %v8616 = vadd.f32 %v8546, %v8567
    %v8617 = vadd.f32 %v8547, %v8567
    %v8618 = vadd.f32 %v8548, %v8567
    %v8619 = vadd.f32 %v8549, %v8567
    %v8620 = vadd.f32 %v8550, %v8567
    %v8621 = vadd.f32 %v8551, %v8567
    %v8622 = vadd.f32 %v8552, %v8567
    %v8623 = vadd.f32 %v8553, %v8567
    %v8624 = vadd.f32 %v8554, %v8567
    %v8625 = vadd.f32 %v8555, %v8567
    %v8626 = vadd.f32 %v8556, %v8567
    %v8627 = vadd.f32 %v8557, %v8567
    %v8628 = vadd.f32 %v8558, %v8567
    %v8629 = vadd.f32 %v8559, %v8567
    %v8630 = vadd.f32 %v8560, %v8567
    %v8631 = vadd.f32 %v8561, %v8567
    %v8632 = vadd.f32 %v8562, %v8567
    %v8633 = vmax.f32 %v8569, 0.0
    %v8634 = vmax.f32 %v8570, 0.0
    %v8635 = vmax.f32 %v8571, 0.0
    %v8636 = vmax.f32 %v8572, 0.0
    %v8637 = vmax.f32 %v8573, 0.0
    %v8638 = vmax.f32 %v8574, 0.0
    %v8639 = vmax.f32 %v8575, 0.0
    %v8640 = vmax.f32 %v8576, 0.0
    %v8641 = vmax.f32 %v8577, 0.0
    %v8642 = vmax.f32 %v8578, 0.0
    %v8643 = vmax.f32 %v8579, 0.0
    %v8644 = vmax.f32 %v8580, 0.0
    %v8645 = vmax.f32 %v8581, 0.0
    %v8646 = vmax.f32 %v8582, 0.0
    %v8647 = vmax.f32 %v8583, 0.0
    %v8648 = vmax.f32 %v8584, 0.0
    %v8649 = vmax.f32 %v8585, 0.0
    %v8650 = vmax.f32 %v8586, 0.0
    %v8651 = vmax.f32 %v8587, 0.0
    %v8652 = vmax.f32 %v8588, 0.0
    %v8653 = vmax.f32 %v8589, 0.0
    %v8654 = vmax.f32 %v8590, 0.0
    %v8655 = vmax.f32 %v8591, 0.0
    %v8656 = vmax.f32 %v8592, 0.0
    %v8657 = vmax.f32 %v8593, 0.0
    %v8658 = vmax.f32 %v8594, 0.0
    %v8659 = vmax.f32 %v8595, 0.0
    %v8660 = vmax.f32 %v8596, 0.0
    %v8661 = vmax.f32 %v8597, 0.0
    %v8662 = vmax.f32 %v8598, 0.0
    %v8663 = vmax.f32 %v8599, 0.0
    %v8664 = vmax.f32 %v8600, 0.0
    %v8665 = vmax.f32 %v8601, 0.0
    %v8666 = vmax.f32 %v8602, 0.0
    %v8667 = vmax.f32 %v8603, 0.0
    %v8668 = vmax.f32 %v8604, 0.0
    %v8669 = vmax.f32 %v8605, 0.0
    %v8670 = vmax.f32 %v8606, 0.0
    %v8671 = vmax.f32 %v8607, 0.0
    %v8672 = vmax.f32 %v8608, 0.0
    %v8673 = vmax.f32 %v8609, 0.0
    %v8674 = vmax.f32 %v8610, 0.0
    %v8675 = vmax.f32 %v8611, 0.0
    %v8676 = vmax.f32 %v8612, 0.0
    %v8677 = vmax.f32 %v8613, 0.0
    %v8678 = vmax.f32 %v8614, 0.0
    %v8679 = vmax.f32 %v8615, 0.0
    %v8680 = vmax.f32 %v8616, 0.0
    %v8681 = vmax.f32 %v8617, 0.0
    %v8682 = vmax.f32 %v8618, 0.0
    %v8683 = vmax.f32 %v8619, 0.0
    %v8684 = vmax.f32 %v8620, 0.0
    %v8685 = vmax.f32 %v8621, 0.0
    %v8686 = vmax.f32 %v8622, 0.0
    %v8687 = vmax.f32 %v8623, 0.0
    %v8688 = vmax.f32 %v8624, 0.0
    %v8689 = vmax.f32 %v8625, 0.0
    %v8690 = vmax.f32 %v8626, 0.0
    %v8691 = vmax.f32 %v8627, 0.0
    %v8692 = vmax.f32 %v8628, 0.0
    %v8693 = vmax.f32 %v8629, 0.0
    %v8694 = vmax.f32 %v8630, 0.0
    %v8695 = vmax.f32 %v8631, 0.0
    %v8696 = vmax.f32 %v8632, 0.0
    %8697 = vst [vmem:[#allocation17] sm:$0xff] %v8633
    %8698 = vst [vmem:[#allocation17 + $0x8] sm:$0xff] %v8634
    %8699 = vst [vmem:[#allocation17 + $0x10] sm:$0xff] %v8635
    %8700 = vst [vmem:[#allocation17 + $0x18] sm:$0xff] %v8636
    %8701 = vst [vmem:[#allocation17 + $0x20] sm:$0xff] %v8637
    %8702 = vst [vmem:[#allocation17 + $0x28] sm:$0xff] %v8638
    %8703 = vst [vmem:[#allocation17 + $0x30] sm:$0xff] %v8639
    %8704 = vst [vmem:[#allocation17 + $0x38] sm:$0xff] %v8640
    %8705 = vst [vmem:[#allocation17 + $0x40] sm:$0xff] %v8641
    %8706 = vst [vmem:[#allocation17 + $0x48] sm:$0xff] %v8642
    %8707 = vst [vmem:[#allocation17 + $0x50] sm:$0xff] %v8643
    %8708 = vst [vmem:[#allocation17 + $0x58] sm:$0xff] %v8644
    %8709 = vst [vmem:[#allocation17 + $0x60] sm:$0xff] %v8645
    %8710 = vst [vmem:[#allocation17 + $0x68] sm:$0xff] %v8646
    %8711 = vst [vmem:[#allocation17 + $0x70] sm:$0xff] %v8647
    %8712 = vst [vmem:[#allocation17 + $0x78] sm:$0xff] %v8648
    %8713 = vst [vmem:[#allocation17 + $0x80] sm:$0xff] %v8649
    %8714 = vst [vmem:[#allocation17 + $0x88] sm:$0xff] %v8650
    %8715 = vst [vmem:[#allocation17 + $0x90] sm:$0xff] %v8651
    %8716 = vst [vmem:[#allocation17 + $0x98] sm:$0xff] %v8652
    %8717 = vst [vmem:[#allocation17 + $0xa0] sm:$0xff] %v8653
    %8718 = vst [vmem:[#allocation17 + $0xa8] sm:$0xff] %v8654
    %8719 = vst [vmem:[#allocation17 + $0xb0] sm:$0xff] %v8655
    %8720 = vst [vmem:[#allocation17 + $0xb8] sm:$0xff] %v8656
    %8721 = vst [vmem:[#allocation17 + $0xc0] sm:$0xff] %v8657
    %8722 = vst [vmem:[#allocation17 + $0xc8] sm:$0xff] %v8658
    %8723 = vst [vmem:[#allocation17 + $0xd0] sm:$0xff] %v8659
    %8724 = vst [vmem:[#allocation17 + $0xd8] sm:$0xff] %v8660
    %8725 = vst [vmem:[#allocation17 + $0xe0] sm:$0xff] %v8661
    %8726 = vst [vmem:[#allocation17 + $0xe8] sm:$0xff] %v8662
    %8727 = vst [vmem:[#allocation17 + $0xf0] sm:$0xff] %v8663
    %8728 = vst [vmem:[#allocation17 + $0xf8] sm:$0xff] %v8664
    %8729 = vst [vmem:[#allocation17 + $0x100] sm:$0xff] %v8665
    %8730 = vst [vmem:[#allocation17 + $0x108] sm:$0xff] %v8666
    %8731 = vst [vmem:[#allocation17 + $0x110] sm:$0xff] %v8667
    %8732 = vst [vmem:[#allocation17 + $0x118] sm:$0xff] %v8668
    %8733 = vst [vmem:[#allocation17 + $0x120] sm:$0xff] %v8669
    %8734 = vst [vmem:[#allocation17 + $0x128] sm:$0xff] %v8670
    %8735 = vst [vmem:[#allocation17 + $0x130] sm:$0xff] %v8671
    %8736 = vst [vmem:[#allocation17 + $0x138] sm:$0xff] %v8672
    %8737 = vst [vmem:[#allocation17 + $0x140] sm:$0xff] %v8673
    %8738 = vst [vmem:[#allocation17 + $0x148] sm:$0xff] %v8674
    %8739 = vst [vmem:[#allocation17 + $0x150] sm:$0xff] %v8675
    %8740 = vst [vmem:[#allocation17 + $0x158] sm:$0xff] %v8676
    %8741 = vst [vmem:[#allocation17 + $0x160] sm:$0xff] %v8677
    %8742 = vst [vmem:[#allocation17 + $0x168] sm:$0xff] %v8678
    %8743 = vst [vmem:[#allocation17 + $0x170] sm:$0xff] %v8679
    %8744 = vst [vmem:[#allocation17 + $0x178] sm:$0xff] %v8680
    %8745 = vst [vmem:[#allocation17 + $0x180] sm:$0xff] %v8681
    %8746 = vst [vmem:[#allocation17 + $0x188] sm:$0xff] %v8682
    %8747 = vst [vmem:[#allocation17 + $0x190] sm:$0xff] %v8683
    %8748 = vst [vmem:[#allocation17 + $0x198] sm:$0xff] %v8684
    %8749 = vst [vmem:[#allocation17 + $0x1a0] sm:$0xff] %v8685
    %8750 = vst [vmem:[#allocation17 + $0x1a8] sm:$0xff] %v8686
    %8751 = vst [vmem:[#allocation17 + $0x1b0] sm:$0xff] %v8687
    %8752 = vst [vmem:[#allocation17 + $0x1b8] sm:$0xff] %v8688
    %8753 = vst [vmem:[#allocation17 + $0x1c0] sm:$0xff] %v8689
    %8754 = vst [vmem:[#allocation17 + $0x1c8] sm:$0xff] %v8690
    %8755 = vst [vmem:[#allocation17 + $0x1d0] sm:$0xff] %v8691
    %8756 = vst [vmem:[#allocation17 + $0x1d8] sm:$0xff] %v8692
    %8757 = vst [vmem:[#allocation17 + $0x1e0] sm:$0xff] %v8693
    %8758 = vst [vmem:[#allocation17 + $0x1e8] sm:$0xff] %v8694
    %8759 = vst [vmem:[#allocation17 + $0x1f0] sm:$0xff] %v8695
    %8760 = vst [vmem:[#allocation17 + $0x1f8] sm:$0xff] %v8696
    // Predicated region
    $region58: #{tpu_custom_call.1} parent=1 // pred_check
      _
    $region59: #{tpu_custom_call.1} parent=1 // pred_check_branch
      %8762 = sbr.rel (0) target = $region61
    $region60: #{tpu_custom_call.1} parent=1 // pred_region
      %s8764 = ssub.s32 8192, 8192
      %8765 = vsyncadd [#allocation7], %s8764
      %s8766 = sshll.u32 [#allocation17], 4
      %s8767 = int_to_ptr.vmem [resolvable:$true] %s8766
      %8772 = dma.vmem_to_hbm [thread:$0]  %s8767, 8192, %s7, [#allocation7], 128, 128, 8
    $region61: #{tpu_custom_call.1} parent=1 // pred_fallthru
      _
    // Predicated region
    $region62: #{tpu_custom_call.1} parent=1 // pred_check
      _
    $region63: #{tpu_custom_call.1} parent=1 // pred_check_branch
      %8774 = sbr.rel (0) target = $region65
    $region64: #{tpu_custom_call.1} parent=1 // pred_region
      %8775 = dma.done [#allocation7], 8192
    $region65: #{tpu_custom_call.1} parent=1 // pred_fallthru
      _
    %8776 = vsyncpa [#allocation6], 1
    %8777 = vsyncpa [#allocation9], 1
    %8778 = vsyncpa [#allocation12], 1
    %8779 = vsyncpa [#allocation15], 1
    %8780 = vsyncpa [#allocation7], 1

</llo_original>
